<compile_context>
chip_gen: v7x
topology: tpu7x:2x2x1
jax: 0.10.0
libtpu: 0.0.40
codegen_flags: <defaults>
</compile_context>

<pallas_src>
import jax
import jax.numpy as jnp
from jax import lax
from jax.experimental import pallas as pl
from jax.experimental.pallas import tpu as pltpu


def _round_up(x, m):
    return (x + m - 1) // m * m


# Sub-pixel tap table for ConvTranspose2d(k=4, s=2, p=1) along one axis:
#   out[2q + phase] += W[k] * u_pad[q + d],  u_pad = u zero-padded by 1.
_UP_TAPS = (((1, 1), (3, 0)),    # even output phase
            ((2, 1), (0, 2)))    # odd output phase


# ----------------------------- Pallas kernels ------------------------------ #

def _make_fused_kernel(ho, wo, cp, inp, outp):
    def kernel(x_ref, wd_ref, wu_ref, t_ref, stats_ref, upad_ref):
        # x_ref:     [1, 8*ho, wo+1, cp]  bf16  (row-tap / col-parity slabs of padded x)
        # wd_ref:    [16, cp, inp]        bf16  down-conv taps (kh*4+kw, cin, cout)
        # wu_ref:    [16, inp, outp]      bf16  up-conv taps   (kh*4+kw, cin, cout)
        # t_ref:     [1, 4*ho, wo, outp]  f32   phase-major conv-transpose output
        # stats_ref: [1, 2, outp]         f32   per-batch-element [sum; sumsq]
        # upad_ref:  [ho+2, wo+2, inp]    f32   scratch: ReLU(d) zero-padded by 1

        # ---- down: LeakyReLU(0.2) + Conv2d(4x4, s2, p1) as 16 tap matmuls ----
        d = jnp.zeros((ho * wo, inp), jnp.float32)
        for kh in range(4):
            for kw in range(4):
                kt = kh * 2 + (kw % 2)      # (row-tap, col-parity) slab index
                aw = kw // 2                # column offset inside the slab
                xi = x_ref[0, kt * ho:(kt + 1) * ho, aw:aw + wo, :]
                xi = jnp.where(xi > 0, xi, xi * 0.2)       # LeakyReLU (pad zeros stay 0)
                d += jnp.dot(xi.reshape(ho * wo, cp), wd_ref[kh * 4 + kw],
                             preferred_element_type=jnp.float32)

        # ---- ReLU fused into the producer; stage zero-padded u in VMEM ----
        u = jnp.maximum(d, 0.0)
        upad_ref[...] = jnp.zeros_like(upad_ref)
        upad_ref[1:1 + ho, 1:1 + wo, :] = u.reshape(ho, wo, inp)

        # ---- up: sub-pixel ConvTranspose2d(4x4, s2, p1): 4 phases x 4 taps ----
        ssum = jnp.zeros((1, outp), jnp.float32)
        ssq = jnp.zeros((1, outp), jnp.float32)
        for py in range(2):
            for px in range(2):
                acc = jnp.zeros((ho * wo, outp), jnp.float32)
                for kh, dy in _UP_TAPS[py]:
                    for kw, dx in _UP_TAPS[px]:
                        ui = upad_ref[dy:dy + ho, dx:dx + wo, :].astype(jnp.bfloat16)
                        acc += jnp.dot(ui.reshape(ho * wo, inp), wu_ref[kh * 4 + kw],
                                       preferred_element_type=jnp.float32)
                ph = py * 2 + px
                t_ref[0, ph * ho:(ph + 1) * ho, :, :] = acc.reshape(ho, wo, outp)
                ssum = ssum + jnp.sum(acc, axis=0, keepdims=True)
                ssq = ssq + jnp.sum(acc * acc, axis=0, keepdims=True)
        stats_ref[0, 0:1, :] = ssum
        stats_ref[0, 1:2, :] = ssq

    return kernel


def _bn_apply_kernel(t_ref, s_ref, b_ref, o_ref):
    o_ref[...] = t_ref[...] * s_ref[...] + b_ref[...]


# ------------------------------ pallas_call wrappers ------------------------ #

def _pallas_fused_core(x_taps, wd, wu, ho, wo):
    n = x_taps.shape[0]
    cp = x_taps.shape[-1]
    inp = wd.shape[-1]
    outp = wu.shape[-1]
    kernel = _make_fused_kernel(ho, wo, cp, inp, outp)
    return pl.pallas_call(
        kernel,
        out_shape=(jax.ShapeDtypeStruct((n, 4 * ho, wo, outp), jnp.float32),
                   jax.ShapeDtypeStruct((n, 2, outp), jnp.float32)),
        grid=(n,),
        in_specs=[
            pl.BlockSpec((1, 8 * ho, wo + 1, cp), lambda i: (i, 0, 0, 0)),
            pl.BlockSpec((16, cp, inp), lambda i: (0, 0, 0)),
            pl.BlockSpec((16, inp, outp), lambda i: (0, 0, 0)),
        ],
        out_specs=(
            pl.BlockSpec((1, 4 * ho, wo, outp), lambda i: (i, 0, 0, 0)),
            pl.BlockSpec((1, 2, outp), lambda i: (i, 0, 0)),
        ),
        scratch_shapes=[pltpu.VMEM((ho + 2, wo + 2, inp), jnp.float32)],
        compiler_params=pltpu.CompilerParams(
            dimension_semantics=("parallel",),
            vmem_limit_bytes=48 * 1024 * 1024),
    )(x_taps, wd, wu)


def _pallas_bn_apply(t_flat, scale, shift, tile_m):
    m, c = t_flat.shape
    return pl.pallas_call(
        _bn_apply_kernel,
        out_shape=jax.ShapeDtypeStruct((m, c), jnp.float32),
        grid=(m // tile_m,),
        in_specs=[
            pl.BlockSpec((tile_m, c), lambda i: (i, 0)),
            pl.BlockSpec((1, c), lambda i: (0, 0)),
            pl.BlockSpec((1, c), lambda i: (0, 0)),
        ],
        out_specs=pl.BlockSpec((tile_m, c), lambda i: (i, 0)),
        compiler_params=pltpu.CompilerParams(
            dimension_semantics=("parallel",)),
    )(t_flat, scale, shift)


# ---------------------------------- glue ------------------------------------ #

def unet_innermost_forward(x_nchw, params):
    """x_nchw: [N, input_nc, H, W] -> [N, input_nc + outer_nc, H, W]."""
    w_down = params["w_down"]    # [inner_nc, input_nc, 4, 4]  (OIHW, Conv2d)
    w_up = params["w_up"]        # [inner_nc, outer_nc, 4, 4]  (IOHW, ConvTranspose2d)
    gamma = params["gamma"]      # [outer_nc]
    beta = params["beta"]        # [outer_nc]

    n, c_in, h, w = x_nchw.shape
    inner_nc = w_down.shape[0]
    outer_nc = w_up.shape[1]
    ho, wo = h // 2, w // 2
    cp = _round_up(c_in, 128)
    inp = _round_up(inner_nc, 128)
    outp = _round_up(outer_nc, 128)

    x_nhwc = jnp.transpose(x_nchw, (0, 2, 3, 1)).astype(jnp.float32)

    # ---- input re-arrangement (cheap XLA glue, ~2x copy; no 4x im2col) ----
    x_pad = jnp.pad(x_nhwc, ((0, 0), (1, 1), (1, 1), (0, cp - c_in))).astype(jnp.bfloat16)
    rows = [x_pad[:, kh:kh + 2 * ho:2, :, :] for kh in range(4)]      # stride-2 row taps
    xt = jnp.stack(rows, axis=1)                                      # [n, 4, ho, 2wo+2, cp]
    xt = xt.reshape(n, 4, ho, wo + 1, 2, cp)                          # split cols by parity
    xt = jnp.transpose(xt, (0, 1, 4, 2, 3, 5)).reshape(n, 8 * ho, wo + 1, cp)

    # ---- weights as 16 tap matrices, zero-padded to lane-dense channel counts ----
    wd = jnp.transpose(w_down, (2, 3, 1, 0)).reshape(16, c_in, inner_nc)
    wd = jnp.pad(wd, ((0, 0), (0, cp - c_in), (0, inp - inner_nc))).astype(jnp.bfloat16)
    wu = jnp.transpose(w_up, (2, 3, 0, 1)).reshape(16, inner_nc, outer_nc)
    wu = jnp.pad(wu, ((0, 0), (0, inp - inner_nc), (0, outp - outer_nc))).astype(jnp.bfloat16)

    # ---- fused LeakyReLU + down-conv + ReLU + sub-pixel up-conv kernel ----
    t_phase, stats = _pallas_fused_core(xt, wd, wu, ho, wo)

    # ---- BatchNorm statistics finalize (tiny [n,2,outp] reduction in XLA) ----
    # NOTE: one-pass E[x^2]-E[x]^2 in f32; fine at these magnitudes. For very large
    # activations switch to centered two-pass partials to avoid cancellation.
    cnt = jnp.float32(n * h * w)
    s = jnp.sum(stats[:, 0, :], axis=0)
    ss = jnp.sum(stats[:, 1, :], axis=0)
    mean = s / cnt
    var = jnp.maximum(ss / cnt - mean * mean, 0.0)
    inv = lax.rsqrt(var + 1e-5)
    gamma_p = jnp.pad(gamma.astype(jnp.float32), (0, outp - outer_nc))
    beta_p = jnp.pad(beta.astype(jnp.float32), (0, outp - outer_nc))
    scale = (gamma_p * inv).reshape(1, outp)
    shift = (beta_p - mean * gamma_p * inv).reshape(1, outp)

    # ---- BN apply: M-tiled, pipelined, lane-dense elementwise kernel ----
    m = n * 4 * ho * wo
    tile_m = 256
    mp = _round_up(m, tile_m)
    t_flat = t_phase.reshape(m, outp)
    if mp != m:
        t_flat = jnp.pad(t_flat, ((0, mp - m), (0, 0)))
    bn_flat = _pallas_bn_apply(t_flat, scale, shift, tile_m)

    # ---- de-interleave phases, skip-concat in NHWC, single transpose to NCHW ----
    bn = bn_flat[:m].reshape(n, 2, 2, ho, wo, outp)[..., :outer_nc]
    bn = jnp.transpose(bn, (0, 3, 1, 4, 2, 5)).reshape(n, h, w, outer_nc)
    out_nhwc = jnp.concatenate([x_nhwc, bn], axis=-1)
    return jnp.transpose(out_nhwc, (0, 3, 1, 2))


# --------------------------- pure-JAX reference ------------------------------ #

def _reference(x, w_down, w_up, gamma, beta):
    y = jnp.where(x >= 0, x, 0.2 * x)
    d = lax.conv_general_dilated(y, w_down, window_strides=(2, 2),
                                 padding=((1, 1), (1, 1)),
                                 dimension_numbers=("NCHW", "OIHW", "NCHW"))
    u = jnp.maximum(d, 0.0)
    w_eq = jnp.flip(jnp.transpose(w_up, (1, 0, 2, 3)), axis=(2, 3))   # [out, in, kh, kw]
    t = lax.conv_general_dilated(u, w_eq, window_strides=(1, 1),
                                 padding=((2, 2), (2, 2)), lhs_dilation=(2, 2),
                                 dimension_numbers=("NCHW", "OIHW", "NCHW"))
    mean = t.mean(axis=(0, 2, 3), keepdims=True)
    var = ((t - mean) ** 2).mean(axis=(0, 2, 3), keepdims=True)
    bn = (t - mean) / jnp.sqrt(var + 1e-5) * gamma.reshape(1, -1, 1, 1) + beta.reshape(1, -1, 1, 1)
    return jnp.concatenate([x, bn], axis=1)


# ---------------------------------- main ------------------------------------- #

if __name__ == "__main__":
    key = jax.random.PRNGKey(0)
    k_x, k_wd, k_wu, k_g, k_b = jax.random.split(key, 5)

    # Small shapes: innermost block with outer_nc = input_nc = 4, inner_nc = 8.
    N, input_nc, inner_nc, outer_nc, H, W = 2, 4, 8, 4, 16, 16

    x = jax.random.normal(k_x, (N, input_nc, H, W), jnp.float32)
    w_down = 0.1 * jax.random.normal(k_wd, (inner_nc, input_nc, 4, 4), jnp.float32)
    w_up = 0.1 * jax.random.normal(k_wu, (inner_nc, outer_nc, 4, 4), jnp.float32)
    gamma = 1.0 + 0.1 * jax.random.normal(k_g, (outer_nc,), jnp.float32)
    beta = 0.1 * jax.random.normal(k_b, (outer_nc,), jnp.float32)

    # Pre-quantize conv operands to bf16 resolution so the f32 reference and the
    # bf16-fed Pallas kernels see identical inputs (isolates scheduling error).
    q = lambda a: a.astype(jnp.bfloat16).astype(jnp.float32)
    x, w_down, w_up = q(x), q(w_down), q(w_up)

    params = {"w_down": w_down, "w_up": w_up, "gamma": gamma, "beta": beta}

    out = jax.jit(unet_innermost_forward)(x, params)
    out = jax.block_until_ready(out)
    assert out.shape == (N, input_nc + outer_nc, H, W), out.shape

    ref = _reference(x, w_down, w_up, gamma, beta)
    max_err = float(jnp.max(jnp.abs(out - ref)))
    assert jnp.allclose(out, ref, atol=3e-2, rtol=3e-2), max_err

    print("KERNEL_OK")
</pallas_src>

<mosaic_0001>
module attributes {stable_mosaic.version = 11 : i64} {
  func.func @kernel(%arg0: i32, %arg1: memref<1x64x9x128xbf16, #tpu.memory_space<vmem>>, %arg2: memref<16x128x128xbf16, #tpu.memory_space<vmem>>, %arg3: memref<16x128x128xbf16, #tpu.memory_space<vmem>>, %arg4: memref<1x32x8x128xf32, #tpu.memory_space<vmem>>, %arg5: memref<1x2x128xf32, #tpu.memory_space<vmem>>, %arg6: memref<10x10x128xf32, #tpu.memory_space<vmem>>) attributes {dimension_semantics = [#tpu.dimension_semantics<parallel>], iteration_bounds = array<i64: 2>, scalar_prefetch = 0 : i64, scratch_operands = 1 : i64, tpu.core_type = #tpu.core_type<tc>, window_params = [{transform_indices = @transform_0, window_bounds = array<i64: 1, 64, 9, 128>}, {pipeline_mode = #tpu.pipeline_mode<synchronous>, transform_indices = @transform_1, window_bounds = array<i64: 16, 128, 128>}, {pipeline_mode = #tpu.pipeline_mode<synchronous>, transform_indices = @transform_2, window_bounds = array<i64: 16, 128, 128>}, {transform_indices = @transform_3, window_bounds = array<i64: 1, 32, 8, 128>}, {transform_indices = @transform_4, window_bounds = array<i64: 1, 2, 128>}]} {
    %cst = arith.constant 0.000000e+00 : f32
    %0 = vector.broadcast %cst : f32 to vector<64x128xf32>
    %c0 = arith.constant 0 : index
    %c0_0 = arith.constant 0 : index
    %c0_1 = arith.constant 0 : index
    %c0_2 = arith.constant 0 : index
    %1 = vector.load %arg1[%c0, %c0_0, %c0_1, %c0_2] : memref<1x64x9x128xbf16, #tpu.memory_space<vmem>>, vector<1x8x8x128xbf16>
    %2 = vector.shape_cast %1 : vector<1x8x8x128xbf16> to vector<8x8x128xbf16>
    %cst_3 = arith.constant 0.000000e+00 : bf16
    %3 = vector.broadcast %cst_3 : bf16 to vector<8x8x128xbf16>
    %4 = arith.cmpf ogt, %2, %3 : vector<8x8x128xbf16>
    %cst_4 = arith.constant 2.001950e-01 : bf16
    %5 = vector.broadcast %cst_4 : bf16 to vector<8x8x128xbf16>
    %6 = arith.mulf %2, %5 : vector<8x8x128xbf16>
    %7 = arith.select %4, %2, %6 : vector<8x8x128xi1>, vector<8x8x128xbf16>
    %8 = vector.shape_cast %7 : vector<8x8x128xbf16> to vector<64x128xbf16>
    %c0_5 = arith.constant 0 : index
    %c0_6 = arith.constant 0 : index
    %c0_7 = arith.constant 0 : index
    %9 = vector.load %arg2[%c0_5, %c0_6, %c0_7] : memref<16x128x128xbf16, #tpu.memory_space<vmem>>, vector<1x128x128xbf16>
    %10 = vector.shape_cast %9 : vector<1x128x128xbf16> to vector<128x128xbf16>
    %cst_8 = arith.constant dense<0.000000e+00> : vector<64x128xf32>
    %11 = tpu.matmul %8, %10, %cst_8 {dimension_numbers = #tpu.dot_dimension_numbers<[1], [0], [0], [1], [0, 0, 1, 1], [], []>} : vector<64x128xbf16>, vector<128x128xbf16>, vector<64x128xf32> -> vector<64x128xf32>
    %12 = arith.addf %0, %11 : vector<64x128xf32>
    %c0_9 = arith.constant 0 : index
    %c8 = arith.constant 8 : index
    %c0_10 = arith.constant 0 : index
    %c0_11 = arith.constant 0 : index
    %13 = vector.load %arg1[%c0_9, %c8, %c0_10, %c0_11] : memref<1x64x9x128xbf16, #tpu.memory_space<vmem>>, vector<1x8x8x128xbf16>
    %14 = vector.shape_cast %13 : vector<1x8x8x128xbf16> to vector<8x8x128xbf16>
    %cst_12 = arith.constant 0.000000e+00 : bf16
    %15 = vector.broadcast %cst_12 : bf16 to vector<8x8x128xbf16>
    %16 = arith.cmpf ogt, %14, %15 : vector<8x8x128xbf16>
    %cst_13 = arith.constant 2.001950e-01 : bf16
    %17 = vector.broadcast %cst_13 : bf16 to vector<8x8x128xbf16>
    %18 = arith.mulf %14, %17 : vector<8x8x128xbf16>
    %19 = arith.select %16, %14, %18 : vector<8x8x128xi1>, vector<8x8x128xbf16>
    %20 = vector.shape_cast %19 : vector<8x8x128xbf16> to vector<64x128xbf16>
    %c1 = arith.constant 1 : index
    %c0_14 = arith.constant 0 : index
    %c0_15 = arith.constant 0 : index
    %21 = vector.load %arg2[%c1, %c0_14, %c0_15] : memref<16x128x128xbf16, #tpu.memory_space<vmem>>, vector<1x128x128xbf16>
    %22 = vector.shape_cast %21 : vector<1x128x128xbf16> to vector<128x128xbf16>
    %cst_16 = arith.constant dense<0.000000e+00> : vector<64x128xf32>
    %23 = tpu.matmul %20, %22, %cst_16 {dimension_numbers = #tpu.dot_dimension_numbers<[1], [0], [0], [1], [0, 0, 1, 1], [], []>} : vector<64x128xbf16>, vector<128x128xbf16>, vector<64x128xf32> -> vector<64x128xf32>
    %24 = arith.addf %12, %23 : vector<64x128xf32>
    %c0_17 = arith.constant 0 : index
    %c0_18 = arith.constant 0 : index
    %c1_19 = arith.constant 1 : index
    %c0_20 = arith.constant 0 : index
    %25 = vector.load %arg1[%c0_17, %c0_18, %c1_19, %c0_20] : memref<1x64x9x128xbf16, #tpu.memory_space<vmem>>, vector<1x8x8x128xbf16>
    %26 = vector.shape_cast %25 : vector<1x8x8x128xbf16> to vector<8x8x128xbf16>
    %cst_21 = arith.constant 0.000000e+00 : bf16
    %27 = vector.broadcast %cst_21 : bf16 to vector<8x8x128xbf16>
    %28 = arith.cmpf ogt, %26, %27 : vector<8x8x128xbf16>
    %cst_22 = arith.constant 2.001950e-01 : bf16
    %29 = vector.broadcast %cst_22 : bf16 to vector<8x8x128xbf16>
    %30 = arith.mulf %26, %29 : vector<8x8x128xbf16>
    %31 = arith.select %28, %26, %30 : vector<8x8x128xi1>, vector<8x8x128xbf16>
    %32 = vector.shape_cast %31 : vector<8x8x128xbf16> to vector<64x128xbf16>
    %c2 = arith.constant 2 : index
    %c0_23 = arith.constant 0 : index
    %c0_24 = arith.constant 0 : index
    %33 = vector.load %arg2[%c2, %c0_23, %c0_24] : memref<16x128x128xbf16, #tpu.memory_space<vmem>>, vector<1x128x128xbf16>
    %34 = vector.shape_cast %33 : vector<1x128x128xbf16> to vector<128x128xbf16>
    %cst_25 = arith.constant dense<0.000000e+00> : vector<64x128xf32>
    %35 = tpu.matmul %32, %34, %cst_25 {dimension_numbers = #tpu.dot_dimension_numbers<[1], [0], [0], [1], [0, 0, 1, 1], [], []>} : vector<64x128xbf16>, vector<128x128xbf16>, vector<64x128xf32> -> vector<64x128xf32>
    %36 = arith.addf %24, %35 : vector<64x128xf32>
    %c0_26 = arith.constant 0 : index
    %c8_27 = arith.constant 8 : index
    %c1_28 = arith.constant 1 : index
    %c0_29 = arith.constant 0 : index
    %37 = vector.load %arg1[%c0_26, %c8_27, %c1_28, %c0_29] : memref<1x64x9x128xbf16, #tpu.memory_space<vmem>>, vector<1x8x8x128xbf16>
    %38 = vector.shape_cast %37 : vector<1x8x8x128xbf16> to vector<8x8x128xbf16>
    %cst_30 = arith.constant 0.000000e+00 : bf16
    %39 = vector.broadcast %cst_30 : bf16 to vector<8x8x128xbf16>
    %40 = arith.cmpf ogt, %38, %39 : vector<8x8x128xbf16>
    %cst_31 = arith.constant 2.001950e-01 : bf16
    %41 = vector.broadcast %cst_31 : bf16 to vector<8x8x128xbf16>
    %42 = arith.mulf %38, %41 : vector<8x8x128xbf16>
    %43 = arith.select %40, %38, %42 : vector<8x8x128xi1>, vector<8x8x128xbf16>
    %44 = vector.shape_cast %43 : vector<8x8x128xbf16> to vector<64x128xbf16>
    %c3 = arith.constant 3 : index
    %c0_32 = arith.constant 0 : index
    %c0_33 = arith.constant 0 : index
    %45 = vector.load %arg2[%c3, %c0_32, %c0_33] : memref<16x128x128xbf16, #tpu.memory_space<vmem>>, vector<1x128x128xbf16>
    %46 = vector.shape_cast %45 : vector<1x128x128xbf16> to vector<128x128xbf16>
    %cst_34 = arith.constant dense<0.000000e+00> : vector<64x128xf32>
    %47 = tpu.matmul %44, %46, %cst_34 {dimension_numbers = #tpu.dot_dimension_numbers<[1], [0], [0], [1], [0, 0, 1, 1], [], []>} : vector<64x128xbf16>, vector<128x128xbf16>, vector<64x128xf32> -> vector<64x128xf32>
    %48 = arith.addf %36, %47 : vector<64x128xf32>
    %c0_35 = arith.constant 0 : index
    %c16 = arith.constant 16 : index
    %c0_36 = arith.constant 0 : index
    %c0_37 = arith.constant 0 : index
    %49 = vector.load %arg1[%c0_35, %c16, %c0_36, %c0_37] : memref<1x64x9x128xbf16, #tpu.memory_space<vmem>>, vector<1x8x8x128xbf16>
    %50 = vector.shape_cast %49 : vector<1x8x8x128xbf16> to vector<8x8x128xbf16>
    %cst_38 = arith.constant 0.000000e+00 : bf16
    %51 = vector.broadcast %cst_38 : bf16 to vector<8x8x128xbf16>
    %52 = arith.cmpf ogt, %50, %51 : vector<8x8x128xbf16>
    %cst_39 = arith.constant 2.001950e-01 : bf16
    %53 = vector.broadcast %cst_39 : bf16 to vector<8x8x128xbf16>
    %54 = arith.mulf %50, %53 : vector<8x8x128xbf16>
    %55 = arith.select %52, %50, %54 : vector<8x8x128xi1>, vector<8x8x128xbf16>
    %56 = vector.shape_cast %55 : vector<8x8x128xbf16> to vector<64x128xbf16>
    %c4 = arith.constant 4 : index
    %c0_40 = arith.constant 0 : index
    %c0_41 = arith.constant 0 : index
    %57 = vector.load %arg2[%c4, %c0_40, %c0_41] : memref<16x128x128xbf16, #tpu.memory_space<vmem>>, vector<1x128x128xbf16>
    %58 = vector.shape_cast %57 : vector<1x128x128xbf16> to vector<128x128xbf16>
    %cst_42 = arith.constant dense<0.000000e+00> : vector<64x128xf32>
    %59 = tpu.matmul %56, %58, %cst_42 {dimension_numbers = #tpu.dot_dimension_numbers<[1], [0], [0], [1], [0, 0, 1, 1], [], []>} : vector<64x128xbf16>, vector<128x128xbf16>, vector<64x128xf32> -> vector<64x128xf32>
    %60 = arith.addf %48, %59 : vector<64x128xf32>
    %c0_43 = arith.constant 0 : index
    %c24 = arith.constant 24 : index
    %c0_44 = arith.constant 0 : index
    %c0_45 = arith.constant 0 : index
    %61 = vector.load %arg1[%c0_43, %c24, %c0_44, %c0_45] : memref<1x64x9x128xbf16, #tpu.memory_space<vmem>>, vector<1x8x8x128xbf16>
    %62 = vector.shape_cast %61 : vector<1x8x8x128xbf16> to vector<8x8x128xbf16>
    %cst_46 = arith.constant 0.000000e+00 : bf16
    %63 = vector.broadcast %cst_46 : bf16 to vector<8x8x128xbf16>
    %64 = arith.cmpf ogt, %62, %63 : vector<8x8x128xbf16>
    %cst_47 = arith.constant 2.001950e-01 : bf16
    %65 = vector.broadcast %cst_47 : bf16 to vector<8x8x128xbf16>
    %66 = arith.mulf %62, %65 : vector<8x8x128xbf16>
    %67 = arith.select %64, %62, %66 : vector<8x8x128xi1>, vector<8x8x128xbf16>
    %68 = vector.shape_cast %67 : vector<8x8x128xbf16> to vector<64x128xbf16>
    %c5 = arith.constant 5 : index
    %c0_48 = arith.constant 0 : index
    %c0_49 = arith.constant 0 : index
    %69 = vector.load %arg2[%c5, %c0_48, %c0_49] : memref<16x128x128xbf16, #tpu.memory_space<vmem>>, vector<1x128x128xbf16>
    %70 = vector.shape_cast %69 : vector<1x128x128xbf16> to vector<128x128xbf16>
    %cst_50 = arith.constant dense<0.000000e+00> : vector<64x128xf32>
    %71 = tpu.matmul %68, %70, %cst_50 {dimension_numbers = #tpu.dot_dimension_numbers<[1], [0], [0], [1], [0, 0, 1, 1], [], []>} : vector<64x128xbf16>, vector<128x128xbf16>, vector<64x128xf32> -> vector<64x128xf32>
    %72 = arith.addf %60, %71 : vector<64x128xf32>
    %c0_51 = arith.constant 0 : index
    %c16_52 = arith.constant 16 : index
    %c1_53 = arith.constant 1 : index
    %c0_54 = arith.constant 0 : index
    %73 = vector.load %arg1[%c0_51, %c16_52, %c1_53, %c0_54] : memref<1x64x9x128xbf16, #tpu.memory_space<vmem>>, vector<1x8x8x128xbf16>
    %74 = vector.shape_cast %73 : vector<1x8x8x128xbf16> to vector<8x8x128xbf16>
    %cst_55 = arith.constant 0.000000e+00 : bf16
    %75 = vector.broadcast %cst_55 : bf16 to vector<8x8x128xbf16>
    %76 = arith.cmpf ogt, %74, %75 : vector<8x8x128xbf16>
    %cst_56 = arith.constant 2.001950e-01 : bf16
    %77 = vector.broadcast %cst_56 : bf16 to vector<8x8x128xbf16>
    %78 = arith.mulf %74, %77 : vector<8x8x128xbf16>
    %79 = arith.select %76, %74, %78 : vector<8x8x128xi1>, vector<8x8x128xbf16>
    %80 = vector.shape_cast %79 : vector<8x8x128xbf16> to vector<64x128xbf16>
    %c6 = arith.constant 6 : index
    %c0_57 = arith.constant 0 : index
    %c0_58 = arith.constant 0 : index
    %81 = vector.load %arg2[%c6, %c0_57, %c0_58] : memref<16x128x128xbf16, #tpu.memory_space<vmem>>, vector<1x128x128xbf16>
    %82 = vector.shape_cast %81 : vector<1x128x128xbf16> to vector<128x128xbf16>
    %cst_59 = arith.constant dense<0.000000e+00> : vector<64x128xf32>
    %83 = tpu.matmul %80, %82, %cst_59 {dimension_numbers = #tpu.dot_dimension_numbers<[1], [0], [0], [1], [0, 0, 1, 1], [], []>} : vector<64x128xbf16>, vector<128x128xbf16>, vector<64x128xf32> -> vector<64x128xf32>
    %84 = arith.addf %72, %83 : vector<64x128xf32>
    %c0_60 = arith.constant 0 : index
    %c24_61 = arith.constant 24 : index
    %c1_62 = arith.constant 1 : index
    %c0_63 = arith.constant 0 : index
    %85 = vector.load %arg1[%c0_60, %c24_61, %c1_62, %c0_63] : memref<1x64x9x128xbf16, #tpu.memory_space<vmem>>, vector<1x8x8x128xbf16>
    %86 = vector.shape_cast %85 : vector<1x8x8x128xbf16> to vector<8x8x128xbf16>
    %cst_64 = arith.constant 0.000000e+00 : bf16
    %87 = vector.broadcast %cst_64 : bf16 to vector<8x8x128xbf16>
    %88 = arith.cmpf ogt, %86, %87 : vector<8x8x128xbf16>
    %cst_65 = arith.constant 2.001950e-01 : bf16
    %89 = vector.broadcast %cst_65 : bf16 to vector<8x8x128xbf16>
    %90 = arith.mulf %86, %89 : vector<8x8x128xbf16>
    %91 = arith.select %88, %86, %90 : vector<8x8x128xi1>, vector<8x8x128xbf16>
    %92 = vector.shape_cast %91 : vector<8x8x128xbf16> to vector<64x128xbf16>
    %c7 = arith.constant 7 : index
    %c0_66 = arith.constant 0 : index
    %c0_67 = arith.constant 0 : index
    %93 = vector.load %arg2[%c7, %c0_66, %c0_67] : memref<16x128x128xbf16, #tpu.memory_space<vmem>>, vector<1x128x128xbf16>
    %94 = vector.shape_cast %93 : vector<1x128x128xbf16> to vector<128x128xbf16>
    %cst_68 = arith.constant dense<0.000000e+00> : vector<64x128xf32>
    %95 = tpu.matmul %92, %94, %cst_68 {dimension_numbers = #tpu.dot_dimension_numbers<[1], [0], [0], [1], [0, 0, 1, 1], [], []>} : vector<64x128xbf16>, vector<128x128xbf16>, vector<64x128xf32> -> vector<64x128xf32>
    %96 = arith.addf %84, %95 : vector<64x128xf32>
    %c0_69 = arith.constant 0 : index
    %c32 = arith.constant 32 : index
    %c0_70 = arith.constant 0 : index
    %c0_71 = arith.constant 0 : index
    %97 = vector.load %arg1[%c0_69, %c32, %c0_70, %c0_71] : memref<1x64x9x128xbf16, #tpu.memory_space<vmem>>, vector<1x8x8x128xbf16>
    %98 = vector.shape_cast %97 : vector<1x8x8x128xbf16> to vector<8x8x128xbf16>
    %cst_72 = arith.constant 0.000000e+00 : bf16
    %99 = vector.broadcast %cst_72 : bf16 to vector<8x8x128xbf16>
    %100 = arith.cmpf ogt, %98, %99 : vector<8x8x128xbf16>
    %cst_73 = arith.constant 2.001950e-01 : bf16
    %101 = vector.broadcast %cst_73 : bf16 to vector<8x8x128xbf16>
    %102 = arith.mulf %98, %101 : vector<8x8x128xbf16>
    %103 = arith.select %100, %98, %102 : vector<8x8x128xi1>, vector<8x8x128xbf16>
    %104 = vector.shape_cast %103 : vector<8x8x128xbf16> to vector<64x128xbf16>
    %c8_74 = arith.constant 8 : index
    %c0_75 = arith.constant 0 : index
    %c0_76 = arith.constant 0 : index
    %105 = vector.load %arg2[%c8_74, %c0_75, %c0_76] : memref<16x128x128xbf16, #tpu.memory_space<vmem>>, vector<1x128x128xbf16>
    %106 = vector.shape_cast %105 : vector<1x128x128xbf16> to vector<128x128xbf16>
    %cst_77 = arith.constant dense<0.000000e+00> : vector<64x128xf32>
    %107 = tpu.matmul %104, %106, %cst_77 {dimension_numbers = #tpu.dot_dimension_numbers<[1], [0], [0], [1], [0, 0, 1, 1], [], []>} : vector<64x128xbf16>, vector<128x128xbf16>, vector<64x128xf32> -> vector<64x128xf32>
    %108 = arith.addf %96, %107 : vector<64x128xf32>
    %c0_78 = arith.constant 0 : index
    %c40 = arith.constant 40 : index
    %c0_79 = arith.constant 0 : index
    %c0_80 = arith.constant 0 : index
    %109 = vector.load %arg1[%c0_78, %c40, %c0_79, %c0_80] : memref<1x64x9x128xbf16, #tpu.memory_space<vmem>>, vector<1x8x8x128xbf16>
    %110 = vector.shape_cast %109 : vector<1x8x8x128xbf16> to vector<8x8x128xbf16>
    %cst_81 = arith.constant 0.000000e+00 : bf16
    %111 = vector.broadcast %cst_81 : bf16 to vector<8x8x128xbf16>
    %112 = arith.cmpf ogt, %110, %111 : vector<8x8x128xbf16>
    %cst_82 = arith.constant 2.001950e-01 : bf16
    %113 = vector.broadcast %cst_82 : bf16 to vector<8x8x128xbf16>
    %114 = arith.mulf %110, %113 : vector<8x8x128xbf16>
    %115 = arith.select %112, %110, %114 : vector<8x8x128xi1>, vector<8x8x128xbf16>
    %116 = vector.shape_cast %115 : vector<8x8x128xbf16> to vector<64x128xbf16>
    %c9 = arith.constant 9 : index
    %c0_83 = arith.constant 0 : index
    %c0_84 = arith.constant 0 : index
    %117 = vector.load %arg2[%c9, %c0_83, %c0_84] : memref<16x128x128xbf16, #tpu.memory_space<vmem>>, vector<1x128x128xbf16>
    %118 = vector.shape_cast %117 : vector<1x128x128xbf16> to vector<128x128xbf16>
    %cst_85 = arith.constant dense<0.000000e+00> : vector<64x128xf32>
    %119 = tpu.matmul %116, %118, %cst_85 {dimension_numbers = #tpu.dot_dimension_numbers<[1], [0], [0], [1], [0, 0, 1, 1], [], []>} : vector<64x128xbf16>, vector<128x128xbf16>, vector<64x128xf32> -> vector<64x128xf32>
    %120 = arith.addf %108, %119 : vector<64x128xf32>
    %c0_86 = arith.constant 0 : index
    %c32_87 = arith.constant 32 : index
    %c1_88 = arith.constant 1 : index
    %c0_89 = arith.constant 0 : index
    %121 = vector.load %arg1[%c0_86, %c32_87, %c1_88, %c0_89] : memref<1x64x9x128xbf16, #tpu.memory_space<vmem>>, vector<1x8x8x128xbf16>
    %122 = vector.shape_cast %121 : vector<1x8x8x128xbf16> to vector<8x8x128xbf16>
    %cst_90 = arith.constant 0.000000e+00 : bf16
    %123 = vector.broadcast %cst_90 : bf16 to vector<8x8x128xbf16>
    %124 = arith.cmpf ogt, %122, %123 : vector<8x8x128xbf16>
    %cst_91 = arith.constant 2.001950e-01 : bf16
    %125 = vector.broadcast %cst_91 : bf16 to vector<8x8x128xbf16>
    %126 = arith.mulf %122, %125 : vector<8x8x128xbf16>
    %127 = arith.select %124, %122, %126 : vector<8x8x128xi1>, vector<8x8x128xbf16>
    %128 = vector.shape_cast %127 : vector<8x8x128xbf16> to vector<64x128xbf16>
    %c10 = arith.constant 10 : index
    %c0_92 = arith.constant 0 : index
    %c0_93 = arith.constant 0 : index
    %129 = vector.load %arg2[%c10, %c0_92, %c0_93] : memref<16x128x128xbf16, #tpu.memory_space<vmem>>, vector<1x128x128xbf16>
    %130 = vector.shape_cast %129 : vector<1x128x128xbf16> to vector<128x128xbf16>
    %cst_94 = arith.constant dense<0.000000e+00> : vector<64x128xf32>
    %131 = tpu.matmul %128, %130, %cst_94 {dimension_numbers = #tpu.dot_dimension_numbers<[1], [0], [0], [1], [0, 0, 1, 1], [], []>} : vector<64x128xbf16>, vector<128x128xbf16>, vector<64x128xf32> -> vector<64x128xf32>
    %132 = arith.addf %120, %131 : vector<64x128xf32>
    %c0_95 = arith.constant 0 : index
    %c40_96 = arith.constant 40 : index
    %c1_97 = arith.constant 1 : index
    %c0_98 = arith.constant 0 : index
    %133 = vector.load %arg1[%c0_95, %c40_96, %c1_97, %c0_98] : memref<1x64x9x128xbf16, #tpu.memory_space<vmem>>, vector<1x8x8x128xbf16>
    %134 = vector.shape_cast %133 : vector<1x8x8x128xbf16> to vector<8x8x128xbf16>
    %cst_99 = arith.constant 0.000000e+00 : bf16
    %135 = vector.broadcast %cst_99 : bf16 to vector<8x8x128xbf16>
    %136 = arith.cmpf ogt, %134, %135 : vector<8x8x128xbf16>
    %cst_100 = arith.constant 2.001950e-01 : bf16
    %137 = vector.broadcast %cst_100 : bf16 to vector<8x8x128xbf16>
    %138 = arith.mulf %134, %137 : vector<8x8x128xbf16>
    %139 = arith.select %136, %134, %138 : vector<8x8x128xi1>, vector<8x8x128xbf16>
    %140 = vector.shape_cast %139 : vector<8x8x128xbf16> to vector<64x128xbf16>
    %c11 = arith.constant 11 : index
    %c0_101 = arith.constant 0 : index
    %c0_102 = arith.constant 0 : index
    %141 = vector.load %arg2[%c11, %c0_101, %c0_102] : memref<16x128x128xbf16, #tpu.memory_space<vmem>>, vector<1x128x128xbf16>
    %142 = vector.shape_cast %141 : vector<1x128x128xbf16> to vector<128x128xbf16>
    %cst_103 = arith.constant dense<0.000000e+00> : vector<64x128xf32>
    %143 = tpu.matmul %140, %142, %cst_103 {dimension_numbers = #tpu.dot_dimension_numbers<[1], [0], [0], [1], [0, 0, 1, 1], [], []>} : vector<64x128xbf16>, vector<128x128xbf16>, vector<64x128xf32> -> vector<64x128xf32>
    %144 = arith.addf %132, %143 : vector<64x128xf32>
    %c0_104 = arith.constant 0 : index
    %c48 = arith.constant 48 : index
    %c0_105 = arith.constant 0 : index
    %c0_106 = arith.constant 0 : index
    %145 = vector.load %arg1[%c0_104, %c48, %c0_105, %c0_106] : memref<1x64x9x128xbf16, #tpu.memory_space<vmem>>, vector<1x8x8x128xbf16>
    %146 = vector.shape_cast %145 : vector<1x8x8x128xbf16> to vector<8x8x128xbf16>
    %cst_107 = arith.constant 0.000000e+00 : bf16
    %147 = vector.broadcast %cst_107 : bf16 to vector<8x8x128xbf16>
    %148 = arith.cmpf ogt, %146, %147 : vector<8x8x128xbf16>
    %cst_108 = arith.constant 2.001950e-01 : bf16
    %149 = vector.broadcast %cst_108 : bf16 to vector<8x8x128xbf16>
    %150 = arith.mulf %146, %149 : vector<8x8x128xbf16>
    %151 = arith.select %148, %146, %150 : vector<8x8x128xi1>, vector<8x8x128xbf16>
    %152 = vector.shape_cast %151 : vector<8x8x128xbf16> to vector<64x128xbf16>
    %c12 = arith.constant 12 : index
    %c0_109 = arith.constant 0 : index
    %c0_110 = arith.constant 0 : index
    %153 = vector.load %arg2[%c12, %c0_109, %c0_110] : memref<16x128x128xbf16, #tpu.memory_space<vmem>>, vector<1x128x128xbf16>
    %154 = vector.shape_cast %153 : vector<1x128x128xbf16> to vector<128x128xbf16>
    %cst_111 = arith.constant dense<0.000000e+00> : vector<64x128xf32>
    %155 = tpu.matmul %152, %154, %cst_111 {dimension_numbers = #tpu.dot_dimension_numbers<[1], [0], [0], [1], [0, 0, 1, 1], [], []>} : vector<64x128xbf16>, vector<128x128xbf16>, vector<64x128xf32> -> vector<64x128xf32>
    %156 = arith.addf %144, %155 : vector<64x128xf32>
    %c0_112 = arith.constant 0 : index
    %c56 = arith.constant 56 : index
    %c0_113 = arith.constant 0 : index
    %c0_114 = arith.constant 0 : index
    %157 = vector.load %arg1[%c0_112, %c56, %c0_113, %c0_114] : memref<1x64x9x128xbf16, #tpu.memory_space<vmem>>, vector<1x8x8x128xbf16>
    %158 = vector.shape_cast %157 : vector<1x8x8x128xbf16> to vector<8x8x128xbf16>
    %cst_115 = arith.constant 0.000000e+00 : bf16
    %159 = vector.broadcast %cst_115 : bf16 to vector<8x8x128xbf16>
    %160 = arith.cmpf ogt, %158, %159 : vector<8x8x128xbf16>
    %cst_116 = arith.constant 2.001950e-01 : bf16
    %161 = vector.broadcast %cst_116 : bf16 to vector<8x8x128xbf16>
    %162 = arith.mulf %158, %161 : vector<8x8x128xbf16>
    %163 = arith.select %160, %158, %162 : vector<8x8x128xi1>, vector<8x8x128xbf16>
    %164 = vector.shape_cast %163 : vector<8x8x128xbf16> to vector<64x128xbf16>
    %c13 = arith.constant 13 : index
    %c0_117 = arith.constant 0 : index
    %c0_118 = arith.constant 0 : index
    %165 = vector.load %arg2[%c13, %c0_117, %c0_118] : memref<16x128x128xbf16, #tpu.memory_space<vmem>>, vector<1x128x128xbf16>
    %166 = vector.shape_cast %165 : vector<1x128x128xbf16> to vector<128x128xbf16>
    %cst_119 = arith.constant dense<0.000000e+00> : vector<64x128xf32>
    %167 = tpu.matmul %164, %166, %cst_119 {dimension_numbers = #tpu.dot_dimension_numbers<[1], [0], [0], [1], [0, 0, 1, 1], [], []>} : vector<64x128xbf16>, vector<128x128xbf16>, vector<64x128xf32> -> vector<64x128xf32>
    %168 = arith.addf %156, %167 : vector<64x128xf32>
    %c0_120 = arith.constant 0 : index
    %c48_121 = arith.constant 48 : index
    %c1_122 = arith.constant 1 : index
    %c0_123 = arith.constant 0 : index
    %169 = vector.load %arg1[%c0_120, %c48_121, %c1_122, %c0_123] : memref<1x64x9x128xbf16, #tpu.memory_space<vmem>>, vector<1x8x8x128xbf16>
    %170 = vector.shape_cast %169 : vector<1x8x8x128xbf16> to vector<8x8x128xbf16>
    %cst_124 = arith.constant 0.000000e+00 : bf16
    %171 = vector.broadcast %cst_124 : bf16 to vector<8x8x128xbf16>
    %172 = arith.cmpf ogt, %170, %171 : vector<8x8x128xbf16>
    %cst_125 = arith.constant 2.001950e-01 : bf16
    %173 = vector.broadcast %cst_125 : bf16 to vector<8x8x128xbf16>
    %174 = arith.mulf %170, %173 : vector<8x8x128xbf16>
    %175 = arith.select %172, %170, %174 : vector<8x8x128xi1>, vector<8x8x128xbf16>
    %176 = vector.shape_cast %175 : vector<8x8x128xbf16> to vector<64x128xbf16>
    %c14 = arith.constant 14 : index
    %c0_126 = arith.constant 0 : index
    %c0_127 = arith.constant 0 : index
    %177 = vector.load %arg2[%c14, %c0_126, %c0_127] : memref<16x128x128xbf16, #tpu.memory_space<vmem>>, vector<1x128x128xbf16>
    %178 = vector.shape_cast %177 : vector<1x128x128xbf16> to vector<128x128xbf16>
    %cst_128 = arith.constant dense<0.000000e+00> : vector<64x128xf32>
    %179 = tpu.matmul %176, %178, %cst_128 {dimension_numbers = #tpu.dot_dimension_numbers<[1], [0], [0], [1], [0, 0, 1, 1], [], []>} : vector<64x128xbf16>, vector<128x128xbf16>, vector<64x128xf32> -> vector<64x128xf32>
    %180 = arith.addf %168, %179 : vector<64x128xf32>
    %c0_129 = arith.constant 0 : index
    %c56_130 = arith.constant 56 : index
    %c1_131 = arith.constant 1 : index
    %c0_132 = arith.constant 0 : index
    %181 = vector.load %arg1[%c0_129, %c56_130, %c1_131, %c0_132] : memref<1x64x9x128xbf16, #tpu.memory_space<vmem>>, vector<1x8x8x128xbf16>
    %182 = vector.shape_cast %181 : vector<1x8x8x128xbf16> to vector<8x8x128xbf16>
    %cst_133 = arith.constant 0.000000e+00 : bf16
    %183 = vector.broadcast %cst_133 : bf16 to vector<8x8x128xbf16>
    %184 = arith.cmpf ogt, %182, %183 : vector<8x8x128xbf16>
    %cst_134 = arith.constant 2.001950e-01 : bf16
    %185 = vector.broadcast %cst_134 : bf16 to vector<8x8x128xbf16>
    %186 = arith.mulf %182, %185 : vector<8x8x128xbf16>
    %187 = arith.select %184, %182, %186 : vector<8x8x128xi1>, vector<8x8x128xbf16>
    %188 = vector.shape_cast %187 : vector<8x8x128xbf16> to vector<64x128xbf16>
    %c15 = arith.constant 15 : index
    %c0_135 = arith.constant 0 : index
    %c0_136 = arith.constant 0 : index
    %189 = vector.load %arg2[%c15, %c0_135, %c0_136] : memref<16x128x128xbf16, #tpu.memory_space<vmem>>, vector<1x128x128xbf16>
    %190 = vector.shape_cast %189 : vector<1x128x128xbf16> to vector<128x128xbf16>
    %cst_137 = arith.constant dense<0.000000e+00> : vector<64x128xf32>
    %191 = tpu.matmul %188, %190, %cst_137 {dimension_numbers = #tpu.dot_dimension_numbers<[1], [0], [0], [1], [0, 0, 1, 1], [], []>} : vector<64x128xbf16>, vector<128x128xbf16>, vector<64x128xf32> -> vector<64x128xf32>
    %192 = arith.addf %180, %191 : vector<64x128xf32>
    %cst_138 = arith.constant 0.000000e+00 : f32
    %193 = vector.broadcast %cst_138 : f32 to vector<64x128xf32>
    %194 = arith.maximumf %192, %193 : vector<64x128xf32>
    %cst_139 = arith.constant 0.000000e+00 : f32
    %195 = vector.broadcast %cst_139 : f32 to vector<10x10x128xf32>
    %c0_140 = arith.constant 0 : index
    %c0_141 = arith.constant 0 : index
    %c0_142 = arith.constant 0 : index
    %196 = vector.load %arg6[%c0_140, %c0_141, %c0_142] : memref<10x10x128xf32, #tpu.memory_space<vmem>>, vector<10x10x128xf32>
    tpu.vector_store %arg6[%c0_140, %c0_141, %c0_142], %195 {strides = array<i32>} : memref<10x10x128xf32, #tpu.memory_space<vmem>>, vector<10x10x128xf32>,
    %197 = vector.shape_cast %194 : vector<64x128xf32> to vector<8x8x128xf32>
    %c1_143 = arith.constant 1 : index
    %c1_144 = arith.constant 1 : index
    %c0_145 = arith.constant 0 : index
    %198 = vector.load %arg6[%c1_143, %c1_144, %c0_145] : memref<10x10x128xf32, #tpu.memory_space<vmem>>, vector<8x8x128xf32>
    tpu.vector_store %arg6[%c1_143, %c1_144, %c0_145], %197 {strides = array<i32>} : memref<10x10x128xf32, #tpu.memory_space<vmem>>, vector<8x8x128xf32>,
    %cst_146 = arith.constant 0.000000e+00 : f32
    %199 = vector.broadcast %cst_146 : f32 to vector<1x128xf32>
    %cst_147 = arith.constant 0.000000e+00 : f32
    %200 = vector.broadcast %cst_147 : f32 to vector<1x128xf32>
    %cst_148 = arith.constant 0.000000e+00 : f32
    %201 = vector.broadcast %cst_148 : f32 to vector<64x128xf32>
    %c1_149 = arith.constant 1 : index
    %c1_150 = arith.constant 1 : index
    %c0_151 = arith.constant 0 : index
    %202 = vector.load %arg6[%c1_149, %c1_150, %c0_151] : memref<10x10x128xf32, #tpu.memory_space<vmem>>, vector<8x8x128xf32>
    %203 = arith.truncf %202 : vector<8x8x128xf32> to vector<8x8x128xbf16>
    %204 = vector.shape_cast %203 : vector<8x8x128xbf16> to vector<64x128xbf16>
    %c5_152 = arith.constant 5 : index
    %c0_153 = arith.constant 0 : index
    %c0_154 = arith.constant 0 : index
    %205 = vector.load %arg3[%c5_152, %c0_153, %c0_154] : memref<16x128x128xbf16, #tpu.memory_space<vmem>>, vector<1x128x128xbf16>
    %206 = vector.shape_cast %205 : vector<1x128x128xbf16> to vector<128x128xbf16>
    %cst_155 = arith.constant dense<0.000000e+00> : vector<64x128xf32>
    %207 = tpu.matmul %204, %206, %cst_155 {dimension_numbers = #tpu.dot_dimension_numbers<[1], [0], [0], [1], [0, 0, 1, 1], [], []>} : vector<64x128xbf16>, vector<128x128xbf16>, vector<64x128xf32> -> vector<64x128xf32>
    %208 = arith.addf %201, %207 : vector<64x128xf32>
    %c1_156 = arith.constant 1 : index
    %c0_157 = arith.constant 0 : index
    %c0_158 = arith.constant 0 : index
    %209 = vector.load %arg6[%c1_156, %c0_157, %c0_158] : memref<10x10x128xf32, #tpu.memory_space<vmem>>, vector<8x8x128xf32>
    %210 = arith.truncf %209 : vector<8x8x128xf32> to vector<8x8x128xbf16>
    %211 = vector.shape_cast %210 : vector<8x8x128xbf16> to vector<64x128xbf16>
    %c7_159 = arith.constant 7 : index
    %c0_160 = arith.constant 0 : index
    %c0_161 = arith.constant 0 : index
    %212 = vector.load %arg3[%c7_159, %c0_160, %c0_161] : memref<16x128x128xbf16, #tpu.memory_space<vmem>>, vector<1x128x128xbf16>
    %213 = vector.shape_cast %212 : vector<1x128x128xbf16> to vector<128x128xbf16>
    %cst_162 = arith.constant dense<0.000000e+00> : vector<64x128xf32>
    %214 = tpu.matmul %211, %213, %cst_162 {dimension_numbers = #tpu.dot_dimension_numbers<[1], [0], [0], [1], [0, 0, 1, 1], [], []>} : vector<64x128xbf16>, vector<128x128xbf16>, vector<64x128xf32> -> vector<64x128xf32>
    %215 = arith.addf %208, %214 : vector<64x128xf32>
    %c0_163 = arith.constant 0 : index
    %c1_164 = arith.constant 1 : index
    %c0_165 = arith.constant 0 : index
    %216 = vector.load %arg6[%c0_163, %c1_164, %c0_165] : memref<10x10x128xf32, #tpu.memory_space<vmem>>, vector<8x8x128xf32>
    %217 = arith.truncf %216 : vector<8x8x128xf32> to vector<8x8x128xbf16>
    %218 = vector.shape_cast %217 : vector<8x8x128xbf16> to vector<64x128xbf16>
    %c13_166 = arith.constant 13 : index
    %c0_167 = arith.constant 0 : index
    %c0_168 = arith.constant 0 : index
    %219 = vector.load %arg3[%c13_166, %c0_167, %c0_168] : memref<16x128x128xbf16, #tpu.memory_space<vmem>>, vector<1x128x128xbf16>
    %220 = vector.shape_cast %219 : vector<1x128x128xbf16> to vector<128x128xbf16>
    %cst_169 = arith.constant dense<0.000000e+00> : vector<64x128xf32>
    %221 = tpu.matmul %218, %220, %cst_169 {dimension_numbers = #tpu.dot_dimension_numbers<[1], [0], [0], [1], [0, 0, 1, 1], [], []>} : vector<64x128xbf16>, vector<128x128xbf16>, vector<64x128xf32> -> vector<64x128xf32>
    %222 = arith.addf %215, %221 : vector<64x128xf32>
    %c0_170 = arith.constant 0 : index
    %c0_171 = arith.constant 0 : index
    %c0_172 = arith.constant 0 : index
    %223 = vector.load %arg6[%c0_170, %c0_171, %c0_172] : memref<10x10x128xf32, #tpu.memory_space<vmem>>, vector<8x8x128xf32>
    %224 = arith.truncf %223 : vector<8x8x128xf32> to vector<8x8x128xbf16>
    %225 = vector.shape_cast %224 : vector<8x8x128xbf16> to vector<64x128xbf16>
    %c15_173 = arith.constant 15 : index
    %c0_174 = arith.constant 0 : index
    %c0_175 = arith.constant 0 : index
    %226 = vector.load %arg3[%c15_173, %c0_174, %c0_175] : memref<16x128x128xbf16, #tpu.memory_space<vmem>>, vector<1x128x128xbf16>
    %227 = vector.shape_cast %226 : vector<1x128x128xbf16> to vector<128x128xbf16>
    %cst_176 = arith.constant dense<0.000000e+00> : vector<64x128xf32>
    %228 = tpu.matmul %225, %227, %cst_176 {dimension_numbers = #tpu.dot_dimension_numbers<[1], [0], [0], [1], [0, 0, 1, 1], [], []>} : vector<64x128xbf16>, vector<128x128xbf16>, vector<64x128xf32> -> vector<64x128xf32>
    %229 = arith.addf %222, %228 : vector<64x128xf32>
    %230 = vector.shape_cast %229 : vector<64x128xf32> to vector<8x8x128xf32>
    %c0_177 = arith.constant 0 : index
    %c0_178 = arith.constant 0 : index
    %c0_179 = arith.constant 0 : index
    %c0_180 = arith.constant 0 : index
    %231 = vector.load %arg4[%c0_177, %c0_178, %c0_179, %c0_180] : memref<1x32x8x128xf32, #tpu.memory_space<vmem>>, vector<1x8x8x128xf32>
    %232 = vector.shape_cast %231 : vector<1x8x8x128xf32> to vector<8x8x128xf32>
    %233 = vector.shape_cast %230 : vector<8x8x128xf32> to vector<1x8x8x128xf32>
    tpu.vector_store %arg4[%c0_177, %c0_178, %c0_179, %c0_180], %233 {strides = array<i32>} : memref<1x32x8x128xf32, #tpu.memory_space<vmem>>, vector<1x8x8x128xf32>,
    %cst_181 = arith.constant dense<0.000000e+00> : vector<128xf32>
    %234 = vector.multi_reduction <add>, %229, %cst_181 [0] : vector<64x128xf32> to vector<128xf32>
    %235 = vector.shape_cast %234 : vector<128xf32> to vector<1x128xf32>
    %236 = arith.addf %199, %235 : vector<1x128xf32>
    %237 = arith.mulf %229, %229 : vector<64x128xf32>
    %cst_182 = arith.constant dense<0.000000e+00> : vector<128xf32>
    %238 = vector.multi_reduction <add>, %237, %cst_182 [0] : vector<64x128xf32> to vector<128xf32>
    %239 = vector.shape_cast %238 : vector<128xf32> to vector<1x128xf32>
    %240 = arith.addf %200, %239 : vector<1x128xf32>
    %cst_183 = arith.constant 0.000000e+00 : f32
    %241 = vector.broadcast %cst_183 : f32 to vector<64x128xf32>
    %c1_184 = arith.constant 1 : index
    %c1_185 = arith.constant 1 : index
    %c0_186 = arith.constant 0 : index
    %242 = vector.load %arg6[%c1_184, %c1_185, %c0_186] : memref<10x10x128xf32, #tpu.memory_space<vmem>>, vector<8x8x128xf32>
    %243 = arith.truncf %242 : vector<8x8x128xf32> to vector<8x8x128xbf16>
    %244 = vector.shape_cast %243 : vector<8x8x128xbf16> to vector<64x128xbf16>
    %c6_187 = arith.constant 6 : index
    %c0_188 = arith.constant 0 : index
    %c0_189 = arith.constant 0 : index
    %245 = vector.load %arg3[%c6_187, %c0_188, %c0_189] : memref<16x128x128xbf16, #tpu.memory_space<vmem>>, vector<1x128x128xbf16>
    %246 = vector.shape_cast %245 : vector<1x128x128xbf16> to vector<128x128xbf16>
    %cst_190 = arith.constant dense<0.000000e+00> : vector<64x128xf32>
    %247 = tpu.matmul %244, %246, %cst_190 {dimension_numbers = #tpu.dot_dimension_numbers<[1], [0], [0], [1], [0, 0, 1, 1], [], []>} : vector<64x128xbf16>, vector<128x128xbf16>, vector<64x128xf32> -> vector<64x128xf32>
    %248 = arith.addf %241, %247 : vector<64x128xf32>
    %c1_191 = arith.constant 1 : index
    %c2_192 = arith.constant 2 : index
    %c0_193 = arith.constant 0 : index
    %249 = vector.load %arg6[%c1_191, %c2_192, %c0_193] : memref<10x10x128xf32, #tpu.memory_space<vmem>>, vector<8x8x128xf32>
    %250 = arith.truncf %249 : vector<8x8x128xf32> to vector<8x8x128xbf16>
    %251 = vector.shape_cast %250 : vector<8x8x128xbf16> to vector<64x128xbf16>
    %c4_194 = arith.constant 4 : index
    %c0_195 = arith.constant 0 : index
    %c0_196 = arith.constant 0 : index
    %252 = vector.load %arg3[%c4_194, %c0_195, %c0_196] : memref<16x128x128xbf16, #tpu.memory_space<vmem>>, vector<1x128x128xbf16>
    %253 = vector.shape_cast %252 : vector<1x128x128xbf16> to vector<128x128xbf16>
    %cst_197 = arith.constant dense<0.000000e+00> : vector<64x128xf32>
    %254 = tpu.matmul %251, %253, %cst_197 {dimension_numbers = #tpu.dot_dimension_numbers<[1], [0], [0], [1], [0, 0, 1, 1], [], []>} : vector<64x128xbf16>, vector<128x128xbf16>, vector<64x128xf32> -> vector<64x128xf32>
    %255 = arith.addf %248, %254 : vector<64x128xf32>
    %c0_198 = arith.constant 0 : index
    %c1_199 = arith.constant 1 : index
    %c0_200 = arith.constant 0 : index
    %256 = vector.load %arg6[%c0_198, %c1_199, %c0_200] : memref<10x10x128xf32, #tpu.memory_space<vmem>>, vector<8x8x128xf32>
    %257 = arith.truncf %256 : vector<8x8x128xf32> to vector<8x8x128xbf16>
    %258 = vector.shape_cast %257 : vector<8x8x128xbf16> to vector<64x128xbf16>
    %c14_201 = arith.constant 14 : index
    %c0_202 = arith.constant 0 : index
    %c0_203 = arith.constant 0 : index
    %259 = vector.load %arg3[%c14_201, %c0_202, %c0_203] : memref<16x128x128xbf16, #tpu.memory_space<vmem>>, vector<1x128x128xbf16>
    %260 = vector.shape_cast %259 : vector<1x128x128xbf16> to vector<128x128xbf16>
    %cst_204 = arith.constant dense<0.000000e+00> : vector<64x128xf32>
    %261 = tpu.matmul %258, %260, %cst_204 {dimension_numbers = #tpu.dot_dimension_numbers<[1], [0], [0], [1], [0, 0, 1, 1], [], []>} : vector<64x128xbf16>, vector<128x128xbf16>, vector<64x128xf32> -> vector<64x128xf32>
    %262 = arith.addf %255, %261 : vector<64x128xf32>
    %c0_205 = arith.constant 0 : index
    %c2_206 = arith.constant 2 : index
    %c0_207 = arith.constant 0 : index
    %263 = vector.load %arg6[%c0_205, %c2_206, %c0_207] : memref<10x10x128xf32, #tpu.memory_space<vmem>>, vector<8x8x128xf32>
    %264 = arith.truncf %263 : vector<8x8x128xf32> to vector<8x8x128xbf16>
    %265 = vector.shape_cast %264 : vector<8x8x128xbf16> to vector<64x128xbf16>
    %c12_208 = arith.constant 12 : index
    %c0_209 = arith.constant 0 : index
    %c0_210 = arith.constant 0 : index
    %266 = vector.load %arg3[%c12_208, %c0_209, %c0_210] : memref<16x128x128xbf16, #tpu.memory_space<vmem>>, vector<1x128x128xbf16>
    %267 = vector.shape_cast %266 : vector<1x128x128xbf16> to vector<128x128xbf16>
    %cst_211 = arith.constant dense<0.000000e+00> : vector<64x128xf32>
    %268 = tpu.matmul %265, %267, %cst_211 {dimension_numbers = #tpu.dot_dimension_numbers<[1], [0], [0], [1], [0, 0, 1, 1], [], []>} : vector<64x128xbf16>, vector<128x128xbf16>, vector<64x128xf32> -> vector<64x128xf32>
    %269 = arith.addf %262, %268 : vector<64x128xf32>
    %270 = vector.shape_cast %269 : vector<64x128xf32> to vector<8x8x128xf32>
    %c0_212 = arith.constant 0 : index
    %c8_213 = arith.constant 8 : index
    %c0_214 = arith.constant 0 : index
    %c0_215 = arith.constant 0 : index
    %271 = vector.load %arg4[%c0_212, %c8_213, %c0_214, %c0_215] : memref<1x32x8x128xf32, #tpu.memory_space<vmem>>, vector<1x8x8x128xf32>
    %272 = vector.shape_cast %271 : vector<1x8x8x128xf32> to vector<8x8x128xf32>
    %273 = vector.shape_cast %270 : vector<8x8x128xf32> to vector<1x8x8x128xf32>
    tpu.vector_store %arg4[%c0_212, %c8_213, %c0_214, %c0_215], %273 {strides = array<i32>} : memref<1x32x8x128xf32, #tpu.memory_space<vmem>>, vector<1x8x8x128xf32>,
    %cst_216 = arith.constant dense<0.000000e+00> : vector<128xf32>
    %274 = vector.multi_reduction <add>, %269, %cst_216 [0] : vector<64x128xf32> to vector<128xf32>
    %275 = vector.shape_cast %274 : vector<128xf32> to vector<1x128xf32>
    %276 = arith.addf %236, %275 : vector<1x128xf32>
    %277 = arith.mulf %269, %269 : vector<64x128xf32>
    %cst_217 = arith.constant dense<0.000000e+00> : vector<128xf32>
    %278 = vector.multi_reduction <add>, %277, %cst_217 [0] : vector<64x128xf32> to vector<128xf32>
    %279 = vector.shape_cast %278 : vector<128xf32> to vector<1x128xf32>
    %280 = arith.addf %240, %279 : vector<1x128xf32>
    %cst_218 = arith.constant 0.000000e+00 : f32
    %281 = vector.broadcast %cst_218 : f32 to vector<64x128xf32>
    %c1_219 = arith.constant 1 : index
    %c1_220 = arith.constant 1 : index
    %c0_221 = arith.constant 0 : index
    %282 = vector.load %arg6[%c1_219, %c1_220, %c0_221] : memref<10x10x128xf32, #tpu.memory_space<vmem>>, vector<8x8x128xf32>
    %283 = arith.truncf %282 : vector<8x8x128xf32> to vector<8x8x128xbf16>
    %284 = vector.shape_cast %283 : vector<8x8x128xbf16> to vector<64x128xbf16>
    %c9_222 = arith.constant 9 : index
    %c0_223 = arith.constant 0 : index
    %c0_224 = arith.constant 0 : index
    %285 = vector.load %arg3[%c9_222, %c0_223, %c0_224] : memref<16x128x128xbf16, #tpu.memory_space<vmem>>, vector<1x128x128xbf16>
    %286 = vector.shape_cast %285 : vector<1x128x128xbf16> to vector<128x128xbf16>
    %cst_225 = arith.constant dense<0.000000e+00> : vector<64x128xf32>
    %287 = tpu.matmul %284, %286, %cst_225 {dimension_numbers = #tpu.dot_dimension_numbers<[1], [0], [0], [1], [0, 0, 1, 1], [], []>} : vector<64x128xbf16>, vector<128x128xbf16>, vector<64x128xf32> -> vector<64x128xf32>
    %288 = arith.addf %281, %287 : vector<64x128xf32>
    %c1_226 = arith.constant 1 : index
    %c0_227 = arith.constant 0 : index
    %c0_228 = arith.constant 0 : index
    %289 = vector.load %arg6[%c1_226, %c0_227, %c0_228] : memref<10x10x128xf32, #tpu.memory_space<vmem>>, vector<8x8x128xf32>
    %290 = arith.truncf %289 : vector<8x8x128xf32> to vector<8x8x128xbf16>
    %291 = vector.shape_cast %290 : vector<8x8x128xbf16> to vector<64x128xbf16>
    %c11_229 = arith.constant 11 : index
    %c0_230 = arith.constant 0 : index
    %c0_231 = arith.constant 0 : index
    %292 = vector.load %arg3[%c11_229, %c0_230, %c0_231] : memref<16x128x128xbf16, #tpu.memory_space<vmem>>, vector<1x128x128xbf16>
    %293 = vector.shape_cast %292 : vector<1x128x128xbf16> to vector<128x128xbf16>
    %cst_232 = arith.constant dense<0.000000e+00> : vector<64x128xf32>
    %294 = tpu.matmul %291, %293, %cst_232 {dimension_numbers = #tpu.dot_dimension_numbers<[1], [0], [0], [1], [0, 0, 1, 1], [], []>} : vector<64x128xbf16>, vector<128x128xbf16>, vector<64x128xf32> -> vector<64x128xf32>
    %295 = arith.addf %288, %294 : vector<64x128xf32>
    %c2_233 = arith.constant 2 : index
    %c1_234 = arith.constant 1 : index
    %c0_235 = arith.constant 0 : index
    %296 = vector.load %arg6[%c2_233, %c1_234, %c0_235] : memref<10x10x128xf32, #tpu.memory_space<vmem>>, vector<8x8x128xf32>
    %297 = arith.truncf %296 : vector<8x8x128xf32> to vector<8x8x128xbf16>
    %298 = vector.shape_cast %297 : vector<8x8x128xbf16> to vector<64x128xbf16>
    %c1_236 = arith.constant 1 : index
    %c0_237 = arith.constant 0 : index
    %c0_238 = arith.constant 0 : index
    %299 = vector.load %arg3[%c1_236, %c0_237, %c0_238] : memref<16x128x128xbf16, #tpu.memory_space<vmem>>, vector<1x128x128xbf16>
    %300 = vector.shape_cast %299 : vector<1x128x128xbf16> to vector<128x128xbf16>
    %cst_239 = arith.constant dense<0.000000e+00> : vector<64x128xf32>
    %301 = tpu.matmul %298, %300, %cst_239 {dimension_numbers = #tpu.dot_dimension_numbers<[1], [0], [0], [1], [0, 0, 1, 1], [], []>} : vector<64x128xbf16>, vector<128x128xbf16>, vector<64x128xf32> -> vector<64x128xf32>
    %302 = arith.addf %295, %301 : vector<64x128xf32>
    %c2_240 = arith.constant 2 : index
    %c0_241 = arith.constant 0 : index
    %c0_242 = arith.constant 0 : index
    %303 = vector.load %arg6[%c2_240, %c0_241, %c0_242] : memref<10x10x128xf32, #tpu.memory_space<vmem>>, vector<8x8x128xf32>
    %304 = arith.truncf %303 : vector<8x8x128xf32> to vector<8x8x128xbf16>
    %305 = vector.shape_cast %304 : vector<8x8x128xbf16> to vector<64x128xbf16>
    %c3_243 = arith.constant 3 : index
    %c0_244 = arith.constant 0 : index
    %c0_245 = arith.constant 0 : index
    %306 = vector.load %arg3[%c3_243, %c0_244, %c0_245] : memref<16x128x128xbf16, #tpu.memory_space<vmem>>, vector<1x128x128xbf16>
    %307 = vector.shape_cast %306 : vector<1x128x128xbf16> to vector<128x128xbf16>
    %cst_246 = arith.constant dense<0.000000e+00> : vector<64x128xf32>
    %308 = tpu.matmul %305, %307, %cst_246 {dimension_numbers = #tpu.dot_dimension_numbers<[1], [0], [0], [1], [0, 0, 1, 1], [], []>} : vector<64x128xbf16>, vector<128x128xbf16>, vector<64x128xf32> -> vector<64x128xf32>
    %309 = arith.addf %302, %308 : vector<64x128xf32>
    %310 = vector.shape_cast %309 : vector<64x128xf32> to vector<8x8x128xf32>
    %c0_247 = arith.constant 0 : index
    %c16_248 = arith.constant 16 : index
    %c0_249 = arith.constant 0 : index
    %c0_250 = arith.constant 0 : index
    %311 = vector.load %arg4[%c0_247, %c16_248, %c0_249, %c0_250] : memref<1x32x8x128xf32, #tpu.memory_space<vmem>>, vector<1x8x8x128xf32>
    %312 = vector.shape_cast %311 : vector<1x8x8x128xf32> to vector<8x8x128xf32>
    %313 = vector.shape_cast %310 : vector<8x8x128xf32> to vector<1x8x8x128xf32>
    tpu.vector_store %arg4[%c0_247, %c16_248, %c0_249, %c0_250], %313 {strides = array<i32>} : memref<1x32x8x128xf32, #tpu.memory_space<vmem>>, vector<1x8x8x128xf32>,
    %cst_251 = arith.constant dense<0.000000e+00> : vector<128xf32>
    %314 = vector.multi_reduction <add>, %309, %cst_251 [0] : vector<64x128xf32> to vector<128xf32>
    %315 = vector.shape_cast %314 : vector<128xf32> to vector<1x128xf32>
    %316 = arith.addf %276, %315 : vector<1x128xf32>
    %317 = arith.mulf %309, %309 : vector<64x128xf32>
    %cst_252 = arith.constant dense<0.000000e+00> : vector<128xf32>
    %318 = vector.multi_reduction <add>, %317, %cst_252 [0] : vector<64x128xf32> to vector<128xf32>
    %319 = vector.shape_cast %318 : vector<128xf32> to vector<1x128xf32>
    %320 = arith.addf %280, %319 : vector<1x128xf32>
    %cst_253 = arith.constant 0.000000e+00 : f32
    %321 = vector.broadcast %cst_253 : f32 to vector<64x128xf32>
    %c1_254 = arith.constant 1 : index
    %c1_255 = arith.constant 1 : index
    %c0_256 = arith.constant 0 : index
    %322 = vector.load %arg6[%c1_254, %c1_255, %c0_256] : memref<10x10x128xf32, #tpu.memory_space<vmem>>, vector<8x8x128xf32>
    %323 = arith.truncf %322 : vector<8x8x128xf32> to vector<8x8x128xbf16>
    %324 = vector.shape_cast %323 : vector<8x8x128xbf16> to vector<64x128xbf16>
    %c10_257 = arith.constant 10 : index
    %c0_258 = arith.constant 0 : index
    %c0_259 = arith.constant 0 : index
    %325 = vector.load %arg3[%c10_257, %c0_258, %c0_259] : memref<16x128x128xbf16, #tpu.memory_space<vmem>>, vector<1x128x128xbf16>
    %326 = vector.shape_cast %325 : vector<1x128x128xbf16> to vector<128x128xbf16>
    %cst_260 = arith.constant dense<0.000000e+00> : vector<64x128xf32>
    %327 = tpu.matmul %324, %326, %cst_260 {dimension_numbers = #tpu.dot_dimension_numbers<[1], [0], [0], [1], [0, 0, 1, 1], [], []>} : vector<64x128xbf16>, vector<128x128xbf16>, vector<64x128xf32> -> vector<64x128xf32>
    %328 = arith.addf %321, %327 : vector<64x128xf32>
    %c1_261 = arith.constant 1 : index
    %c2_262 = arith.constant 2 : index
    %c0_263 = arith.constant 0 : index
    %329 = vector.load %arg6[%c1_261, %c2_262, %c0_263] : memref<10x10x128xf32, #tpu.memory_space<vmem>>, vector<8x8x128xf32>
    %330 = arith.truncf %329 : vector<8x8x128xf32> to vector<8x8x128xbf16>
    %331 = vector.shape_cast %330 : vector<8x8x128xbf16> to vector<64x128xbf16>
    %c8_264 = arith.constant 8 : index
    %c0_265 = arith.constant 0 : index
    %c0_266 = arith.constant 0 : index
    %332 = vector.load %arg3[%c8_264, %c0_265, %c0_266] : memref<16x128x128xbf16, #tpu.memory_space<vmem>>, vector<1x128x128xbf16>
    %333 = vector.shape_cast %332 : vector<1x128x128xbf16> to vector<128x128xbf16>
    %cst_267 = arith.constant dense<0.000000e+00> : vector<64x128xf32>
    %334 = tpu.matmul %331, %333, %cst_267 {dimension_numbers = #tpu.dot_dimension_numbers<[1], [0], [0], [1], [0, 0, 1, 1], [], []>} : vector<64x128xbf16>, vector<128x128xbf16>, vector<64x128xf32> -> vector<64x128xf32>
    %335 = arith.addf %328, %334 : vector<64x128xf32>
    %c2_268 = arith.constant 2 : index
    %c1_269 = arith.constant 1 : index
    %c0_270 = arith.constant 0 : index
    %336 = vector.load %arg6[%c2_268, %c1_269, %c0_270] : memref<10x10x128xf32, #tpu.memory_space<vmem>>, vector<8x8x128xf32>
    %337 = arith.truncf %336 : vector<8x8x128xf32> to vector<8x8x128xbf16>
    %338 = vector.shape_cast %337 : vector<8x8x128xbf16> to vector<64x128xbf16>
    %c2_271 = arith.constant 2 : index
    %c0_272 = arith.constant 0 : index
    %c0_273 = arith.constant 0 : index
    %339 = vector.load %arg3[%c2_271, %c0_272, %c0_273] : memref<16x128x128xbf16, #tpu.memory_space<vmem>>, vector<1x128x128xbf16>
    %340 = vector.shape_cast %339 : vector<1x128x128xbf16> to vector<128x128xbf16>
    %cst_274 = arith.constant dense<0.000000e+00> : vector<64x128xf32>
    %341 = tpu.matmul %338, %340, %cst_274 {dimension_numbers = #tpu.dot_dimension_numbers<[1], [0], [0], [1], [0, 0, 1, 1], [], []>} : vector<64x128xbf16>, vector<128x128xbf16>, vector<64x128xf32> -> vector<64x128xf32>
    %342 = arith.addf %335, %341 : vector<64x128xf32>
    %c2_275 = arith.constant 2 : index
    %c2_276 = arith.constant 2 : index
    %c0_277 = arith.constant 0 : index
    %343 = vector.load %arg6[%c2_275, %c2_276, %c0_277] : memref<10x10x128xf32, #tpu.memory_space<vmem>>, vector<8x8x128xf32>
    %344 = arith.truncf %343 : vector<8x8x128xf32> to vector<8x8x128xbf16>
    %345 = vector.shape_cast %344 : vector<8x8x128xbf16> to vector<64x128xbf16>
    %c0_278 = arith.constant 0 : index
    %c0_279 = arith.constant 0 : index
    %c0_280 = arith.constant 0 : index
    %346 = vector.load %arg3[%c0_278, %c0_279, %c0_280] : memref<16x128x128xbf16, #tpu.memory_space<vmem>>, vector<1x128x128xbf16>
    %347 = vector.shape_cast %346 : vector<1x128x128xbf16> to vector<128x128xbf16>
    %cst_281 = arith.constant dense<0.000000e+00> : vector<64x128xf32>
    %348 = tpu.matmul %345, %347, %cst_281 {dimension_numbers = #tpu.dot_dimension_numbers<[1], [0], [0], [1], [0, 0, 1, 1], [], []>} : vector<64x128xbf16>, vector<128x128xbf16>, vector<64x128xf32> -> vector<64x128xf32>
    %349 = arith.addf %342, %348 : vector<64x128xf32>
    %350 = vector.shape_cast %349 : vector<64x128xf32> to vector<8x8x128xf32>
    %c0_282 = arith.constant 0 : index
    %c24_283 = arith.constant 24 : index
    %c0_284 = arith.constant 0 : index
    %c0_285 = arith.constant 0 : index
    %351 = vector.load %arg4[%c0_282, %c24_283, %c0_284, %c0_285] : memref<1x32x8x128xf32, #tpu.memory_space<vmem>>, vector<1x8x8x128xf32>
    %352 = vector.shape_cast %351 : vector<1x8x8x128xf32> to vector<8x8x128xf32>
    %353 = vector.shape_cast %350 : vector<8x8x128xf32> to vector<1x8x8x128xf32>
    tpu.vector_store %arg4[%c0_282, %c24_283, %c0_284, %c0_285], %353 {strides = array<i32>} : memref<1x32x8x128xf32, #tpu.memory_space<vmem>>, vector<1x8x8x128xf32>,
    %cst_286 = arith.constant dense<0.000000e+00> : vector<128xf32>
    %354 = vector.multi_reduction <add>, %349, %cst_286 [0] : vector<64x128xf32> to vector<128xf32>
    %355 = vector.shape_cast %354 : vector<128xf32> to vector<1x128xf32>
    %356 = arith.addf %316, %355 : vector<1x128xf32>
    %357 = arith.mulf %349, %349 : vector<64x128xf32>
    %cst_287 = arith.constant dense<0.000000e+00> : vector<128xf32>
    %358 = vector.multi_reduction <add>, %357, %cst_287 [0] : vector<64x128xf32> to vector<128xf32>
    %359 = vector.shape_cast %358 : vector<128xf32> to vector<1x128xf32>
    %360 = arith.addf %320, %359 : vector<1x128xf32>
    %c0_288 = arith.constant 0 : index
    %c0_289 = arith.constant 0 : index
    %c0_290 = arith.constant 0 : index
    %361 = vector.load %arg5[%c0_288, %c0_289, %c0_290] : memref<1x2x128xf32, #tpu.memory_space<vmem>>, vector<1x1x128xf32>
    %362 = vector.shape_cast %361 : vector<1x1x128xf32> to vector<1x128xf32>
    %363 = vector.shape_cast %356 : vector<1x128xf32> to vector<1x1x128xf32>
    tpu.vector_store %arg5[%c0_288, %c0_289, %c0_290], %363 {strides = array<i32>} : memref<1x2x128xf32, #tpu.memory_space<vmem>>, vector<1x1x128xf32>,
    %c0_291 = arith.constant 0 : index
    %c1_292 = arith.constant 1 : index
    %c0_293 = arith.constant 0 : index
    %364 = vector.load %arg5[%c0_291, %c1_292, %c0_293] : memref<1x2x128xf32, #tpu.memory_space<vmem>>, vector<1x1x128xf32>
    %365 = vector.shape_cast %364 : vector<1x1x128xf32> to vector<1x128xf32>
    %366 = vector.shape_cast %360 : vector<1x128xf32> to vector<1x1x128xf32>
    tpu.vector_store %arg5[%c0_291, %c1_292, %c0_293], %366 {strides = array<i32>} : memref<1x2x128xf32, #tpu.memory_space<vmem>>, vector<1x1x128xf32>,
    return
  }
  func.func @transform_0(%arg0: i32) -> (i32, i32, i32, i32) {
    %c0_i32 = arith.constant 0 : i32
    %c0_i32_0 = arith.constant 0 : i32
    %c0_i32_1 = arith.constant 0 : i32
    %c0_i32_2 = arith.constant 0 : i32
    return %arg0, %c0_i32, %c0_i32_0, %c0_i32_1 : i32, i32, i32, i32
  }
  func.func @transform_1(%arg0: i32) -> (i32, i32, i32) {
    %c0_i32 = arith.constant 0 : i32
    %c0_i32_0 = arith.constant 0 : i32
    %c0_i32_1 = arith.constant 0 : i32
    %c0_i32_2 = arith.constant 0 : i32
    return %c0_i32, %c0_i32_0, %c0_i32_1 : i32, i32, i32
  }
  func.func @transform_2(%arg0: i32) -> (i32, i32, i32) {
    %c0_i32 = arith.constant 0 : i32
    %c0_i32_0 = arith.constant 0 : i32
    %c0_i32_1 = arith.constant 0 : i32
    %c0_i32_2 = arith.constant 0 : i32
    return %c0_i32, %c0_i32_0, %c0_i32_1 : i32, i32, i32
  }
  func.func @transform_3(%arg0: i32) -> (i32, i32, i32, i32) {
    %c0_i32 = arith.constant 0 : i32
    %c0_i32_0 = arith.constant 0 : i32
    %c0_i32_1 = arith.constant 0 : i32
    %c0_i32_2 = arith.constant 0 : i32
    return %arg0, %c0_i32, %c0_i32_0, %c0_i32_1 : i32, i32, i32, i32
  }
  func.func @transform_4(%arg0: i32) -> (i32, i32, i32) {
    %c0_i32 = arith.constant 0 : i32
    %c0_i32_0 = arith.constant 0 : i32
    %c0_i32_1 = arith.constant 0 : i32
    return %arg0, %c0_i32, %c0_i32_0 : i32, i32, i32
  }
}

module attributes {stable_mosaic.version = 11 : i64} {
  func.func @_bn_apply_kernel(%arg0: i32, %arg1: memref<256x128xf32, #tpu.memory_space<vmem>>, %arg2: memref<1x128xf32, #tpu.memory_space<vmem>>, %arg3: memref<1x128xf32, #tpu.memory_space<vmem>>, %arg4: memref<256x128xf32, #tpu.memory_space<vmem>>) attributes {dimension_semantics = [#tpu.dimension_semantics<parallel>], iteration_bounds = array<i64: 2>, scalar_prefetch = 0 : i64, scratch_operands = 0 : i64, tpu.core_type = #tpu.core_type<tc>, window_params = [{transform_indices = @transform_0, window_bounds = array<i64: 256, 128>}, {pipeline_mode = #tpu.pipeline_mode<synchronous>, transform_indices = @transform_1, window_bounds = array<i64: 1, 128>}, {pipeline_mode = #tpu.pipeline_mode<synchronous>, transform_indices = @transform_2, window_bounds = array<i64: 1, 128>}, {transform_indices = @transform_3, window_bounds = array<i64: 256, 128>}]} {
    %c0 = arith.constant 0 : index
    %c0_0 = arith.constant 0 : index
    %0 = vector.load %arg1[%c0, %c0_0] : memref<256x128xf32, #tpu.memory_space<vmem>>, vector<256x128xf32>
    %c0_1 = arith.constant 0 : index
    %c0_2 = arith.constant 0 : index
    %1 = vector.load %arg2[%c0_1, %c0_2] : memref<1x128xf32, #tpu.memory_space<vmem>>, vector<1x128xf32>
    %2 = vector.broadcast %1 : vector<1x128xf32> to vector<256x128xf32>
    %3 = arith.mulf %0, %2 : vector<256x128xf32>
    %c0_3 = arith.constant 0 : index
    %c0_4 = arith.constant 0 : index
    %4 = vector.load %arg3[%c0_3, %c0_4] : memref<1x128xf32, #tpu.memory_space<vmem>>, vector<1x128xf32>
    %5 = vector.broadcast %4 : vector<1x128xf32> to vector<256x128xf32>
    %6 = arith.addf %3, %5 : vector<256x128xf32>
    %c0_5 = arith.constant 0 : index
    %c0_6 = arith.constant 0 : index
    %7 = vector.load %arg4[%c0_5, %c0_6] : memref<256x128xf32, #tpu.memory_space<vmem>>, vector<256x128xf32>
    tpu.vector_store %arg4[%c0_5, %c0_6], %6 {strides = array<i32>} : memref<256x128xf32, #tpu.memory_space<vmem>>, vector<256x128xf32>,
    return
  }
  func.func @transform_0(%arg0: i32) -> (i32, i32) {
    %c0_i32 = arith.constant 0 : i32
    %c0_i32_0 = arith.constant 0 : i32
    return %arg0, %c0_i32 : i32, i32
  }
  func.func @transform_1(%arg0: i32) -> (i32, i32) {
    %c0_i32 = arith.constant 0 : i32
    %c0_i32_0 = arith.constant 0 : i32
    %c0_i32_1 = arith.constant 0 : i32
    return %c0_i32, %c0_i32_0 : i32, i32
  }
  func.func @transform_2(%arg0: i32) -> (i32, i32) {
    %c0_i32 = arith.constant 0 : i32
    %c0_i32_0 = arith.constant 0 : i32
    %c0_i32_1 = arith.constant 0 : i32
    return %c0_i32, %c0_i32_0 : i32, i32
  }
  func.func @transform_3(%arg0: i32) -> (i32, i32) {
    %c0_i32 = arith.constant 0 : i32
    %c0_i32_0 = arith.constant 0 : i32
    return %arg0, %c0_i32 : i32, i32
  }
}

</mosaic_0001>

<llo_original>
// kernel: unet_innermost_forward.3
$region0: #{unet_innermost_forward.3}
  #allocation0 [shape = 'u32[]', space=smem, size = 0x4, offset = 0x4, fixed_abs, tag = 'smem constant byte address 0x4 - core index']
  #allocation1 [shape = 'u32[144,128]{1,0:T(1,128)}', space=vmem, size = 0x12000, scoped, tag = 'internal scratch']
  %s0 = inlined_call_operand.vmem [shape: f32[512,128], index: 0, kind: input, shape index: {}]
  %s1 = inlined_call_operand.vmem [shape: f32[1,128], index: 1, kind: input, shape index: {}]
  %s2 = inlined_call_operand.vmem [shape: f32[1,128], index: 2, kind: input, shape index: {}]
  %s3 = inlined_call_operand.vmem [shape: f32[512,128], index: 3, kind: output, shape index: {}]
  %s4 = sld [smem:[#allocation0]]
  $region45: #{unet_innermost_forward.3} parent=0
    _
  %s6 = ssub.s32 1, %s4
  %s7 = scalar_select 0, %s6, %s4
  loop: start=0, step=1, limit=4
  $region2: #{unet_innermost_forward.3} parent=0 // loop_pre_header
    _
  $region3: #{unet_innermost_forward.3} parent=0 // loop_header
    %s9 = sphi 0, %s13
    %p10 = scmp.ge.s32.totalorder %s9, 4
    %s19 = sphi 0, %s21
    %s22 = sphi 0, %s19
    %s23 = sphi 0, %s22
    %s39 = sphi 0, %s23
    %s43 = sphi 0, %s43
    %s45 = sphi 0, %s43
    %s46 = sphi 0, %s45
    %s60 = sphi 0, %s46
    %s64 = sphi 0, %s64
    %s66 = sphi 0, %s64
    %s67 = sphi 0, %s66
    %s81 = sphi 0, %s67
    %s87 = sphi 0, %s89
    %s90 = sphi 0, %s87
    %s91 = sphi 0, %s90
    %s107 = sphi 0, %s91
  $region4: #{unet_innermost_forward.3} parent=0 // loop_header_branch
    %12 = sbr.rel (%p10) target = $region8
  $region5: #{unet_innermost_forward.3} parent=0 // loop_body
    %s14 = ssub.s32 %s9, 1
    %s15 = ssub.s32 %s9, 2
    %s16 = sadd.s32 %s9, 1
    %s17 = ssub.s32 %s9, %s16
    %p18 = scmp.eq.s32.totalorder %s17, 0
    %s20 = sadd.s32 %s19, 1
    %s21 = scalar_select %p18, %s19, %s20
    %p24 = pneg %p18
    %p25 = scmp.eq.s32.totalorder %s9, 1
    %p26 = por %p24, %p25
    %p27 = scmp.ne.s32.totalorder %s19, %s22
    %p28 = scmp.eq.s32.totalorder %s9, 0
    %p29 = por %p27, %p28
    %p30 = scmp.ne.s32.totalorder %s19, %s22
    %p31 = scmp.eq.s32.totalorder %s14, 1
    %p32 = por %p30, %p31
    %p33 = scmp.ne.s32.totalorder %s22, %s23
    %p34 = scmp.eq.s32.totalorder %s14, 0
    %p35 = por %p33, %p34
    %p36 = scmp.ne.s32.totalorder %s22, %s23
    %p37 = scmp.eq.s32.totalorder %s15, 1
    %p38 = por %p36, %p37
    %p40 = scmp.ne.s32.totalorder %s23, %s39
    %p41 = scmp.eq.s32.totalorder %s15, 0
    %p42 = por %p40, %p41
    %s44 = sadd.s32 %s43, 1
    %p47 = scmp.eq.s32.totalorder %s9, 1
    %p48 = scmp.ne.s32.totalorder %s43, %s45
    %p49 = scmp.eq.s32.totalorder %s9, 0
    %p50 = por %p48, %p49
    %p51 = scmp.ne.s32.totalorder %s43, %s45
    %p52 = scmp.eq.s32.totalorder %s14, 1
    %p53 = por %p51, %p52
    %p54 = scmp.ne.s32.totalorder %s45, %s46
    %p55 = scmp.eq.s32.totalorder %s14, 0
    %p56 = por %p54, %p55
    %p57 = scmp.ne.s32.totalorder %s45, %s46
    %p58 = scmp.eq.s32.totalorder %s15, 1
    %p59 = por %p57, %p58
    %p61 = scmp.ne.s32.totalorder %s46, %s60
    %p62 = scmp.eq.s32.totalorder %s15, 0
    %p63 = por %p61, %p62
    %s65 = sadd.s32 %s64, 1
    %p68 = scmp.eq.s32.totalorder %s9, 1
    %p69 = scmp.ne.s32.totalorder %s64, %s66
    %p70 = scmp.eq.s32.totalorder %s9, 0
    %p71 = por %p69, %p70
    %p72 = scmp.ne.s32.totalorder %s64, %s66
    %p73 = scmp.eq.s32.totalorder %s14, 1
    %p74 = por %p72, %p73
    %p75 = scmp.ne.s32.totalorder %s66, %s67
    %p76 = scmp.eq.s32.totalorder %s14, 0
    %p77 = por %p75, %p76
    %p78 = scmp.ne.s32.totalorder %s66, %s67
    %p79 = scmp.eq.s32.totalorder %s15, 1
    %p80 = por %p78, %p79
    %p82 = scmp.ne.s32.totalorder %s67, %s81
    %p83 = scmp.eq.s32.totalorder %s15, 0
    %p84 = por %p82, %p83
    %s85 = ssub.s32 %s9, %s16
    %p86 = scmp.eq.s32.totalorder %s85, 0
    %s88 = sadd.s32 %s87, 1
    %s89 = scalar_select %p86, %s87, %s88
    %p92 = pneg %p86
    %p93 = scmp.eq.s32.totalorder %s9, 1
    %p94 = por %p92, %p93
    %p95 = scmp.ne.s32.totalorder %s87, %s90
    %p96 = scmp.eq.s32.totalorder %s9, 0
    %p97 = por %p95, %p96
    %p98 = scmp.ne.s32.totalorder %s87, %s90
    %p99 = scmp.eq.s32.totalorder %s14, 1
    %p100 = por %p98, %p99
    %p101 = scmp.ne.s32.totalorder %s90, %s91
    %p102 = scmp.eq.s32.totalorder %s14, 0
    %p103 = por %p101, %p102
    %p104 = scmp.ne.s32.totalorder %s90, %s91
    %p105 = scmp.eq.s32.totalorder %s15, 1
    %p106 = por %p104, %p105
    %p108 = scmp.ne.s32.totalorder %s91, %s107
    %p109 = scmp.eq.s32.totalorder %s15, 0
    %p110 = por %p108, %p109
    %p111 = scmp.le.s32.totalorder 1, %s9
    %p112 = scmp.lt.s32.totalorder %s9, 3
    %p113 = pnand %p111, %p112
    %p114 = pneg %p113
    // Predicated region
    $region9: #{unet_innermost_forward.3} parent=5 // pred_check
      _
    $region10: #{unet_innermost_forward.3} parent=5 // pred_check_branch
      %116 = sbr.rel (%p113) target = $region12
    $region11: #{unet_innermost_forward.3} parent=5 // pred_region
      %s117 = ssub.s32 %s9, 1
      // Predicated region
      $region13: #{unet_innermost_forward.3} parent=11 // pred_check
        %p118 = pneg %p56
      $region14: #{unet_innermost_forward.3} parent=11 // pred_check_branch
        %120 = sbr.rel (%p118) target = $region16
      $region15: #{unet_innermost_forward.3} parent=11 // pred_region
        _
      $region16: #{unet_innermost_forward.3} parent=11 // pred_fallthru
        _
      // Predicated region
      $region17: #{unet_innermost_forward.3} parent=11 // pred_check
        %p121 = pneg %p77
      $region18: #{unet_innermost_forward.3} parent=11 // pred_check_branch
        %123 = sbr.rel (%p121) target = $region20
      $region19: #{unet_innermost_forward.3} parent=11 // pred_region
        _
      $region20: #{unet_innermost_forward.3} parent=11 // pred_fallthru
        _
    $region12: #{unet_innermost_forward.3} parent=5 // pred_fallthru
      _
    %p124 = scmp.lt.s32.totalorder %s9, 2
    // Predicated region
    $region21: #{unet_innermost_forward.3} parent=5 // pred_check
      %p125 = pneg %p124
    $region22: #{unet_innermost_forward.3} parent=5 // pred_check_branch
      %127 = sbr.rel (%p125) target = $region24
    $region23: #{unet_innermost_forward.3} parent=5 // pred_region
      // Predicated region
      $region25: #{unet_innermost_forward.3} parent=23 // pred_check
        %p128 = pneg %p29
      $region26: #{unet_innermost_forward.3} parent=23 // pred_check_branch
        %130 = sbr.rel (%p128) target = $region28
      $region27: #{unet_innermost_forward.3} parent=23 // pred_region
        %s131 = smul.u32 32, %s9
        %p132 = scmp.lt.s32.totalorder %s131, 63
        %s133 = scalar_select %p132, %s131, 63
        %s134 = smul.addr %s133, 8
        %s135 = scalar_lea.vmem %s0, %s134
        %s136 = smul.u32 32, %s9
      $region28: #{unet_innermost_forward.3} parent=23 // pred_fallthru
        _
    $region24: #{unet_innermost_forward.3} parent=5 // pred_fallthru
      _
    %p137 = scmp.le.s32.totalorder 1, %s9
    %p138 = scmp.lt.s32.totalorder %s9, 3
    %p139 = pnand %p137, %p138
    %p140 = pneg %p139
    // Predicated region
    $region29: #{unet_innermost_forward.3} parent=5 // pred_check
      _
    $region30: #{unet_innermost_forward.3} parent=5 // pred_check_branch
      %142 = sbr.rel (%p139) target = $region32
    $region31: #{unet_innermost_forward.3} parent=5 // pred_region
      %s143 = ssub.s32 %s9, 1
      %s144 = smul.u32 32, %s14
      %p145 = scmp.lt.s32.totalorder %s144, 63
      %s146 = scalar_select %p145, %s144, 63
      %s147 = smul.addr %s146, 8
      %s148 = scalar_lea.vmem %s0, %s147
      %p149 = pneg %p35
      %p150 = pneg %p32
      %p151 = pneg %p56
      %p152 = pneg %p53
      %p153 = pneg %p77
      %p154 = pneg %p74
      %p155 = pneg %p103
      %p156 = pneg %p100
      %s157 = smul.u32 32, %s14
      %p158 = scmp.lt.s32.totalorder %s157, 63
      %s159 = scalar_select %p158, %s157, 63
      %s160 = smul.addr %s159, 8
      %s161 = scalar_lea.vmem %s3, %s160
      %s162 = smul.u32 32, %s14
      %p163 = scmp.lt.s32.totalorder %s162, 63
      %s164 = scalar_select %p163, %s162, 63
      %s165 = smul.addr %s164, 8
      %s166 = scalar_lea.vmem %s0, %s165
      %s167 = smul.u32 32, %s14
      %s168 = smul.u32 32, %s14
      %p169 = scmp.lt.s32.totalorder %s168, 63
      %s170 = scalar_select %p169, %s168, 63
      %s171 = smul.addr %s170, 8
      %s172 = scalar_lea.vmem %s3, %s171
      %s173 = smul.u32 32, %s14
      %v174 = vld [vmem:[%s166] sm:$0xff]
      %v175 = vld [vmem:[%s166 + $0x8] sm:$0xff]
      %v176 = vld [vmem:[%s166 + $0x10] sm:$0xff]
      %v177 = vld [vmem:[%s166 + $0x18] sm:$0xff]
      %v178 = vld [vmem:[%s166 + $0x20] sm:$0xff]
      %v179 = vld [vmem:[%s166 + $0x28] sm:$0xff]
      %v180 = vld [vmem:[%s166 + $0x30] sm:$0xff]
      %v181 = vld [vmem:[%s166 + $0x38] sm:$0xff]
      %v182 = vld [vmem:[%s166 + $0x40] sm:$0xff]
      %v183 = vld [vmem:[%s166 + $0x48] sm:$0xff]
      %v184 = vld [vmem:[%s166 + $0x50] sm:$0xff]
      %v185 = vld [vmem:[%s166 + $0x58] sm:$0xff]
      %v186 = vld [vmem:[%s166 + $0x60] sm:$0xff]
      %v187 = vld [vmem:[%s166 + $0x68] sm:$0xff]
      %v188 = vld [vmem:[%s166 + $0x70] sm:$0xff]
      %v189 = vld [vmem:[%s166 + $0x78] sm:$0xff]
      %v190 = vld [vmem:[%s166 + $0x80] sm:$0xff]
      %v191 = vld [vmem:[%s166 + $0x88] sm:$0xff]
      %v192 = vld [vmem:[%s166 + $0x90] sm:$0xff]
      %v193 = vld [vmem:[%s166 + $0x98] sm:$0xff]
      %v194 = vld [vmem:[%s166 + $0xa0] sm:$0xff]
      %v195 = vld [vmem:[%s166 + $0xa8] sm:$0xff]
      %v196 = vld [vmem:[%s166 + $0xb0] sm:$0xff]
      %v197 = vld [vmem:[%s166 + $0xb8] sm:$0xff]
      %v198 = vld [vmem:[%s166 + $0xc0] sm:$0xff]
      %v199 = vld [vmem:[%s166 + $0xc8] sm:$0xff]
      %v200 = vld [vmem:[%s166 + $0xd0] sm:$0xff]
      %v201 = vld [vmem:[%s166 + $0xd8] sm:$0xff]
      %v202 = vld [vmem:[%s166 + $0xe0] sm:$0xff]
      %v203 = vld [vmem:[%s166 + $0xe8] sm:$0xff]
      %v204 = vld [vmem:[%s166 + $0xf0] sm:$0xff]
      %v205 = vld [vmem:[%s166 + $0xf8] sm:$0xff]
      %v206 = vld [vmem:[%s1] sm:$0x1]
      %v208 = vlaneseq
      %v209 = vshrl.u32 %v208, 7
      %v210 = vsub.s32 0, %v209
      %v211 = vrot.slane %v206, %v210
      %v213 = vmul.f32 %v174, %v211
      %v214 = vmul.f32 %v175, %v211
      %v215 = vmul.f32 %v176, %v211
      %v216 = vmul.f32 %v177, %v211
      %v217 = vmul.f32 %v178, %v211
      %v218 = vmul.f32 %v179, %v211
      %v219 = vmul.f32 %v180, %v211
      %v220 = vmul.f32 %v181, %v211
      %v221 = vmul.f32 %v182, %v211
      %v222 = vmul.f32 %v183, %v211
      %v223 = vmul.f32 %v184, %v211
      %v224 = vmul.f32 %v185, %v211
      %v225 = vmul.f32 %v186, %v211
      %v226 = vmul.f32 %v187, %v211
      %v227 = vmul.f32 %v188, %v211
      %v228 = vmul.f32 %v189, %v211
      %v229 = vmul.f32 %v190, %v211
      %v230 = vmul.f32 %v191, %v211
      %v231 = vmul.f32 %v192, %v211
      %v232 = vmul.f32 %v193, %v211
      %v233 = vmul.f32 %v194, %v211
      %v234 = vmul.f32 %v195, %v211
      %v235 = vmul.f32 %v196, %v211
      %v236 = vmul.f32 %v197, %v211
      %v237 = vmul.f32 %v198, %v211
      %v238 = vmul.f32 %v199, %v211
      %v239 = vmul.f32 %v200, %v211
      %v240 = vmul.f32 %v201, %v211
      %v241 = vmul.f32 %v202, %v211
      %v242 = vmul.f32 %v203, %v211
      %v243 = vmul.f32 %v204, %v211
      %v244 = vmul.f32 %v205, %v211
      %v245 = vld [vmem:[%s2] sm:$0x1]
      %v247 = vlaneseq
      %v248 = vshrl.u32 %v247, 7
      %v249 = vsub.s32 0, %v248
      %v250 = vrot.slane %v245, %v249
      %v252 = vadd.f32 %v213, %v250
      %v253 = vadd.f32 %v214, %v250
      %v254 = vadd.f32 %v215, %v250
      %v255 = vadd.f32 %v216, %v250
      %v256 = vadd.f32 %v217, %v250
      %v257 = vadd.f32 %v218, %v250
      %v258 = vadd.f32 %v219, %v250
      %v259 = vadd.f32 %v220, %v250
      %v260 = vadd.f32 %v221, %v250
      %v261 = vadd.f32 %v222, %v250
      %v262 = vadd.f32 %v223, %v250
      %v263 = vadd.f32 %v224, %v250
      %v264 = vadd.f32 %v225, %v250
      %v265 = vadd.f32 %v226, %v250
      %v266 = vadd.f32 %v227, %v250
      %v267 = vadd.f32 %v228, %v250
      %v268 = vadd.f32 %v229, %v250
      %v269 = vadd.f32 %v230, %v250
      %v270 = vadd.f32 %v231, %v250
      %v271 = vadd.f32 %v232, %v250
      %v272 = vadd.f32 %v233, %v250
      %v273 = vadd.f32 %v234, %v250
      %v274 = vadd.f32 %v235, %v250
      %v275 = vadd.f32 %v236, %v250
      %v276 = vadd.f32 %v237, %v250
      %v277 = vadd.f32 %v238, %v250
      %v278 = vadd.f32 %v239, %v250
      %v279 = vadd.f32 %v240, %v250
      %v280 = vadd.f32 %v241, %v250
      %v281 = vadd.f32 %v242, %v250
      %v282 = vadd.f32 %v243, %v250
      %v283 = vadd.f32 %v244, %v250
      %284 = vst [vmem:[%s172] sm:$0xff] %v252
      %285 = vst [vmem:[%s172 + $0x8] sm:$0xff] %v253
      %286 = vst [vmem:[%s172 + $0x10] sm:$0xff] %v254
      %287 = vst [vmem:[%s172 + $0x18] sm:$0xff] %v255
      %288 = vst [vmem:[%s172 + $0x20] sm:$0xff] %v256
      %289 = vst [vmem:[%s172 + $0x28] sm:$0xff] %v257
      %290 = vst [vmem:[%s172 + $0x30] sm:$0xff] %v258
      %291 = vst [vmem:[%s172 + $0x38] sm:$0xff] %v259
      %292 = vst [vmem:[%s172 + $0x40] sm:$0xff] %v260
      %293 = vst [vmem:[%s172 + $0x48] sm:$0xff] %v261
      %294 = vst [vmem:[%s172 + $0x50] sm:$0xff] %v262
      %295 = vst [vmem:[%s172 + $0x58] sm:$0xff] %v263
      %296 = vst [vmem:[%s172 + $0x60] sm:$0xff] %v264
      %297 = vst [vmem:[%s172 + $0x68] sm:$0xff] %v265
      %298 = vst [vmem:[%s172 + $0x70] sm:$0xff] %v266
      %299 = vst [vmem:[%s172 + $0x78] sm:$0xff] %v267
      %300 = vst [vmem:[%s172 + $0x80] sm:$0xff] %v268
      %301 = vst [vmem:[%s172 + $0x88] sm:$0xff] %v269
      %302 = vst [vmem:[%s172 + $0x90] sm:$0xff] %v270
      %303 = vst [vmem:[%s172 + $0x98] sm:$0xff] %v271
      %304 = vst [vmem:[%s172 + $0xa0] sm:$0xff] %v272
      %305 = vst [vmem:[%s172 + $0xa8] sm:$0xff] %v273
      %306 = vst [vmem:[%s172 + $0xb0] sm:$0xff] %v274
      %307 = vst [vmem:[%s172 + $0xb8] sm:$0xff] %v275
      %308 = vst [vmem:[%s172 + $0xc0] sm:$0xff] %v276
      %309 = vst [vmem:[%s172 + $0xc8] sm:$0xff] %v277
      %310 = vst [vmem:[%s172 + $0xd0] sm:$0xff] %v278
      %311 = vst [vmem:[%s172 + $0xd8] sm:$0xff] %v279
      %312 = vst [vmem:[%s172 + $0xe0] sm:$0xff] %v280
      %313 = vst [vmem:[%s172 + $0xe8] sm:$0xff] %v281
      %314 = vst [vmem:[%s172 + $0xf0] sm:$0xff] %v282
      %315 = vst [vmem:[%s172 + $0xf8] sm:$0xff] %v283
      %s316 = smul.u32 32, %s14
      %p317 = scmp.lt.s32.totalorder %s316, 63
      %s318 = scalar_select %p317, %s316, 63
      %s319 = smul.addr %s318, 8
      %s320 = scalar_lea.vmem %s3, %s319
      // Predicated region
      $region33: #{unet_innermost_forward.3} parent=31 // pred_check
        %p321 = pneg %p100
      $region34: #{unet_innermost_forward.3} parent=31 // pred_check_branch
        %323 = sbr.rel (%p321) target = $region36
      $region35: #{unet_innermost_forward.3} parent=31 // pred_region
        %s324 = smul.u32 32, %s14
      $region36: #{unet_innermost_forward.3} parent=31 // pred_fallthru
        _
    $region32: #{unet_innermost_forward.3} parent=5 // pred_fallthru
      _
    %p325 = scmp.le.s32.totalorder 2, %s9
    // Predicated region
    $region37: #{unet_innermost_forward.3} parent=5 // pred_check
      %p326 = pneg %p325
    $region38: #{unet_innermost_forward.3} parent=5 // pred_check_branch
      %328 = sbr.rel (%p326) target = $region40
    $region39: #{unet_innermost_forward.3} parent=5 // pred_region
      %s329 = ssub.s32 %s9, 2
      // Predicated region
      $region41: #{unet_innermost_forward.3} parent=39 // pred_check
        %p330 = pneg %p106
      $region42: #{unet_innermost_forward.3} parent=39 // pred_check_branch
        %332 = sbr.rel (%p330) target = $region44
      $region43: #{unet_innermost_forward.3} parent=39 // pred_region
        %s333 = smul.u32 32, %s15
        %p334 = scmp.lt.s32.totalorder %s333, 63
        %s335 = scalar_select %p334, %s333, 63
        %s336 = smul.addr %s335, 8
        %s337 = scalar_lea.vmem %s3, %s336
      $region44: #{unet_innermost_forward.3} parent=39 // pred_fallthru
        _
    $region40: #{unet_innermost_forward.3} parent=5 // pred_fallthru
      _
  $region6: #{unet_innermost_forward.3} parent=0 // loop_footer
    %s13 = sadd.s32 1, %s9
  $region7: #{unet_innermost_forward.3} parent=0 // loop_footer_branch
    %8 = sbr.rel target = $region3
  $region8: #{unet_innermost_forward.3} parent=0 // loop_exit
    _

// kernel: unet_innermost_forward.2
$region0: #{unet_innermost_forward.2}
  #allocation0 [shape = 'u32[]', space=smem, size = 0x4, offset = 0x4, fixed_abs, tag = 'smem constant byte address 0x4 - core index']
  #allocation1 [shape = 'u32[144,128]{1,0:T(1,128)}', space=vmem, size = 0x12000, scoped, tag = 'internal scratch']
  #allocation2 [shape = 'f32[10,10,128]{2,1,0:T(8,128)}', space=vmem, size = 0x14000, scoped, tag = 'scratch operand']
  %s0 = inlined_call_operand.vmem [shape: bf16[2,64,9,128], index: 0, kind: input, shape index: {}]
  %s1 = inlined_call_operand.vmem [shape: bf16[16,128,128], index: 1, kind: input, shape index: {}]
  %s2 = inlined_call_operand.vmem [shape: bf16[16,128,128], index: 2, kind: input, shape index: {}]
  %s3 = inlined_call_operand.vmem [shape: f32[2,32,8,128], index: 3, kind: output, shape index: {0}]
  %s4 = inlined_call_operand.vmem [shape: f32[2,2,128], index: 4, kind: output, shape index: {1}]
  %5 = xla_tuple %s3, %s4
  %s6 = sld [smem:[#allocation0]]
  $region53: #{unet_innermost_forward.2} parent=0
    _
  %s8 = ssub.s32 1, %s6
  %s9 = scalar_select 0, %s8, %s6
  loop: start=0, step=1, limit=4
  $region2: #{unet_innermost_forward.2} parent=0 // loop_pre_header
    _
  $region3: #{unet_innermost_forward.2} parent=0 // loop_header
    %s11 = sphi 0, %s15
    %p12 = scmp.ge.s32.totalorder %s11, 4
    %s21 = sphi 0, %s23
    %s24 = sphi 0, %s21
    %s25 = sphi 0, %s24
    %s41 = sphi 0, %s25
    %s45 = sphi 0, %s45
    %s47 = sphi 0, %s45
    %s48 = sphi 0, %s47
    %s62 = sphi 0, %s48
    %s66 = sphi 0, %s66
    %s68 = sphi 0, %s66
    %s69 = sphi 0, %s68
    %s83 = sphi 0, %s69
    %s89 = sphi 0, %s91
    %s92 = sphi 0, %s89
    %s93 = sphi 0, %s92
    %s109 = sphi 0, %s93
    %s115 = sphi 0, %s117
    %s118 = sphi 0, %s115
    %s119 = sphi 0, %s118
    %s135 = sphi 0, %s119
  $region4: #{unet_innermost_forward.2} parent=0 // loop_header_branch
    %14 = sbr.rel (%p12) target = $region8
  $region5: #{unet_innermost_forward.2} parent=0 // loop_body
    %s16 = ssub.s32 %s11, 1
    %s17 = ssub.s32 %s11, 2
    %s18 = sadd.s32 %s11, 1
    %s19 = ssub.s32 %s11, %s18
    %p20 = scmp.eq.s32.totalorder %s19, 0
    %s22 = sadd.s32 %s21, 1
    %s23 = scalar_select %p20, %s21, %s22
    %p26 = pneg %p20
    %p27 = scmp.eq.s32.totalorder %s11, 1
    %p28 = por %p26, %p27
    %p29 = scmp.ne.s32.totalorder %s21, %s24
    %p30 = scmp.eq.s32.totalorder %s11, 0
    %p31 = por %p29, %p30
    %p32 = scmp.ne.s32.totalorder %s21, %s24
    %p33 = scmp.eq.s32.totalorder %s16, 1
    %p34 = por %p32, %p33
    %p35 = scmp.ne.s32.totalorder %s24, %s25
    %p36 = scmp.eq.s32.totalorder %s16, 0
    %p37 = por %p35, %p36
    %p38 = scmp.ne.s32.totalorder %s24, %s25
    %p39 = scmp.eq.s32.totalorder %s17, 1
    %p40 = por %p38, %p39
    %p42 = scmp.ne.s32.totalorder %s25, %s41
    %p43 = scmp.eq.s32.totalorder %s17, 0
    %p44 = por %p42, %p43
    %s46 = sadd.s32 %s45, 1
    %p49 = scmp.eq.s32.totalorder %s11, 1
    %p50 = scmp.ne.s32.totalorder %s45, %s47
    %p51 = scmp.eq.s32.totalorder %s11, 0
    %p52 = por %p50, %p51
    %p53 = scmp.ne.s32.totalorder %s45, %s47
    %p54 = scmp.eq.s32.totalorder %s16, 1
    %p55 = por %p53, %p54
    %p56 = scmp.ne.s32.totalorder %s47, %s48
    %p57 = scmp.eq.s32.totalorder %s16, 0
    %p58 = por %p56, %p57
    %p59 = scmp.ne.s32.totalorder %s47, %s48
    %p60 = scmp.eq.s32.totalorder %s17, 1
    %p61 = por %p59, %p60
    %p63 = scmp.ne.s32.totalorder %s48, %s62
    %p64 = scmp.eq.s32.totalorder %s17, 0
    %p65 = por %p63, %p64
    %s67 = sadd.s32 %s66, 1
    %p70 = scmp.eq.s32.totalorder %s11, 1
    %p71 = scmp.ne.s32.totalorder %s66, %s68
    %p72 = scmp.eq.s32.totalorder %s11, 0
    %p73 = por %p71, %p72
    %p74 = scmp.ne.s32.totalorder %s66, %s68
    %p75 = scmp.eq.s32.totalorder %s16, 1
    %p76 = por %p74, %p75
    %p77 = scmp.ne.s32.totalorder %s68, %s69
    %p78 = scmp.eq.s32.totalorder %s16, 0
    %p79 = por %p77, %p78
    %p80 = scmp.ne.s32.totalorder %s68, %s69
    %p81 = scmp.eq.s32.totalorder %s17, 1
    %p82 = por %p80, %p81
    %p84 = scmp.ne.s32.totalorder %s69, %s83
    %p85 = scmp.eq.s32.totalorder %s17, 0
    %p86 = por %p84, %p85
    %s87 = ssub.s32 %s11, %s18
    %p88 = scmp.eq.s32.totalorder %s87, 0
    %s90 = sadd.s32 %s89, 1
    %s91 = scalar_select %p88, %s89, %s90
    %p94 = pneg %p88
    %p95 = scmp.eq.s32.totalorder %s11, 1
    %p96 = por %p94, %p95
    %p97 = scmp.ne.s32.totalorder %s89, %s92
    %p98 = scmp.eq.s32.totalorder %s11, 0
    %p99 = por %p97, %p98
    %p100 = scmp.ne.s32.totalorder %s89, %s92
    %p101 = scmp.eq.s32.totalorder %s16, 1
    %p102 = por %p100, %p101
    %p103 = scmp.ne.s32.totalorder %s92, %s93
    %p104 = scmp.eq.s32.totalorder %s16, 0
    %p105 = por %p103, %p104
    %p106 = scmp.ne.s32.totalorder %s92, %s93
    %p107 = scmp.eq.s32.totalorder %s17, 1
    %p108 = por %p106, %p107
    %p110 = scmp.ne.s32.totalorder %s93, %s109
    %p111 = scmp.eq.s32.totalorder %s17, 0
    %p112 = por %p110, %p111
    %s113 = ssub.s32 %s11, %s18
    %p114 = scmp.eq.s32.totalorder %s113, 0
    %s116 = sadd.s32 %s115, 1
    %s117 = scalar_select %p114, %s115, %s116
    %p120 = pneg %p114
    %p121 = scmp.eq.s32.totalorder %s11, 1
    %p122 = por %p120, %p121
    %p123 = scmp.ne.s32.totalorder %s115, %s118
    %p124 = scmp.eq.s32.totalorder %s11, 0
    %p125 = por %p123, %p124
    %p126 = scmp.ne.s32.totalorder %s115, %s118
    %p127 = scmp.eq.s32.totalorder %s16, 1
    %p128 = por %p126, %p127
    %p129 = scmp.ne.s32.totalorder %s118, %s119
    %p130 = scmp.eq.s32.totalorder %s16, 0
    %p131 = por %p129, %p130
    %p132 = scmp.ne.s32.totalorder %s118, %s119
    %p133 = scmp.eq.s32.totalorder %s17, 1
    %p134 = por %p132, %p133
    %p136 = scmp.ne.s32.totalorder %s119, %s135
    %p137 = scmp.eq.s32.totalorder %s17, 0
    %p138 = por %p136, %p137
    %p139 = scmp.le.s32.totalorder 1, %s11
    %p140 = scmp.lt.s32.totalorder %s11, 3
    %p141 = pnand %p139, %p140
    %p142 = pneg %p141
    // Predicated region
    $region9: #{unet_innermost_forward.2} parent=5 // pred_check
      _
    $region10: #{unet_innermost_forward.2} parent=5 // pred_check_branch
      %144 = sbr.rel (%p141) target = $region12
    $region11: #{unet_innermost_forward.2} parent=5 // pred_region
      %s145 = ssub.s32 %s11, 1
      // Predicated region
      $region13: #{unet_innermost_forward.2} parent=11 // pred_check
        %p146 = pneg %p58
      $region14: #{unet_innermost_forward.2} parent=11 // pred_check_branch
        %148 = sbr.rel (%p146) target = $region16
      $region15: #{unet_innermost_forward.2} parent=11 // pred_region
        _
      $region16: #{unet_innermost_forward.2} parent=11 // pred_fallthru
        _
      // Predicated region
      $region17: #{unet_innermost_forward.2} parent=11 // pred_check
        %p149 = pneg %p79
      $region18: #{unet_innermost_forward.2} parent=11 // pred_check_branch
        %151 = sbr.rel (%p149) target = $region20
      $region19: #{unet_innermost_forward.2} parent=11 // pred_region
        _
      $region20: #{unet_innermost_forward.2} parent=11 // pred_fallthru
        _
    $region12: #{unet_innermost_forward.2} parent=5 // pred_fallthru
      _
    %p152 = scmp.lt.s32.totalorder %s11, 2
    // Predicated region
    $region21: #{unet_innermost_forward.2} parent=5 // pred_check
      %p153 = pneg %p152
    $region22: #{unet_innermost_forward.2} parent=5 // pred_check_branch
      %155 = sbr.rel (%p153) target = $region24
    $region23: #{unet_innermost_forward.2} parent=5 // pred_region
      // Predicated region
      $region25: #{unet_innermost_forward.2} parent=23 // pred_check
        %p156 = pneg %p31
      $region26: #{unet_innermost_forward.2} parent=23 // pred_check_branch
        %158 = sbr.rel (%p156) target = $region28
      $region27: #{unet_innermost_forward.2} parent=23 // pred_region
        %p159 = scmp.lt.s32.totalorder %s11, 1
        %s160 = scalar_select %p159, %s11, 1
        %s161 = smul.addr %s160, 128
        %s162 = smul.addr %s161, 4
        %s163 = scalar_lea.vmem %s0, %s162
      $region28: #{unet_innermost_forward.2} parent=23 // pred_fallthru
        _
    $region24: #{unet_innermost_forward.2} parent=5 // pred_fallthru
      _
    %p164 = scmp.le.s32.totalorder 1, %s11
    %p165 = scmp.lt.s32.totalorder %s11, 3
    %p166 = pnand %p164, %p165
    %p167 = pneg %p166
    // Predicated region
    $region29: #{unet_innermost_forward.2} parent=5 // pred_check
      _
    $region30: #{unet_innermost_forward.2} parent=5 // pred_check_branch
      %169 = sbr.rel (%p166) target = $region32
    $region31: #{unet_innermost_forward.2} parent=5 // pred_region
      %s170 = ssub.s32 %s11, 1
      %p171 = scmp.lt.s32.totalorder %s16, 1
      %s172 = scalar_select %p171, %s16, 1
      %s173 = smul.addr %s172, 128
      %s174 = smul.addr %s173, 4
      %s175 = scalar_lea.vmem %s0, %s174
      %p176 = pneg %p37
      %p177 = pneg %p34
      %p178 = pneg %p58
      %p179 = pneg %p55
      %p180 = pneg %p79
      %p181 = pneg %p76
      %p182 = pneg %p105
      %p183 = pneg %p102
      %p184 = scmp.lt.s32.totalorder %s16, 1
      %s185 = scalar_select %p184, %s16, 1
      %s186 = smul.addr %s185, 32
      %s187 = smul.addr %s186, 8
      %s188 = scalar_lea.vmem %s3, %s187
      %p189 = pneg %p131
      %p190 = pneg %p128
      %p191 = scmp.lt.s32.totalorder %s16, 1
      %s192 = scalar_select %p191, %s16, 1
      %s193 = smul.addr %s192, 2
      %s194 = scalar_lea.vmem %s4, %s193
      %p195 = scmp.lt.s32.totalorder %s16, 1
      %s196 = scalar_select %p195, %s16, 1
      %s197 = smul.addr %s196, 128
      %s198 = smul.addr %s197, 4
      %s199 = scalar_lea.vmem %s0, %s198
      %p200 = scmp.lt.s32.totalorder %s16, 1
      %s201 = scalar_select %p200, %s16, 1
      %s202 = smul.addr %s201, 32
      %s203 = smul.addr %s202, 8
      %s204 = scalar_lea.vmem %s3, %s203
      %p205 = scmp.lt.s32.totalorder %s16, 1
      %s206 = scalar_select %p205, %s16, 1
      %s207 = smul.addr %s206, 2
      %s208 = scalar_lea.vmem %s4, %s207
      %v211 = vld [vmem:[%s199] sm:$0xf]
      %v212 = vld [vmem:[%s199 + $0x8] sm:$0xf]
      %v213 = vld [vmem:[%s199 + $0x10] sm:$0xf]
      %v214 = vld [vmem:[%s199 + $0x18] sm:$0xf]
      %v215 = vld [vmem:[%s199 + $0x20] sm:$0xf]
      %v216 = vld [vmem:[%s199 + $0x28] sm:$0xf]
      %v217 = vld [vmem:[%s199 + $0x30] sm:$0xf]
      %v218 = vld [vmem:[%s199 + $0x38] sm:$0xf]
      %vm219 = vcmp.gt.bf16.partialorder %v211, 0
      %vm220 = vcmp.gt.bf16.partialorder %v212, 0
      %vm221 = vcmp.gt.bf16.partialorder %v213, 0
      %vm222 = vcmp.gt.bf16.partialorder %v214, 0
      %vm223 = vcmp.gt.bf16.partialorder %v215, 0
      %vm224 = vcmp.gt.bf16.partialorder %v216, 0
      %vm225 = vcmp.gt.bf16.partialorder %v217, 0
      %vm226 = vcmp.gt.bf16.partialorder %v218, 0
      %v227 = vmul.bf16 %v211, 1045249613
      %v228 = vmul.bf16 %v212, 1045249613
      %v229 = vmul.bf16 %v213, 1045249613
      %v230 = vmul.bf16 %v214, 1045249613
      %v231 = vmul.bf16 %v215, 1045249613
      %v232 = vmul.bf16 %v216, 1045249613
      %v233 = vmul.bf16 %v217, 1045249613
      %v234 = vmul.bf16 %v218, 1045249613
      %v235 = vsel %vm219, %v211, %v227
      %v236 = vsel %vm220, %v212, %v228
      %v237 = vsel %vm221, %v213, %v229
      %v238 = vsel %vm222, %v214, %v230
      %v239 = vsel %vm223, %v215, %v231
      %v240 = vsel %vm224, %v216, %v232
      %v241 = vsel %vm225, %v217, %v233
      %v242 = vsel %vm226, %v218, %v234
      %v243 = vld [vmem:[%s1] sm:$0xf]
      %v244 = vld [vmem:[%s1 + $0x4] sm:$0xf]
      %v245 = vld [vmem:[%s1 + $0x8] sm:$0xf]
      %v246 = vld [vmem:[%s1 + $0xc] sm:$0xf]
      %v247 = vld [vmem:[%s1 + $0x10] sm:$0xf]
      %v248 = vld [vmem:[%s1 + $0x14] sm:$0xf]
      %v249 = vld [vmem:[%s1 + $0x18] sm:$0xf]
      %v250 = vld [vmem:[%s1 + $0x1c] sm:$0xf]
      %v251 = vld [vmem:[%s1 + $0x20] sm:$0xf]
      %v252 = vld [vmem:[%s1 + $0x24] sm:$0xf]
      %v253 = vld [vmem:[%s1 + $0x28] sm:$0xf]
      %v254 = vld [vmem:[%s1 + $0x2c] sm:$0xf]
      %v255 = vld [vmem:[%s1 + $0x30] sm:$0xf]
      %v256 = vld [vmem:[%s1 + $0x34] sm:$0xf]
      %v257 = vld [vmem:[%s1 + $0x38] sm:$0xf]
      %v258 = vld [vmem:[%s1 + $0x3c] sm:$0xf]
      %s259 = scalar_lea.vmem %s199, 64
      %v260 = vld [vmem:[%s259] sm:$0xf]
      %v261 = vld [vmem:[%s259 + $0x8] sm:$0xf]
      %v262 = vld [vmem:[%s259 + $0x10] sm:$0xf]
      %v263 = vld [vmem:[%s259 + $0x18] sm:$0xf]
      %v264 = vld [vmem:[%s259 + $0x20] sm:$0xf]
      %v265 = vld [vmem:[%s259 + $0x28] sm:$0xf]
      %v266 = vld [vmem:[%s259 + $0x30] sm:$0xf]
      %v267 = vld [vmem:[%s259 + $0x38] sm:$0xf]
      %vm268 = vcmp.gt.bf16.partialorder %v260, 0
      %vm269 = vcmp.gt.bf16.partialorder %v261, 0
      %vm270 = vcmp.gt.bf16.partialorder %v262, 0
      %vm271 = vcmp.gt.bf16.partialorder %v263, 0
      %vm272 = vcmp.gt.bf16.partialorder %v264, 0
      %vm273 = vcmp.gt.bf16.partialorder %v265, 0
      %vm274 = vcmp.gt.bf16.partialorder %v266, 0
      %vm275 = vcmp.gt.bf16.partialorder %v267, 0
      %v276 = vmul.bf16 %v260, 1045249613
      %v277 = vmul.bf16 %v261, 1045249613
      %v278 = vmul.bf16 %v262, 1045249613
      %v279 = vmul.bf16 %v263, 1045249613
      %v280 = vmul.bf16 %v264, 1045249613
      %v281 = vmul.bf16 %v265, 1045249613
      %v282 = vmul.bf16 %v266, 1045249613
      %v283 = vmul.bf16 %v267, 1045249613
      %v284 = vsel %vm268, %v260, %v276
      %v285 = vsel %vm269, %v261, %v277
      %v286 = vsel %vm270, %v262, %v278
      %v287 = vsel %vm271, %v263, %v279
      %v288 = vsel %vm272, %v264, %v280
      %v289 = vsel %vm273, %v265, %v281
      %v290 = vsel %vm274, %v266, %v282
      %v291 = vsel %vm275, %v267, %v283
      %s292 = scalar_lea.vmem %s1, 64
      %v293 = vld [vmem:[%s292] sm:$0xf]
      %v294 = vld [vmem:[%s292 + $0x4] sm:$0xf]
      %v295 = vld [vmem:[%s292 + $0x8] sm:$0xf]
      %v296 = vld [vmem:[%s292 + $0xc] sm:$0xf]
      %v297 = vld [vmem:[%s292 + $0x10] sm:$0xf]
      %v298 = vld [vmem:[%s292 + $0x14] sm:$0xf]
      %v299 = vld [vmem:[%s292 + $0x18] sm:$0xf]
      %v300 = vld [vmem:[%s292 + $0x1c] sm:$0xf]
      %v301 = vld [vmem:[%s292 + $0x20] sm:$0xf]
      %v302 = vld [vmem:[%s292 + $0x24] sm:$0xf]
      %v303 = vld [vmem:[%s292 + $0x28] sm:$0xf]
      %v304 = vld [vmem:[%s292 + $0x2c] sm:$0xf]
      %v305 = vld [vmem:[%s292 + $0x30] sm:$0xf]
      %v306 = vld [vmem:[%s292 + $0x34] sm:$0xf]
      %v307 = vld [vmem:[%s292 + $0x38] sm:$0xf]
      %v308 = vld [vmem:[%s292 + $0x3c] sm:$0xf]
      %v317 = vunpack.c.l.b16 %v284
      %v318 = vunpack.c.l.b16 %v285
      %v319 = vunpack.c.l.b16 %v286
      %v320 = vunpack.c.l.b16 %v287
      %v321 = vunpack.c.l.b16 %v288
      %v322 = vunpack.c.l.b16 %v289
      %v323 = vunpack.c.l.b16 %v290
      %v324 = vunpack.c.l.b16 %v291
      %v325 = vpack.c.b16 %v318, %v317
      %v326 = vpack.c.b16 %v320, %v319
      %v327 = vpack.c.b16 %v322, %v321
      %v328 = vpack.c.b16 %v324, %v323
      %v349 = vunpack.c.l.b16 %v293
      %v350 = vunpack.c.l.b16 %v294
      %v351 = vunpack.c.l.b16 %v295
      %v352 = vunpack.c.l.b16 %v296
      %v353 = vunpack.c.l.b16 %v297
      %v354 = vunpack.c.l.b16 %v298
      %v355 = vunpack.c.l.b16 %v299
      %v356 = vunpack.c.l.b16 %v300
      %v357 = vunpack.c.l.b16 %v301
      %v358 = vunpack.c.l.b16 %v302
      %v359 = vunpack.c.l.b16 %v303
      %v360 = vunpack.c.l.b16 %v304
      %v361 = vunpack.c.l.b16 %v305
      %v362 = vunpack.c.l.b16 %v306
      %v363 = vunpack.c.l.b16 %v307
      %v364 = vunpack.c.l.b16 %v308
      %v365 = vpack.c.b16 %v350, %v349
      %v366 = vpack.c.b16 %v352, %v351
      %v367 = vpack.c.b16 %v354, %v353
      %v368 = vpack.c.b16 %v356, %v355
      %v369 = vpack.c.b16 %v358, %v357
      %v370 = vpack.c.b16 %v360, %v359
      %v371 = vpack.c.b16 %v362, %v361
      %v372 = vpack.c.b16 %v364, %v363
      %381 = vmatprep.subr.bf16.mxu0 0
      %382 = vmatpush1.bf16.msra.mxu0 %v365
      %383 = vmatprep.subr.bf16.mxu0 0
      %384 = vmatpush1.bf16.msra.mxu0 %v366
      %385 = vmatprep.subr.bf16.mxu0 0
      %386 = vmatpush1.bf16.msra.mxu0 %v367
      %387 = vmatprep.subr.bf16.mxu0 0
      %388 = vmatpush1.bf16.msra.mxu0 %v368
      %389 = vmatprep.subr.bf16.mxu0 0
      %390 = vmatpush1.bf16.msra.mxu0 %v369
      %391 = vmatprep.subr.bf16.mxu0 0
      %392 = vmatpush1.bf16.msra.mxu0 %v370
      %393 = vmatprep.subr.bf16.mxu0 0
      %394 = vmatpush1.bf16.msra.mxu0 %v371
      %395 = vmatprep.subr.bf16.mxu0 0
      %396 = vmatpush1.bf16.msra.mxu0 %v372
      %397 = vmatprep.subr.bf16.mxu0 0
      %398 = vmatpush1.bf16.msra.mxu0 0
      %399 = vmatprep.subr.bf16.mxu0 0
      %400 = vmatpush1.bf16.msra.mxu0 0
      %401 = vmatprep.subr.bf16.mxu0 0
      %402 = vmatpush1.bf16.msra.mxu0 0
      %403 = vmatprep.subr.bf16.mxu0 0
      %404 = vmatpush1.bf16.msra.mxu0 0
      %405 = vmatprep.subr.bf16.mxu0 0
      %406 = vmatpush1.bf16.msra.mxu0 0
      %407 = vmatprep.subr.bf16.mxu0 0
      %408 = vmatpush1.bf16.msra.mxu0 0
      %409 = vmatprep.subr.bf16.mxu0 0
      %410 = vmatpush1.bf16.msra.mxu0 0
      %411 = vmatprep.subr.bf16.mxu0 0
      %412 = vmatpush1.bf16.msra.mxu0 0
      %413 = vmatprep.mubr.bf16.mxu0 0
      %414 = vmatmul.mubr.bf16.gmra.mrb[0].mxu0 %v325
      %v415 = vpop.f32.mrb[0].mxu0
      %v416 = vadd.f32 0.0, %v415
      %v417 = vpop.f32.mrb[0].mxu0
      %v418 = vpop.f32.mrb[0].mxu0
      %v419 = vadd.f32 0.0, %v418
      %v420 = vpop.f32.mrb[0].mxu0
      %421 = vmatprep.mubr.bf16.mxu0 0
      %422 = vmatmul.mubr.bf16.gmra.mrb[0].mxu0 %v326
      %v423 = vpop.f32.mrb[0].mxu0
      %v424 = vadd.f32 0.0, %v423
      %v425 = vpop.f32.mrb[0].mxu0
      %v426 = vpop.f32.mrb[0].mxu0
      %v427 = vadd.f32 0.0, %v426
      %v428 = vpop.f32.mrb[0].mxu0
      %429 = vmatprep.mubr.bf16.mxu0 0
      %430 = vmatmul.mubr.bf16.gmra.mrb[0].mxu0 %v327
      %v431 = vpop.f32.mrb[0].mxu0
      %v432 = vadd.f32 0.0, %v431
      %v433 = vpop.f32.mrb[0].mxu0
      %v434 = vpop.f32.mrb[0].mxu0
      %v435 = vadd.f32 0.0, %v434
      %v436 = vpop.f32.mrb[0].mxu0
      %437 = vmatprep.mubr.bf16.mxu0 0
      %438 = vmatmul.mubr.bf16.gmra.mrb[0].mxu0 %v328
      %v439 = vpop.f32.mrb[0].mxu0
      %v440 = vadd.f32 0.0, %v439
      %v441 = vpop.f32.mrb[0].mxu0
      %v442 = vpop.f32.mrb[0].mxu0
      %v443 = vadd.f32 0.0, %v442
      %v444 = vpop.f32.mrb[0].mxu0
      %445 = vdwg.mxu0
      %v454 = vunpack.c.l.b16 %v235
      %v455 = vunpack.c.l.b16 %v236
      %v456 = vunpack.c.l.b16 %v237
      %v457 = vunpack.c.l.b16 %v238
      %v458 = vunpack.c.l.b16 %v239
      %v459 = vunpack.c.l.b16 %v240
      %v460 = vunpack.c.l.b16 %v241
      %v461 = vunpack.c.l.b16 %v242
      %v462 = vpack.c.b16 %v455, %v454
      %v463 = vpack.c.b16 %v457, %v456
      %v464 = vpack.c.b16 %v459, %v458
      %v465 = vpack.c.b16 %v461, %v460
      %v486 = vunpack.c.l.b16 %v243
      %v487 = vunpack.c.l.b16 %v244
      %v488 = vunpack.c.l.b16 %v245
      %v489 = vunpack.c.l.b16 %v246
      %v490 = vunpack.c.l.b16 %v247
      %v491 = vunpack.c.l.b16 %v248
      %v492 = vunpack.c.l.b16 %v249
      %v493 = vunpack.c.l.b16 %v250
      %v494 = vunpack.c.l.b16 %v251
      %v495 = vunpack.c.l.b16 %v252
      %v496 = vunpack.c.l.b16 %v253
      %v497 = vunpack.c.l.b16 %v254
      %v498 = vunpack.c.l.b16 %v255
      %v499 = vunpack.c.l.b16 %v256
      %v500 = vunpack.c.l.b16 %v257
      %v501 = vunpack.c.l.b16 %v258
      %v502 = vpack.c.b16 %v487, %v486
      %v503 = vpack.c.b16 %v489, %v488
      %v504 = vpack.c.b16 %v491, %v490
      %v505 = vpack.c.b16 %v493, %v492
      %v506 = vpack.c.b16 %v495, %v494
      %v507 = vpack.c.b16 %v497, %v496
      %v508 = vpack.c.b16 %v499, %v498
      %v509 = vpack.c.b16 %v501, %v500
      %518 = vmatprep.subr.bf16.mxu0 0
      %519 = vmatpush1.bf16.msra.mxu0 %v502
      %520 = vmatprep.subr.bf16.mxu0 0
      %521 = vmatpush1.bf16.msra.mxu0 %v503
      %522 = vmatprep.subr.bf16.mxu0 0
      %523 = vmatpush1.bf16.msra.mxu0 %v504
      %524 = vmatprep.subr.bf16.mxu0 0
      %525 = vmatpush1.bf16.msra.mxu0 %v505
      %526 = vmatprep.subr.bf16.mxu0 0
      %527 = vmatpush1.bf16.msra.mxu0 %v506
      %528 = vmatprep.subr.bf16.mxu0 0
      %529 = vmatpush1.bf16.msra.mxu0 %v507
      %530 = vmatprep.subr.bf16.mxu0 0
      %531 = vmatpush1.bf16.msra.mxu0 %v508
      %532 = vmatprep.subr.bf16.mxu0 0
      %533 = vmatpush1.bf16.msra.mxu0 %v509
      %534 = vmatprep.subr.bf16.mxu0 0
      %535 = vmatpush1.bf16.msra.mxu0 0
      %536 = vmatprep.subr.bf16.mxu0 0
      %537 = vmatpush1.bf16.msra.mxu0 0
      %538 = vmatprep.subr.bf16.mxu0 0
      %539 = vmatpush1.bf16.msra.mxu0 0
      %540 = vmatprep.subr.bf16.mxu0 0
      %541 = vmatpush1.bf16.msra.mxu0 0
      %542 = vmatprep.subr.bf16.mxu0 0
      %543 = vmatpush1.bf16.msra.mxu0 0
      %544 = vmatprep.subr.bf16.mxu0 0
      %545 = vmatpush1.bf16.msra.mxu0 0
      %546 = vmatprep.subr.bf16.mxu0 0
      %547 = vmatpush1.bf16.msra.mxu0 0
      %548 = vmatprep.subr.bf16.mxu0 0
      %549 = vmatpush1.bf16.msra.mxu0 0
      %550 = vmatprep.mubr.bf16.mxu0 0
      %551 = vmatmul.mubr.bf16.gmra.mrb[0].mxu0 %v462
      %v552 = vpop.f32.mrb[0].mxu0
      %v553 = vadd.f32 %v416, %v552
      %v554 = vpop.f32.mrb[0].mxu0
      %v555 = vpop.f32.mrb[0].mxu0
      %v556 = vadd.f32 %v419, %v555
      %v557 = vpop.f32.mrb[0].mxu0
      %558 = vmatprep.mubr.bf16.mxu0 0
      %559 = vmatmul.mubr.bf16.gmra.mrb[0].mxu0 %v463
      %v560 = vpop.f32.mrb[0].mxu0
      %v561 = vadd.f32 %v424, %v560
      %v562 = vpop.f32.mrb[0].mxu0
      %v563 = vpop.f32.mrb[0].mxu0
      %v564 = vadd.f32 %v427, %v563
      %v565 = vpop.f32.mrb[0].mxu0
      %566 = vmatprep.mubr.bf16.mxu0 0
      %567 = vmatmul.mubr.bf16.gmra.mrb[0].mxu0 %v464
      %v568 = vpop.f32.mrb[0].mxu0
      %v569 = vadd.f32 %v432, %v568
      %v570 = vpop.f32.mrb[0].mxu0
      %v571 = vpop.f32.mrb[0].mxu0
      %v572 = vadd.f32 %v435, %v571
      %v573 = vpop.f32.mrb[0].mxu0
      %574 = vmatprep.mubr.bf16.mxu0 0
      %575 = vmatmul.mubr.bf16.gmra.mrb[0].mxu0 %v465
      %v576 = vpop.f32.mrb[0].mxu0
      %v577 = vadd.f32 %v440, %v576
      %v578 = vpop.f32.mrb[0].mxu0
      %v579 = vpop.f32.mrb[0].mxu0
      %v580 = vadd.f32 %v443, %v579
      %v581 = vpop.f32.mrb[0].mxu0
      %582 = vdwg.mxu0
      %v583 = vld [vmem:[%s199] sm:$0xf]
      %v584 = vld [vmem:[%s199 + $0x4] sm:$0x1]
      %v585 = vld [vmem:[%s199 + $0x8] sm:$0xf]
      %v586 = vld [vmem:[%s199 + $0xc] sm:$0x1]
      %v587 = vld [vmem:[%s199 + $0x10] sm:$0xf]
      %v588 = vld [vmem:[%s199 + $0x14] sm:$0x1]
      %v589 = vld [vmem:[%s199 + $0x18] sm:$0xf]
      %v590 = vld [vmem:[%s199 + $0x1c] sm:$0x1]
      %v591 = vld [vmem:[%s199 + $0x20] sm:$0xf]
      %v592 = vld [vmem:[%s199 + $0x24] sm:$0x1]
      %v593 = vld [vmem:[%s199 + $0x28] sm:$0xf]
      %v594 = vld [vmem:[%s199 + $0x2c] sm:$0x1]
      %v595 = vld [vmem:[%s199 + $0x30] sm:$0xf]
      %v596 = vld [vmem:[%s199 + $0x34] sm:$0x1]
      %v597 = vld [vmem:[%s199 + $0x38] sm:$0xf]
      %v598 = vld [vmem:[%s199 + $0x3c] sm:$0x1]
      %vm599 = vcmp.gt.bf16.partialorder %v583, 0
      %vm600 = vcmp.gt.bf16.partialorder %v584, 0
      %vm601 = vcmp.gt.bf16.partialorder %v585, 0
      %vm602 = vcmp.gt.bf16.partialorder %v586, 0
      %vm603 = vcmp.gt.bf16.partialorder %v587, 0
      %vm604 = vcmp.gt.bf16.partialorder %v588, 0
      %vm605 = vcmp.gt.bf16.partialorder %v589, 0
      %vm606 = vcmp.gt.bf16.partialorder %v590, 0
      %vm607 = vcmp.gt.bf16.partialorder %v591, 0
      %vm608 = vcmp.gt.bf16.partialorder %v592, 0
      %vm609 = vcmp.gt.bf16.partialorder %v593, 0
      %vm610 = vcmp.gt.bf16.partialorder %v594, 0
      %vm611 = vcmp.gt.bf16.partialorder %v595, 0
      %vm612 = vcmp.gt.bf16.partialorder %v596, 0
      %vm613 = vcmp.gt.bf16.partialorder %v597, 0
      %vm614 = vcmp.gt.bf16.partialorder %v598, 0
      %v615 = vmul.bf16 %v583, 1045249613
      %v616 = vmul.bf16 %v584, 1045249613
      %v617 = vmul.bf16 %v585, 1045249613
      %v618 = vmul.bf16 %v586, 1045249613
      %v619 = vmul.bf16 %v587, 1045249613
      %v620 = vmul.bf16 %v588, 1045249613
      %v621 = vmul.bf16 %v589, 1045249613
      %v622 = vmul.bf16 %v590, 1045249613
      %v623 = vmul.bf16 %v591, 1045249613
      %v624 = vmul.bf16 %v592, 1045249613
      %v625 = vmul.bf16 %v593, 1045249613
      %v626 = vmul.bf16 %v594, 1045249613
      %v627 = vmul.bf16 %v595, 1045249613
      %v628 = vmul.bf16 %v596, 1045249613
      %v629 = vmul.bf16 %v597, 1045249613
      %v630 = vmul.bf16 %v598, 1045249613
      %v631 = vsel %vm599, %v583, %v615
      %v632 = vsel %vm600, %v584, %v616
      %v633 = vsel %vm601, %v585, %v617
      %v634 = vsel %vm602, %v586, %v618
      %v635 = vsel %vm603, %v587, %v619
      %v636 = vsel %vm604, %v588, %v620
      %v637 = vsel %vm605, %v589, %v621
      %v638 = vsel %vm606, %v590, %v622
      %v639 = vsel %vm607, %v591, %v623
      %v640 = vsel %vm608, %v592, %v624
      %v641 = vsel %vm609, %v593, %v625
      %v642 = vsel %vm610, %v594, %v626
      %v643 = vsel %vm611, %v595, %v627
      %v644 = vsel %vm612, %v596, %v628
      %v645 = vsel %vm613, %v597, %v629
      %v646 = vsel %vm614, %v598, %v630
      %vm647 = vsmask.f32 3328
      %vm648 = vsmask.f32 7440
      %vm649 = vmor %vm647, %vm648
      %v651 = vshrl.u32 %v631, 16
      %v653 = vrot.slane %v651, 4
      %v654 = vshll.u32 %v631, 16
      %v656 = vrot.slane %v654, 5
      %v657 = vor.u32 %v653, %v656
      %v658 = vrot.slane %v657, 4
      %v660 = vshll.u32 %v632, 16
      %v662 = vrot.slane %v660, 5
      %v663 = vsel %vm649, %v658, %v662
      %v665 = vshrl.u32 %v633, 16
      %v667 = vrot.slane %v665, 4
      %v668 = vshll.u32 %v633, 16
      %v670 = vrot.slane %v668, 5
      %v671 = vor.u32 %v667, %v670
      %v672 = vrot.slane %v671, 4
      %v674 = vshll.u32 %v634, 16
      %v676 = vrot.slane %v674, 5
      %v677 = vsel %vm649, %v672, %v676
      %v679 = vshrl.u32 %v635, 16
      %v681 = vrot.slane %v679, 4
      %v682 = vshll.u32 %v635, 16
      %v684 = vrot.slane %v682, 5
      %v685 = vor.u32 %v681, %v684
      %v686 = vrot.slane %v685, 4
      %v688 = vshll.u32 %v636, 16
      %v690 = vrot.slane %v688, 5
      %v691 = vsel %vm649, %v686, %v690
      %v693 = vshrl.u32 %v637, 16
      %v695 = vrot.slane %v693, 4
      %v696 = vshll.u32 %v637, 16
      %v698 = vrot.slane %v696, 5
      %v699 = vor.u32 %v695, %v698
      %v700 = vrot.slane %v699, 4
      %v702 = vshll.u32 %v638, 16
      %v704 = vrot.slane %v702, 5
      %v705 = vsel %vm649, %v700, %v704
      %v707 = vshrl.u32 %v639, 16
      %v709 = vrot.slane %v707, 4
      %v710 = vshll.u32 %v639, 16
      %v712 = vrot.slane %v710, 5
      %v713 = vor.u32 %v709, %v712
      %v714 = vrot.slane %v713, 4
      %v716 = vshll.u32 %v640, 16
      %v718 = vrot.slane %v716, 5
      %v719 = vsel %vm649, %v714, %v718
      %v721 = vshrl.u32 %v641, 16
      %v723 = vrot.slane %v721, 4
      %v724 = vshll.u32 %v641, 16
      %v726 = vrot.slane %v724, 5
      %v727 = vor.u32 %v723, %v726
      %v728 = vrot.slane %v727, 4
      %v730 = vshll.u32 %v642, 16
      %v732 = vrot.slane %v730, 5
      %v733 = vsel %vm649, %v728, %v732
      %v735 = vshrl.u32 %v643, 16
      %v737 = vrot.slane %v735, 4
      %v738 = vshll.u32 %v643, 16
      %v740 = vrot.slane %v738, 5
      %v741 = vor.u32 %v737, %v740
      %v742 = vrot.slane %v741, 4
      %v744 = vshll.u32 %v644, 16
      %v746 = vrot.slane %v744, 5
      %v747 = vsel %vm649, %v742, %v746
      %v749 = vshrl.u32 %v645, 16
      %v751 = vrot.slane %v749, 4
      %v752 = vshll.u32 %v645, 16
      %v754 = vrot.slane %v752, 5
      %v755 = vor.u32 %v751, %v754
      %v756 = vrot.slane %v755, 4
      %v758 = vshll.u32 %v646, 16
      %v760 = vrot.slane %v758, 5
      %v761 = vsel %vm649, %v756, %v760
      %s762 = scalar_lea.vmem %s1, 128
      %v763 = vld [vmem:[%s762] sm:$0xf]
      %v764 = vld [vmem:[%s762 + $0x4] sm:$0xf]
      %v765 = vld [vmem:[%s762 + $0x8] sm:$0xf]
      %v766 = vld [vmem:[%s762 + $0xc] sm:$0xf]
      %v767 = vld [vmem:[%s762 + $0x10] sm:$0xf]
      %v768 = vld [vmem:[%s762 + $0x14] sm:$0xf]
      %v769 = vld [vmem:[%s762 + $0x18] sm:$0xf]
      %v770 = vld [vmem:[%s762 + $0x1c] sm:$0xf]
      %v771 = vld [vmem:[%s762 + $0x20] sm:$0xf]
      %v772 = vld [vmem:[%s762 + $0x24] sm:$0xf]
      %v773 = vld [vmem:[%s762 + $0x28] sm:$0xf]
      %v774 = vld [vmem:[%s762 + $0x2c] sm:$0xf]
      %v775 = vld [vmem:[%s762 + $0x30] sm:$0xf]
      %v776 = vld [vmem:[%s762 + $0x34] sm:$0xf]
      %v777 = vld [vmem:[%s762 + $0x38] sm:$0xf]
      %v778 = vld [vmem:[%s762 + $0x3c] sm:$0xf]
      %v779 = vunpack.c.l.b16 %v663
      %v780 = vunpack.c.l.b16 %v677
      %v781 = vunpack.c.l.b16 %v691
      %v782 = vunpack.c.l.b16 %v705
      %v783 = vunpack.c.l.b16 %v719
      %v784 = vunpack.c.l.b16 %v733
      %v785 = vunpack.c.l.b16 %v747
      %v786 = vunpack.c.l.b16 %v761
      %v787 = vpack.c.b16 %v780, %v779
      %v788 = vpack.c.b16 %v782, %v781
      %v789 = vpack.c.b16 %v784, %v783
      %v790 = vpack.c.b16 %v786, %v785
      %v811 = vunpack.c.l.b16 %v763
      %v812 = vunpack.c.l.b16 %v764
      %v813 = vunpack.c.l.b16 %v765
      %v814 = vunpack.c.l.b16 %v766
      %v815 = vunpack.c.l.b16 %v767
      %v816 = vunpack.c.l.b16 %v768
      %v817 = vunpack.c.l.b16 %v769
      %v818 = vunpack.c.l.b16 %v770
      %v819 = vunpack.c.l.b16 %v771
      %v820 = vunpack.c.l.b16 %v772
      %v821 = vunpack.c.l.b16 %v773
      %v822 = vunpack.c.l.b16 %v774
      %v823 = vunpack.c.l.b16 %v775
      %v824 = vunpack.c.l.b16 %v776
      %v825 = vunpack.c.l.b16 %v777
      %v826 = vunpack.c.l.b16 %v778
      %v827 = vpack.c.b16 %v812, %v811
      %v828 = vpack.c.b16 %v814, %v813
      %v829 = vpack.c.b16 %v816, %v815
      %v830 = vpack.c.b16 %v818, %v817
      %v831 = vpack.c.b16 %v820, %v819
      %v832 = vpack.c.b16 %v822, %v821
      %v833 = vpack.c.b16 %v824, %v823
      %v834 = vpack.c.b16 %v826, %v825
      %843 = vmatprep.subr.bf16.mxu0 0
      %844 = vmatpush1.bf16.msra.mxu0 %v827
      %845 = vmatprep.subr.bf16.mxu0 0
      %846 = vmatpush1.bf16.msra.mxu0 %v828
      %847 = vmatprep.subr.bf16.mxu0 0
      %848 = vmatpush1.bf16.msra.mxu0 %v829
      %849 = vmatprep.subr.bf16.mxu0 0
      %850 = vmatpush1.bf16.msra.mxu0 %v830
      %851 = vmatprep.subr.bf16.mxu0 0
      %852 = vmatpush1.bf16.msra.mxu0 %v831
      %853 = vmatprep.subr.bf16.mxu0 0
      %854 = vmatpush1.bf16.msra.mxu0 %v832
      %855 = vmatprep.subr.bf16.mxu0 0
      %856 = vmatpush1.bf16.msra.mxu0 %v833
      %857 = vmatprep.subr.bf16.mxu0 0
      %858 = vmatpush1.bf16.msra.mxu0 %v834
      %859 = vmatprep.subr.bf16.mxu0 0
      %860 = vmatpush1.bf16.msra.mxu0 0
      %861 = vmatprep.subr.bf16.mxu0 0
      %862 = vmatpush1.bf16.msra.mxu0 0
      %863 = vmatprep.subr.bf16.mxu0 0
      %864 = vmatpush1.bf16.msra.mxu0 0
      %865 = vmatprep.subr.bf16.mxu0 0
      %866 = vmatpush1.bf16.msra.mxu0 0
      %867 = vmatprep.subr.bf16.mxu0 0
      %868 = vmatpush1.bf16.msra.mxu0 0
      %869 = vmatprep.subr.bf16.mxu0 0
      %870 = vmatpush1.bf16.msra.mxu0 0
      %871 = vmatprep.subr.bf16.mxu0 0
      %872 = vmatpush1.bf16.msra.mxu0 0
      %873 = vmatprep.subr.bf16.mxu0 0
      %874 = vmatpush1.bf16.msra.mxu0 0
      %875 = vmatprep.mubr.bf16.mxu0 0
      %876 = vmatmul.mubr.bf16.gmra.mrb[0].mxu0 %v787
      %v877 = vpop.f32.mrb[0].mxu0
      %v878 = vadd.f32 0.0, %v877
      %v879 = vpop.f32.mrb[0].mxu0
      %v880 = vpop.f32.mrb[0].mxu0
      %v881 = vadd.f32 0.0, %v880
      %v882 = vpop.f32.mrb[0].mxu0
      %883 = vmatprep.mubr.bf16.mxu0 0
      %884 = vmatmul.mubr.bf16.gmra.mrb[0].mxu0 %v788
      %v885 = vpop.f32.mrb[0].mxu0
      %v886 = vadd.f32 0.0, %v885
      %v887 = vpop.f32.mrb[0].mxu0
      %v888 = vpop.f32.mrb[0].mxu0
      %v889 = vadd.f32 0.0, %v888
      %v890 = vpop.f32.mrb[0].mxu0
      %891 = vmatprep.mubr.bf16.mxu0 0
      %892 = vmatmul.mubr.bf16.gmra.mrb[0].mxu0 %v789
      %v893 = vpop.f32.mrb[0].mxu0
      %v894 = vadd.f32 0.0, %v893
      %v895 = vpop.f32.mrb[0].mxu0
      %v896 = vpop.f32.mrb[0].mxu0
      %v897 = vadd.f32 0.0, %v896
      %v898 = vpop.f32.mrb[0].mxu0
      %899 = vmatprep.mubr.bf16.mxu0 0
      %900 = vmatmul.mubr.bf16.gmra.mrb[0].mxu0 %v790
      %v901 = vpop.f32.mrb[0].mxu0
      %v902 = vadd.f32 0.0, %v901
      %v903 = vpop.f32.mrb[0].mxu0
      %v904 = vpop.f32.mrb[0].mxu0
      %v905 = vadd.f32 0.0, %v904
      %v906 = vpop.f32.mrb[0].mxu0
      %907 = vdwg.mxu0
      %v908 = vadd.f32 %v553, %v878
      %v909 = vadd.f32 %v556, %v881
      %v910 = vadd.f32 %v561, %v886
      %v911 = vadd.f32 %v564, %v889
      %v912 = vadd.f32 %v569, %v894
      %v913 = vadd.f32 %v572, %v897
      %v914 = vadd.f32 %v577, %v902
      %v915 = vadd.f32 %v580, %v905
      %v916 = vld [vmem:[%s259] sm:$0xf]
      %v917 = vld [vmem:[%s259 + $0x4] sm:$0x1]
      %v918 = vld [vmem:[%s259 + $0x8] sm:$0xf]
      %v919 = vld [vmem:[%s259 + $0xc] sm:$0x1]
      %v920 = vld [vmem:[%s259 + $0x10] sm:$0xf]
      %v921 = vld [vmem:[%s259 + $0x14] sm:$0x1]
      %v922 = vld [vmem:[%s259 + $0x18] sm:$0xf]
      %v923 = vld [vmem:[%s259 + $0x1c] sm:$0x1]
      %v924 = vld [vmem:[%s259 + $0x20] sm:$0xf]
      %v925 = vld [vmem:[%s259 + $0x24] sm:$0x1]
      %v926 = vld [vmem:[%s259 + $0x28] sm:$0xf]
      %v927 = vld [vmem:[%s259 + $0x2c] sm:$0x1]
      %v928 = vld [vmem:[%s259 + $0x30] sm:$0xf]
      %v929 = vld [vmem:[%s259 + $0x34] sm:$0x1]
      %v930 = vld [vmem:[%s259 + $0x38] sm:$0xf]
      %v931 = vld [vmem:[%s259 + $0x3c] sm:$0x1]
      %vm932 = vcmp.gt.bf16.partialorder %v916, 0
      %vm933 = vcmp.gt.bf16.partialorder %v917, 0
      %vm934 = vcmp.gt.bf16.partialorder %v918, 0
      %vm935 = vcmp.gt.bf16.partialorder %v919, 0
      %vm936 = vcmp.gt.bf16.partialorder %v920, 0
      %vm937 = vcmp.gt.bf16.partialorder %v921, 0
      %vm938 = vcmp.gt.bf16.partialorder %v922, 0
      %vm939 = vcmp.gt.bf16.partialorder %v923, 0
      %vm940 = vcmp.gt.bf16.partialorder %v924, 0
      %vm941 = vcmp.gt.bf16.partialorder %v925, 0
      %vm942 = vcmp.gt.bf16.partialorder %v926, 0
      %vm943 = vcmp.gt.bf16.partialorder %v927, 0
      %vm944 = vcmp.gt.bf16.partialorder %v928, 0
      %vm945 = vcmp.gt.bf16.partialorder %v929, 0
      %vm946 = vcmp.gt.bf16.partialorder %v930, 0
      %vm947 = vcmp.gt.bf16.partialorder %v931, 0
      %v948 = vmul.bf16 %v916, 1045249613
      %v949 = vmul.bf16 %v917, 1045249613
      %v950 = vmul.bf16 %v918, 1045249613
      %v951 = vmul.bf16 %v919, 1045249613
      %v952 = vmul.bf16 %v920, 1045249613
      %v953 = vmul.bf16 %v921, 1045249613
      %v954 = vmul.bf16 %v922, 1045249613
      %v955 = vmul.bf16 %v923, 1045249613
      %v956 = vmul.bf16 %v924, 1045249613
      %v957 = vmul.bf16 %v925, 1045249613
      %v958 = vmul.bf16 %v926, 1045249613
      %v959 = vmul.bf16 %v927, 1045249613
      %v960 = vmul.bf16 %v928, 1045249613
      %v961 = vmul.bf16 %v929, 1045249613
      %v962 = vmul.bf16 %v930, 1045249613
      %v963 = vmul.bf16 %v931, 1045249613
      %v964 = vsel %vm932, %v916, %v948
      %v965 = vsel %vm933, %v917, %v949
      %v966 = vsel %vm934, %v918, %v950
      %v967 = vsel %vm935, %v919, %v951
      %v968 = vsel %vm936, %v920, %v952
      %v969 = vsel %vm937, %v921, %v953
      %v970 = vsel %vm938, %v922, %v954
      %v971 = vsel %vm939, %v923, %v955
      %v972 = vsel %vm940, %v924, %v956
      %v973 = vsel %vm941, %v925, %v957
      %v974 = vsel %vm942, %v926, %v958
      %v975 = vsel %vm943, %v927, %v959
      %v976 = vsel %vm944, %v928, %v960
      %v977 = vsel %vm945, %v929, %v961
      %v978 = vsel %vm946, %v930, %v962
      %v979 = vsel %vm947, %v931, %v963
      %v981 = vshrl.u32 %v964, 16
      %v983 = vrot.slane %v981, 4
      %v984 = vshll.u32 %v964, 16
      %v986 = vrot.slane %v984, 5
      %v987 = vor.u32 %v983, %v986
      %v988 = vrot.slane %v987, 4
      %v990 = vshll.u32 %v965, 16
      %v992 = vrot.slane %v990, 5
      %v993 = vsel %vm649, %v988, %v992
      %v995 = vshrl.u32 %v966, 16
      %v997 = vrot.slane %v995, 4
      %v998 = vshll.u32 %v966, 16
      %v1000 = vrot.slane %v998, 5
      %v1001 = vor.u32 %v997, %v1000
      %v1002 = vrot.slane %v1001, 4
      %v1004 = vshll.u32 %v967, 16
      %v1006 = vrot.slane %v1004, 5
      %v1007 = vsel %vm649, %v1002, %v1006
      %v1009 = vshrl.u32 %v968, 16
      %v1011 = vrot.slane %v1009, 4
      %v1012 = vshll.u32 %v968, 16
      %v1014 = vrot.slane %v1012, 5
      %v1015 = vor.u32 %v1011, %v1014
      %v1016 = vrot.slane %v1015, 4
      %v1018 = vshll.u32 %v969, 16
      %v1020 = vrot.slane %v1018, 5
      %v1021 = vsel %vm649, %v1016, %v1020
      %v1023 = vshrl.u32 %v970, 16
      %v1025 = vrot.slane %v1023, 4
      %v1026 = vshll.u32 %v970, 16
      %v1028 = vrot.slane %v1026, 5
      %v1029 = vor.u32 %v1025, %v1028
      %v1030 = vrot.slane %v1029, 4
      %v1032 = vshll.u32 %v971, 16
      %v1034 = vrot.slane %v1032, 5
      %v1035 = vsel %vm649, %v1030, %v1034
      %v1037 = vshrl.u32 %v972, 16
      %v1039 = vrot.slane %v1037, 4
      %v1040 = vshll.u32 %v972, 16
      %v1042 = vrot.slane %v1040, 5
      %v1043 = vor.u32 %v1039, %v1042
      %v1044 = vrot.slane %v1043, 4
      %v1046 = vshll.u32 %v973, 16
      %v1048 = vrot.slane %v1046, 5
      %v1049 = vsel %vm649, %v1044, %v1048
      %v1051 = vshrl.u32 %v974, 16
      %v1053 = vrot.slane %v1051, 4
      %v1054 = vshll.u32 %v974, 16
      %v1056 = vrot.slane %v1054, 5
      %v1057 = vor.u32 %v1053, %v1056
      %v1058 = vrot.slane %v1057, 4
      %v1060 = vshll.u32 %v975, 16
      %v1062 = vrot.slane %v1060, 5
      %v1063 = vsel %vm649, %v1058, %v1062
      %v1065 = vshrl.u32 %v976, 16
      %v1067 = vrot.slane %v1065, 4
      %v1068 = vshll.u32 %v976, 16
      %v1070 = vrot.slane %v1068, 5
      %v1071 = vor.u32 %v1067, %v1070
      %v1072 = vrot.slane %v1071, 4
      %v1074 = vshll.u32 %v977, 16
      %v1076 = vrot.slane %v1074, 5
      %v1077 = vsel %vm649, %v1072, %v1076
      %v1079 = vshrl.u32 %v978, 16
      %v1081 = vrot.slane %v1079, 4
      %v1082 = vshll.u32 %v978, 16
      %v1084 = vrot.slane %v1082, 5
      %v1085 = vor.u32 %v1081, %v1084
      %v1086 = vrot.slane %v1085, 4
      %v1088 = vshll.u32 %v979, 16
      %v1090 = vrot.slane %v1088, 5
      %v1091 = vsel %vm649, %v1086, %v1090
      %s1092 = scalar_lea.vmem %s1, 192
      %v1093 = vld [vmem:[%s1092] sm:$0xf]
      %v1094 = vld [vmem:[%s1092 + $0x4] sm:$0xf]
      %v1095 = vld [vmem:[%s1092 + $0x8] sm:$0xf]
      %v1096 = vld [vmem:[%s1092 + $0xc] sm:$0xf]
      %v1097 = vld [vmem:[%s1092 + $0x10] sm:$0xf]
      %v1098 = vld [vmem:[%s1092 + $0x14] sm:$0xf]
      %v1099 = vld [vmem:[%s1092 + $0x18] sm:$0xf]
      %v1100 = vld [vmem:[%s1092 + $0x1c] sm:$0xf]
      %v1101 = vld [vmem:[%s1092 + $0x20] sm:$0xf]
      %v1102 = vld [vmem:[%s1092 + $0x24] sm:$0xf]
      %v1103 = vld [vmem:[%s1092 + $0x28] sm:$0xf]
      %v1104 = vld [vmem:[%s1092 + $0x2c] sm:$0xf]
      %v1105 = vld [vmem:[%s1092 + $0x30] sm:$0xf]
      %v1106 = vld [vmem:[%s1092 + $0x34] sm:$0xf]
      %v1107 = vld [vmem:[%s1092 + $0x38] sm:$0xf]
      %v1108 = vld [vmem:[%s1092 + $0x3c] sm:$0xf]
      %v1109 = vunpack.c.l.b16 %v993
      %v1110 = vunpack.c.l.b16 %v1007
      %v1111 = vunpack.c.l.b16 %v1021
      %v1112 = vunpack.c.l.b16 %v1035
      %v1113 = vunpack.c.l.b16 %v1049
      %v1114 = vunpack.c.l.b16 %v1063
      %v1115 = vunpack.c.l.b16 %v1077
      %v1116 = vunpack.c.l.b16 %v1091
      %v1117 = vpack.c.b16 %v1110, %v1109
      %v1118 = vpack.c.b16 %v1112, %v1111
      %v1119 = vpack.c.b16 %v1114, %v1113
      %v1120 = vpack.c.b16 %v1116, %v1115
      %v1141 = vunpack.c.l.b16 %v1093
      %v1142 = vunpack.c.l.b16 %v1094
      %v1143 = vunpack.c.l.b16 %v1095
      %v1144 = vunpack.c.l.b16 %v1096
      %v1145 = vunpack.c.l.b16 %v1097
      %v1146 = vunpack.c.l.b16 %v1098
      %v1147 = vunpack.c.l.b16 %v1099
      %v1148 = vunpack.c.l.b16 %v1100
      %v1149 = vunpack.c.l.b16 %v1101
      %v1150 = vunpack.c.l.b16 %v1102
      %v1151 = vunpack.c.l.b16 %v1103
      %v1152 = vunpack.c.l.b16 %v1104
      %v1153 = vunpack.c.l.b16 %v1105
      %v1154 = vunpack.c.l.b16 %v1106
      %v1155 = vunpack.c.l.b16 %v1107
      %v1156 = vunpack.c.l.b16 %v1108
      %v1157 = vpack.c.b16 %v1142, %v1141
      %v1158 = vpack.c.b16 %v1144, %v1143
      %v1159 = vpack.c.b16 %v1146, %v1145
      %v1160 = vpack.c.b16 %v1148, %v1147
      %v1161 = vpack.c.b16 %v1150, %v1149
      %v1162 = vpack.c.b16 %v1152, %v1151
      %v1163 = vpack.c.b16 %v1154, %v1153
      %v1164 = vpack.c.b16 %v1156, %v1155
      %1173 = vmatprep.subr.bf16.mxu0 0
      %1174 = vmatpush1.bf16.msra.mxu0 %v1157
      %1175 = vmatprep.subr.bf16.mxu0 0
      %1176 = vmatpush1.bf16.msra.mxu0 %v1158
      %1177 = vmatprep.subr.bf16.mxu0 0
      %1178 = vmatpush1.bf16.msra.mxu0 %v1159
      %1179 = vmatprep.subr.bf16.mxu0 0
      %1180 = vmatpush1.bf16.msra.mxu0 %v1160
      %1181 = vmatprep.subr.bf16.mxu0 0
      %1182 = vmatpush1.bf16.msra.mxu0 %v1161
      %1183 = vmatprep.subr.bf16.mxu0 0
      %1184 = vmatpush1.bf16.msra.mxu0 %v1162
      %1185 = vmatprep.subr.bf16.mxu0 0
      %1186 = vmatpush1.bf16.msra.mxu0 %v1163
      %1187 = vmatprep.subr.bf16.mxu0 0
      %1188 = vmatpush1.bf16.msra.mxu0 %v1164
      %1189 = vmatprep.subr.bf16.mxu0 0
      %1190 = vmatpush1.bf16.msra.mxu0 0
      %1191 = vmatprep.subr.bf16.mxu0 0
      %1192 = vmatpush1.bf16.msra.mxu0 0
      %1193 = vmatprep.subr.bf16.mxu0 0
      %1194 = vmatpush1.bf16.msra.mxu0 0
      %1195 = vmatprep.subr.bf16.mxu0 0
      %1196 = vmatpush1.bf16.msra.mxu0 0
      %1197 = vmatprep.subr.bf16.mxu0 0
      %1198 = vmatpush1.bf16.msra.mxu0 0
      %1199 = vmatprep.subr.bf16.mxu0 0
      %1200 = vmatpush1.bf16.msra.mxu0 0
      %1201 = vmatprep.subr.bf16.mxu0 0
      %1202 = vmatpush1.bf16.msra.mxu0 0
      %1203 = vmatprep.subr.bf16.mxu0 0
      %1204 = vmatpush1.bf16.msra.mxu0 0
      %1205 = vmatprep.mubr.bf16.mxu0 0
      %1206 = vmatmul.mubr.bf16.gmra.mrb[0].mxu0 %v1117
      %v1207 = vpop.f32.mrb[0].mxu0
      %v1208 = vadd.f32 0.0, %v1207
      %v1209 = vpop.f32.mrb[0].mxu0
      %v1210 = vpop.f32.mrb[0].mxu0
      %v1211 = vadd.f32 0.0, %v1210
      %v1212 = vpop.f32.mrb[0].mxu0
      %1213 = vmatprep.mubr.bf16.mxu0 0
      %1214 = vmatmul.mubr.bf16.gmra.mrb[0].mxu0 %v1118
      %v1215 = vpop.f32.mrb[0].mxu0
      %v1216 = vadd.f32 0.0, %v1215
      %v1217 = vpop.f32.mrb[0].mxu0
      %v1218 = vpop.f32.mrb[0].mxu0
      %v1219 = vadd.f32 0.0, %v1218
      %v1220 = vpop.f32.mrb[0].mxu0
      %1221 = vmatprep.mubr.bf16.mxu0 0
      %1222 = vmatmul.mubr.bf16.gmra.mrb[0].mxu0 %v1119
      %v1223 = vpop.f32.mrb[0].mxu0
      %v1224 = vadd.f32 0.0, %v1223
      %v1225 = vpop.f32.mrb[0].mxu0
      %v1226 = vpop.f32.mrb[0].mxu0
      %v1227 = vadd.f32 0.0, %v1226
      %v1228 = vpop.f32.mrb[0].mxu0
      %1229 = vmatprep.mubr.bf16.mxu0 0
      %1230 = vmatmul.mubr.bf16.gmra.mrb[0].mxu0 %v1120
      %v1231 = vpop.f32.mrb[0].mxu0
      %v1232 = vadd.f32 0.0, %v1231
      %v1233 = vpop.f32.mrb[0].mxu0
      %v1234 = vpop.f32.mrb[0].mxu0
      %v1235 = vadd.f32 0.0, %v1234
      %v1236 = vpop.f32.mrb[0].mxu0
      %1237 = vdwg.mxu0
      %v1238 = vadd.f32 %v908, %v1208
      %v1239 = vadd.f32 %v909, %v1211
      %v1240 = vadd.f32 %v910, %v1216
      %v1241 = vadd.f32 %v911, %v1219
      %v1242 = vadd.f32 %v912, %v1224
      %v1243 = vadd.f32 %v913, %v1227
      %v1244 = vadd.f32 %v914, %v1232
      %v1245 = vadd.f32 %v915, %v1235
      %s1246 = scalar_lea.vmem %s199, 128
      %v1247 = vld [vmem:[%s1246] sm:$0xf]
      %v1248 = vld [vmem:[%s1246 + $0x8] sm:$0xf]
      %v1249 = vld [vmem:[%s1246 + $0x10] sm:$0xf]
      %v1250 = vld [vmem:[%s1246 + $0x18] sm:$0xf]
      %v1251 = vld [vmem:[%s1246 + $0x20] sm:$0xf]
      %v1252 = vld [vmem:[%s1246 + $0x28] sm:$0xf]
      %v1253 = vld [vmem:[%s1246 + $0x30] sm:$0xf]
      %v1254 = vld [vmem:[%s1246 + $0x38] sm:$0xf]
      %vm1255 = vcmp.gt.bf16.partialorder %v1247, 0
      %vm1256 = vcmp.gt.bf16.partialorder %v1248, 0
      %vm1257 = vcmp.gt.bf16.partialorder %v1249, 0
      %vm1258 = vcmp.gt.bf16.partialorder %v1250, 0
      %vm1259 = vcmp.gt.bf16.partialorder %v1251, 0
      %vm1260 = vcmp.gt.bf16.partialorder %v1252, 0
      %vm1261 = vcmp.gt.bf16.partialorder %v1253, 0
      %vm1262 = vcmp.gt.bf16.partialorder %v1254, 0
      %v1263 = vmul.bf16 %v1247, 1045249613
      %v1264 = vmul.bf16 %v1248, 1045249613
      %v1265 = vmul.bf16 %v1249, 1045249613
      %v1266 = vmul.bf16 %v1250, 1045249613
      %v1267 = vmul.bf16 %v1251, 1045249613
      %v1268 = vmul.bf16 %v1252, 1045249613
      %v1269 = vmul.bf16 %v1253, 1045249613
      %v1270 = vmul.bf16 %v1254, 1045249613
      %v1271 = vsel %vm1255, %v1247, %v1263
      %v1272 = vsel %vm1256, %v1248, %v1264
      %v1273 = vsel %vm1257, %v1249, %v1265
      %v1274 = vsel %vm1258, %v1250, %v1266
      %v1275 = vsel %vm1259, %v1251, %v1267
      %v1276 = vsel %vm1260, %v1252, %v1268
      %v1277 = vsel %vm1261, %v1253, %v1269
      %v1278 = vsel %vm1262, %v1254, %v1270
      %s1279 = scalar_lea.vmem %s1, 256
      %v1280 = vld [vmem:[%s1279] sm:$0xf]
      %v1281 = vld [vmem:[%s1279 + $0x4] sm:$0xf]
      %v1282 = vld [vmem:[%s1279 + $0x8] sm:$0xf]
      %v1283 = vld [vmem:[%s1279 + $0xc] sm:$0xf]
      %v1284 = vld [vmem:[%s1279 + $0x10] sm:$0xf]
      %v1285 = vld [vmem:[%s1279 + $0x14] sm:$0xf]
      %v1286 = vld [vmem:[%s1279 + $0x18] sm:$0xf]
      %v1287 = vld [vmem:[%s1279 + $0x1c] sm:$0xf]
      %v1288 = vld [vmem:[%s1279 + $0x20] sm:$0xf]
      %v1289 = vld [vmem:[%s1279 + $0x24] sm:$0xf]
      %v1290 = vld [vmem:[%s1279 + $0x28] sm:$0xf]
      %v1291 = vld [vmem:[%s1279 + $0x2c] sm:$0xf]
      %v1292 = vld [vmem:[%s1279 + $0x30] sm:$0xf]
      %v1293 = vld [vmem:[%s1279 + $0x34] sm:$0xf]
      %v1294 = vld [vmem:[%s1279 + $0x38] sm:$0xf]
      %v1295 = vld [vmem:[%s1279 + $0x3c] sm:$0xf]
      %v1304 = vunpack.c.l.b16 %v1271
      %v1305 = vunpack.c.l.b16 %v1272
      %v1306 = vunpack.c.l.b16 %v1273
      %v1307 = vunpack.c.l.b16 %v1274
      %v1308 = vunpack.c.l.b16 %v1275
      %v1309 = vunpack.c.l.b16 %v1276
      %v1310 = vunpack.c.l.b16 %v1277
      %v1311 = vunpack.c.l.b16 %v1278
      %v1312 = vpack.c.b16 %v1305, %v1304
      %v1313 = vpack.c.b16 %v1307, %v1306
      %v1314 = vpack.c.b16 %v1309, %v1308
      %v1315 = vpack.c.b16 %v1311, %v1310
      %v1336 = vunpack.c.l.b16 %v1280
      %v1337 = vunpack.c.l.b16 %v1281
      %v1338 = vunpack.c.l.b16 %v1282
      %v1339 = vunpack.c.l.b16 %v1283
      %v1340 = vunpack.c.l.b16 %v1284
      %v1341 = vunpack.c.l.b16 %v1285
      %v1342 = vunpack.c.l.b16 %v1286
      %v1343 = vunpack.c.l.b16 %v1287
      %v1344 = vunpack.c.l.b16 %v1288
      %v1345 = vunpack.c.l.b16 %v1289
      %v1346 = vunpack.c.l.b16 %v1290
      %v1347 = vunpack.c.l.b16 %v1291
      %v1348 = vunpack.c.l.b16 %v1292
      %v1349 = vunpack.c.l.b16 %v1293
      %v1350 = vunpack.c.l.b16 %v1294
      %v1351 = vunpack.c.l.b16 %v1295
      %v1352 = vpack.c.b16 %v1337, %v1336
      %v1353 = vpack.c.b16 %v1339, %v1338
      %v1354 = vpack.c.b16 %v1341, %v1340
      %v1355 = vpack.c.b16 %v1343, %v1342
      %v1356 = vpack.c.b16 %v1345, %v1344
      %v1357 = vpack.c.b16 %v1347, %v1346
      %v1358 = vpack.c.b16 %v1349, %v1348
      %v1359 = vpack.c.b16 %v1351, %v1350
      %1368 = vmatprep.subr.bf16.mxu0 0
      %1369 = vmatpush1.bf16.msra.mxu0 %v1352
      %1370 = vmatprep.subr.bf16.mxu0 0
      %1371 = vmatpush1.bf16.msra.mxu0 %v1353
      %1372 = vmatprep.subr.bf16.mxu0 0
      %1373 = vmatpush1.bf16.msra.mxu0 %v1354
      %1374 = vmatprep.subr.bf16.mxu0 0
      %1375 = vmatpush1.bf16.msra.mxu0 %v1355
      %1376 = vmatprep.subr.bf16.mxu0 0
      %1377 = vmatpush1.bf16.msra.mxu0 %v1356
      %1378 = vmatprep.subr.bf16.mxu0 0
      %1379 = vmatpush1.bf16.msra.mxu0 %v1357
      %1380 = vmatprep.subr.bf16.mxu0 0
      %1381 = vmatpush1.bf16.msra.mxu0 %v1358
      %1382 = vmatprep.subr.bf16.mxu0 0
      %1383 = vmatpush1.bf16.msra.mxu0 %v1359
      %1384 = vmatprep.subr.bf16.mxu0 0
      %1385 = vmatpush1.bf16.msra.mxu0 0
      %1386 = vmatprep.subr.bf16.mxu0 0
      %1387 = vmatpush1.bf16.msra.mxu0 0
      %1388 = vmatprep.subr.bf16.mxu0 0
      %1389 = vmatpush1.bf16.msra.mxu0 0
      %1390 = vmatprep.subr.bf16.mxu0 0
      %1391 = vmatpush1.bf16.msra.mxu0 0
      %1392 = vmatprep.subr.bf16.mxu0 0
      %1393 = vmatpush1.bf16.msra.mxu0 0
      %1394 = vmatprep.subr.bf16.mxu0 0
      %1395 = vmatpush1.bf16.msra.mxu0 0
      %1396 = vmatprep.subr.bf16.mxu0 0
      %1397 = vmatpush1.bf16.msra.mxu0 0
      %1398 = vmatprep.subr.bf16.mxu0 0
      %1399 = vmatpush1.bf16.msra.mxu0 0
      %1400 = vmatprep.mubr.bf16.mxu0 0
      %1401 = vmatmul.mubr.bf16.gmra.mrb[0].mxu0 %v1312
      %v1402 = vpop.f32.mrb[0].mxu0
      %v1403 = vadd.f32 0.0, %v1402
      %v1404 = vpop.f32.mrb[0].mxu0
      %v1405 = vpop.f32.mrb[0].mxu0
      %v1406 = vadd.f32 0.0, %v1405
      %v1407 = vpop.f32.mrb[0].mxu0
      %1408 = vmatprep.mubr.bf16.mxu0 0
      %1409 = vmatmul.mubr.bf16.gmra.mrb[0].mxu0 %v1313
      %v1410 = vpop.f32.mrb[0].mxu0
      %v1411 = vadd.f32 0.0, %v1410
      %v1412 = vpop.f32.mrb[0].mxu0
      %v1413 = vpop.f32.mrb[0].mxu0
      %v1414 = vadd.f32 0.0, %v1413
      %v1415 = vpop.f32.mrb[0].mxu0
      %1416 = vmatprep.mubr.bf16.mxu0 0
      %1417 = vmatmul.mubr.bf16.gmra.mrb[0].mxu0 %v1314
      %v1418 = vpop.f32.mrb[0].mxu0
      %v1419 = vadd.f32 0.0, %v1418
      %v1420 = vpop.f32.mrb[0].mxu0
      %v1421 = vpop.f32.mrb[0].mxu0
      %v1422 = vadd.f32 0.0, %v1421
      %v1423 = vpop.f32.mrb[0].mxu0
      %1424 = vmatprep.mubr.bf16.mxu0 0
      %1425 = vmatmul.mubr.bf16.gmra.mrb[0].mxu0 %v1315
      %v1426 = vpop.f32.mrb[0].mxu0
      %v1427 = vadd.f32 0.0, %v1426
      %v1428 = vpop.f32.mrb[0].mxu0
      %v1429 = vpop.f32.mrb[0].mxu0
      %v1430 = vadd.f32 0.0, %v1429
      %v1431 = vpop.f32.mrb[0].mxu0
      %1432 = vdwg.mxu0
      %v1433 = vadd.f32 %v1238, %v1403
      %v1434 = vadd.f32 %v1239, %v1406
      %v1435 = vadd.f32 %v1240, %v1411
      %v1436 = vadd.f32 %v1241, %v1414
      %v1437 = vadd.f32 %v1242, %v1419
      %v1438 = vadd.f32 %v1243, %v1422
      %v1439 = vadd.f32 %v1244, %v1427
      %v1440 = vadd.f32 %v1245, %v1430
      %s1441 = scalar_lea.vmem %s199, 192
      %v1442 = vld [vmem:[%s1441] sm:$0xf]
      %v1443 = vld [vmem:[%s1441 + $0x8] sm:$0xf]
      %v1444 = vld [vmem:[%s1441 + $0x10] sm:$0xf]
      %v1445 = vld [vmem:[%s1441 + $0x18] sm:$0xf]
      %v1446 = vld [vmem:[%s1441 + $0x20] sm:$0xf]
      %v1447 = vld [vmem:[%s1441 + $0x28] sm:$0xf]
      %v1448 = vld [vmem:[%s1441 + $0x30] sm:$0xf]
      %v1449 = vld [vmem:[%s1441 + $0x38] sm:$0xf]
      %vm1450 = vcmp.gt.bf16.partialorder %v1442, 0
      %vm1451 = vcmp.gt.bf16.partialorder %v1443, 0
      %vm1452 = vcmp.gt.bf16.partialorder %v1444, 0
      %vm1453 = vcmp.gt.bf16.partialorder %v1445, 0
      %vm1454 = vcmp.gt.bf16.partialorder %v1446, 0
      %vm1455 = vcmp.gt.bf16.partialorder %v1447, 0
      %vm1456 = vcmp.gt.bf16.partialorder %v1448, 0
      %vm1457 = vcmp.gt.bf16.partialorder %v1449, 0
      %v1458 = vmul.bf16 %v1442, 1045249613
      %v1459 = vmul.bf16 %v1443, 1045249613
      %v1460 = vmul.bf16 %v1444, 1045249613
      %v1461 = vmul.bf16 %v1445, 1045249613
      %v1462 = vmul.bf16 %v1446, 1045249613
      %v1463 = vmul.bf16 %v1447, 1045249613
      %v1464 = vmul.bf16 %v1448, 1045249613
      %v1465 = vmul.bf16 %v1449, 1045249613
      %v1466 = vsel %vm1450, %v1442, %v1458
      %v1467 = vsel %vm1451, %v1443, %v1459
      %v1468 = vsel %vm1452, %v1444, %v1460
      %v1469 = vsel %vm1453, %v1445, %v1461
      %v1470 = vsel %vm1454, %v1446, %v1462
      %v1471 = vsel %vm1455, %v1447, %v1463
      %v1472 = vsel %vm1456, %v1448, %v1464
      %v1473 = vsel %vm1457, %v1449, %v1465
      %s1474 = scalar_lea.vmem %s1, 320
      %v1475 = vld [vmem:[%s1474] sm:$0xf]
      %v1476 = vld [vmem:[%s1474 + $0x4] sm:$0xf]
      %v1477 = vld [vmem:[%s1474 + $0x8] sm:$0xf]
      %v1478 = vld [vmem:[%s1474 + $0xc] sm:$0xf]
      %v1479 = vld [vmem:[%s1474 + $0x10] sm:$0xf]
      %v1480 = vld [vmem:[%s1474 + $0x14] sm:$0xf]
      %v1481 = vld [vmem:[%s1474 + $0x18] sm:$0xf]
      %v1482 = vld [vmem:[%s1474 + $0x1c] sm:$0xf]
      %v1483 = vld [vmem:[%s1474 + $0x20] sm:$0xf]
      %v1484 = vld [vmem:[%s1474 + $0x24] sm:$0xf]
      %v1485 = vld [vmem:[%s1474 + $0x28] sm:$0xf]
      %v1486 = vld [vmem:[%s1474 + $0x2c] sm:$0xf]
      %v1487 = vld [vmem:[%s1474 + $0x30] sm:$0xf]
      %v1488 = vld [vmem:[%s1474 + $0x34] sm:$0xf]
      %v1489 = vld [vmem:[%s1474 + $0x38] sm:$0xf]
      %v1490 = vld [vmem:[%s1474 + $0x3c] sm:$0xf]
      %v1499 = vunpack.c.l.b16 %v1466
      %v1500 = vunpack.c.l.b16 %v1467
      %v1501 = vunpack.c.l.b16 %v1468
      %v1502 = vunpack.c.l.b16 %v1469
      %v1503 = vunpack.c.l.b16 %v1470
      %v1504 = vunpack.c.l.b16 %v1471
      %v1505 = vunpack.c.l.b16 %v1472
      %v1506 = vunpack.c.l.b16 %v1473
      %v1507 = vpack.c.b16 %v1500, %v1499
      %v1508 = vpack.c.b16 %v1502, %v1501
      %v1509 = vpack.c.b16 %v1504, %v1503
      %v1510 = vpack.c.b16 %v1506, %v1505
      %v1531 = vunpack.c.l.b16 %v1475
      %v1532 = vunpack.c.l.b16 %v1476
      %v1533 = vunpack.c.l.b16 %v1477
      %v1534 = vunpack.c.l.b16 %v1478
      %v1535 = vunpack.c.l.b16 %v1479
      %v1536 = vunpack.c.l.b16 %v1480
      %v1537 = vunpack.c.l.b16 %v1481
      %v1538 = vunpack.c.l.b16 %v1482
      %v1539 = vunpack.c.l.b16 %v1483
      %v1540 = vunpack.c.l.b16 %v1484
      %v1541 = vunpack.c.l.b16 %v1485
      %v1542 = vunpack.c.l.b16 %v1486
      %v1543 = vunpack.c.l.b16 %v1487
      %v1544 = vunpack.c.l.b16 %v1488
      %v1545 = vunpack.c.l.b16 %v1489
      %v1546 = vunpack.c.l.b16 %v1490
      %v1547 = vpack.c.b16 %v1532, %v1531
      %v1548 = vpack.c.b16 %v1534, %v1533
      %v1549 = vpack.c.b16 %v1536, %v1535
      %v1550 = vpack.c.b16 %v1538, %v1537
      %v1551 = vpack.c.b16 %v1540, %v1539
      %v1552 = vpack.c.b16 %v1542, %v1541
      %v1553 = vpack.c.b16 %v1544, %v1543
      %v1554 = vpack.c.b16 %v1546, %v1545
      %1563 = vmatprep.subr.bf16.mxu0 0
      %1564 = vmatpush1.bf16.msra.mxu0 %v1547
      %1565 = vmatprep.subr.bf16.mxu0 0
      %1566 = vmatpush1.bf16.msra.mxu0 %v1548
      %1567 = vmatprep.subr.bf16.mxu0 0
      %1568 = vmatpush1.bf16.msra.mxu0 %v1549
      %1569 = vmatprep.subr.bf16.mxu0 0
      %1570 = vmatpush1.bf16.msra.mxu0 %v1550
      %1571 = vmatprep.subr.bf16.mxu0 0
      %1572 = vmatpush1.bf16.msra.mxu0 %v1551
      %1573 = vmatprep.subr.bf16.mxu0 0
      %1574 = vmatpush1.bf16.msra.mxu0 %v1552
      %1575 = vmatprep.subr.bf16.mxu0 0
      %1576 = vmatpush1.bf16.msra.mxu0 %v1553
      %1577 = vmatprep.subr.bf16.mxu0 0
      %1578 = vmatpush1.bf16.msra.mxu0 %v1554
      %1579 = vmatprep.subr.bf16.mxu0 0
      %1580 = vmatpush1.bf16.msra.mxu0 0
      %1581 = vmatprep.subr.bf16.mxu0 0
      %1582 = vmatpush1.bf16.msra.mxu0 0
      %1583 = vmatprep.subr.bf16.mxu0 0
      %1584 = vmatpush1.bf16.msra.mxu0 0
      %1585 = vmatprep.subr.bf16.mxu0 0
      %1586 = vmatpush1.bf16.msra.mxu0 0
      %1587 = vmatprep.subr.bf16.mxu0 0
      %1588 = vmatpush1.bf16.msra.mxu0 0
      %1589 = vmatprep.subr.bf16.mxu0 0
      %1590 = vmatpush1.bf16.msra.mxu0 0
      %1591 = vmatprep.subr.bf16.mxu0 0
      %1592 = vmatpush1.bf16.msra.mxu0 0
      %1593 = vmatprep.subr.bf16.mxu0 0
      %1594 = vmatpush1.bf16.msra.mxu0 0
      %1595 = vmatprep.mubr.bf16.mxu0 0
      %1596 = vmatmul.mubr.bf16.gmra.mrb[0].mxu0 %v1507
      %v1597 = vpop.f32.mrb[0].mxu0
      %v1598 = vadd.f32 0.0, %v1597
      %v1599 = vpop.f32.mrb[0].mxu0
      %v1600 = vpop.f32.mrb[0].mxu0
      %v1601 = vadd.f32 0.0, %v1600
      %v1602 = vpop.f32.mrb[0].mxu0
      %1603 = vmatprep.mubr.bf16.mxu0 0
      %1604 = vmatmul.mubr.bf16.gmra.mrb[0].mxu0 %v1508
      %v1605 = vpop.f32.mrb[0].mxu0
      %v1606 = vadd.f32 0.0, %v1605
      %v1607 = vpop.f32.mrb[0].mxu0
      %v1608 = vpop.f32.mrb[0].mxu0
      %v1609 = vadd.f32 0.0, %v1608
      %v1610 = vpop.f32.mrb[0].mxu0
      %1611 = vmatprep.mubr.bf16.mxu0 0
      %1612 = vmatmul.mubr.bf16.gmra.mrb[0].mxu0 %v1509
      %v1613 = vpop.f32.mrb[0].mxu0
      %v1614 = vadd.f32 0.0, %v1613
      %v1615 = vpop.f32.mrb[0].mxu0
      %v1616 = vpop.f32.mrb[0].mxu0
      %v1617 = vadd.f32 0.0, %v1616
      %v1618 = vpop.f32.mrb[0].mxu0
      %1619 = vmatprep.mubr.bf16.mxu0 0
      %1620 = vmatmul.mubr.bf16.gmra.mrb[0].mxu0 %v1510
      %v1621 = vpop.f32.mrb[0].mxu0
      %v1622 = vadd.f32 0.0, %v1621
      %v1623 = vpop.f32.mrb[0].mxu0
      %v1624 = vpop.f32.mrb[0].mxu0
      %v1625 = vadd.f32 0.0, %v1624
      %v1626 = vpop.f32.mrb[0].mxu0
      %1627 = vdwg.mxu0
      %v1628 = vadd.f32 %v1433, %v1598
      %v1629 = vadd.f32 %v1434, %v1601
      %v1630 = vadd.f32 %v1435, %v1606
      %v1631 = vadd.f32 %v1436, %v1609
      %v1632 = vadd.f32 %v1437, %v1614
      %v1633 = vadd.f32 %v1438, %v1617
      %v1634 = vadd.f32 %v1439, %v1622
      %v1635 = vadd.f32 %v1440, %v1625
      %v1636 = vld [vmem:[%s1246] sm:$0xf]
      %v1637 = vld [vmem:[%s1246 + $0x4] sm:$0x1]
      %v1638 = vld [vmem:[%s1246 + $0x8] sm:$0xf]
      %v1639 = vld [vmem:[%s1246 + $0xc] sm:$0x1]
      %v1640 = vld [vmem:[%s1246 + $0x10] sm:$0xf]
      %v1641 = vld [vmem:[%s1246 + $0x14] sm:$0x1]
      %v1642 = vld [vmem:[%s1246 + $0x18] sm:$0xf]
      %v1643 = vld [vmem:[%s1246 + $0x1c] sm:$0x1]
      %v1644 = vld [vmem:[%s1246 + $0x20] sm:$0xf]
      %v1645 = vld [vmem:[%s1246 + $0x24] sm:$0x1]
      %v1646 = vld [vmem:[%s1246 + $0x28] sm:$0xf]
      %v1647 = vld [vmem:[%s1246 + $0x2c] sm:$0x1]
      %v1648 = vld [vmem:[%s1246 + $0x30] sm:$0xf]
      %v1649 = vld [vmem:[%s1246 + $0x34] sm:$0x1]
      %v1650 = vld [vmem:[%s1246 + $0x38] sm:$0xf]
      %v1651 = vld [vmem:[%s1246 + $0x3c] sm:$0x1]
      %vm1652 = vcmp.gt.bf16.partialorder %v1636, 0
      %vm1653 = vcmp.gt.bf16.partialorder %v1637, 0
      %vm1654 = vcmp.gt.bf16.partialorder %v1638, 0
      %vm1655 = vcmp.gt.bf16.partialorder %v1639, 0
      %vm1656 = vcmp.gt.bf16.partialorder %v1640, 0
      %vm1657 = vcmp.gt.bf16.partialorder %v1641, 0
      %vm1658 = vcmp.gt.bf16.partialorder %v1642, 0
      %vm1659 = vcmp.gt.bf16.partialorder %v1643, 0
      %vm1660 = vcmp.gt.bf16.partialorder %v1644, 0
      %vm1661 = vcmp.gt.bf16.partialorder %v1645, 0
      %vm1662 = vcmp.gt.bf16.partialorder %v1646, 0
      %vm1663 = vcmp.gt.bf16.partialorder %v1647, 0
      %vm1664 = vcmp.gt.bf16.partialorder %v1648, 0
      %vm1665 = vcmp.gt.bf16.partialorder %v1649, 0
      %vm1666 = vcmp.gt.bf16.partialorder %v1650, 0
      %vm1667 = vcmp.gt.bf16.partialorder %v1651, 0
      %v1668 = vmul.bf16 %v1636, 1045249613
      %v1669 = vmul.bf16 %v1637, 1045249613
      %v1670 = vmul.bf16 %v1638, 1045249613
      %v1671 = vmul.bf16 %v1639, 1045249613
      %v1672 = vmul.bf16 %v1640, 1045249613
      %v1673 = vmul.bf16 %v1641, 1045249613
      %v1674 = vmul.bf16 %v1642, 1045249613
      %v1675 = vmul.bf16 %v1643, 1045249613
      %v1676 = vmul.bf16 %v1644, 1045249613
      %v1677 = vmul.bf16 %v1645, 1045249613
      %v1678 = vmul.bf16 %v1646, 1045249613
      %v1679 = vmul.bf16 %v1647, 1045249613
      %v1680 = vmul.bf16 %v1648, 1045249613
      %v1681 = vmul.bf16 %v1649, 1045249613
      %v1682 = vmul.bf16 %v1650, 1045249613
      %v1683 = vmul.bf16 %v1651, 1045249613
      %v1684 = vsel %vm1652, %v1636, %v1668
      %v1685 = vsel %vm1653, %v1637, %v1669
      %v1686 = vsel %vm1654, %v1638, %v1670
      %v1687 = vsel %vm1655, %v1639, %v1671
      %v1688 = vsel %vm1656, %v1640, %v1672
      %v1689 = vsel %vm1657, %v1641, %v1673
      %v1690 = vsel %vm1658, %v1642, %v1674
      %v1691 = vsel %vm1659, %v1643, %v1675
      %v1692 = vsel %vm1660, %v1644, %v1676
      %v1693 = vsel %vm1661, %v1645, %v1677
      %v1694 = vsel %vm1662, %v1646, %v1678
      %v1695 = vsel %vm1663, %v1647, %v1679
      %v1696 = vsel %vm1664, %v1648, %v1680
      %v1697 = vsel %vm1665, %v1649, %v1681
      %v1698 = vsel %vm1666, %v1650, %v1682
      %v1699 = vsel %vm1667, %v1651, %v1683
      %v1701 = vshrl.u32 %v1684, 16
      %v1703 = vrot.slane %v1701, 4
      %v1704 = vshll.u32 %v1684, 16
      %v1706 = vrot.slane %v1704, 5
      %v1707 = vor.u32 %v1703, %v1706
      %v1708 = vrot.slane %v1707, 4
      %v1710 = vshll.u32 %v1685, 16
      %v1712 = vrot.slane %v1710, 5
      %v1713 = vsel %vm649, %v1708, %v1712
      %v1715 = vshrl.u32 %v1686, 16
      %v1717 = vrot.slane %v1715, 4
      %v1718 = vshll.u32 %v1686, 16
      %v1720 = vrot.slane %v1718, 5
      %v1721 = vor.u32 %v1717, %v1720
      %v1722 = vrot.slane %v1721, 4
      %v1724 = vshll.u32 %v1687, 16
      %v1726 = vrot.slane %v1724, 5
      %v1727 = vsel %vm649, %v1722, %v1726
      %v1729 = vshrl.u32 %v1688, 16
      %v1731 = vrot.slane %v1729, 4
      %v1732 = vshll.u32 %v1688, 16
      %v1734 = vrot.slane %v1732, 5
      %v1735 = vor.u32 %v1731, %v1734
      %v1736 = vrot.slane %v1735, 4
      %v1738 = vshll.u32 %v1689, 16
      %v1740 = vrot.slane %v1738, 5
      %v1741 = vsel %vm649, %v1736, %v1740
      %v1743 = vshrl.u32 %v1690, 16
      %v1745 = vrot.slane %v1743, 4
      %v1746 = vshll.u32 %v1690, 16
      %v1748 = vrot.slane %v1746, 5
      %v1749 = vor.u32 %v1745, %v1748
      %v1750 = vrot.slane %v1749, 4
      %v1752 = vshll.u32 %v1691, 16
      %v1754 = vrot.slane %v1752, 5
      %v1755 = vsel %vm649, %v1750, %v1754
      %v1757 = vshrl.u32 %v1692, 16
      %v1759 = vrot.slane %v1757, 4
      %v1760 = vshll.u32 %v1692, 16
      %v1762 = vrot.slane %v1760, 5
      %v1763 = vor.u32 %v1759, %v1762
      %v1764 = vrot.slane %v1763, 4
      %v1766 = vshll.u32 %v1693, 16
      %v1768 = vrot.slane %v1766, 5
      %v1769 = vsel %vm649, %v1764, %v1768
      %v1771 = vshrl.u32 %v1694, 16
      %v1773 = vrot.slane %v1771, 4
      %v1774 = vshll.u32 %v1694, 16
      %v1776 = vrot.slane %v1774, 5
      %v1777 = vor.u32 %v1773, %v1776
      %v1778 = vrot.slane %v1777, 4
      %v1780 = vshll.u32 %v1695, 16
      %v1782 = vrot.slane %v1780, 5
      %v1783 = vsel %vm649, %v1778, %v1782
      %v1785 = vshrl.u32 %v1696, 16
      %v1787 = vrot.slane %v1785, 4
      %v1788 = vshll.u32 %v1696, 16
      %v1790 = vrot.slane %v1788, 5
      %v1791 = vor.u32 %v1787, %v1790
      %v1792 = vrot.slane %v1791, 4
      %v1794 = vshll.u32 %v1697, 16
      %v1796 = vrot.slane %v1794, 5
      %v1797 = vsel %vm649, %v1792, %v1796
      %v1799 = vshrl.u32 %v1698, 16
      %v1801 = vrot.slane %v1799, 4
      %v1802 = vshll.u32 %v1698, 16
      %v1804 = vrot.slane %v1802, 5
      %v1805 = vor.u32 %v1801, %v1804
      %v1806 = vrot.slane %v1805, 4
      %v1808 = vshll.u32 %v1699, 16
      %v1810 = vrot.slane %v1808, 5
      %v1811 = vsel %vm649, %v1806, %v1810
      %s1812 = scalar_lea.vmem %s1, 384
      %v1813 = vld [vmem:[%s1812] sm:$0xf]
      %v1814 = vld [vmem:[%s1812 + $0x4] sm:$0xf]
      %v1815 = vld [vmem:[%s1812 + $0x8] sm:$0xf]
      %v1816 = vld [vmem:[%s1812 + $0xc] sm:$0xf]
      %v1817 = vld [vmem:[%s1812 + $0x10] sm:$0xf]
      %v1818 = vld [vmem:[%s1812 + $0x14] sm:$0xf]
      %v1819 = vld [vmem:[%s1812 + $0x18] sm:$0xf]
      %v1820 = vld [vmem:[%s1812 + $0x1c] sm:$0xf]
      %v1821 = vld [vmem:[%s1812 + $0x20] sm:$0xf]
      %v1822 = vld [vmem:[%s1812 + $0x24] sm:$0xf]
      %v1823 = vld [vmem:[%s1812 + $0x28] sm:$0xf]
      %v1824 = vld [vmem:[%s1812 + $0x2c] sm:$0xf]
      %v1825 = vld [vmem:[%s1812 + $0x30] sm:$0xf]
      %v1826 = vld [vmem:[%s1812 + $0x34] sm:$0xf]
      %v1827 = vld [vmem:[%s1812 + $0x38] sm:$0xf]
      %v1828 = vld [vmem:[%s1812 + $0x3c] sm:$0xf]
      %v1829 = vunpack.c.l.b16 %v1713
      %v1830 = vunpack.c.l.b16 %v1727
      %v1831 = vunpack.c.l.b16 %v1741
      %v1832 = vunpack.c.l.b16 %v1755
      %v1833 = vunpack.c.l.b16 %v1769
      %v1834 = vunpack.c.l.b16 %v1783
      %v1835 = vunpack.c.l.b16 %v1797
      %v1836 = vunpack.c.l.b16 %v1811
      %v1837 = vpack.c.b16 %v1830, %v1829
      %v1838 = vpack.c.b16 %v1832, %v1831
      %v1839 = vpack.c.b16 %v1834, %v1833
      %v1840 = vpack.c.b16 %v1836, %v1835
      %v1861 = vunpack.c.l.b16 %v1813
      %v1862 = vunpack.c.l.b16 %v1814
      %v1863 = vunpack.c.l.b16 %v1815
      %v1864 = vunpack.c.l.b16 %v1816
      %v1865 = vunpack.c.l.b16 %v1817
      %v1866 = vunpack.c.l.b16 %v1818
      %v1867 = vunpack.c.l.b16 %v1819
      %v1868 = vunpack.c.l.b16 %v1820
      %v1869 = vunpack.c.l.b16 %v1821
      %v1870 = vunpack.c.l.b16 %v1822
      %v1871 = vunpack.c.l.b16 %v1823
      %v1872 = vunpack.c.l.b16 %v1824
      %v1873 = vunpack.c.l.b16 %v1825
      %v1874 = vunpack.c.l.b16 %v1826
      %v1875 = vunpack.c.l.b16 %v1827
      %v1876 = vunpack.c.l.b16 %v1828
      %v1877 = vpack.c.b16 %v1862, %v1861
      %v1878 = vpack.c.b16 %v1864, %v1863
      %v1879 = vpack.c.b16 %v1866, %v1865
      %v1880 = vpack.c.b16 %v1868, %v1867
      %v1881 = vpack.c.b16 %v1870, %v1869
      %v1882 = vpack.c.b16 %v1872, %v1871
      %v1883 = vpack.c.b16 %v1874, %v1873
      %v1884 = vpack.c.b16 %v1876, %v1875
      %1893 = vmatprep.subr.bf16.mxu0 0
      %1894 = vmatpush1.bf16.msra.mxu0 %v1877
      %1895 = vmatprep.subr.bf16.mxu0 0
      %1896 = vmatpush1.bf16.msra.mxu0 %v1878
      %1897 = vmatprep.subr.bf16.mxu0 0
      %1898 = vmatpush1.bf16.msra.mxu0 %v1879
      %1899 = vmatprep.subr.bf16.mxu0 0
      %1900 = vmatpush1.bf16.msra.mxu0 %v1880
      %1901 = vmatprep.subr.bf16.mxu0 0
      %1902 = vmatpush1.bf16.msra.mxu0 %v1881
      %1903 = vmatprep.subr.bf16.mxu0 0
      %1904 = vmatpush1.bf16.msra.mxu0 %v1882
      %1905 = vmatprep.subr.bf16.mxu0 0
      %1906 = vmatpush1.bf16.msra.mxu0 %v1883
      %1907 = vmatprep.subr.bf16.mxu0 0
      %1908 = vmatpush1.bf16.msra.mxu0 %v1884
      %1909 = vmatprep.subr.bf16.mxu0 0
      %1910 = vmatpush1.bf16.msra.mxu0 0
      %1911 = vmatprep.subr.bf16.mxu0 0
      %1912 = vmatpush1.bf16.msra.mxu0 0
      %1913 = vmatprep.subr.bf16.mxu0 0
      %1914 = vmatpush1.bf16.msra.mxu0 0
      %1915 = vmatprep.subr.bf16.mxu0 0
      %1916 = vmatpush1.bf16.msra.mxu0 0
      %1917 = vmatprep.subr.bf16.mxu0 0
      %1918 = vmatpush1.bf16.msra.mxu0 0
      %1919 = vmatprep.subr.bf16.mxu0 0
      %1920 = vmatpush1.bf16.msra.mxu0 0
      %1921 = vmatprep.subr.bf16.mxu0 0
      %1922 = vmatpush1.bf16.msra.mxu0 0
      %1923 = vmatprep.subr.bf16.mxu0 0
      %1924 = vmatpush1.bf16.msra.mxu0 0
      %1925 = vmatprep.mubr.bf16.mxu0 0
      %1926 = vmatmul.mubr.bf16.gmra.mrb[0].mxu0 %v1837
      %v1927 = vpop.f32.mrb[0].mxu0
      %v1928 = vadd.f32 0.0, %v1927
      %v1929 = vpop.f32.mrb[0].mxu0
      %v1930 = vpop.f32.mrb[0].mxu0
      %v1931 = vadd.f32 0.0, %v1930
      %v1932 = vpop.f32.mrb[0].mxu0
      %1933 = vmatprep.mubr.bf16.mxu0 0
      %1934 = vmatmul.mubr.bf16.gmra.mrb[0].mxu0 %v1838
      %v1935 = vpop.f32.mrb[0].mxu0
      %v1936 = vadd.f32 0.0, %v1935
      %v1937 = vpop.f32.mrb[0].mxu0
      %v1938 = vpop.f32.mrb[0].mxu0
      %v1939 = vadd.f32 0.0, %v1938
      %v1940 = vpop.f32.mrb[0].mxu0
      %1941 = vmatprep.mubr.bf16.mxu0 0
      %1942 = vmatmul.mubr.bf16.gmra.mrb[0].mxu0 %v1839
      %v1943 = vpop.f32.mrb[0].mxu0
      %v1944 = vadd.f32 0.0, %v1943
      %v1945 = vpop.f32.mrb[0].mxu0
      %v1946 = vpop.f32.mrb[0].mxu0
      %v1947 = vadd.f32 0.0, %v1946
      %v1948 = vpop.f32.mrb[0].mxu0
      %1949 = vmatprep.mubr.bf16.mxu0 0
      %1950 = vmatmul.mubr.bf16.gmra.mrb[0].mxu0 %v1840
      %v1951 = vpop.f32.mrb[0].mxu0
      %v1952 = vadd.f32 0.0, %v1951
      %v1953 = vpop.f32.mrb[0].mxu0
      %v1954 = vpop.f32.mrb[0].mxu0
      %v1955 = vadd.f32 0.0, %v1954
      %v1956 = vpop.f32.mrb[0].mxu0
      %1957 = vdwg.mxu0
      %v1958 = vadd.f32 %v1628, %v1928
      %v1959 = vadd.f32 %v1629, %v1931
      %v1960 = vadd.f32 %v1630, %v1936
      %v1961 = vadd.f32 %v1631, %v1939
      %v1962 = vadd.f32 %v1632, %v1944
      %v1963 = vadd.f32 %v1633, %v1947
      %v1964 = vadd.f32 %v1634, %v1952
      %v1965 = vadd.f32 %v1635, %v1955
      %v1966 = vld [vmem:[%s1441] sm:$0xf]
      %v1967 = vld [vmem:[%s1441 + $0x4] sm:$0x1]
      %v1968 = vld [vmem:[%s1441 + $0x8] sm:$0xf]
      %v1969 = vld [vmem:[%s1441 + $0xc] sm:$0x1]
      %v1970 = vld [vmem:[%s1441 + $0x10] sm:$0xf]
      %v1971 = vld [vmem:[%s1441 + $0x14] sm:$0x1]
      %v1972 = vld [vmem:[%s1441 + $0x18] sm:$0xf]
      %v1973 = vld [vmem:[%s1441 + $0x1c] sm:$0x1]
      %v1974 = vld [vmem:[%s1441 + $0x20] sm:$0xf]
      %v1975 = vld [vmem:[%s1441 + $0x24] sm:$0x1]
      %v1976 = vld [vmem:[%s1441 + $0x28] sm:$0xf]
      %v1977 = vld [vmem:[%s1441 + $0x2c] sm:$0x1]
      %v1978 = vld [vmem:[%s1441 + $0x30] sm:$0xf]
      %v1979 = vld [vmem:[%s1441 + $0x34] sm:$0x1]
      %v1980 = vld [vmem:[%s1441 + $0x38] sm:$0xf]
      %v1981 = vld [vmem:[%s1441 + $0x3c] sm:$0x1]
      %vm1982 = vcmp.gt.bf16.partialorder %v1966, 0
      %vm1983 = vcmp.gt.bf16.partialorder %v1967, 0
      %vm1984 = vcmp.gt.bf16.partialorder %v1968, 0
      %vm1985 = vcmp.gt.bf16.partialorder %v1969, 0
      %vm1986 = vcmp.gt.bf16.partialorder %v1970, 0
      %vm1987 = vcmp.gt.bf16.partialorder %v1971, 0
      %vm1988 = vcmp.gt.bf16.partialorder %v1972, 0
      %vm1989 = vcmp.gt.bf16.partialorder %v1973, 0
      %vm1990 = vcmp.gt.bf16.partialorder %v1974, 0
      %vm1991 = vcmp.gt.bf16.partialorder %v1975, 0
      %vm1992 = vcmp.gt.bf16.partialorder %v1976, 0
      %vm1993 = vcmp.gt.bf16.partialorder %v1977, 0
      %vm1994 = vcmp.gt.bf16.partialorder %v1978, 0
      %vm1995 = vcmp.gt.bf16.partialorder %v1979, 0
      %vm1996 = vcmp.gt.bf16.partialorder %v1980, 0
      %vm1997 = vcmp.gt.bf16.partialorder %v1981, 0
      %v1998 = vmul.bf16 %v1966, 1045249613
      %v1999 = vmul.bf16 %v1967, 1045249613
      %v2000 = vmul.bf16 %v1968, 1045249613
      %v2001 = vmul.bf16 %v1969, 1045249613
      %v2002 = vmul.bf16 %v1970, 1045249613
      %v2003 = vmul.bf16 %v1971, 1045249613
      %v2004 = vmul.bf16 %v1972, 1045249613
      %v2005 = vmul.bf16 %v1973, 1045249613
      %v2006 = vmul.bf16 %v1974, 1045249613
      %v2007 = vmul.bf16 %v1975, 1045249613
      %v2008 = vmul.bf16 %v1976, 1045249613
      %v2009 = vmul.bf16 %v1977, 1045249613
      %v2010 = vmul.bf16 %v1978, 1045249613
      %v2011 = vmul.bf16 %v1979, 1045249613
      %v2012 = vmul.bf16 %v1980, 1045249613
      %v2013 = vmul.bf16 %v1981, 1045249613
      %v2014 = vsel %vm1982, %v1966, %v1998
      %v2015 = vsel %vm1983, %v1967, %v1999
      %v2016 = vsel %vm1984, %v1968, %v2000
      %v2017 = vsel %vm1985, %v1969, %v2001
      %v2018 = vsel %vm1986, %v1970, %v2002
      %v2019 = vsel %vm1987, %v1971, %v2003
      %v2020 = vsel %vm1988, %v1972, %v2004
      %v2021 = vsel %vm1989, %v1973, %v2005
      %v2022 = vsel %vm1990, %v1974, %v2006
      %v2023 = vsel %vm1991, %v1975, %v2007
      %v2024 = vsel %vm1992, %v1976, %v2008
      %v2025 = vsel %vm1993, %v1977, %v2009
      %v2026 = vsel %vm1994, %v1978, %v2010
      %v2027 = vsel %vm1995, %v1979, %v2011
      %v2028 = vsel %vm1996, %v1980, %v2012
      %v2029 = vsel %vm1997, %v1981, %v2013
      %v2031 = vshrl.u32 %v2014, 16
      %v2033 = vrot.slane %v2031, 4
      %v2034 = vshll.u32 %v2014, 16
      %v2036 = vrot.slane %v2034, 5
      %v2037 = vor.u32 %v2033, %v2036
      %v2038 = vrot.slane %v2037, 4
      %v2040 = vshll.u32 %v2015, 16
      %v2042 = vrot.slane %v2040, 5
      %v2043 = vsel %vm649, %v2038, %v2042
      %v2045 = vshrl.u32 %v2016, 16
      %v2047 = vrot.slane %v2045, 4
      %v2048 = vshll.u32 %v2016, 16
      %v2050 = vrot.slane %v2048, 5
      %v2051 = vor.u32 %v2047, %v2050
      %v2052 = vrot.slane %v2051, 4
      %v2054 = vshll.u32 %v2017, 16
      %v2056 = vrot.slane %v2054, 5
      %v2057 = vsel %vm649, %v2052, %v2056
      %v2059 = vshrl.u32 %v2018, 16
      %v2061 = vrot.slane %v2059, 4
      %v2062 = vshll.u32 %v2018, 16
      %v2064 = vrot.slane %v2062, 5
      %v2065 = vor.u32 %v2061, %v2064
      %v2066 = vrot.slane %v2065, 4
      %v2068 = vshll.u32 %v2019, 16
      %v2070 = vrot.slane %v2068, 5
      %v2071 = vsel %vm649, %v2066, %v2070
      %v2073 = vshrl.u32 %v2020, 16
      %v2075 = vrot.slane %v2073, 4
      %v2076 = vshll.u32 %v2020, 16
      %v2078 = vrot.slane %v2076, 5
      %v2079 = vor.u32 %v2075, %v2078
      %v2080 = vrot.slane %v2079, 4
      %v2082 = vshll.u32 %v2021, 16
      %v2084 = vrot.slane %v2082, 5
      %v2085 = vsel %vm649, %v2080, %v2084
      %v2087 = vshrl.u32 %v2022, 16
      %v2089 = vrot.slane %v2087, 4
      %v2090 = vshll.u32 %v2022, 16
      %v2092 = vrot.slane %v2090, 5
      %v2093 = vor.u32 %v2089, %v2092
      %v2094 = vrot.slane %v2093, 4
      %v2096 = vshll.u32 %v2023, 16
      %v2098 = vrot.slane %v2096, 5
      %v2099 = vsel %vm649, %v2094, %v2098
      %v2101 = vshrl.u32 %v2024, 16
      %v2103 = vrot.slane %v2101, 4
      %v2104 = vshll.u32 %v2024, 16
      %v2106 = vrot.slane %v2104, 5
      %v2107 = vor.u32 %v2103, %v2106
      %v2108 = vrot.slane %v2107, 4
      %v2110 = vshll.u32 %v2025, 16
      %v2112 = vrot.slane %v2110, 5
      %v2113 = vsel %vm649, %v2108, %v2112
      %v2115 = vshrl.u32 %v2026, 16
      %v2117 = vrot.slane %v2115, 4
      %v2118 = vshll.u32 %v2026, 16
      %v2120 = vrot.slane %v2118, 5
      %v2121 = vor.u32 %v2117, %v2120
      %v2122 = vrot.slane %v2121, 4
      %v2124 = vshll.u32 %v2027, 16
      %v2126 = vrot.slane %v2124, 5
      %v2127 = vsel %vm649, %v2122, %v2126
      %v2129 = vshrl.u32 %v2028, 16
      %v2131 = vrot.slane %v2129, 4
      %v2132 = vshll.u32 %v2028, 16
      %v2134 = vrot.slane %v2132, 5
      %v2135 = vor.u32 %v2131, %v2134
      %v2136 = vrot.slane %v2135, 4
      %v2138 = vshll.u32 %v2029, 16
      %v2140 = vrot.slane %v2138, 5
      %v2141 = vsel %vm649, %v2136, %v2140
      %s2142 = scalar_lea.vmem %s1, 448
      %v2143 = vld [vmem:[%s2142] sm:$0xf]
      %v2144 = vld [vmem:[%s2142 + $0x4] sm:$0xf]
      %v2145 = vld [vmem:[%s2142 + $0x8] sm:$0xf]
      %v2146 = vld [vmem:[%s2142 + $0xc] sm:$0xf]
      %v2147 = vld [vmem:[%s2142 + $0x10] sm:$0xf]
      %v2148 = vld [vmem:[%s2142 + $0x14] sm:$0xf]
      %v2149 = vld [vmem:[%s2142 + $0x18] sm:$0xf]
      %v2150 = vld [vmem:[%s2142 + $0x1c] sm:$0xf]
      %v2151 = vld [vmem:[%s2142 + $0x20] sm:$0xf]
      %v2152 = vld [vmem:[%s2142 + $0x24] sm:$0xf]
      %v2153 = vld [vmem:[%s2142 + $0x28] sm:$0xf]
      %v2154 = vld [vmem:[%s2142 + $0x2c] sm:$0xf]
      %v2155 = vld [vmem:[%s2142 + $0x30] sm:$0xf]
      %v2156 = vld [vmem:[%s2142 + $0x34] sm:$0xf]
      %v2157 = vld [vmem:[%s2142 + $0x38] sm:$0xf]
      %v2158 = vld [vmem:[%s2142 + $0x3c] sm:$0xf]
      %v2159 = vunpack.c.l.b16 %v2043
      %v2160 = vunpack.c.l.b16 %v2057
      %v2161 = vunpack.c.l.b16 %v2071
      %v2162 = vunpack.c.l.b16 %v2085
      %v2163 = vunpack.c.l.b16 %v2099
      %v2164 = vunpack.c.l.b16 %v2113
      %v2165 = vunpack.c.l.b16 %v2127
      %v2166 = vunpack.c.l.b16 %v2141
      %v2167 = vpack.c.b16 %v2160, %v2159
      %v2168 = vpack.c.b16 %v2162, %v2161
      %v2169 = vpack.c.b16 %v2164, %v2163
      %v2170 = vpack.c.b16 %v2166, %v2165
      %v2191 = vunpack.c.l.b16 %v2143
      %v2192 = vunpack.c.l.b16 %v2144
      %v2193 = vunpack.c.l.b16 %v2145
      %v2194 = vunpack.c.l.b16 %v2146
      %v2195 = vunpack.c.l.b16 %v2147
      %v2196 = vunpack.c.l.b16 %v2148
      %v2197 = vunpack.c.l.b16 %v2149
      %v2198 = vunpack.c.l.b16 %v2150
      %v2199 = vunpack.c.l.b16 %v2151
      %v2200 = vunpack.c.l.b16 %v2152
      %v2201 = vunpack.c.l.b16 %v2153
      %v2202 = vunpack.c.l.b16 %v2154
      %v2203 = vunpack.c.l.b16 %v2155
      %v2204 = vunpack.c.l.b16 %v2156
      %v2205 = vunpack.c.l.b16 %v2157
      %v2206 = vunpack.c.l.b16 %v2158
      %v2207 = vpack.c.b16 %v2192, %v2191
      %v2208 = vpack.c.b16 %v2194, %v2193
      %v2209 = vpack.c.b16 %v2196, %v2195
      %v2210 = vpack.c.b16 %v2198, %v2197
      %v2211 = vpack.c.b16 %v2200, %v2199
      %v2212 = vpack.c.b16 %v2202, %v2201
      %v2213 = vpack.c.b16 %v2204, %v2203
      %v2214 = vpack.c.b16 %v2206, %v2205
      %2223 = vmatprep.subr.bf16.mxu0 0
      %2224 = vmatpush1.bf16.msra.mxu0 %v2207
      %2225 = vmatprep.subr.bf16.mxu0 0
      %2226 = vmatpush1.bf16.msra.mxu0 %v2208
      %2227 = vmatprep.subr.bf16.mxu0 0
      %2228 = vmatpush1.bf16.msra.mxu0 %v2209
      %2229 = vmatprep.subr.bf16.mxu0 0
      %2230 = vmatpush1.bf16.msra.mxu0 %v2210
      %2231 = vmatprep.subr.bf16.mxu0 0
      %2232 = vmatpush1.bf16.msra.mxu0 %v2211
      %2233 = vmatprep.subr.bf16.mxu0 0
      %2234 = vmatpush1.bf16.msra.mxu0 %v2212
      %2235 = vmatprep.subr.bf16.mxu0 0
      %2236 = vmatpush1.bf16.msra.mxu0 %v2213
      %2237 = vmatprep.subr.bf16.mxu0 0
      %2238 = vmatpush1.bf16.msra.mxu0 %v2214
      %2239 = vmatprep.subr.bf16.mxu0 0
      %2240 = vmatpush1.bf16.msra.mxu0 0
      %2241 = vmatprep.subr.bf16.mxu0 0
      %2242 = vmatpush1.bf16.msra.mxu0 0
      %2243 = vmatprep.subr.bf16.mxu0 0
      %2244 = vmatpush1.bf16.msra.mxu0 0
      %2245 = vmatprep.subr.bf16.mxu0 0
      %2246 = vmatpush1.bf16.msra.mxu0 0
      %2247 = vmatprep.subr.bf16.mxu0 0
      %2248 = vmatpush1.bf16.msra.mxu0 0
      %2249 = vmatprep.subr.bf16.mxu0 0
      %2250 = vmatpush1.bf16.msra.mxu0 0
      %2251 = vmatprep.subr.bf16.mxu0 0
      %2252 = vmatpush1.bf16.msra.mxu0 0
      %2253 = vmatprep.subr.bf16.mxu0 0
      %2254 = vmatpush1.bf16.msra.mxu0 0
      %2255 = vmatprep.mubr.bf16.mxu0 0
      %2256 = vmatmul.mubr.bf16.gmra.mrb[0].mxu0 %v2167
      %v2257 = vpop.f32.mrb[0].mxu0
      %v2258 = vadd.f32 0.0, %v2257
      %v2259 = vpop.f32.mrb[0].mxu0
      %v2260 = vpop.f32.mrb[0].mxu0
      %v2261 = vadd.f32 0.0, %v2260
      %v2262 = vpop.f32.mrb[0].mxu0
      %2263 = vmatprep.mubr.bf16.mxu0 0
      %2264 = vmatmul.mubr.bf16.gmra.mrb[0].mxu0 %v2168
      %v2265 = vpop.f32.mrb[0].mxu0
      %v2266 = vadd.f32 0.0, %v2265
      %v2267 = vpop.f32.mrb[0].mxu0
      %v2268 = vpop.f32.mrb[0].mxu0
      %v2269 = vadd.f32 0.0, %v2268
      %v2270 = vpop.f32.mrb[0].mxu0
      %2271 = vmatprep.mubr.bf16.mxu0 0
      %2272 = vmatmul.mubr.bf16.gmra.mrb[0].mxu0 %v2169
      %v2273 = vpop.f32.mrb[0].mxu0
      %v2274 = vadd.f32 0.0, %v2273
      %v2275 = vpop.f32.mrb[0].mxu0
      %v2276 = vpop.f32.mrb[0].mxu0
      %v2277 = vadd.f32 0.0, %v2276
      %v2278 = vpop.f32.mrb[0].mxu0
      %2279 = vmatprep.mubr.bf16.mxu0 0
      %2280 = vmatmul.mubr.bf16.gmra.mrb[0].mxu0 %v2170
      %v2281 = vpop.f32.mrb[0].mxu0
      %v2282 = vadd.f32 0.0, %v2281
      %v2283 = vpop.f32.mrb[0].mxu0
      %v2284 = vpop.f32.mrb[0].mxu0
      %v2285 = vadd.f32 0.0, %v2284
      %v2286 = vpop.f32.mrb[0].mxu0
      %2287 = vdwg.mxu0
      %v2288 = vadd.f32 %v1958, %v2258
      %v2289 = vadd.f32 %v1959, %v2261
      %v2290 = vadd.f32 %v1960, %v2266
      %v2291 = vadd.f32 %v1961, %v2269
      %v2292 = vadd.f32 %v1962, %v2274
      %v2293 = vadd.f32 %v1963, %v2277
      %v2294 = vadd.f32 %v1964, %v2282
      %v2295 = vadd.f32 %v1965, %v2285
      %s2296 = scalar_lea.vmem %s199, 256
      %v2297 = vld [vmem:[%s2296] sm:$0xf]
      %v2298 = vld [vmem:[%s2296 + $0x8] sm:$0xf]
      %v2299 = vld [vmem:[%s2296 + $0x10] sm:$0xf]
      %v2300 = vld [vmem:[%s2296 + $0x18] sm:$0xf]
      %v2301 = vld [vmem:[%s2296 + $0x20] sm:$0xf]
      %v2302 = vld [vmem:[%s2296 + $0x28] sm:$0xf]
      %v2303 = vld [vmem:[%s2296 + $0x30] sm:$0xf]
      %v2304 = vld [vmem:[%s2296 + $0x38] sm:$0xf]
      %vm2305 = vcmp.gt.bf16.partialorder %v2297, 0
      %vm2306 = vcmp.gt.bf16.partialorder %v2298, 0
      %vm2307 = vcmp.gt.bf16.partialorder %v2299, 0
      %vm2308 = vcmp.gt.bf16.partialorder %v2300, 0
      %vm2309 = vcmp.gt.bf16.partialorder %v2301, 0
      %vm2310 = vcmp.gt.bf16.partialorder %v2302, 0
      %vm2311 = vcmp.gt.bf16.partialorder %v2303, 0
      %vm2312 = vcmp.gt.bf16.partialorder %v2304, 0
      %v2313 = vmul.bf16 %v2297, 1045249613
      %v2314 = vmul.bf16 %v2298, 1045249613
      %v2315 = vmul.bf16 %v2299, 1045249613
      %v2316 = vmul.bf16 %v2300, 1045249613
      %v2317 = vmul.bf16 %v2301, 1045249613
      %v2318 = vmul.bf16 %v2302, 1045249613
      %v2319 = vmul.bf16 %v2303, 1045249613
      %v2320 = vmul.bf16 %v2304, 1045249613
      %v2321 = vsel %vm2305, %v2297, %v2313
      %v2322 = vsel %vm2306, %v2298, %v2314
      %v2323 = vsel %vm2307, %v2299, %v2315
      %v2324 = vsel %vm2308, %v2300, %v2316
      %v2325 = vsel %vm2309, %v2301, %v2317
      %v2326 = vsel %vm2310, %v2302, %v2318
      %v2327 = vsel %vm2311, %v2303, %v2319
      %v2328 = vsel %vm2312, %v2304, %v2320
      %s2329 = scalar_lea.vmem %s1, 512
      %v2330 = vld [vmem:[%s2329] sm:$0xf]
      %v2331 = vld [vmem:[%s2329 + $0x4] sm:$0xf]
      %v2332 = vld [vmem:[%s2329 + $0x8] sm:$0xf]
      %v2333 = vld [vmem:[%s2329 + $0xc] sm:$0xf]
      %v2334 = vld [vmem:[%s2329 + $0x10] sm:$0xf]
      %v2335 = vld [vmem:[%s2329 + $0x14] sm:$0xf]
      %v2336 = vld [vmem:[%s2329 + $0x18] sm:$0xf]
      %v2337 = vld [vmem:[%s2329 + $0x1c] sm:$0xf]
      %v2338 = vld [vmem:[%s2329 + $0x20] sm:$0xf]
      %v2339 = vld [vmem:[%s2329 + $0x24] sm:$0xf]
      %v2340 = vld [vmem:[%s2329 + $0x28] sm:$0xf]
      %v2341 = vld [vmem:[%s2329 + $0x2c] sm:$0xf]
      %v2342 = vld [vmem:[%s2329 + $0x30] sm:$0xf]
      %v2343 = vld [vmem:[%s2329 + $0x34] sm:$0xf]
      %v2344 = vld [vmem:[%s2329 + $0x38] sm:$0xf]
      %v2345 = vld [vmem:[%s2329 + $0x3c] sm:$0xf]
      %v2354 = vunpack.c.l.b16 %v2321
      %v2355 = vunpack.c.l.b16 %v2322
      %v2356 = vunpack.c.l.b16 %v2323
      %v2357 = vunpack.c.l.b16 %v2324
      %v2358 = vunpack.c.l.b16 %v2325
      %v2359 = vunpack.c.l.b16 %v2326
      %v2360 = vunpack.c.l.b16 %v2327
      %v2361 = vunpack.c.l.b16 %v2328
      %v2362 = vpack.c.b16 %v2355, %v2354
      %v2363 = vpack.c.b16 %v2357, %v2356
      %v2364 = vpack.c.b16 %v2359, %v2358
      %v2365 = vpack.c.b16 %v2361, %v2360
      %v2386 = vunpack.c.l.b16 %v2330
      %v2387 = vunpack.c.l.b16 %v2331
      %v2388 = vunpack.c.l.b16 %v2332
      %v2389 = vunpack.c.l.b16 %v2333
      %v2390 = vunpack.c.l.b16 %v2334
      %v2391 = vunpack.c.l.b16 %v2335
      %v2392 = vunpack.c.l.b16 %v2336
      %v2393 = vunpack.c.l.b16 %v2337
      %v2394 = vunpack.c.l.b16 %v2338
      %v2395 = vunpack.c.l.b16 %v2339
      %v2396 = vunpack.c.l.b16 %v2340
      %v2397 = vunpack.c.l.b16 %v2341
      %v2398 = vunpack.c.l.b16 %v2342
      %v2399 = vunpack.c.l.b16 %v2343
      %v2400 = vunpack.c.l.b16 %v2344
      %v2401 = vunpack.c.l.b16 %v2345
      %v2402 = vpack.c.b16 %v2387, %v2386
      %v2403 = vpack.c.b16 %v2389, %v2388
      %v2404 = vpack.c.b16 %v2391, %v2390
      %v2405 = vpack.c.b16 %v2393, %v2392
      %v2406 = vpack.c.b16 %v2395, %v2394
      %v2407 = vpack.c.b16 %v2397, %v2396
      %v2408 = vpack.c.b16 %v2399, %v2398
      %v2409 = vpack.c.b16 %v2401, %v2400
      %2418 = vmatprep.subr.bf16.mxu0 0
      %2419 = vmatpush1.bf16.msra.mxu0 %v2402
      %2420 = vmatprep.subr.bf16.mxu0 0
      %2421 = vmatpush1.bf16.msra.mxu0 %v2403
      %2422 = vmatprep.subr.bf16.mxu0 0
      %2423 = vmatpush1.bf16.msra.mxu0 %v2404
      %2424 = vmatprep.subr.bf16.mxu0 0
      %2425 = vmatpush1.bf16.msra.mxu0 %v2405
      %2426 = vmatprep.subr.bf16.mxu0 0
      %2427 = vmatpush1.bf16.msra.mxu0 %v2406
      %2428 = vmatprep.subr.bf16.mxu0 0
      %2429 = vmatpush1.bf16.msra.mxu0 %v2407
      %2430 = vmatprep.subr.bf16.mxu0 0
      %2431 = vmatpush1.bf16.msra.mxu0 %v2408
      %2432 = vmatprep.subr.bf16.mxu0 0
      %2433 = vmatpush1.bf16.msra.mxu0 %v2409
      %2434 = vmatprep.subr.bf16.mxu0 0
      %2435 = vmatpush1.bf16.msra.mxu0 0
      %2436 = vmatprep.subr.bf16.mxu0 0
      %2437 = vmatpush1.bf16.msra.mxu0 0
      %2438 = vmatprep.subr.bf16.mxu0 0
      %2439 = vmatpush1.bf16.msra.mxu0 0
      %2440 = vmatprep.subr.bf16.mxu0 0
      %2441 = vmatpush1.bf16.msra.mxu0 0
      %2442 = vmatprep.subr.bf16.mxu0 0
      %2443 = vmatpush1.bf16.msra.mxu0 0
      %2444 = vmatprep.subr.bf16.mxu0 0
      %2445 = vmatpush1.bf16.msra.mxu0 0
      %2446 = vmatprep.subr.bf16.mxu0 0
      %2447 = vmatpush1.bf16.msra.mxu0 0
      %2448 = vmatprep.subr.bf16.mxu0 0
      %2449 = vmatpush1.bf16.msra.mxu0 0
      %2450 = vmatprep.mubr.bf16.mxu0 0
      %2451 = vmatmul.mubr.bf16.gmra.mrb[0].mxu0 %v2362
      %v2452 = vpop.f32.mrb[0].mxu0
      %v2453 = vadd.f32 0.0, %v2452
      %v2454 = vpop.f32.mrb[0].mxu0
      %v2455 = vpop.f32.mrb[0].mxu0
      %v2456 = vadd.f32 0.0, %v2455
      %v2457 = vpop.f32.mrb[0].mxu0
      %2458 = vmatprep.mubr.bf16.mxu0 0
      %2459 = vmatmul.mubr.bf16.gmra.mrb[0].mxu0 %v2363
      %v2460 = vpop.f32.mrb[0].mxu0
      %v2461 = vadd.f32 0.0, %v2460
      %v2462 = vpop.f32.mrb[0].mxu0
      %v2463 = vpop.f32.mrb[0].mxu0
      %v2464 = vadd.f32 0.0, %v2463
      %v2465 = vpop.f32.mrb[0].mxu0
      %2466 = vmatprep.mubr.bf16.mxu0 0
      %2467 = vmatmul.mubr.bf16.gmra.mrb[0].mxu0 %v2364
      %v2468 = vpop.f32.mrb[0].mxu0
      %v2469 = vadd.f32 0.0, %v2468
      %v2470 = vpop.f32.mrb[0].mxu0
      %v2471 = vpop.f32.mrb[0].mxu0
      %v2472 = vadd.f32 0.0, %v2471
      %v2473 = vpop.f32.mrb[0].mxu0
      %2474 = vmatprep.mubr.bf16.mxu0 0
      %2475 = vmatmul.mubr.bf16.gmra.mrb[0].mxu0 %v2365
      %v2476 = vpop.f32.mrb[0].mxu0
      %v2477 = vadd.f32 0.0, %v2476
      %v2478 = vpop.f32.mrb[0].mxu0
      %v2479 = vpop.f32.mrb[0].mxu0
      %v2480 = vadd.f32 0.0, %v2479
      %v2481 = vpop.f32.mrb[0].mxu0
      %2482 = vdwg.mxu0
      %v2483 = vadd.f32 %v2288, %v2453
      %v2484 = vadd.f32 %v2289, %v2456
      %v2485 = vadd.f32 %v2290, %v2461
      %v2486 = vadd.f32 %v2291, %v2464
      %v2487 = vadd.f32 %v2292, %v2469
      %v2488 = vadd.f32 %v2293, %v2472
      %v2489 = vadd.f32 %v2294, %v2477
      %v2490 = vadd.f32 %v2295, %v2480
      %s2491 = scalar_lea.vmem %s199, 320
      %v2492 = vld [vmem:[%s2491] sm:$0xf]
      %v2493 = vld [vmem:[%s2491 + $0x8] sm:$0xf]
      %v2494 = vld [vmem:[%s2491 + $0x10] sm:$0xf]
      %v2495 = vld [vmem:[%s2491 + $0x18] sm:$0xf]
      %v2496 = vld [vmem:[%s2491 + $0x20] sm:$0xf]
      %v2497 = vld [vmem:[%s2491 + $0x28] sm:$0xf]
      %v2498 = vld [vmem:[%s2491 + $0x30] sm:$0xf]
      %v2499 = vld [vmem:[%s2491 + $0x38] sm:$0xf]
      %vm2500 = vcmp.gt.bf16.partialorder %v2492, 0
      %vm2501 = vcmp.gt.bf16.partialorder %v2493, 0
      %vm2502 = vcmp.gt.bf16.partialorder %v2494, 0
      %vm2503 = vcmp.gt.bf16.partialorder %v2495, 0
      %vm2504 = vcmp.gt.bf16.partialorder %v2496, 0
      %vm2505 = vcmp.gt.bf16.partialorder %v2497, 0
      %vm2506 = vcmp.gt.bf16.partialorder %v2498, 0
      %vm2507 = vcmp.gt.bf16.partialorder %v2499, 0
      %v2508 = vmul.bf16 %v2492, 1045249613
      %v2509 = vmul.bf16 %v2493, 1045249613
      %v2510 = vmul.bf16 %v2494, 1045249613
      %v2511 = vmul.bf16 %v2495, 1045249613
      %v2512 = vmul.bf16 %v2496, 1045249613
      %v2513 = vmul.bf16 %v2497, 1045249613
      %v2514 = vmul.bf16 %v2498, 1045249613
      %v2515 = vmul.bf16 %v2499, 1045249613
      %v2516 = vsel %vm2500, %v2492, %v2508
      %v2517 = vsel %vm2501, %v2493, %v2509
      %v2518 = vsel %vm2502, %v2494, %v2510
      %v2519 = vsel %vm2503, %v2495, %v2511
      %v2520 = vsel %vm2504, %v2496, %v2512
      %v2521 = vsel %vm2505, %v2497, %v2513
      %v2522 = vsel %vm2506, %v2498, %v2514
      %v2523 = vsel %vm2507, %v2499, %v2515
      %s2524 = scalar_lea.vmem %s1, 576
      %v2525 = vld [vmem:[%s2524] sm:$0xf]
      %v2526 = vld [vmem:[%s2524 + $0x4] sm:$0xf]
      %v2527 = vld [vmem:[%s2524 + $0x8] sm:$0xf]
      %v2528 = vld [vmem:[%s2524 + $0xc] sm:$0xf]
      %v2529 = vld [vmem:[%s2524 + $0x10] sm:$0xf]
      %v2530 = vld [vmem:[%s2524 + $0x14] sm:$0xf]
      %v2531 = vld [vmem:[%s2524 + $0x18] sm:$0xf]
      %v2532 = vld [vmem:[%s2524 + $0x1c] sm:$0xf]
      %v2533 = vld [vmem:[%s2524 + $0x20] sm:$0xf]
      %v2534 = vld [vmem:[%s2524 + $0x24] sm:$0xf]
      %v2535 = vld [vmem:[%s2524 + $0x28] sm:$0xf]
      %v2536 = vld [vmem:[%s2524 + $0x2c] sm:$0xf]
      %v2537 = vld [vmem:[%s2524 + $0x30] sm:$0xf]
      %v2538 = vld [vmem:[%s2524 + $0x34] sm:$0xf]
      %v2539 = vld [vmem:[%s2524 + $0x38] sm:$0xf]
      %v2540 = vld [vmem:[%s2524 + $0x3c] sm:$0xf]
      %v2549 = vunpack.c.l.b16 %v2516
      %v2550 = vunpack.c.l.b16 %v2517
      %v2551 = vunpack.c.l.b16 %v2518
      %v2552 = vunpack.c.l.b16 %v2519
      %v2553 = vunpack.c.l.b16 %v2520
      %v2554 = vunpack.c.l.b16 %v2521
      %v2555 = vunpack.c.l.b16 %v2522
      %v2556 = vunpack.c.l.b16 %v2523
      %v2557 = vpack.c.b16 %v2550, %v2549
      %v2558 = vpack.c.b16 %v2552, %v2551
      %v2559 = vpack.c.b16 %v2554, %v2553
      %v2560 = vpack.c.b16 %v2556, %v2555
      %v2581 = vunpack.c.l.b16 %v2525
      %v2582 = vunpack.c.l.b16 %v2526
      %v2583 = vunpack.c.l.b16 %v2527
      %v2584 = vunpack.c.l.b16 %v2528
      %v2585 = vunpack.c.l.b16 %v2529
      %v2586 = vunpack.c.l.b16 %v2530
      %v2587 = vunpack.c.l.b16 %v2531
      %v2588 = vunpack.c.l.b16 %v2532
      %v2589 = vunpack.c.l.b16 %v2533
      %v2590 = vunpack.c.l.b16 %v2534
      %v2591 = vunpack.c.l.b16 %v2535
      %v2592 = vunpack.c.l.b16 %v2536
      %v2593 = vunpack.c.l.b16 %v2537
      %v2594 = vunpack.c.l.b16 %v2538
      %v2595 = vunpack.c.l.b16 %v2539
      %v2596 = vunpack.c.l.b16 %v2540
      %v2597 = vpack.c.b16 %v2582, %v2581
      %v2598 = vpack.c.b16 %v2584, %v2583
      %v2599 = vpack.c.b16 %v2586, %v2585
      %v2600 = vpack.c.b16 %v2588, %v2587
      %v2601 = vpack.c.b16 %v2590, %v2589
      %v2602 = vpack.c.b16 %v2592, %v2591
      %v2603 = vpack.c.b16 %v2594, %v2593
      %v2604 = vpack.c.b16 %v2596, %v2595
      %2613 = vmatprep.subr.bf16.mxu0 0
      %2614 = vmatpush1.bf16.msra.mxu0 %v2597
      %2615 = vmatprep.subr.bf16.mxu0 0
      %2616 = vmatpush1.bf16.msra.mxu0 %v2598
      %2617 = vmatprep.subr.bf16.mxu0 0
      %2618 = vmatpush1.bf16.msra.mxu0 %v2599
      %2619 = vmatprep.subr.bf16.mxu0 0
      %2620 = vmatpush1.bf16.msra.mxu0 %v2600
      %2621 = vmatprep.subr.bf16.mxu0 0
      %2622 = vmatpush1.bf16.msra.mxu0 %v2601
      %2623 = vmatprep.subr.bf16.mxu0 0
      %2624 = vmatpush1.bf16.msra.mxu0 %v2602
      %2625 = vmatprep.subr.bf16.mxu0 0
      %2626 = vmatpush1.bf16.msra.mxu0 %v2603
      %2627 = vmatprep.subr.bf16.mxu0 0
      %2628 = vmatpush1.bf16.msra.mxu0 %v2604
      %2629 = vmatprep.subr.bf16.mxu0 0
      %2630 = vmatpush1.bf16.msra.mxu0 0
      %2631 = vmatprep.subr.bf16.mxu0 0
      %2632 = vmatpush1.bf16.msra.mxu0 0
      %2633 = vmatprep.subr.bf16.mxu0 0
      %2634 = vmatpush1.bf16.msra.mxu0 0
      %2635 = vmatprep.subr.bf16.mxu0 0
      %2636 = vmatpush1.bf16.msra.mxu0 0
      %2637 = vmatprep.subr.bf16.mxu0 0
      %2638 = vmatpush1.bf16.msra.mxu0 0
      %2639 = vmatprep.subr.bf16.mxu0 0
      %2640 = vmatpush1.bf16.msra.mxu0 0
      %2641 = vmatprep.subr.bf16.mxu0 0
      %2642 = vmatpush1.bf16.msra.mxu0 0
      %2643 = vmatprep.subr.bf16.mxu0 0
      %2644 = vmatpush1.bf16.msra.mxu0 0
      %2645 = vmatprep.mubr.bf16.mxu0 0
      %2646 = vmatmul.mubr.bf16.gmra.mrb[0].mxu0 %v2557
      %v2647 = vpop.f32.mrb[0].mxu0
      %v2648 = vadd.f32 0.0, %v2647
      %v2649 = vpop.f32.mrb[0].mxu0
      %v2650 = vpop.f32.mrb[0].mxu0
      %v2651 = vadd.f32 0.0, %v2650
      %v2652 = vpop.f32.mrb[0].mxu0
      %2653 = vmatprep.mubr.bf16.mxu0 0
      %2654 = vmatmul.mubr.bf16.gmra.mrb[0].mxu0 %v2558
      %v2655 = vpop.f32.mrb[0].mxu0
      %v2656 = vadd.f32 0.0, %v2655
      %v2657 = vpop.f32.mrb[0].mxu0
      %v2658 = vpop.f32.mrb[0].mxu0
      %v2659 = vadd.f32 0.0, %v2658
      %v2660 = vpop.f32.mrb[0].mxu0
      %2661 = vmatprep.mubr.bf16.mxu0 0
      %2662 = vmatmul.mubr.bf16.gmra.mrb[0].mxu0 %v2559
      %v2663 = vpop.f32.mrb[0].mxu0
      %v2664 = vadd.f32 0.0, %v2663
      %v2665 = vpop.f32.mrb[0].mxu0
      %v2666 = vpop.f32.mrb[0].mxu0
      %v2667 = vadd.f32 0.0, %v2666
      %v2668 = vpop.f32.mrb[0].mxu0
      %2669 = vmatprep.mubr.bf16.mxu0 0
      %2670 = vmatmul.mubr.bf16.gmra.mrb[0].mxu0 %v2560
      %v2671 = vpop.f32.mrb[0].mxu0
      %v2672 = vadd.f32 0.0, %v2671
      %v2673 = vpop.f32.mrb[0].mxu0
      %v2674 = vpop.f32.mrb[0].mxu0
      %v2675 = vadd.f32 0.0, %v2674
      %v2676 = vpop.f32.mrb[0].mxu0
      %2677 = vdwg.mxu0
      %v2678 = vadd.f32 %v2483, %v2648
      %v2679 = vadd.f32 %v2484, %v2651
      %v2680 = vadd.f32 %v2485, %v2656
      %v2681 = vadd.f32 %v2486, %v2659
      %v2682 = vadd.f32 %v2487, %v2664
      %v2683 = vadd.f32 %v2488, %v2667
      %v2684 = vadd.f32 %v2489, %v2672
      %v2685 = vadd.f32 %v2490, %v2675
      %v2686 = vld [vmem:[%s2296] sm:$0xf]
      %v2687 = vld [vmem:[%s2296 + $0x4] sm:$0x1]
      %v2688 = vld [vmem:[%s2296 + $0x8] sm:$0xf]
      %v2689 = vld [vmem:[%s2296 + $0xc] sm:$0x1]
      %v2690 = vld [vmem:[%s2296 + $0x10] sm:$0xf]
      %v2691 = vld [vmem:[%s2296 + $0x14] sm:$0x1]
      %v2692 = vld [vmem:[%s2296 + $0x18] sm:$0xf]
      %v2693 = vld [vmem:[%s2296 + $0x1c] sm:$0x1]
      %v2694 = vld [vmem:[%s2296 + $0x20] sm:$0xf]
      %v2695 = vld [vmem:[%s2296 + $0x24] sm:$0x1]
      %v2696 = vld [vmem:[%s2296 + $0x28] sm:$0xf]
      %v2697 = vld [vmem:[%s2296 + $0x2c] sm:$0x1]
      %v2698 = vld [vmem:[%s2296 + $0x30] sm:$0xf]
      %v2699 = vld [vmem:[%s2296 + $0x34] sm:$0x1]
      %v2700 = vld [vmem:[%s2296 + $0x38] sm:$0xf]
      %v2701 = vld [vmem:[%s2296 + $0x3c] sm:$0x1]
      %vm2702 = vcmp.gt.bf16.partialorder %v2686, 0
      %vm2703 = vcmp.gt.bf16.partialorder %v2687, 0
      %vm2704 = vcmp.gt.bf16.partialorder %v2688, 0
      %vm2705 = vcmp.gt.bf16.partialorder %v2689, 0
      %vm2706 = vcmp.gt.bf16.partialorder %v2690, 0
      %vm2707 = vcmp.gt.bf16.partialorder %v2691, 0
      %vm2708 = vcmp.gt.bf16.partialorder %v2692, 0
      %vm2709 = vcmp.gt.bf16.partialorder %v2693, 0
      %vm2710 = vcmp.gt.bf16.partialorder %v2694, 0
      %vm2711 = vcmp.gt.bf16.partialorder %v2695, 0
      %vm2712 = vcmp.gt.bf16.partialorder %v2696, 0
      %vm2713 = vcmp.gt.bf16.partialorder %v2697, 0
      %vm2714 = vcmp.gt.bf16.partialorder %v2698, 0
      %vm2715 = vcmp.gt.bf16.partialorder %v2699, 0
      %vm2716 = vcmp.gt.bf16.partialorder %v2700, 0
      %vm2717 = vcmp.gt.bf16.partialorder %v2701, 0
      %v2718 = vmul.bf16 %v2686, 1045249613
      %v2719 = vmul.bf16 %v2687, 1045249613
      %v2720 = vmul.bf16 %v2688, 1045249613
      %v2721 = vmul.bf16 %v2689, 1045249613
      %v2722 = vmul.bf16 %v2690, 1045249613
      %v2723 = vmul.bf16 %v2691, 1045249613
      %v2724 = vmul.bf16 %v2692, 1045249613
      %v2725 = vmul.bf16 %v2693, 1045249613
      %v2726 = vmul.bf16 %v2694, 1045249613
      %v2727 = vmul.bf16 %v2695, 1045249613
      %v2728 = vmul.bf16 %v2696, 1045249613
      %v2729 = vmul.bf16 %v2697, 1045249613
      %v2730 = vmul.bf16 %v2698, 1045249613
      %v2731 = vmul.bf16 %v2699, 1045249613
      %v2732 = vmul.bf16 %v2700, 1045249613
      %v2733 = vmul.bf16 %v2701, 1045249613
      %v2734 = vsel %vm2702, %v2686, %v2718
      %v2735 = vsel %vm2703, %v2687, %v2719
      %v2736 = vsel %vm2704, %v2688, %v2720
      %v2737 = vsel %vm2705, %v2689, %v2721
      %v2738 = vsel %vm2706, %v2690, %v2722
      %v2739 = vsel %vm2707, %v2691, %v2723
      %v2740 = vsel %vm2708, %v2692, %v2724
      %v2741 = vsel %vm2709, %v2693, %v2725
      %v2742 = vsel %vm2710, %v2694, %v2726
      %v2743 = vsel %vm2711, %v2695, %v2727
      %v2744 = vsel %vm2712, %v2696, %v2728
      %v2745 = vsel %vm2713, %v2697, %v2729
      %v2746 = vsel %vm2714, %v2698, %v2730
      %v2747 = vsel %vm2715, %v2699, %v2731
      %v2748 = vsel %vm2716, %v2700, %v2732
      %v2749 = vsel %vm2717, %v2701, %v2733
      %v2751 = vshrl.u32 %v2734, 16
      %v2753 = vrot.slane %v2751, 4
      %v2754 = vshll.u32 %v2734, 16
      %v2756 = vrot.slane %v2754, 5
      %v2757 = vor.u32 %v2753, %v2756
      %v2758 = vrot.slane %v2757, 4
      %v2760 = vshll.u32 %v2735, 16
      %v2762 = vrot.slane %v2760, 5
      %v2763 = vsel %vm649, %v2758, %v2762
      %v2765 = vshrl.u32 %v2736, 16
      %v2767 = vrot.slane %v2765, 4
      %v2768 = vshll.u32 %v2736, 16
      %v2770 = vrot.slane %v2768, 5
      %v2771 = vor.u32 %v2767, %v2770
      %v2772 = vrot.slane %v2771, 4
      %v2774 = vshll.u32 %v2737, 16
      %v2776 = vrot.slane %v2774, 5
      %v2777 = vsel %vm649, %v2772, %v2776
      %v2779 = vshrl.u32 %v2738, 16
      %v2781 = vrot.slane %v2779, 4
      %v2782 = vshll.u32 %v2738, 16
      %v2784 = vrot.slane %v2782, 5
      %v2785 = vor.u32 %v2781, %v2784
      %v2786 = vrot.slane %v2785, 4
      %v2788 = vshll.u32 %v2739, 16
      %v2790 = vrot.slane %v2788, 5
      %v2791 = vsel %vm649, %v2786, %v2790
      %v2793 = vshrl.u32 %v2740, 16
      %v2795 = vrot.slane %v2793, 4
      %v2796 = vshll.u32 %v2740, 16
      %v2798 = vrot.slane %v2796, 5
      %v2799 = vor.u32 %v2795, %v2798
      %v2800 = vrot.slane %v2799, 4
      %v2802 = vshll.u32 %v2741, 16
      %v2804 = vrot.slane %v2802, 5
      %v2805 = vsel %vm649, %v2800, %v2804
      %v2807 = vshrl.u32 %v2742, 16
      %v2809 = vrot.slane %v2807, 4
      %v2810 = vshll.u32 %v2742, 16
      %v2812 = vrot.slane %v2810, 5
      %v2813 = vor.u32 %v2809, %v2812
      %v2814 = vrot.slane %v2813, 4
      %v2816 = vshll.u32 %v2743, 16
      %v2818 = vrot.slane %v2816, 5
      %v2819 = vsel %vm649, %v2814, %v2818
      %v2821 = vshrl.u32 %v2744, 16
      %v2823 = vrot.slane %v2821, 4
      %v2824 = vshll.u32 %v2744, 16
      %v2826 = vrot.slane %v2824, 5
      %v2827 = vor.u32 %v2823, %v2826
      %v2828 = vrot.slane %v2827, 4
      %v2830 = vshll.u32 %v2745, 16
      %v2832 = vrot.slane %v2830, 5
      %v2833 = vsel %vm649, %v2828, %v2832
      %v2835 = vshrl.u32 %v2746, 16
      %v2837 = vrot.slane %v2835, 4
      %v2838 = vshll.u32 %v2746, 16
      %v2840 = vrot.slane %v2838, 5
      %v2841 = vor.u32 %v2837, %v2840
      %v2842 = vrot.slane %v2841, 4
      %v2844 = vshll.u32 %v2747, 16
      %v2846 = vrot.slane %v2844, 5
      %v2847 = vsel %vm649, %v2842, %v2846
      %v2849 = vshrl.u32 %v2748, 16
      %v2851 = vrot.slane %v2849, 4
      %v2852 = vshll.u32 %v2748, 16
      %v2854 = vrot.slane %v2852, 5
      %v2855 = vor.u32 %v2851, %v2854
      %v2856 = vrot.slane %v2855, 4
      %v2858 = vshll.u32 %v2749, 16
      %v2860 = vrot.slane %v2858, 5
      %v2861 = vsel %vm649, %v2856, %v2860
      %s2862 = scalar_lea.vmem %s1, 640
      %v2863 = vld [vmem:[%s2862] sm:$0xf]
      %v2864 = vld [vmem:[%s2862 + $0x4] sm:$0xf]
      %v2865 = vld [vmem:[%s2862 + $0x8] sm:$0xf]
      %v2866 = vld [vmem:[%s2862 + $0xc] sm:$0xf]
      %v2867 = vld [vmem:[%s2862 + $0x10] sm:$0xf]
      %v2868 = vld [vmem:[%s2862 + $0x14] sm:$0xf]
      %v2869 = vld [vmem:[%s2862 + $0x18] sm:$0xf]
      %v2870 = vld [vmem:[%s2862 + $0x1c] sm:$0xf]
      %v2871 = vld [vmem:[%s2862 + $0x20] sm:$0xf]
      %v2872 = vld [vmem:[%s2862 + $0x24] sm:$0xf]
      %v2873 = vld [vmem:[%s2862 + $0x28] sm:$0xf]
      %v2874 = vld [vmem:[%s2862 + $0x2c] sm:$0xf]
      %v2875 = vld [vmem:[%s2862 + $0x30] sm:$0xf]
      %v2876 = vld [vmem:[%s2862 + $0x34] sm:$0xf]
      %v2877 = vld [vmem:[%s2862 + $0x38] sm:$0xf]
      %v2878 = vld [vmem:[%s2862 + $0x3c] sm:$0xf]
      %v2879 = vunpack.c.l.b16 %v2763
      %v2880 = vunpack.c.l.b16 %v2777
      %v2881 = vunpack.c.l.b16 %v2791
      %v2882 = vunpack.c.l.b16 %v2805
      %v2883 = vunpack.c.l.b16 %v2819
      %v2884 = vunpack.c.l.b16 %v2833
      %v2885 = vunpack.c.l.b16 %v2847
      %v2886 = vunpack.c.l.b16 %v2861
      %v2887 = vpack.c.b16 %v2880, %v2879
      %v2888 = vpack.c.b16 %v2882, %v2881
      %v2889 = vpack.c.b16 %v2884, %v2883
      %v2890 = vpack.c.b16 %v2886, %v2885
      %v2911 = vunpack.c.l.b16 %v2863
      %v2912 = vunpack.c.l.b16 %v2864
      %v2913 = vunpack.c.l.b16 %v2865
      %v2914 = vunpack.c.l.b16 %v2866
      %v2915 = vunpack.c.l.b16 %v2867
      %v2916 = vunpack.c.l.b16 %v2868
      %v2917 = vunpack.c.l.b16 %v2869
      %v2918 = vunpack.c.l.b16 %v2870
      %v2919 = vunpack.c.l.b16 %v2871
      %v2920 = vunpack.c.l.b16 %v2872
      %v2921 = vunpack.c.l.b16 %v2873
      %v2922 = vunpack.c.l.b16 %v2874
      %v2923 = vunpack.c.l.b16 %v2875
      %v2924 = vunpack.c.l.b16 %v2876
      %v2925 = vunpack.c.l.b16 %v2877
      %v2926 = vunpack.c.l.b16 %v2878
      %v2927 = vpack.c.b16 %v2912, %v2911
      %v2928 = vpack.c.b16 %v2914, %v2913
      %v2929 = vpack.c.b16 %v2916, %v2915
      %v2930 = vpack.c.b16 %v2918, %v2917
      %v2931 = vpack.c.b16 %v2920, %v2919
      %v2932 = vpack.c.b16 %v2922, %v2921
      %v2933 = vpack.c.b16 %v2924, %v2923
      %v2934 = vpack.c.b16 %v2926, %v2925
      %2943 = vmatprep.subr.bf16.mxu0 0
      %2944 = vmatpush1.bf16.msra.mxu0 %v2927
      %2945 = vmatprep.subr.bf16.mxu0 0
      %2946 = vmatpush1.bf16.msra.mxu0 %v2928
      %2947 = vmatprep.subr.bf16.mxu0 0
      %2948 = vmatpush1.bf16.msra.mxu0 %v2929
      %2949 = vmatprep.subr.bf16.mxu0 0
      %2950 = vmatpush1.bf16.msra.mxu0 %v2930
      %2951 = vmatprep.subr.bf16.mxu0 0
      %2952 = vmatpush1.bf16.msra.mxu0 %v2931
      %2953 = vmatprep.subr.bf16.mxu0 0
      %2954 = vmatpush1.bf16.msra.mxu0 %v2932
      %2955 = vmatprep.subr.bf16.mxu0 0
      %2956 = vmatpush1.bf16.msra.mxu0 %v2933
      %2957 = vmatprep.subr.bf16.mxu0 0
      %2958 = vmatpush1.bf16.msra.mxu0 %v2934
      %2959 = vmatprep.subr.bf16.mxu0 0
      %2960 = vmatpush1.bf16.msra.mxu0 0
      %2961 = vmatprep.subr.bf16.mxu0 0
      %2962 = vmatpush1.bf16.msra.mxu0 0
      %2963 = vmatprep.subr.bf16.mxu0 0
      %2964 = vmatpush1.bf16.msra.mxu0 0
      %2965 = vmatprep.subr.bf16.mxu0 0
      %2966 = vmatpush1.bf16.msra.mxu0 0
      %2967 = vmatprep.subr.bf16.mxu0 0
      %2968 = vmatpush1.bf16.msra.mxu0 0
      %2969 = vmatprep.subr.bf16.mxu0 0
      %2970 = vmatpush1.bf16.msra.mxu0 0
      %2971 = vmatprep.subr.bf16.mxu0 0
      %2972 = vmatpush1.bf16.msra.mxu0 0
      %2973 = vmatprep.subr.bf16.mxu0 0
      %2974 = vmatpush1.bf16.msra.mxu0 0
      %2975 = vmatprep.mubr.bf16.mxu0 0
      %2976 = vmatmul.mubr.bf16.gmra.mrb[0].mxu0 %v2887
      %v2977 = vpop.f32.mrb[0].mxu0
      %v2978 = vadd.f32 0.0, %v2977
      %v2979 = vpop.f32.mrb[0].mxu0
      %v2980 = vpop.f32.mrb[0].mxu0
      %v2981 = vadd.f32 0.0, %v2980
      %v2982 = vpop.f32.mrb[0].mxu0
      %2983 = vmatprep.mubr.bf16.mxu0 0
      %2984 = vmatmul.mubr.bf16.gmra.mrb[0].mxu0 %v2888
      %v2985 = vpop.f32.mrb[0].mxu0
      %v2986 = vadd.f32 0.0, %v2985
      %v2987 = vpop.f32.mrb[0].mxu0
      %v2988 = vpop.f32.mrb[0].mxu0
      %v2989 = vadd.f32 0.0, %v2988
      %v2990 = vpop.f32.mrb[0].mxu0
      %2991 = vmatprep.mubr.bf16.mxu0 0
      %2992 = vmatmul.mubr.bf16.gmra.mrb[0].mxu0 %v2889
      %v2993 = vpop.f32.mrb[0].mxu0
      %v2994 = vadd.f32 0.0, %v2993
      %v2995 = vpop.f32.mrb[0].mxu0
      %v2996 = vpop.f32.mrb[0].mxu0
      %v2997 = vadd.f32 0.0, %v2996
      %v2998 = vpop.f32.mrb[0].mxu0
      %2999 = vmatprep.mubr.bf16.mxu0 0
      %3000 = vmatmul.mubr.bf16.gmra.mrb[0].mxu0 %v2890
      %v3001 = vpop.f32.mrb[0].mxu0
      %v3002 = vadd.f32 0.0, %v3001
      %v3003 = vpop.f32.mrb[0].mxu0
      %v3004 = vpop.f32.mrb[0].mxu0
      %v3005 = vadd.f32 0.0, %v3004
      %v3006 = vpop.f32.mrb[0].mxu0
      %3007 = vdwg.mxu0
      %v3008 = vadd.f32 %v2678, %v2978
      %v3009 = vadd.f32 %v2679, %v2981
      %v3010 = vadd.f32 %v2680, %v2986
      %v3011 = vadd.f32 %v2681, %v2989
      %v3012 = vadd.f32 %v2682, %v2994
      %v3013 = vadd.f32 %v2683, %v2997
      %v3014 = vadd.f32 %v2684, %v3002
      %v3015 = vadd.f32 %v2685, %v3005
      %v3016 = vld [vmem:[%s2491] sm:$0xf]
      %v3017 = vld [vmem:[%s2491 + $0x4] sm:$0x1]
      %v3018 = vld [vmem:[%s2491 + $0x8] sm:$0xf]
      %v3019 = vld [vmem:[%s2491 + $0xc] sm:$0x1]
      %v3020 = vld [vmem:[%s2491 + $0x10] sm:$0xf]
      %v3021 = vld [vmem:[%s2491 + $0x14] sm:$0x1]
      %v3022 = vld [vmem:[%s2491 + $0x18] sm:$0xf]
      %v3023 = vld [vmem:[%s2491 + $0x1c] sm:$0x1]
      %v3024 = vld [vmem:[%s2491 + $0x20] sm:$0xf]
      %v3025 = vld [vmem:[%s2491 + $0x24] sm:$0x1]
      %v3026 = vld [vmem:[%s2491 + $0x28] sm:$0xf]
      %v3027 = vld [vmem:[%s2491 + $0x2c] sm:$0x1]
      %v3028 = vld [vmem:[%s2491 + $0x30] sm:$0xf]
      %v3029 = vld [vmem:[%s2491 + $0x34] sm:$0x1]
      %v3030 = vld [vmem:[%s2491 + $0x38] sm:$0xf]
      %v3031 = vld [vmem:[%s2491 + $0x3c] sm:$0x1]
      %vm3032 = vcmp.gt.bf16.partialorder %v3016, 0
      %vm3033 = vcmp.gt.bf16.partialorder %v3017, 0
      %vm3034 = vcmp.gt.bf16.partialorder %v3018, 0
      %vm3035 = vcmp.gt.bf16.partialorder %v3019, 0
      %vm3036 = vcmp.gt.bf16.partialorder %v3020, 0
      %vm3037 = vcmp.gt.bf16.partialorder %v3021, 0
      %vm3038 = vcmp.gt.bf16.partialorder %v3022, 0
      %vm3039 = vcmp.gt.bf16.partialorder %v3023, 0
      %vm3040 = vcmp.gt.bf16.partialorder %v3024, 0
      %vm3041 = vcmp.gt.bf16.partialorder %v3025, 0
      %vm3042 = vcmp.gt.bf16.partialorder %v3026, 0
      %vm3043 = vcmp.gt.bf16.partialorder %v3027, 0
      %vm3044 = vcmp.gt.bf16.partialorder %v3028, 0
      %vm3045 = vcmp.gt.bf16.partialorder %v3029, 0
      %vm3046 = vcmp.gt.bf16.partialorder %v3030, 0
      %vm3047 = vcmp.gt.bf16.partialorder %v3031, 0
      %v3048 = vmul.bf16 %v3016, 1045249613
      %v3049 = vmul.bf16 %v3017, 1045249613
      %v3050 = vmul.bf16 %v3018, 1045249613
      %v3051 = vmul.bf16 %v3019, 1045249613
      %v3052 = vmul.bf16 %v3020, 1045249613
      %v3053 = vmul.bf16 %v3021, 1045249613
      %v3054 = vmul.bf16 %v3022, 1045249613
      %v3055 = vmul.bf16 %v3023, 1045249613
      %v3056 = vmul.bf16 %v3024, 1045249613
      %v3057 = vmul.bf16 %v3025, 1045249613
      %v3058 = vmul.bf16 %v3026, 1045249613
      %v3059 = vmul.bf16 %v3027, 1045249613
      %v3060 = vmul.bf16 %v3028, 1045249613
      %v3061 = vmul.bf16 %v3029, 1045249613
      %v3062 = vmul.bf16 %v3030, 1045249613
      %v3063 = vmul.bf16 %v3031, 1045249613
      %v3064 = vsel %vm3032, %v3016, %v3048
      %v3065 = vsel %vm3033, %v3017, %v3049
      %v3066 = vsel %vm3034, %v3018, %v3050
      %v3067 = vsel %vm3035, %v3019, %v3051
      %v3068 = vsel %vm3036, %v3020, %v3052
      %v3069 = vsel %vm3037, %v3021, %v3053
      %v3070 = vsel %vm3038, %v3022, %v3054
      %v3071 = vsel %vm3039, %v3023, %v3055
      %v3072 = vsel %vm3040, %v3024, %v3056
      %v3073 = vsel %vm3041, %v3025, %v3057
      %v3074 = vsel %vm3042, %v3026, %v3058
      %v3075 = vsel %vm3043, %v3027, %v3059
      %v3076 = vsel %vm3044, %v3028, %v3060
      %v3077 = vsel %vm3045, %v3029, %v3061
      %v3078 = vsel %vm3046, %v3030, %v3062
      %v3079 = vsel %vm3047, %v3031, %v3063
      %v3081 = vshrl.u32 %v3064, 16
      %v3083 = vrot.slane %v3081, 4
      %v3084 = vshll.u32 %v3064, 16
      %v3086 = vrot.slane %v3084, 5
      %v3087 = vor.u32 %v3083, %v3086
      %v3088 = vrot.slane %v3087, 4
      %v3090 = vshll.u32 %v3065, 16
      %v3092 = vrot.slane %v3090, 5
      %v3093 = vsel %vm649, %v3088, %v3092
      %v3095 = vshrl.u32 %v3066, 16
      %v3097 = vrot.slane %v3095, 4
      %v3098 = vshll.u32 %v3066, 16
      %v3100 = vrot.slane %v3098, 5
      %v3101 = vor.u32 %v3097, %v3100
      %v3102 = vrot.slane %v3101, 4
      %v3104 = vshll.u32 %v3067, 16
      %v3106 = vrot.slane %v3104, 5
      %v3107 = vsel %vm649, %v3102, %v3106
      %v3109 = vshrl.u32 %v3068, 16
      %v3111 = vrot.slane %v3109, 4
      %v3112 = vshll.u32 %v3068, 16
      %v3114 = vrot.slane %v3112, 5
      %v3115 = vor.u32 %v3111, %v3114
      %v3116 = vrot.slane %v3115, 4
      %v3118 = vshll.u32 %v3069, 16
      %v3120 = vrot.slane %v3118, 5
      %v3121 = vsel %vm649, %v3116, %v3120
      %v3123 = vshrl.u32 %v3070, 16
      %v3125 = vrot.slane %v3123, 4
      %v3126 = vshll.u32 %v3070, 16
      %v3128 = vrot.slane %v3126, 5
      %v3129 = vor.u32 %v3125, %v3128
      %v3130 = vrot.slane %v3129, 4
      %v3132 = vshll.u32 %v3071, 16
      %v3134 = vrot.slane %v3132, 5
      %v3135 = vsel %vm649, %v3130, %v3134
      %v3137 = vshrl.u32 %v3072, 16
      %v3139 = vrot.slane %v3137, 4
      %v3140 = vshll.u32 %v3072, 16
      %v3142 = vrot.slane %v3140, 5
      %v3143 = vor.u32 %v3139, %v3142
      %v3144 = vrot.slane %v3143, 4
      %v3146 = vshll.u32 %v3073, 16
      %v3148 = vrot.slane %v3146, 5
      %v3149 = vsel %vm649, %v3144, %v3148
      %v3151 = vshrl.u32 %v3074, 16
      %v3153 = vrot.slane %v3151, 4
      %v3154 = vshll.u32 %v3074, 16
      %v3156 = vrot.slane %v3154, 5
      %v3157 = vor.u32 %v3153, %v3156
      %v3158 = vrot.slane %v3157, 4
      %v3160 = vshll.u32 %v3075, 16
      %v3162 = vrot.slane %v3160, 5
      %v3163 = vsel %vm649, %v3158, %v3162
      %v3165 = vshrl.u32 %v3076, 16
      %v3167 = vrot.slane %v3165, 4
      %v3168 = vshll.u32 %v3076, 16
      %v3170 = vrot.slane %v3168, 5
      %v3171 = vor.u32 %v3167, %v3170
      %v3172 = vrot.slane %v3171, 4
      %v3174 = vshll.u32 %v3077, 16
      %v3176 = vrot.slane %v3174, 5
      %v3177 = vsel %vm649, %v3172, %v3176
      %v3179 = vshrl.u32 %v3078, 16
      %v3181 = vrot.slane %v3179, 4
      %v3182 = vshll.u32 %v3078, 16
      %v3184 = vrot.slane %v3182, 5
      %v3185 = vor.u32 %v3181, %v3184
      %v3186 = vrot.slane %v3185, 4
      %v3188 = vshll.u32 %v3079, 16
      %v3190 = vrot.slane %v3188, 5
      %v3191 = vsel %vm649, %v3186, %v3190
      %s3192 = scalar_lea.vmem %s1, 704
      %v3193 = vld [vmem:[%s3192] sm:$0xf]
      %v3194 = vld [vmem:[%s3192 + $0x4] sm:$0xf]
      %v3195 = vld [vmem:[%s3192 + $0x8] sm:$0xf]
      %v3196 = vld [vmem:[%s3192 + $0xc] sm:$0xf]
      %v3197 = vld [vmem:[%s3192 + $0x10] sm:$0xf]
      %v3198 = vld [vmem:[%s3192 + $0x14] sm:$0xf]
      %v3199 = vld [vmem:[%s3192 + $0x18] sm:$0xf]
      %v3200 = vld [vmem:[%s3192 + $0x1c] sm:$0xf]
      %v3201 = vld [vmem:[%s3192 + $0x20] sm:$0xf]
      %v3202 = vld [vmem:[%s3192 + $0x24] sm:$0xf]
      %v3203 = vld [vmem:[%s3192 + $0x28] sm:$0xf]
      %v3204 = vld [vmem:[%s3192 + $0x2c] sm:$0xf]
      %v3205 = vld [vmem:[%s3192 + $0x30] sm:$0xf]
      %v3206 = vld [vmem:[%s3192 + $0x34] sm:$0xf]
      %v3207 = vld [vmem:[%s3192 + $0x38] sm:$0xf]
      %v3208 = vld [vmem:[%s3192 + $0x3c] sm:$0xf]
      %v3209 = vunpack.c.l.b16 %v3093
      %v3210 = vunpack.c.l.b16 %v3107
      %v3211 = vunpack.c.l.b16 %v3121
      %v3212 = vunpack.c.l.b16 %v3135
      %v3213 = vunpack.c.l.b16 %v3149
      %v3214 = vunpack.c.l.b16 %v3163
      %v3215 = vunpack.c.l.b16 %v3177
      %v3216 = vunpack.c.l.b16 %v3191
      %v3217 = vpack.c.b16 %v3210, %v3209
      %v3218 = vpack.c.b16 %v3212, %v3211
      %v3219 = vpack.c.b16 %v3214, %v3213
      %v3220 = vpack.c.b16 %v3216, %v3215
      %v3241 = vunpack.c.l.b16 %v3193
      %v3242 = vunpack.c.l.b16 %v3194
      %v3243 = vunpack.c.l.b16 %v3195
      %v3244 = vunpack.c.l.b16 %v3196
      %v3245 = vunpack.c.l.b16 %v3197
      %v3246 = vunpack.c.l.b16 %v3198
      %v3247 = vunpack.c.l.b16 %v3199
      %v3248 = vunpack.c.l.b16 %v3200
      %v3249 = vunpack.c.l.b16 %v3201
      %v3250 = vunpack.c.l.b16 %v3202
      %v3251 = vunpack.c.l.b16 %v3203
      %v3252 = vunpack.c.l.b16 %v3204
      %v3253 = vunpack.c.l.b16 %v3205
      %v3254 = vunpack.c.l.b16 %v3206
      %v3255 = vunpack.c.l.b16 %v3207
      %v3256 = vunpack.c.l.b16 %v3208
      %v3257 = vpack.c.b16 %v3242, %v3241
      %v3258 = vpack.c.b16 %v3244, %v3243
      %v3259 = vpack.c.b16 %v3246, %v3245
      %v3260 = vpack.c.b16 %v3248, %v3247
      %v3261 = vpack.c.b16 %v3250, %v3249
      %v3262 = vpack.c.b16 %v3252, %v3251
      %v3263 = vpack.c.b16 %v3254, %v3253
      %v3264 = vpack.c.b16 %v3256, %v3255
      %3273 = vmatprep.subr.bf16.mxu0 0
      %3274 = vmatpush1.bf16.msra.mxu0 %v3257
      %3275 = vmatprep.subr.bf16.mxu0 0
      %3276 = vmatpush1.bf16.msra.mxu0 %v3258
      %3277 = vmatprep.subr.bf16.mxu0 0
      %3278 = vmatpush1.bf16.msra.mxu0 %v3259
      %3279 = vmatprep.subr.bf16.mxu0 0
      %3280 = vmatpush1.bf16.msra.mxu0 %v3260
      %3281 = vmatprep.subr.bf16.mxu0 0
      %3282 = vmatpush1.bf16.msra.mxu0 %v3261
      %3283 = vmatprep.subr.bf16.mxu0 0
      %3284 = vmatpush1.bf16.msra.mxu0 %v3262
      %3285 = vmatprep.subr.bf16.mxu0 0
      %3286 = vmatpush1.bf16.msra.mxu0 %v3263
      %3287 = vmatprep.subr.bf16.mxu0 0
      %3288 = vmatpush1.bf16.msra.mxu0 %v3264
      %3289 = vmatprep.subr.bf16.mxu0 0
      %3290 = vmatpush1.bf16.msra.mxu0 0
      %3291 = vmatprep.subr.bf16.mxu0 0
      %3292 = vmatpush1.bf16.msra.mxu0 0
      %3293 = vmatprep.subr.bf16.mxu0 0
      %3294 = vmatpush1.bf16.msra.mxu0 0
      %3295 = vmatprep.subr.bf16.mxu0 0
      %3296 = vmatpush1.bf16.msra.mxu0 0
      %3297 = vmatprep.subr.bf16.mxu0 0
      %3298 = vmatpush1.bf16.msra.mxu0 0
      %3299 = vmatprep.subr.bf16.mxu0 0
      %3300 = vmatpush1.bf16.msra.mxu0 0
      %3301 = vmatprep.subr.bf16.mxu0 0
      %3302 = vmatpush1.bf16.msra.mxu0 0
      %3303 = vmatprep.subr.bf16.mxu0 0
      %3304 = vmatpush1.bf16.msra.mxu0 0
      %3305 = vmatprep.mubr.bf16.mxu0 0
      %3306 = vmatmul.mubr.bf16.gmra.mrb[0].mxu0 %v3217
      %v3307 = vpop.f32.mrb[0].mxu0
      %v3308 = vadd.f32 0.0, %v3307
      %v3309 = vpop.f32.mrb[0].mxu0
      %v3310 = vpop.f32.mrb[0].mxu0
      %v3311 = vadd.f32 0.0, %v3310
      %v3312 = vpop.f32.mrb[0].mxu0
      %3313 = vmatprep.mubr.bf16.mxu0 0
      %3314 = vmatmul.mubr.bf16.gmra.mrb[0].mxu0 %v3218
      %v3315 = vpop.f32.mrb[0].mxu0
      %v3316 = vadd.f32 0.0, %v3315
      %v3317 = vpop.f32.mrb[0].mxu0
      %v3318 = vpop.f32.mrb[0].mxu0
      %v3319 = vadd.f32 0.0, %v3318
      %v3320 = vpop.f32.mrb[0].mxu0
      %3321 = vmatprep.mubr.bf16.mxu0 0
      %3322 = vmatmul.mubr.bf16.gmra.mrb[0].mxu0 %v3219
      %v3323 = vpop.f32.mrb[0].mxu0
      %v3324 = vadd.f32 0.0, %v3323
      %v3325 = vpop.f32.mrb[0].mxu0
      %v3326 = vpop.f32.mrb[0].mxu0
      %v3327 = vadd.f32 0.0, %v3326
      %v3328 = vpop.f32.mrb[0].mxu0
      %3329 = vmatprep.mubr.bf16.mxu0 0
      %3330 = vmatmul.mubr.bf16.gmra.mrb[0].mxu0 %v3220
      %v3331 = vpop.f32.mrb[0].mxu0
      %v3332 = vadd.f32 0.0, %v3331
      %v3333 = vpop.f32.mrb[0].mxu0
      %v3334 = vpop.f32.mrb[0].mxu0
      %v3335 = vadd.f32 0.0, %v3334
      %v3336 = vpop.f32.mrb[0].mxu0
      %3337 = vdwg.mxu0
      %v3338 = vadd.f32 %v3008, %v3308
      %v3339 = vadd.f32 %v3009, %v3311
      %v3340 = vadd.f32 %v3010, %v3316
      %v3341 = vadd.f32 %v3011, %v3319
      %v3342 = vadd.f32 %v3012, %v3324
      %v3343 = vadd.f32 %v3013, %v3327
      %v3344 = vadd.f32 %v3014, %v3332
      %v3345 = vadd.f32 %v3015, %v3335
      %s3346 = scalar_lea.vmem %s199, 384
      %v3347 = vld [vmem:[%s3346] sm:$0xf]
      %v3348 = vld [vmem:[%s3346 + $0x8] sm:$0xf]
      %v3349 = vld [vmem:[%s3346 + $0x10] sm:$0xf]
      %v3350 = vld [vmem:[%s3346 + $0x18] sm:$0xf]
      %v3351 = vld [vmem:[%s3346 + $0x20] sm:$0xf]
      %v3352 = vld [vmem:[%s3346 + $0x28] sm:$0xf]
      %v3353 = vld [vmem:[%s3346 + $0x30] sm:$0xf]
      %v3354 = vld [vmem:[%s3346 + $0x38] sm:$0xf]
      %vm3355 = vcmp.gt.bf16.partialorder %v3347, 0
      %vm3356 = vcmp.gt.bf16.partialorder %v3348, 0
      %vm3357 = vcmp.gt.bf16.partialorder %v3349, 0
      %vm3358 = vcmp.gt.bf16.partialorder %v3350, 0
      %vm3359 = vcmp.gt.bf16.partialorder %v3351, 0
      %vm3360 = vcmp.gt.bf16.partialorder %v3352, 0
      %vm3361 = vcmp.gt.bf16.partialorder %v3353, 0
      %vm3362 = vcmp.gt.bf16.partialorder %v3354, 0
      %v3363 = vmul.bf16 %v3347, 1045249613
      %v3364 = vmul.bf16 %v3348, 1045249613
      %v3365 = vmul.bf16 %v3349, 1045249613
      %v3366 = vmul.bf16 %v3350, 1045249613
      %v3367 = vmul.bf16 %v3351, 1045249613
      %v3368 = vmul.bf16 %v3352, 1045249613
      %v3369 = vmul.bf16 %v3353, 1045249613
      %v3370 = vmul.bf16 %v3354, 1045249613
      %v3371 = vsel %vm3355, %v3347, %v3363
      %v3372 = vsel %vm3356, %v3348, %v3364
      %v3373 = vsel %vm3357, %v3349, %v3365
      %v3374 = vsel %vm3358, %v3350, %v3366
      %v3375 = vsel %vm3359, %v3351, %v3367
      %v3376 = vsel %vm3360, %v3352, %v3368
      %v3377 = vsel %vm3361, %v3353, %v3369
      %v3378 = vsel %vm3362, %v3354, %v3370
      %s3379 = scalar_lea.vmem %s1, 768
      %v3380 = vld [vmem:[%s3379] sm:$0xf]
      %v3381 = vld [vmem:[%s3379 + $0x4] sm:$0xf]
      %v3382 = vld [vmem:[%s3379 + $0x8] sm:$0xf]
      %v3383 = vld [vmem:[%s3379 + $0xc] sm:$0xf]
      %v3384 = vld [vmem:[%s3379 + $0x10] sm:$0xf]
      %v3385 = vld [vmem:[%s3379 + $0x14] sm:$0xf]
      %v3386 = vld [vmem:[%s3379 + $0x18] sm:$0xf]
      %v3387 = vld [vmem:[%s3379 + $0x1c] sm:$0xf]
      %v3388 = vld [vmem:[%s3379 + $0x20] sm:$0xf]
      %v3389 = vld [vmem:[%s3379 + $0x24] sm:$0xf]
      %v3390 = vld [vmem:[%s3379 + $0x28] sm:$0xf]
      %v3391 = vld [vmem:[%s3379 + $0x2c] sm:$0xf]
      %v3392 = vld [vmem:[%s3379 + $0x30] sm:$0xf]
      %v3393 = vld [vmem:[%s3379 + $0x34] sm:$0xf]
      %v3394 = vld [vmem:[%s3379 + $0x38] sm:$0xf]
      %v3395 = vld [vmem:[%s3379 + $0x3c] sm:$0xf]
      %v3404 = vunpack.c.l.b16 %v3371
      %v3405 = vunpack.c.l.b16 %v3372
      %v3406 = vunpack.c.l.b16 %v3373
      %v3407 = vunpack.c.l.b16 %v3374
      %v3408 = vunpack.c.l.b16 %v3375
      %v3409 = vunpack.c.l.b16 %v3376
      %v3410 = vunpack.c.l.b16 %v3377
      %v3411 = vunpack.c.l.b16 %v3378
      %v3412 = vpack.c.b16 %v3405, %v3404
      %v3413 = vpack.c.b16 %v3407, %v3406
      %v3414 = vpack.c.b16 %v3409, %v3408
      %v3415 = vpack.c.b16 %v3411, %v3410
      %v3436 = vunpack.c.l.b16 %v3380
      %v3437 = vunpack.c.l.b16 %v3381
      %v3438 = vunpack.c.l.b16 %v3382
      %v3439 = vunpack.c.l.b16 %v3383
      %v3440 = vunpack.c.l.b16 %v3384
      %v3441 = vunpack.c.l.b16 %v3385
      %v3442 = vunpack.c.l.b16 %v3386
      %v3443 = vunpack.c.l.b16 %v3387
      %v3444 = vunpack.c.l.b16 %v3388
      %v3445 = vunpack.c.l.b16 %v3389
      %v3446 = vunpack.c.l.b16 %v3390
      %v3447 = vunpack.c.l.b16 %v3391
      %v3448 = vunpack.c.l.b16 %v3392
      %v3449 = vunpack.c.l.b16 %v3393
      %v3450 = vunpack.c.l.b16 %v3394
      %v3451 = vunpack.c.l.b16 %v3395
      %v3452 = vpack.c.b16 %v3437, %v3436
      %v3453 = vpack.c.b16 %v3439, %v3438
      %v3454 = vpack.c.b16 %v3441, %v3440
      %v3455 = vpack.c.b16 %v3443, %v3442
      %v3456 = vpack.c.b16 %v3445, %v3444
      %v3457 = vpack.c.b16 %v3447, %v3446
      %v3458 = vpack.c.b16 %v3449, %v3448
      %v3459 = vpack.c.b16 %v3451, %v3450
      %3468 = vmatprep.subr.bf16.mxu0 0
      %3469 = vmatpush1.bf16.msra.mxu0 %v3452
      %3470 = vmatprep.subr.bf16.mxu0 0
      %3471 = vmatpush1.bf16.msra.mxu0 %v3453
      %3472 = vmatprep.subr.bf16.mxu0 0
      %3473 = vmatpush1.bf16.msra.mxu0 %v3454
      %3474 = vmatprep.subr.bf16.mxu0 0
      %3475 = vmatpush1.bf16.msra.mxu0 %v3455
      %3476 = vmatprep.subr.bf16.mxu0 0
      %3477 = vmatpush1.bf16.msra.mxu0 %v3456
      %3478 = vmatprep.subr.bf16.mxu0 0
      %3479 = vmatpush1.bf16.msra.mxu0 %v3457
      %3480 = vmatprep.subr.bf16.mxu0 0
      %3481 = vmatpush1.bf16.msra.mxu0 %v3458
      %3482 = vmatprep.subr.bf16.mxu0 0
      %3483 = vmatpush1.bf16.msra.mxu0 %v3459
      %3484 = vmatprep.subr.bf16.mxu0 0
      %3485 = vmatpush1.bf16.msra.mxu0 0
      %3486 = vmatprep.subr.bf16.mxu0 0
      %3487 = vmatpush1.bf16.msra.mxu0 0
      %3488 = vmatprep.subr.bf16.mxu0 0
      %3489 = vmatpush1.bf16.msra.mxu0 0
      %3490 = vmatprep.subr.bf16.mxu0 0
      %3491 = vmatpush1.bf16.msra.mxu0 0
      %3492 = vmatprep.subr.bf16.mxu0 0
      %3493 = vmatpush1.bf16.msra.mxu0 0
      %3494 = vmatprep.subr.bf16.mxu0 0
      %3495 = vmatpush1.bf16.msra.mxu0 0
      %3496 = vmatprep.subr.bf16.mxu0 0
      %3497 = vmatpush1.bf16.msra.mxu0 0
      %3498 = vmatprep.subr.bf16.mxu0 0
      %3499 = vmatpush1.bf16.msra.mxu0 0
      %3500 = vmatprep.mubr.bf16.mxu0 0
      %3501 = vmatmul.mubr.bf16.gmra.mrb[0].mxu0 %v3412
      %v3502 = vpop.f32.mrb[0].mxu0
      %v3503 = vadd.f32 0.0, %v3502
      %v3504 = vpop.f32.mrb[0].mxu0
      %v3505 = vpop.f32.mrb[0].mxu0
      %v3506 = vadd.f32 0.0, %v3505
      %v3507 = vpop.f32.mrb[0].mxu0
      %3508 = vmatprep.mubr.bf16.mxu0 0
      %3509 = vmatmul.mubr.bf16.gmra.mrb[0].mxu0 %v3413
      %v3510 = vpop.f32.mrb[0].mxu0
      %v3511 = vadd.f32 0.0, %v3510
      %v3512 = vpop.f32.mrb[0].mxu0
      %v3513 = vpop.f32.mrb[0].mxu0
      %v3514 = vadd.f32 0.0, %v3513
      %v3515 = vpop.f32.mrb[0].mxu0
      %3516 = vmatprep.mubr.bf16.mxu0 0
      %3517 = vmatmul.mubr.bf16.gmra.mrb[0].mxu0 %v3414
      %v3518 = vpop.f32.mrb[0].mxu0
      %v3519 = vadd.f32 0.0, %v3518
      %v3520 = vpop.f32.mrb[0].mxu0
      %v3521 = vpop.f32.mrb[0].mxu0
      %v3522 = vadd.f32 0.0, %v3521
      %v3523 = vpop.f32.mrb[0].mxu0
      %3524 = vmatprep.mubr.bf16.mxu0 0
      %3525 = vmatmul.mubr.bf16.gmra.mrb[0].mxu0 %v3415
      %v3526 = vpop.f32.mrb[0].mxu0
      %v3527 = vadd.f32 0.0, %v3526
      %v3528 = vpop.f32.mrb[0].mxu0
      %v3529 = vpop.f32.mrb[0].mxu0
      %v3530 = vadd.f32 0.0, %v3529
      %v3531 = vpop.f32.mrb[0].mxu0
      %3532 = vdwg.mxu0
      %v3533 = vadd.f32 %v3338, %v3503
      %v3534 = vadd.f32 %v3339, %v3506
      %v3535 = vadd.f32 %v3340, %v3511
      %v3536 = vadd.f32 %v3341, %v3514
      %v3537 = vadd.f32 %v3342, %v3519
      %v3538 = vadd.f32 %v3343, %v3522
      %v3539 = vadd.f32 %v3344, %v3527
      %v3540 = vadd.f32 %v3345, %v3530
      %s3541 = scalar_lea.vmem %s199, 448
      %v3542 = vld [vmem:[%s3541] sm:$0xf]
      %v3543 = vld [vmem:[%s3541 + $0x8] sm:$0xf]
      %v3544 = vld [vmem:[%s3541 + $0x10] sm:$0xf]
      %v3545 = vld [vmem:[%s3541 + $0x18] sm:$0xf]
      %v3546 = vld [vmem:[%s3541 + $0x20] sm:$0xf]
      %v3547 = vld [vmem:[%s3541 + $0x28] sm:$0xf]
      %v3548 = vld [vmem:[%s3541 + $0x30] sm:$0xf]
      %v3549 = vld [vmem:[%s3541 + $0x38] sm:$0xf]
      %vm3550 = vcmp.gt.bf16.partialorder %v3542, 0
      %vm3551 = vcmp.gt.bf16.partialorder %v3543, 0
      %vm3552 = vcmp.gt.bf16.partialorder %v3544, 0
      %vm3553 = vcmp.gt.bf16.partialorder %v3545, 0
      %vm3554 = vcmp.gt.bf16.partialorder %v3546, 0
      %vm3555 = vcmp.gt.bf16.partialorder %v3547, 0
      %vm3556 = vcmp.gt.bf16.partialorder %v3548, 0
      %vm3557 = vcmp.gt.bf16.partialorder %v3549, 0
      %v3558 = vmul.bf16 %v3542, 1045249613
      %v3559 = vmul.bf16 %v3543, 1045249613
      %v3560 = vmul.bf16 %v3544, 1045249613
      %v3561 = vmul.bf16 %v3545, 1045249613
      %v3562 = vmul.bf16 %v3546, 1045249613
      %v3563 = vmul.bf16 %v3547, 1045249613
      %v3564 = vmul.bf16 %v3548, 1045249613
      %v3565 = vmul.bf16 %v3549, 1045249613
      %v3566 = vsel %vm3550, %v3542, %v3558
      %v3567 = vsel %vm3551, %v3543, %v3559
      %v3568 = vsel %vm3552, %v3544, %v3560
      %v3569 = vsel %vm3553, %v3545, %v3561
      %v3570 = vsel %vm3554, %v3546, %v3562
      %v3571 = vsel %vm3555, %v3547, %v3563
      %v3572 = vsel %vm3556, %v3548, %v3564
      %v3573 = vsel %vm3557, %v3549, %v3565
      %s3574 = scalar_lea.vmem %s1, 832
      %v3575 = vld [vmem:[%s3574] sm:$0xf]
      %v3576 = vld [vmem:[%s3574 + $0x4] sm:$0xf]
      %v3577 = vld [vmem:[%s3574 + $0x8] sm:$0xf]
      %v3578 = vld [vmem:[%s3574 + $0xc] sm:$0xf]
      %v3579 = vld [vmem:[%s3574 + $0x10] sm:$0xf]
      %v3580 = vld [vmem:[%s3574 + $0x14] sm:$0xf]
      %v3581 = vld [vmem:[%s3574 + $0x18] sm:$0xf]
      %v3582 = vld [vmem:[%s3574 + $0x1c] sm:$0xf]
      %v3583 = vld [vmem:[%s3574 + $0x20] sm:$0xf]
      %v3584 = vld [vmem:[%s3574 + $0x24] sm:$0xf]
      %v3585 = vld [vmem:[%s3574 + $0x28] sm:$0xf]
      %v3586 = vld [vmem:[%s3574 + $0x2c] sm:$0xf]
      %v3587 = vld [vmem:[%s3574 + $0x30] sm:$0xf]
      %v3588 = vld [vmem:[%s3574 + $0x34] sm:$0xf]
      %v3589 = vld [vmem:[%s3574 + $0x38] sm:$0xf]
      %v3590 = vld [vmem:[%s3574 + $0x3c] sm:$0xf]
      %v3599 = vunpack.c.l.b16 %v3566
      %v3600 = vunpack.c.l.b16 %v3567
      %v3601 = vunpack.c.l.b16 %v3568
      %v3602 = vunpack.c.l.b16 %v3569
      %v3603 = vunpack.c.l.b16 %v3570
      %v3604 = vunpack.c.l.b16 %v3571
      %v3605 = vunpack.c.l.b16 %v3572
      %v3606 = vunpack.c.l.b16 %v3573
      %v3607 = vpack.c.b16 %v3600, %v3599
      %v3608 = vpack.c.b16 %v3602, %v3601
      %v3609 = vpack.c.b16 %v3604, %v3603
      %v3610 = vpack.c.b16 %v3606, %v3605
      %v3631 = vunpack.c.l.b16 %v3575
      %v3632 = vunpack.c.l.b16 %v3576
      %v3633 = vunpack.c.l.b16 %v3577
      %v3634 = vunpack.c.l.b16 %v3578
      %v3635 = vunpack.c.l.b16 %v3579
      %v3636 = vunpack.c.l.b16 %v3580
      %v3637 = vunpack.c.l.b16 %v3581
      %v3638 = vunpack.c.l.b16 %v3582
      %v3639 = vunpack.c.l.b16 %v3583
      %v3640 = vunpack.c.l.b16 %v3584
      %v3641 = vunpack.c.l.b16 %v3585
      %v3642 = vunpack.c.l.b16 %v3586
      %v3643 = vunpack.c.l.b16 %v3587
      %v3644 = vunpack.c.l.b16 %v3588
      %v3645 = vunpack.c.l.b16 %v3589
      %v3646 = vunpack.c.l.b16 %v3590
      %v3647 = vpack.c.b16 %v3632, %v3631
      %v3648 = vpack.c.b16 %v3634, %v3633
      %v3649 = vpack.c.b16 %v3636, %v3635
      %v3650 = vpack.c.b16 %v3638, %v3637
      %v3651 = vpack.c.b16 %v3640, %v3639
      %v3652 = vpack.c.b16 %v3642, %v3641
      %v3653 = vpack.c.b16 %v3644, %v3643
      %v3654 = vpack.c.b16 %v3646, %v3645
      %3663 = vmatprep.subr.bf16.mxu0 0
      %3664 = vmatpush1.bf16.msra.mxu0 %v3647
      %3665 = vmatprep.subr.bf16.mxu0 0
      %3666 = vmatpush1.bf16.msra.mxu0 %v3648
      %3667 = vmatprep.subr.bf16.mxu0 0
      %3668 = vmatpush1.bf16.msra.mxu0 %v3649
      %3669 = vmatprep.subr.bf16.mxu0 0
      %3670 = vmatpush1.bf16.msra.mxu0 %v3650
      %3671 = vmatprep.subr.bf16.mxu0 0
      %3672 = vmatpush1.bf16.msra.mxu0 %v3651
      %3673 = vmatprep.subr.bf16.mxu0 0
      %3674 = vmatpush1.bf16.msra.mxu0 %v3652
      %3675 = vmatprep.subr.bf16.mxu0 0
      %3676 = vmatpush1.bf16.msra.mxu0 %v3653
      %3677 = vmatprep.subr.bf16.mxu0 0
      %3678 = vmatpush1.bf16.msra.mxu0 %v3654
      %3679 = vmatprep.subr.bf16.mxu0 0
      %3680 = vmatpush1.bf16.msra.mxu0 0
      %3681 = vmatprep.subr.bf16.mxu0 0
      %3682 = vmatpush1.bf16.msra.mxu0 0
      %3683 = vmatprep.subr.bf16.mxu0 0
      %3684 = vmatpush1.bf16.msra.mxu0 0
      %3685 = vmatprep.subr.bf16.mxu0 0
      %3686 = vmatpush1.bf16.msra.mxu0 0
      %3687 = vmatprep.subr.bf16.mxu0 0
      %3688 = vmatpush1.bf16.msra.mxu0 0
      %3689 = vmatprep.subr.bf16.mxu0 0
      %3690 = vmatpush1.bf16.msra.mxu0 0
      %3691 = vmatprep.subr.bf16.mxu0 0
      %3692 = vmatpush1.bf16.msra.mxu0 0
      %3693 = vmatprep.subr.bf16.mxu0 0
      %3694 = vmatpush1.bf16.msra.mxu0 0
      %3695 = vmatprep.mubr.bf16.mxu0 0
      %3696 = vmatmul.mubr.bf16.gmra.mrb[0].mxu0 %v3607
      %v3697 = vpop.f32.mrb[0].mxu0
      %v3698 = vadd.f32 0.0, %v3697
      %v3699 = vpop.f32.mrb[0].mxu0
      %v3700 = vpop.f32.mrb[0].mxu0
      %v3701 = vadd.f32 0.0, %v3700
      %v3702 = vpop.f32.mrb[0].mxu0
      %3703 = vmatprep.mubr.bf16.mxu0 0
      %3704 = vmatmul.mubr.bf16.gmra.mrb[0].mxu0 %v3608
      %v3705 = vpop.f32.mrb[0].mxu0
      %v3706 = vadd.f32 0.0, %v3705
      %v3707 = vpop.f32.mrb[0].mxu0
      %v3708 = vpop.f32.mrb[0].mxu0
      %v3709 = vadd.f32 0.0, %v3708
      %v3710 = vpop.f32.mrb[0].mxu0
      %3711 = vmatprep.mubr.bf16.mxu0 0
      %3712 = vmatmul.mubr.bf16.gmra.mrb[0].mxu0 %v3609
      %v3713 = vpop.f32.mrb[0].mxu0
      %v3714 = vadd.f32 0.0, %v3713
      %v3715 = vpop.f32.mrb[0].mxu0
      %v3716 = vpop.f32.mrb[0].mxu0
      %v3717 = vadd.f32 0.0, %v3716
      %v3718 = vpop.f32.mrb[0].mxu0
      %3719 = vmatprep.mubr.bf16.mxu0 0
      %3720 = vmatmul.mubr.bf16.gmra.mrb[0].mxu0 %v3610
      %v3721 = vpop.f32.mrb[0].mxu0
      %v3722 = vadd.f32 0.0, %v3721
      %v3723 = vpop.f32.mrb[0].mxu0
      %v3724 = vpop.f32.mrb[0].mxu0
      %v3725 = vadd.f32 0.0, %v3724
      %v3726 = vpop.f32.mrb[0].mxu0
      %3727 = vdwg.mxu0
      %v3728 = vadd.f32 %v3533, %v3698
      %v3729 = vadd.f32 %v3534, %v3701
      %v3730 = vadd.f32 %v3535, %v3706
      %v3731 = vadd.f32 %v3536, %v3709
      %v3732 = vadd.f32 %v3537, %v3714
      %v3733 = vadd.f32 %v3538, %v3717
      %v3734 = vadd.f32 %v3539, %v3722
      %v3735 = vadd.f32 %v3540, %v3725
      %v3736 = vld [vmem:[%s3346] sm:$0xf]
      %v3737 = vld [vmem:[%s3346 + $0x4] sm:$0x1]
      %v3738 = vld [vmem:[%s3346 + $0x8] sm:$0xf]
      %v3739 = vld [vmem:[%s3346 + $0xc] sm:$0x1]
      %v3740 = vld [vmem:[%s3346 + $0x10] sm:$0xf]
      %v3741 = vld [vmem:[%s3346 + $0x14] sm:$0x1]
      %v3742 = vld [vmem:[%s3346 + $0x18] sm:$0xf]
      %v3743 = vld [vmem:[%s3346 + $0x1c] sm:$0x1]
      %v3744 = vld [vmem:[%s3346 + $0x20] sm:$0xf]
      %v3745 = vld [vmem:[%s3346 + $0x24] sm:$0x1]
      %v3746 = vld [vmem:[%s3346 + $0x28] sm:$0xf]
      %v3747 = vld [vmem:[%s3346 + $0x2c] sm:$0x1]
      %v3748 = vld [vmem:[%s3346 + $0x30] sm:$0xf]
      %v3749 = vld [vmem:[%s3346 + $0x34] sm:$0x1]
      %v3750 = vld [vmem:[%s3346 + $0x38] sm:$0xf]
      %v3751 = vld [vmem:[%s3346 + $0x3c] sm:$0x1]
      %vm3752 = vcmp.gt.bf16.partialorder %v3736, 0
      %vm3753 = vcmp.gt.bf16.partialorder %v3737, 0
      %vm3754 = vcmp.gt.bf16.partialorder %v3738, 0
      %vm3755 = vcmp.gt.bf16.partialorder %v3739, 0
      %vm3756 = vcmp.gt.bf16.partialorder %v3740, 0
      %vm3757 = vcmp.gt.bf16.partialorder %v3741, 0
      %vm3758 = vcmp.gt.bf16.partialorder %v3742, 0
      %vm3759 = vcmp.gt.bf16.partialorder %v3743, 0
      %vm3760 = vcmp.gt.bf16.partialorder %v3744, 0
      %vm3761 = vcmp.gt.bf16.partialorder %v3745, 0
      %vm3762 = vcmp.gt.bf16.partialorder %v3746, 0
      %vm3763 = vcmp.gt.bf16.partialorder %v3747, 0
      %vm3764 = vcmp.gt.bf16.partialorder %v3748, 0
      %vm3765 = vcmp.gt.bf16.partialorder %v3749, 0
      %vm3766 = vcmp.gt.bf16.partialorder %v3750, 0
      %vm3767 = vcmp.gt.bf16.partialorder %v3751, 0
      %v3768 = vmul.bf16 %v3736, 1045249613
      %v3769 = vmul.bf16 %v3737, 1045249613
      %v3770 = vmul.bf16 %v3738, 1045249613
      %v3771 = vmul.bf16 %v3739, 1045249613
      %v3772 = vmul.bf16 %v3740, 1045249613
      %v3773 = vmul.bf16 %v3741, 1045249613
      %v3774 = vmul.bf16 %v3742, 1045249613
      %v3775 = vmul.bf16 %v3743, 1045249613
      %v3776 = vmul.bf16 %v3744, 1045249613
      %v3777 = vmul.bf16 %v3745, 1045249613
      %v3778 = vmul.bf16 %v3746, 1045249613
      %v3779 = vmul.bf16 %v3747, 1045249613
      %v3780 = vmul.bf16 %v3748, 1045249613
      %v3781 = vmul.bf16 %v3749, 1045249613
      %v3782 = vmul.bf16 %v3750, 1045249613
      %v3783 = vmul.bf16 %v3751, 1045249613
      %v3784 = vsel %vm3752, %v3736, %v3768
      %v3785 = vsel %vm3753, %v3737, %v3769
      %v3786 = vsel %vm3754, %v3738, %v3770
      %v3787 = vsel %vm3755, %v3739, %v3771
      %v3788 = vsel %vm3756, %v3740, %v3772
      %v3789 = vsel %vm3757, %v3741, %v3773
      %v3790 = vsel %vm3758, %v3742, %v3774
      %v3791 = vsel %vm3759, %v3743, %v3775
      %v3792 = vsel %vm3760, %v3744, %v3776
      %v3793 = vsel %vm3761, %v3745, %v3777
      %v3794 = vsel %vm3762, %v3746, %v3778
      %v3795 = vsel %vm3763, %v3747, %v3779
      %v3796 = vsel %vm3764, %v3748, %v3780
      %v3797 = vsel %vm3765, %v3749, %v3781
      %v3798 = vsel %vm3766, %v3750, %v3782
      %v3799 = vsel %vm3767, %v3751, %v3783
      %v3801 = vshrl.u32 %v3784, 16
      %v3803 = vrot.slane %v3801, 4
      %v3804 = vshll.u32 %v3784, 16
      %v3806 = vrot.slane %v3804, 5
      %v3807 = vor.u32 %v3803, %v3806
      %v3808 = vrot.slane %v3807, 4
      %v3810 = vshll.u32 %v3785, 16
      %v3812 = vrot.slane %v3810, 5
      %v3813 = vsel %vm649, %v3808, %v3812
      %v3815 = vshrl.u32 %v3786, 16
      %v3817 = vrot.slane %v3815, 4
      %v3818 = vshll.u32 %v3786, 16
      %v3820 = vrot.slane %v3818, 5
      %v3821 = vor.u32 %v3817, %v3820
      %v3822 = vrot.slane %v3821, 4
      %v3824 = vshll.u32 %v3787, 16
      %v3826 = vrot.slane %v3824, 5
      %v3827 = vsel %vm649, %v3822, %v3826
      %v3829 = vshrl.u32 %v3788, 16
      %v3831 = vrot.slane %v3829, 4
      %v3832 = vshll.u32 %v3788, 16
      %v3834 = vrot.slane %v3832, 5
      %v3835 = vor.u32 %v3831, %v3834
      %v3836 = vrot.slane %v3835, 4
      %v3838 = vshll.u32 %v3789, 16
      %v3840 = vrot.slane %v3838, 5
      %v3841 = vsel %vm649, %v3836, %v3840
      %v3843 = vshrl.u32 %v3790, 16
      %v3845 = vrot.slane %v3843, 4
      %v3846 = vshll.u32 %v3790, 16
      %v3848 = vrot.slane %v3846, 5
      %v3849 = vor.u32 %v3845, %v3848
      %v3850 = vrot.slane %v3849, 4
      %v3852 = vshll.u32 %v3791, 16
      %v3854 = vrot.slane %v3852, 5
      %v3855 = vsel %vm649, %v3850, %v3854
      %v3857 = vshrl.u32 %v3792, 16
      %v3859 = vrot.slane %v3857, 4
      %v3860 = vshll.u32 %v3792, 16
      %v3862 = vrot.slane %v3860, 5
      %v3863 = vor.u32 %v3859, %v3862
      %v3864 = vrot.slane %v3863, 4
      %v3866 = vshll.u32 %v3793, 16
      %v3868 = vrot.slane %v3866, 5
      %v3869 = vsel %vm649, %v3864, %v3868
      %v3871 = vshrl.u32 %v3794, 16
      %v3873 = vrot.slane %v3871, 4
      %v3874 = vshll.u32 %v3794, 16
      %v3876 = vrot.slane %v3874, 5
      %v3877 = vor.u32 %v3873, %v3876
      %v3878 = vrot.slane %v3877, 4
      %v3880 = vshll.u32 %v3795, 16
      %v3882 = vrot.slane %v3880, 5
      %v3883 = vsel %vm649, %v3878, %v3882
      %v3885 = vshrl.u32 %v3796, 16
      %v3887 = vrot.slane %v3885, 4
      %v3888 = vshll.u32 %v3796, 16
      %v3890 = vrot.slane %v3888, 5
      %v3891 = vor.u32 %v3887, %v3890
      %v3892 = vrot.slane %v3891, 4
      %v3894 = vshll.u32 %v3797, 16
      %v3896 = vrot.slane %v3894, 5
      %v3897 = vsel %vm649, %v3892, %v3896
      %v3899 = vshrl.u32 %v3798, 16
      %v3901 = vrot.slane %v3899, 4
      %v3902 = vshll.u32 %v3798, 16
      %v3904 = vrot.slane %v3902, 5
      %v3905 = vor.u32 %v3901, %v3904
      %v3906 = vrot.slane %v3905, 4
      %v3908 = vshll.u32 %v3799, 16
      %v3910 = vrot.slane %v3908, 5
      %v3911 = vsel %vm649, %v3906, %v3910
      %s3912 = scalar_lea.vmem %s1, 896
      %v3913 = vld [vmem:[%s3912] sm:$0xf]
      %v3914 = vld [vmem:[%s3912 + $0x4] sm:$0xf]
      %v3915 = vld [vmem:[%s3912 + $0x8] sm:$0xf]
      %v3916 = vld [vmem:[%s3912 + $0xc] sm:$0xf]
      %v3917 = vld [vmem:[%s3912 + $0x10] sm:$0xf]
      %v3918 = vld [vmem:[%s3912 + $0x14] sm:$0xf]
      %v3919 = vld [vmem:[%s3912 + $0x18] sm:$0xf]
      %v3920 = vld [vmem:[%s3912 + $0x1c] sm:$0xf]
      %v3921 = vld [vmem:[%s3912 + $0x20] sm:$0xf]
      %v3922 = vld [vmem:[%s3912 + $0x24] sm:$0xf]
      %v3923 = vld [vmem:[%s3912 + $0x28] sm:$0xf]
      %v3924 = vld [vmem:[%s3912 + $0x2c] sm:$0xf]
      %v3925 = vld [vmem:[%s3912 + $0x30] sm:$0xf]
      %v3926 = vld [vmem:[%s3912 + $0x34] sm:$0xf]
      %v3927 = vld [vmem:[%s3912 + $0x38] sm:$0xf]
      %v3928 = vld [vmem:[%s3912 + $0x3c] sm:$0xf]
      %v3929 = vunpack.c.l.b16 %v3813
      %v3930 = vunpack.c.l.b16 %v3827
      %v3931 = vunpack.c.l.b16 %v3841
      %v3932 = vunpack.c.l.b16 %v3855
      %v3933 = vunpack.c.l.b16 %v3869
      %v3934 = vunpack.c.l.b16 %v3883
      %v3935 = vunpack.c.l.b16 %v3897
      %v3936 = vunpack.c.l.b16 %v3911
      %v3937 = vpack.c.b16 %v3930, %v3929
      %v3938 = vpack.c.b16 %v3932, %v3931
      %v3939 = vpack.c.b16 %v3934, %v3933
      %v3940 = vpack.c.b16 %v3936, %v3935
      %v3961 = vunpack.c.l.b16 %v3913
      %v3962 = vunpack.c.l.b16 %v3914
      %v3963 = vunpack.c.l.b16 %v3915
      %v3964 = vunpack.c.l.b16 %v3916
      %v3965 = vunpack.c.l.b16 %v3917
      %v3966 = vunpack.c.l.b16 %v3918
      %v3967 = vunpack.c.l.b16 %v3919
      %v3968 = vunpack.c.l.b16 %v3920
      %v3969 = vunpack.c.l.b16 %v3921
      %v3970 = vunpack.c.l.b16 %v3922
      %v3971 = vunpack.c.l.b16 %v3923
      %v3972 = vunpack.c.l.b16 %v3924
      %v3973 = vunpack.c.l.b16 %v3925
      %v3974 = vunpack.c.l.b16 %v3926
      %v3975 = vunpack.c.l.b16 %v3927
      %v3976 = vunpack.c.l.b16 %v3928
      %v3977 = vpack.c.b16 %v3962, %v3961
      %v3978 = vpack.c.b16 %v3964, %v3963
      %v3979 = vpack.c.b16 %v3966, %v3965
      %v3980 = vpack.c.b16 %v3968, %v3967
      %v3981 = vpack.c.b16 %v3970, %v3969
      %v3982 = vpack.c.b16 %v3972, %v3971
      %v3983 = vpack.c.b16 %v3974, %v3973
      %v3984 = vpack.c.b16 %v3976, %v3975
      %3993 = vmatprep.subr.bf16.mxu0 0
      %3994 = vmatpush1.bf16.msra.mxu0 %v3977
      %3995 = vmatprep.subr.bf16.mxu0 0
      %3996 = vmatpush1.bf16.msra.mxu0 %v3978
      %3997 = vmatprep.subr.bf16.mxu0 0
      %3998 = vmatpush1.bf16.msra.mxu0 %v3979
      %3999 = vmatprep.subr.bf16.mxu0 0
      %4000 = vmatpush1.bf16.msra.mxu0 %v3980
      %4001 = vmatprep.subr.bf16.mxu0 0
      %4002 = vmatpush1.bf16.msra.mxu0 %v3981
      %4003 = vmatprep.subr.bf16.mxu0 0
      %4004 = vmatpush1.bf16.msra.mxu0 %v3982
      %4005 = vmatprep.subr.bf16.mxu0 0
      %4006 = vmatpush1.bf16.msra.mxu0 %v3983
      %4007 = vmatprep.subr.bf16.mxu0 0
      %4008 = vmatpush1.bf16.msra.mxu0 %v3984
      %4009 = vmatprep.subr.bf16.mxu0 0
      %4010 = vmatpush1.bf16.msra.mxu0 0
      %4011 = vmatprep.subr.bf16.mxu0 0
      %4012 = vmatpush1.bf16.msra.mxu0 0
      %4013 = vmatprep.subr.bf16.mxu0 0
      %4014 = vmatpush1.bf16.msra.mxu0 0
      %4015 = vmatprep.subr.bf16.mxu0 0
      %4016 = vmatpush1.bf16.msra.mxu0 0
      %4017 = vmatprep.subr.bf16.mxu0 0
      %4018 = vmatpush1.bf16.msra.mxu0 0
      %4019 = vmatprep.subr.bf16.mxu0 0
      %4020 = vmatpush1.bf16.msra.mxu0 0
      %4021 = vmatprep.subr.bf16.mxu0 0
      %4022 = vmatpush1.bf16.msra.mxu0 0
      %4023 = vmatprep.subr.bf16.mxu0 0
      %4024 = vmatpush1.bf16.msra.mxu0 0
      %4025 = vmatprep.mubr.bf16.mxu0 0
      %4026 = vmatmul.mubr.bf16.gmra.mrb[0].mxu0 %v3937
      %v4027 = vpop.f32.mrb[0].mxu0
      %v4028 = vadd.f32 0.0, %v4027
      %v4029 = vpop.f32.mrb[0].mxu0
      %v4030 = vpop.f32.mrb[0].mxu0
      %v4031 = vadd.f32 0.0, %v4030
      %v4032 = vpop.f32.mrb[0].mxu0
      %4033 = vmatprep.mubr.bf16.mxu0 0
      %4034 = vmatmul.mubr.bf16.gmra.mrb[0].mxu0 %v3938
      %v4035 = vpop.f32.mrb[0].mxu0
      %v4036 = vadd.f32 0.0, %v4035
      %v4037 = vpop.f32.mrb[0].mxu0
      %v4038 = vpop.f32.mrb[0].mxu0
      %v4039 = vadd.f32 0.0, %v4038
      %v4040 = vpop.f32.mrb[0].mxu0
      %4041 = vmatprep.mubr.bf16.mxu0 0
      %4042 = vmatmul.mubr.bf16.gmra.mrb[0].mxu0 %v3939
      %v4043 = vpop.f32.mrb[0].mxu0
      %v4044 = vadd.f32 0.0, %v4043
      %v4045 = vpop.f32.mrb[0].mxu0
      %v4046 = vpop.f32.mrb[0].mxu0
      %v4047 = vadd.f32 0.0, %v4046
      %v4048 = vpop.f32.mrb[0].mxu0
      %4049 = vmatprep.mubr.bf16.mxu0 0
      %4050 = vmatmul.mubr.bf16.gmra.mrb[0].mxu0 %v3940
      %v4051 = vpop.f32.mrb[0].mxu0
      %v4052 = vadd.f32 0.0, %v4051
      %v4053 = vpop.f32.mrb[0].mxu0
      %v4054 = vpop.f32.mrb[0].mxu0
      %v4055 = vadd.f32 0.0, %v4054
      %v4056 = vpop.f32.mrb[0].mxu0
      %4057 = vdwg.mxu0
      %v4058 = vadd.f32 %v3728, %v4028
      %v4059 = vadd.f32 %v3729, %v4031
      %v4060 = vadd.f32 %v3730, %v4036
      %v4061 = vadd.f32 %v3731, %v4039
      %v4062 = vadd.f32 %v3732, %v4044
      %v4063 = vadd.f32 %v3733, %v4047
      %v4064 = vadd.f32 %v3734, %v4052
      %v4065 = vadd.f32 %v3735, %v4055
      %v4066 = vld [vmem:[%s3541] sm:$0xf]
      %v4067 = vld [vmem:[%s3541 + $0x4] sm:$0x1]
      %v4068 = vld [vmem:[%s3541 + $0x8] sm:$0xf]
      %v4069 = vld [vmem:[%s3541 + $0xc] sm:$0x1]
      %v4070 = vld [vmem:[%s3541 + $0x10] sm:$0xf]
      %v4071 = vld [vmem:[%s3541 + $0x14] sm:$0x1]
      %v4072 = vld [vmem:[%s3541 + $0x18] sm:$0xf]
      %v4073 = vld [vmem:[%s3541 + $0x1c] sm:$0x1]
      %v4074 = vld [vmem:[%s3541 + $0x20] sm:$0xf]
      %v4075 = vld [vmem:[%s3541 + $0x24] sm:$0x1]
      %v4076 = vld [vmem:[%s3541 + $0x28] sm:$0xf]
      %v4077 = vld [vmem:[%s3541 + $0x2c] sm:$0x1]
      %v4078 = vld [vmem:[%s3541 + $0x30] sm:$0xf]
      %v4079 = vld [vmem:[%s3541 + $0x34] sm:$0x1]
      %v4080 = vld [vmem:[%s3541 + $0x38] sm:$0xf]
      %v4081 = vld [vmem:[%s3541 + $0x3c] sm:$0x1]
      %vm4082 = vcmp.gt.bf16.partialorder %v4066, 0
      %vm4083 = vcmp.gt.bf16.partialorder %v4067, 0
      %vm4084 = vcmp.gt.bf16.partialorder %v4068, 0
      %vm4085 = vcmp.gt.bf16.partialorder %v4069, 0
      %vm4086 = vcmp.gt.bf16.partialorder %v4070, 0
      %vm4087 = vcmp.gt.bf16.partialorder %v4071, 0
      %vm4088 = vcmp.gt.bf16.partialorder %v4072, 0
      %vm4089 = vcmp.gt.bf16.partialorder %v4073, 0
      %vm4090 = vcmp.gt.bf16.partialorder %v4074, 0
      %vm4091 = vcmp.gt.bf16.partialorder %v4075, 0
      %vm4092 = vcmp.gt.bf16.partialorder %v4076, 0
      %vm4093 = vcmp.gt.bf16.partialorder %v4077, 0
      %vm4094 = vcmp.gt.bf16.partialorder %v4078, 0
      %vm4095 = vcmp.gt.bf16.partialorder %v4079, 0
      %vm4096 = vcmp.gt.bf16.partialorder %v4080, 0
      %vm4097 = vcmp.gt.bf16.partialorder %v4081, 0
      %v4098 = vmul.bf16 %v4066, 1045249613
      %v4099 = vmul.bf16 %v4067, 1045249613
      %v4100 = vmul.bf16 %v4068, 1045249613
      %v4101 = vmul.bf16 %v4069, 1045249613
      %v4102 = vmul.bf16 %v4070, 1045249613
      %v4103 = vmul.bf16 %v4071, 1045249613
      %v4104 = vmul.bf16 %v4072, 1045249613
      %v4105 = vmul.bf16 %v4073, 1045249613
      %v4106 = vmul.bf16 %v4074, 1045249613
      %v4107 = vmul.bf16 %v4075, 1045249613
      %v4108 = vmul.bf16 %v4076, 1045249613
      %v4109 = vmul.bf16 %v4077, 1045249613
      %v4110 = vmul.bf16 %v4078, 1045249613
      %v4111 = vmul.bf16 %v4079, 1045249613
      %v4112 = vmul.bf16 %v4080, 1045249613
      %v4113 = vmul.bf16 %v4081, 1045249613
      %v4114 = vsel %vm4082, %v4066, %v4098
      %v4115 = vsel %vm4083, %v4067, %v4099
      %v4116 = vsel %vm4084, %v4068, %v4100
      %v4117 = vsel %vm4085, %v4069, %v4101
      %v4118 = vsel %vm4086, %v4070, %v4102
      %v4119 = vsel %vm4087, %v4071, %v4103
      %v4120 = vsel %vm4088, %v4072, %v4104
      %v4121 = vsel %vm4089, %v4073, %v4105
      %v4122 = vsel %vm4090, %v4074, %v4106
      %v4123 = vsel %vm4091, %v4075, %v4107
      %v4124 = vsel %vm4092, %v4076, %v4108
      %v4125 = vsel %vm4093, %v4077, %v4109
      %v4126 = vsel %vm4094, %v4078, %v4110
      %v4127 = vsel %vm4095, %v4079, %v4111
      %v4128 = vsel %vm4096, %v4080, %v4112
      %v4129 = vsel %vm4097, %v4081, %v4113
      %v4131 = vshrl.u32 %v4114, 16
      %v4133 = vrot.slane %v4131, 4
      %v4134 = vshll.u32 %v4114, 16
      %v4136 = vrot.slane %v4134, 5
      %v4137 = vor.u32 %v4133, %v4136
      %v4138 = vrot.slane %v4137, 4
      %v4140 = vshll.u32 %v4115, 16
      %v4142 = vrot.slane %v4140, 5
      %v4143 = vsel %vm649, %v4138, %v4142
      %v4145 = vshrl.u32 %v4116, 16
      %v4147 = vrot.slane %v4145, 4
      %v4148 = vshll.u32 %v4116, 16
      %v4150 = vrot.slane %v4148, 5
      %v4151 = vor.u32 %v4147, %v4150
      %v4152 = vrot.slane %v4151, 4
      %v4154 = vshll.u32 %v4117, 16
      %v4156 = vrot.slane %v4154, 5
      %v4157 = vsel %vm649, %v4152, %v4156
      %v4159 = vshrl.u32 %v4118, 16
      %v4161 = vrot.slane %v4159, 4
      %v4162 = vshll.u32 %v4118, 16
      %v4164 = vrot.slane %v4162, 5
      %v4165 = vor.u32 %v4161, %v4164
      %v4166 = vrot.slane %v4165, 4
      %v4168 = vshll.u32 %v4119, 16
      %v4170 = vrot.slane %v4168, 5
      %v4171 = vsel %vm649, %v4166, %v4170
      %v4173 = vshrl.u32 %v4120, 16
      %v4175 = vrot.slane %v4173, 4
      %v4176 = vshll.u32 %v4120, 16
      %v4178 = vrot.slane %v4176, 5
      %v4179 = vor.u32 %v4175, %v4178
      %v4180 = vrot.slane %v4179, 4
      %v4182 = vshll.u32 %v4121, 16
      %v4184 = vrot.slane %v4182, 5
      %v4185 = vsel %vm649, %v4180, %v4184
      %v4187 = vshrl.u32 %v4122, 16
      %v4189 = vrot.slane %v4187, 4
      %v4190 = vshll.u32 %v4122, 16
      %v4192 = vrot.slane %v4190, 5
      %v4193 = vor.u32 %v4189, %v4192
      %v4194 = vrot.slane %v4193, 4
      %v4196 = vshll.u32 %v4123, 16
      %v4198 = vrot.slane %v4196, 5
      %v4199 = vsel %vm649, %v4194, %v4198
      %v4201 = vshrl.u32 %v4124, 16
      %v4203 = vrot.slane %v4201, 4
      %v4204 = vshll.u32 %v4124, 16
      %v4206 = vrot.slane %v4204, 5
      %v4207 = vor.u32 %v4203, %v4206
      %v4208 = vrot.slane %v4207, 4
      %v4210 = vshll.u32 %v4125, 16
      %v4212 = vrot.slane %v4210, 5
      %v4213 = vsel %vm649, %v4208, %v4212
      %v4215 = vshrl.u32 %v4126, 16
      %v4217 = vrot.slane %v4215, 4
      %v4218 = vshll.u32 %v4126, 16
      %v4220 = vrot.slane %v4218, 5
      %v4221 = vor.u32 %v4217, %v4220
      %v4222 = vrot.slane %v4221, 4
      %v4224 = vshll.u32 %v4127, 16
      %v4226 = vrot.slane %v4224, 5
      %v4227 = vsel %vm649, %v4222, %v4226
      %v4229 = vshrl.u32 %v4128, 16
      %v4231 = vrot.slane %v4229, 4
      %v4232 = vshll.u32 %v4128, 16
      %v4234 = vrot.slane %v4232, 5
      %v4235 = vor.u32 %v4231, %v4234
      %v4236 = vrot.slane %v4235, 4
      %v4238 = vshll.u32 %v4129, 16
      %v4240 = vrot.slane %v4238, 5
      %v4241 = vsel %vm649, %v4236, %v4240
      %s4242 = scalar_lea.vmem %s1, 960
      %v4243 = vld [vmem:[%s4242] sm:$0xf]
      %v4244 = vld [vmem:[%s4242 + $0x4] sm:$0xf]
      %v4245 = vld [vmem:[%s4242 + $0x8] sm:$0xf]
      %v4246 = vld [vmem:[%s4242 + $0xc] sm:$0xf]
      %v4247 = vld [vmem:[%s4242 + $0x10] sm:$0xf]
      %v4248 = vld [vmem:[%s4242 + $0x14] sm:$0xf]
      %v4249 = vld [vmem:[%s4242 + $0x18] sm:$0xf]
      %v4250 = vld [vmem:[%s4242 + $0x1c] sm:$0xf]
      %v4251 = vld [vmem:[%s4242 + $0x20] sm:$0xf]
      %v4252 = vld [vmem:[%s4242 + $0x24] sm:$0xf]
      %v4253 = vld [vmem:[%s4242 + $0x28] sm:$0xf]
      %v4254 = vld [vmem:[%s4242 + $0x2c] sm:$0xf]
      %v4255 = vld [vmem:[%s4242 + $0x30] sm:$0xf]
      %v4256 = vld [vmem:[%s4242 + $0x34] sm:$0xf]
      %v4257 = vld [vmem:[%s4242 + $0x38] sm:$0xf]
      %v4258 = vld [vmem:[%s4242 + $0x3c] sm:$0xf]
      %v4259 = vunpack.c.l.b16 %v4143
      %v4260 = vunpack.c.l.b16 %v4157
      %v4261 = vunpack.c.l.b16 %v4171
      %v4262 = vunpack.c.l.b16 %v4185
      %v4263 = vunpack.c.l.b16 %v4199
      %v4264 = vunpack.c.l.b16 %v4213
      %v4265 = vunpack.c.l.b16 %v4227
      %v4266 = vunpack.c.l.b16 %v4241
      %v4267 = vpack.c.b16 %v4260, %v4259
      %v4268 = vpack.c.b16 %v4262, %v4261
      %v4269 = vpack.c.b16 %v4264, %v4263
      %v4270 = vpack.c.b16 %v4266, %v4265
      %v4291 = vunpack.c.l.b16 %v4243
      %v4292 = vunpack.c.l.b16 %v4244
      %v4293 = vunpack.c.l.b16 %v4245
      %v4294 = vunpack.c.l.b16 %v4246
      %v4295 = vunpack.c.l.b16 %v4247
      %v4296 = vunpack.c.l.b16 %v4248
      %v4297 = vunpack.c.l.b16 %v4249
      %v4298 = vunpack.c.l.b16 %v4250
      %v4299 = vunpack.c.l.b16 %v4251
      %v4300 = vunpack.c.l.b16 %v4252
      %v4301 = vunpack.c.l.b16 %v4253
      %v4302 = vunpack.c.l.b16 %v4254
      %v4303 = vunpack.c.l.b16 %v4255
      %v4304 = vunpack.c.l.b16 %v4256
      %v4305 = vunpack.c.l.b16 %v4257
      %v4306 = vunpack.c.l.b16 %v4258
      %v4307 = vpack.c.b16 %v4292, %v4291
      %v4308 = vpack.c.b16 %v4294, %v4293
      %v4309 = vpack.c.b16 %v4296, %v4295
      %v4310 = vpack.c.b16 %v4298, %v4297
      %v4311 = vpack.c.b16 %v4300, %v4299
      %v4312 = vpack.c.b16 %v4302, %v4301
      %v4313 = vpack.c.b16 %v4304, %v4303
      %v4314 = vpack.c.b16 %v4306, %v4305
      %4323 = vmatprep.subr.bf16.mxu0 0
      %4324 = vmatpush1.bf16.msra.mxu0 %v4307
      %4325 = vmatprep.subr.bf16.mxu0 0
      %4326 = vmatpush1.bf16.msra.mxu0 %v4308
      %4327 = vmatprep.subr.bf16.mxu0 0
      %4328 = vmatpush1.bf16.msra.mxu0 %v4309
      %4329 = vmatprep.subr.bf16.mxu0 0
      %4330 = vmatpush1.bf16.msra.mxu0 %v4310
      %4331 = vmatprep.subr.bf16.mxu0 0
      %4332 = vmatpush1.bf16.msra.mxu0 %v4311
      %4333 = vmatprep.subr.bf16.mxu0 0
      %4334 = vmatpush1.bf16.msra.mxu0 %v4312
      %4335 = vmatprep.subr.bf16.mxu0 0
      %4336 = vmatpush1.bf16.msra.mxu0 %v4313
      %4337 = vmatprep.subr.bf16.mxu0 0
      %4338 = vmatpush1.bf16.msra.mxu0 %v4314
      %4339 = vmatprep.subr.bf16.mxu0 0
      %4340 = vmatpush1.bf16.msra.mxu0 0
      %4341 = vmatprep.subr.bf16.mxu0 0
      %4342 = vmatpush1.bf16.msra.mxu0 0
      %4343 = vmatprep.subr.bf16.mxu0 0
      %4344 = vmatpush1.bf16.msra.mxu0 0
      %4345 = vmatprep.subr.bf16.mxu0 0
      %4346 = vmatpush1.bf16.msra.mxu0 0
      %4347 = vmatprep.subr.bf16.mxu0 0
      %4348 = vmatpush1.bf16.msra.mxu0 0
      %4349 = vmatprep.subr.bf16.mxu0 0
      %4350 = vmatpush1.bf16.msra.mxu0 0
      %4351 = vmatprep.subr.bf16.mxu0 0
      %4352 = vmatpush1.bf16.msra.mxu0 0
      %4353 = vmatprep.subr.bf16.mxu0 0
      %4354 = vmatpush1.bf16.msra.mxu0 0
      %4355 = vmatprep.mubr.bf16.mxu0 0
      %4356 = vmatmul.mubr.bf16.gmra.mrb[0].mxu0 %v4267
      %v4357 = vpop.f32.mrb[0].mxu0
      %v4358 = vadd.f32 0.0, %v4357
      %v4359 = vpop.f32.mrb[0].mxu0
      %v4360 = vpop.f32.mrb[0].mxu0
      %v4361 = vadd.f32 0.0, %v4360
      %v4362 = vpop.f32.mrb[0].mxu0
      %4363 = vmatprep.mubr.bf16.mxu0 0
      %4364 = vmatmul.mubr.bf16.gmra.mrb[0].mxu0 %v4268
      %v4365 = vpop.f32.mrb[0].mxu0
      %v4366 = vadd.f32 0.0, %v4365
      %v4367 = vpop.f32.mrb[0].mxu0
      %v4368 = vpop.f32.mrb[0].mxu0
      %v4369 = vadd.f32 0.0, %v4368
      %v4370 = vpop.f32.mrb[0].mxu0
      %4371 = vmatprep.mubr.bf16.mxu0 0
      %4372 = vmatmul.mubr.bf16.gmra.mrb[0].mxu0 %v4269
      %v4373 = vpop.f32.mrb[0].mxu0
      %v4374 = vadd.f32 0.0, %v4373
      %v4375 = vpop.f32.mrb[0].mxu0
      %v4376 = vpop.f32.mrb[0].mxu0
      %v4377 = vadd.f32 0.0, %v4376
      %v4378 = vpop.f32.mrb[0].mxu0
      %4379 = vmatprep.mubr.bf16.mxu0 0
      %4380 = vmatmul.mubr.bf16.gmra.mrb[0].mxu0 %v4270
      %v4381 = vpop.f32.mrb[0].mxu0
      %v4382 = vadd.f32 0.0, %v4381
      %v4383 = vpop.f32.mrb[0].mxu0
      %v4384 = vpop.f32.mrb[0].mxu0
      %v4385 = vadd.f32 0.0, %v4384
      %v4386 = vpop.f32.mrb[0].mxu0
      %4387 = vdwg.mxu0
      %v4388 = vadd.f32 %v4058, %v4358
      %v4389 = vadd.f32 %v4059, %v4361
      %v4390 = vadd.f32 %v4060, %v4366
      %v4391 = vadd.f32 %v4061, %v4369
      %v4392 = vadd.f32 %v4062, %v4374
      %v4393 = vadd.f32 %v4063, %v4377
      %v4394 = vadd.f32 %v4064, %v4382
      %v4395 = vadd.f32 %v4065, %v4385
      %v4396 = vmax.f32 %v4388, 0.0
      %v4397 = vmax.f32 %v4389, 0.0
      %v4398 = vmax.f32 %v4390, 0.0
      %v4399 = vmax.f32 %v4391, 0.0
      %v4400 = vmax.f32 %v4392, 0.0
      %v4401 = vmax.f32 %v4393, 0.0
      %v4402 = vmax.f32 %v4394, 0.0
      %v4403 = vmax.f32 %v4395, 0.0
      %4404 = vst [vmem:[#allocation2] sm:$0xff] 0.0
      %4405 = vst [vmem:[#allocation2 + $0x8] sm:$0x3] 0.0
      %4406 = vst [vmem:[#allocation2 + $0x10] sm:$0xff] 0.0
      %4407 = vst [vmem:[#allocation2 + $0x18] sm:$0x3] 0.0
      %4408 = vst [vmem:[#allocation2 + $0x20] sm:$0xff] 0.0
      %4409 = vst [vmem:[#allocation2 + $0x28] sm:$0x3] 0.0
      %4410 = vst [vmem:[#allocation2 + $0x30] sm:$0xff] 0.0
      %4411 = vst [vmem:[#allocation2 + $0x38] sm:$0x3] 0.0
      %4412 = vst [vmem:[#allocation2 + $0x40] sm:$0xff] 0.0
      %4413 = vst [vmem:[#allocation2 + $0x48] sm:$0x3] 0.0
      %4414 = vst [vmem:[#allocation2 + $0x50] sm:$0xff] 0.0
      %4415 = vst [vmem:[#allocation2 + $0x58] sm:$0x3] 0.0
      %4416 = vst [vmem:[#allocation2 + $0x60] sm:$0xff] 0.0
      %4417 = vst [vmem:[#allocation2 + $0x68] sm:$0x3] 0.0
      %4418 = vst [vmem:[#allocation2 + $0x70] sm:$0xff] 0.0
      %4419 = vst [vmem:[#allocation2 + $0x78] sm:$0x3] 0.0
      %4420 = vst [vmem:[#allocation2 + $0x80] sm:$0xff] 0.0
      %4421 = vst [vmem:[#allocation2 + $0x88] sm:$0x3] 0.0
      %4422 = vst [vmem:[#allocation2 + $0x90] sm:$0xff] 0.0
      %4423 = vst [vmem:[#allocation2 + $0x98] sm:$0x3] 0.0
      %s4424 = scalar_lea.vmem [#allocation2], 16
      %4425 = vst [vmem:[%s4424 + $0x1] sm:$0xff] %v4396
      %4426 = vst [vmem:[%s4424 + $0x11] sm:$0xff] %v4397
      %4427 = vst [vmem:[%s4424 + $0x21] sm:$0xff] %v4398
      %4428 = vst [vmem:[%s4424 + $0x31] sm:$0xff] %v4399
      %4429 = vst [vmem:[%s4424 + $0x41] sm:$0xff] %v4400
      %4430 = vst [vmem:[%s4424 + $0x51] sm:$0xff] %v4401
      %4431 = vst [vmem:[%s4424 + $0x61] sm:$0xff] %v4402
      %4432 = vst [vmem:[%s4424 + $0x71] sm:$0xff] %v4403
      %v4433 = vld [vmem:[%s4424 + $0x1] sm:$0xff]
      %v4434 = vld [vmem:[%s4424 + $0x11] sm:$0xff]
      %v4435 = vld [vmem:[%s4424 + $0x21] sm:$0xff]
      %v4436 = vld [vmem:[%s4424 + $0x31] sm:$0xff]
      %v4437 = vld [vmem:[%s4424 + $0x41] sm:$0xff]
      %v4438 = vld [vmem:[%s4424 + $0x51] sm:$0xff]
      %v4439 = vld [vmem:[%s4424 + $0x61] sm:$0xff]
      %v4440 = vld [vmem:[%s4424 + $0x71] sm:$0xff]
      %v4441 = vpack.c.bf16 %v4433, %v4433
      %v4442 = vpack.c.bf16 %v4434, %v4434
      %v4443 = vpack.c.bf16 %v4435, %v4435
      %v4444 = vpack.c.bf16 %v4436, %v4436
      %v4445 = vpack.c.bf16 %v4437, %v4437
      %v4446 = vpack.c.bf16 %v4438, %v4438
      %v4447 = vpack.c.bf16 %v4439, %v4439
      %v4448 = vpack.c.bf16 %v4440, %v4440
      %s4449 = scalar_lea.vmem %s2, 320
      %v4450 = vld [vmem:[%s4449] sm:$0xf]
      %v4451 = vld [vmem:[%s4449 + $0x4] sm:$0xf]
      %v4452 = vld [vmem:[%s4449 + $0x8] sm:$0xf]
      %v4453 = vld [vmem:[%s4449 + $0xc] sm:$0xf]
      %v4454 = vld [vmem:[%s4449 + $0x10] sm:$0xf]
      %v4455 = vld [vmem:[%s4449 + $0x14] sm:$0xf]
      %v4456 = vld [vmem:[%s4449 + $0x18] sm:$0xf]
      %v4457 = vld [vmem:[%s4449 + $0x1c] sm:$0xf]
      %v4458 = vld [vmem:[%s4449 + $0x20] sm:$0xf]
      %v4459 = vld [vmem:[%s4449 + $0x24] sm:$0xf]
      %v4460 = vld [vmem:[%s4449 + $0x28] sm:$0xf]
      %v4461 = vld [vmem:[%s4449 + $0x2c] sm:$0xf]
      %v4462 = vld [vmem:[%s4449 + $0x30] sm:$0xf]
      %v4463 = vld [vmem:[%s4449 + $0x34] sm:$0xf]
      %v4464 = vld [vmem:[%s4449 + $0x38] sm:$0xf]
      %v4465 = vld [vmem:[%s4449 + $0x3c] sm:$0xf]
      %v4466 = vld [vmem:[%s4424] sm:$0xff]
      %v4467 = vld [vmem:[%s4424 + $0x10] sm:$0xff]
      %v4468 = vld [vmem:[%s4424 + $0x20] sm:$0xff]
      %v4469 = vld [vmem:[%s4424 + $0x30] sm:$0xff]
      %v4470 = vld [vmem:[%s4424 + $0x40] sm:$0xff]
      %v4471 = vld [vmem:[%s4424 + $0x50] sm:$0xff]
      %v4472 = vld [vmem:[%s4424 + $0x60] sm:$0xff]
      %v4473 = vld [vmem:[%s4424 + $0x70] sm:$0xff]
      %v4474 = vpack.c.bf16 %v4466, %v4466
      %v4475 = vpack.c.bf16 %v4467, %v4467
      %v4476 = vpack.c.bf16 %v4468, %v4468
      %v4477 = vpack.c.bf16 %v4469, %v4469
      %v4478 = vpack.c.bf16 %v4470, %v4470
      %v4479 = vpack.c.bf16 %v4471, %v4471
      %v4480 = vpack.c.bf16 %v4472, %v4472
      %v4481 = vpack.c.bf16 %v4473, %v4473
      %s4482 = scalar_lea.vmem %s2, 448
      %v4483 = vld [vmem:[%s4482] sm:$0xf]
      %v4484 = vld [vmem:[%s4482 + $0x4] sm:$0xf]
      %v4485 = vld [vmem:[%s4482 + $0x8] sm:$0xf]
      %v4486 = vld [vmem:[%s4482 + $0xc] sm:$0xf]
      %v4487 = vld [vmem:[%s4482 + $0x10] sm:$0xf]
      %v4488 = vld [vmem:[%s4482 + $0x14] sm:$0xf]
      %v4489 = vld [vmem:[%s4482 + $0x18] sm:$0xf]
      %v4490 = vld [vmem:[%s4482 + $0x1c] sm:$0xf]
      %v4491 = vld [vmem:[%s4482 + $0x20] sm:$0xf]
      %v4492 = vld [vmem:[%s4482 + $0x24] sm:$0xf]
      %v4493 = vld [vmem:[%s4482 + $0x28] sm:$0xf]
      %v4494 = vld [vmem:[%s4482 + $0x2c] sm:$0xf]
      %v4495 = vld [vmem:[%s4482 + $0x30] sm:$0xf]
      %v4496 = vld [vmem:[%s4482 + $0x34] sm:$0xf]
      %v4497 = vld [vmem:[%s4482 + $0x38] sm:$0xf]
      %v4498 = vld [vmem:[%s4482 + $0x3c] sm:$0xf]
      %v4507 = vunpack.c.l.b16 %v4474
      %v4508 = vunpack.c.l.b16 %v4475
      %v4509 = vunpack.c.l.b16 %v4476
      %v4510 = vunpack.c.l.b16 %v4477
      %v4511 = vunpack.c.l.b16 %v4478
      %v4512 = vunpack.c.l.b16 %v4479
      %v4513 = vunpack.c.l.b16 %v4480
      %v4514 = vunpack.c.l.b16 %v4481
      %v4515 = vpack.c.b16 %v4508, %v4507
      %v4516 = vpack.c.b16 %v4510, %v4509
      %v4517 = vpack.c.b16 %v4512, %v4511
      %v4518 = vpack.c.b16 %v4514, %v4513
      %v4539 = vunpack.c.l.b16 %v4483
      %v4540 = vunpack.c.l.b16 %v4484
      %v4541 = vunpack.c.l.b16 %v4485
      %v4542 = vunpack.c.l.b16 %v4486
      %v4543 = vunpack.c.l.b16 %v4487
      %v4544 = vunpack.c.l.b16 %v4488
      %v4545 = vunpack.c.l.b16 %v4489
      %v4546 = vunpack.c.l.b16 %v4490
      %v4547 = vunpack.c.l.b16 %v4491
      %v4548 = vunpack.c.l.b16 %v4492
      %v4549 = vunpack.c.l.b16 %v4493
      %v4550 = vunpack.c.l.b16 %v4494
      %v4551 = vunpack.c.l.b16 %v4495
      %v4552 = vunpack.c.l.b16 %v4496
      %v4553 = vunpack.c.l.b16 %v4497
      %v4554 = vunpack.c.l.b16 %v4498
      %v4555 = vpack.c.b16 %v4540, %v4539
      %v4556 = vpack.c.b16 %v4542, %v4541
      %v4557 = vpack.c.b16 %v4544, %v4543
      %v4558 = vpack.c.b16 %v4546, %v4545
      %v4559 = vpack.c.b16 %v4548, %v4547
      %v4560 = vpack.c.b16 %v4550, %v4549
      %v4561 = vpack.c.b16 %v4552, %v4551
      %v4562 = vpack.c.b16 %v4554, %v4553
      %4571 = vmatprep.subr.bf16.mxu0 0
      %4572 = vmatpush1.bf16.msra.mxu0 %v4555
      %4573 = vmatprep.subr.bf16.mxu0 0
      %4574 = vmatpush1.bf16.msra.mxu0 %v4556
      %4575 = vmatprep.subr.bf16.mxu0 0
      %4576 = vmatpush1.bf16.msra.mxu0 %v4557
      %4577 = vmatprep.subr.bf16.mxu0 0
      %4578 = vmatpush1.bf16.msra.mxu0 %v4558
      %4579 = vmatprep.subr.bf16.mxu0 0
      %4580 = vmatpush1.bf16.msra.mxu0 %v4559
      %4581 = vmatprep.subr.bf16.mxu0 0
      %4582 = vmatpush1.bf16.msra.mxu0 %v4560
      %4583 = vmatprep.subr.bf16.mxu0 0
      %4584 = vmatpush1.bf16.msra.mxu0 %v4561
      %4585 = vmatprep.subr.bf16.mxu0 0
      %4586 = vmatpush1.bf16.msra.mxu0 %v4562
      %4587 = vmatprep.subr.bf16.mxu0 0
      %4588 = vmatpush1.bf16.msra.mxu0 0
      %4589 = vmatprep.subr.bf16.mxu0 0
      %4590 = vmatpush1.bf16.msra.mxu0 0
      %4591 = vmatprep.subr.bf16.mxu0 0
      %4592 = vmatpush1.bf16.msra.mxu0 0
      %4593 = vmatprep.subr.bf16.mxu0 0
      %4594 = vmatpush1.bf16.msra.mxu0 0
      %4595 = vmatprep.subr.bf16.mxu0 0
      %4596 = vmatpush1.bf16.msra.mxu0 0
      %4597 = vmatprep.subr.bf16.mxu0 0
      %4598 = vmatpush1.bf16.msra.mxu0 0
      %4599 = vmatprep.subr.bf16.mxu0 0
      %4600 = vmatpush1.bf16.msra.mxu0 0
      %4601 = vmatprep.subr.bf16.mxu0 0
      %4602 = vmatpush1.bf16.msra.mxu0 0
      %4603 = vmatprep.mubr.bf16.mxu0 0
      %4604 = vmatmul.mubr.bf16.gmra.mrb[0].mxu0 %v4515
      %v4605 = vpop.f32.mrb[0].mxu0
      %v4606 = vadd.f32 0.0, %v4605
      %v4607 = vpop.f32.mrb[0].mxu0
      %v4608 = vpop.f32.mrb[0].mxu0
      %v4609 = vadd.f32 0.0, %v4608
      %v4610 = vpop.f32.mrb[0].mxu0
      %4611 = vmatprep.mubr.bf16.mxu0 0
      %4612 = vmatmul.mubr.bf16.gmra.mrb[0].mxu0 %v4516
      %v4613 = vpop.f32.mrb[0].mxu0
      %v4614 = vadd.f32 0.0, %v4613
      %v4615 = vpop.f32.mrb[0].mxu0
      %v4616 = vpop.f32.mrb[0].mxu0
      %v4617 = vadd.f32 0.0, %v4616
      %v4618 = vpop.f32.mrb[0].mxu0
      %4619 = vmatprep.mubr.bf16.mxu0 0
      %4620 = vmatmul.mubr.bf16.gmra.mrb[0].mxu0 %v4517
      %v4621 = vpop.f32.mrb[0].mxu0
      %v4622 = vadd.f32 0.0, %v4621
      %v4623 = vpop.f32.mrb[0].mxu0
      %v4624 = vpop.f32.mrb[0].mxu0
      %v4625 = vadd.f32 0.0, %v4624
      %v4626 = vpop.f32.mrb[0].mxu0
      %4627 = vmatprep.mubr.bf16.mxu0 0
      %4628 = vmatmul.mubr.bf16.gmra.mrb[0].mxu0 %v4518
      %v4629 = vpop.f32.mrb[0].mxu0
      %v4630 = vadd.f32 0.0, %v4629
      %v4631 = vpop.f32.mrb[0].mxu0
      %v4632 = vpop.f32.mrb[0].mxu0
      %v4633 = vadd.f32 0.0, %v4632
      %v4634 = vpop.f32.mrb[0].mxu0
      %4635 = vdwg.mxu0
      %v4644 = vunpack.c.l.b16 %v4441
      %v4645 = vunpack.c.l.b16 %v4442
      %v4646 = vunpack.c.l.b16 %v4443
      %v4647 = vunpack.c.l.b16 %v4444
      %v4648 = vunpack.c.l.b16 %v4445
      %v4649 = vunpack.c.l.b16 %v4446
      %v4650 = vunpack.c.l.b16 %v4447
      %v4651 = vunpack.c.l.b16 %v4448
      %v4652 = vpack.c.b16 %v4645, %v4644
      %v4653 = vpack.c.b16 %v4647, %v4646
      %v4654 = vpack.c.b16 %v4649, %v4648
      %v4655 = vpack.c.b16 %v4651, %v4650
      %v4676 = vunpack.c.l.b16 %v4450
      %v4677 = vunpack.c.l.b16 %v4451
      %v4678 = vunpack.c.l.b16 %v4452
      %v4679 = vunpack.c.l.b16 %v4453
      %v4680 = vunpack.c.l.b16 %v4454
      %v4681 = vunpack.c.l.b16 %v4455
      %v4682 = vunpack.c.l.b16 %v4456
      %v4683 = vunpack.c.l.b16 %v4457
      %v4684 = vunpack.c.l.b16 %v4458
      %v4685 = vunpack.c.l.b16 %v4459
      %v4686 = vunpack.c.l.b16 %v4460
      %v4687 = vunpack.c.l.b16 %v4461
      %v4688 = vunpack.c.l.b16 %v4462
      %v4689 = vunpack.c.l.b16 %v4463
      %v4690 = vunpack.c.l.b16 %v4464
      %v4691 = vunpack.c.l.b16 %v4465
      %v4692 = vpack.c.b16 %v4677, %v4676
      %v4693 = vpack.c.b16 %v4679, %v4678
      %v4694 = vpack.c.b16 %v4681, %v4680
      %v4695 = vpack.c.b16 %v4683, %v4682
      %v4696 = vpack.c.b16 %v4685, %v4684
      %v4697 = vpack.c.b16 %v4687, %v4686
      %v4698 = vpack.c.b16 %v4689, %v4688
      %v4699 = vpack.c.b16 %v4691, %v4690
      %4708 = vmatprep.subr.bf16.mxu0 0
      %4709 = vmatpush1.bf16.msra.mxu0 %v4692
      %4710 = vmatprep.subr.bf16.mxu0 0
      %4711 = vmatpush1.bf16.msra.mxu0 %v4693
      %4712 = vmatprep.subr.bf16.mxu0 0
      %4713 = vmatpush1.bf16.msra.mxu0 %v4694
      %4714 = vmatprep.subr.bf16.mxu0 0
      %4715 = vmatpush1.bf16.msra.mxu0 %v4695
      %4716 = vmatprep.subr.bf16.mxu0 0
      %4717 = vmatpush1.bf16.msra.mxu0 %v4696
      %4718 = vmatprep.subr.bf16.mxu0 0
      %4719 = vmatpush1.bf16.msra.mxu0 %v4697
      %4720 = vmatprep.subr.bf16.mxu0 0
      %4721 = vmatpush1.bf16.msra.mxu0 %v4698
      %4722 = vmatprep.subr.bf16.mxu0 0
      %4723 = vmatpush1.bf16.msra.mxu0 %v4699
      %4724 = vmatprep.subr.bf16.mxu0 0
      %4725 = vmatpush1.bf16.msra.mxu0 0
      %4726 = vmatprep.subr.bf16.mxu0 0
      %4727 = vmatpush1.bf16.msra.mxu0 0
      %4728 = vmatprep.subr.bf16.mxu0 0
      %4729 = vmatpush1.bf16.msra.mxu0 0
      %4730 = vmatprep.subr.bf16.mxu0 0
      %4731 = vmatpush1.bf16.msra.mxu0 0
      %4732 = vmatprep.subr.bf16.mxu0 0
      %4733 = vmatpush1.bf16.msra.mxu0 0
      %4734 = vmatprep.subr.bf16.mxu0 0
      %4735 = vmatpush1.bf16.msra.mxu0 0
      %4736 = vmatprep.subr.bf16.mxu0 0
      %4737 = vmatpush1.bf16.msra.mxu0 0
      %4738 = vmatprep.subr.bf16.mxu0 0
      %4739 = vmatpush1.bf16.msra.mxu0 0
      %4740 = vmatprep.mubr.bf16.mxu0 0
      %4741 = vmatmul.mubr.bf16.gmra.mrb[0].mxu0 %v4652
      %v4742 = vpop.f32.mrb[0].mxu0
      %v4743 = vadd.f32 %v4606, %v4742
      %v4744 = vpop.f32.mrb[0].mxu0
      %v4745 = vpop.f32.mrb[0].mxu0
      %v4746 = vadd.f32 %v4609, %v4745
      %v4747 = vpop.f32.mrb[0].mxu0
      %4748 = vmatprep.mubr.bf16.mxu0 0
      %4749 = vmatmul.mubr.bf16.gmra.mrb[0].mxu0 %v4653
      %v4750 = vpop.f32.mrb[0].mxu0
      %v4751 = vadd.f32 %v4614, %v4750
      %v4752 = vpop.f32.mrb[0].mxu0
      %v4753 = vpop.f32.mrb[0].mxu0
      %v4754 = vadd.f32 %v4617, %v4753
      %v4755 = vpop.f32.mrb[0].mxu0
      %4756 = vmatprep.mubr.bf16.mxu0 0
      %4757 = vmatmul.mubr.bf16.gmra.mrb[0].mxu0 %v4654
      %v4758 = vpop.f32.mrb[0].mxu0
      %v4759 = vadd.f32 %v4622, %v4758
      %v4760 = vpop.f32.mrb[0].mxu0
      %v4761 = vpop.f32.mrb[0].mxu0
      %v4762 = vadd.f32 %v4625, %v4761
      %v4763 = vpop.f32.mrb[0].mxu0
      %4764 = vmatprep.mubr.bf16.mxu0 0
      %4765 = vmatmul.mubr.bf16.gmra.mrb[0].mxu0 %v4655
      %v4766 = vpop.f32.mrb[0].mxu0
      %v4767 = vadd.f32 %v4630, %v4766
      %v4768 = vpop.f32.mrb[0].mxu0
      %v4769 = vpop.f32.mrb[0].mxu0
      %v4770 = vadd.f32 %v4633, %v4769
      %v4771 = vpop.f32.mrb[0].mxu0
      %4772 = vdwg.mxu0
      %v4773 = vld [vmem:[#allocation2 + $0x1] sm:$0xff]
      %v4774 = vld [vmem:[#allocation2 + $0x11] sm:$0xff]
      %v4775 = vld [vmem:[#allocation2 + $0x21] sm:$0xff]
      %v4776 = vld [vmem:[#allocation2 + $0x31] sm:$0xff]
      %v4777 = vld [vmem:[#allocation2 + $0x41] sm:$0xff]
      %v4778 = vld [vmem:[#allocation2 + $0x51] sm:$0xff]
      %v4779 = vld [vmem:[#allocation2 + $0x61] sm:$0xff]
      %v4780 = vld [vmem:[#allocation2 + $0x71] sm:$0xff]
      %v4781 = vpack.c.bf16 %v4773, %v4773
      %v4782 = vpack.c.bf16 %v4774, %v4774
      %v4783 = vpack.c.bf16 %v4775, %v4775
      %v4784 = vpack.c.bf16 %v4776, %v4776
      %v4785 = vpack.c.bf16 %v4777, %v4777
      %v4786 = vpack.c.bf16 %v4778, %v4778
      %v4787 = vpack.c.bf16 %v4779, %v4779
      %v4788 = vpack.c.bf16 %v4780, %v4780
      %s4789 = scalar_lea.vmem %s2, 832
      %v4790 = vld [vmem:[%s4789] sm:$0xf]
      %v4791 = vld [vmem:[%s4789 + $0x4] sm:$0xf]
      %v4792 = vld [vmem:[%s4789 + $0x8] sm:$0xf]
      %v4793 = vld [vmem:[%s4789 + $0xc] sm:$0xf]
      %v4794 = vld [vmem:[%s4789 + $0x10] sm:$0xf]
      %v4795 = vld [vmem:[%s4789 + $0x14] sm:$0xf]
      %v4796 = vld [vmem:[%s4789 + $0x18] sm:$0xf]
      %v4797 = vld [vmem:[%s4789 + $0x1c] sm:$0xf]
      %v4798 = vld [vmem:[%s4789 + $0x20] sm:$0xf]
      %v4799 = vld [vmem:[%s4789 + $0x24] sm:$0xf]
      %v4800 = vld [vmem:[%s4789 + $0x28] sm:$0xf]
      %v4801 = vld [vmem:[%s4789 + $0x2c] sm:$0xf]
      %v4802 = vld [vmem:[%s4789 + $0x30] sm:$0xf]
      %v4803 = vld [vmem:[%s4789 + $0x34] sm:$0xf]
      %v4804 = vld [vmem:[%s4789 + $0x38] sm:$0xf]
      %v4805 = vld [vmem:[%s4789 + $0x3c] sm:$0xf]
      %v4814 = vunpack.c.l.b16 %v4781
      %v4815 = vunpack.c.l.b16 %v4782
      %v4816 = vunpack.c.l.b16 %v4783
      %v4817 = vunpack.c.l.b16 %v4784
      %v4818 = vunpack.c.l.b16 %v4785
      %v4819 = vunpack.c.l.b16 %v4786
      %v4820 = vunpack.c.l.b16 %v4787
      %v4821 = vunpack.c.l.b16 %v4788
      %v4822 = vpack.c.b16 %v4815, %v4814
      %v4823 = vpack.c.b16 %v4817, %v4816
      %v4824 = vpack.c.b16 %v4819, %v4818
      %v4825 = vpack.c.b16 %v4821, %v4820
      %v4846 = vunpack.c.l.b16 %v4790
      %v4847 = vunpack.c.l.b16 %v4791
      %v4848 = vunpack.c.l.b16 %v4792
      %v4849 = vunpack.c.l.b16 %v4793
      %v4850 = vunpack.c.l.b16 %v4794
      %v4851 = vunpack.c.l.b16 %v4795
      %v4852 = vunpack.c.l.b16 %v4796
      %v4853 = vunpack.c.l.b16 %v4797
      %v4854 = vunpack.c.l.b16 %v4798
      %v4855 = vunpack.c.l.b16 %v4799
      %v4856 = vunpack.c.l.b16 %v4800
      %v4857 = vunpack.c.l.b16 %v4801
      %v4858 = vunpack.c.l.b16 %v4802
      %v4859 = vunpack.c.l.b16 %v4803
      %v4860 = vunpack.c.l.b16 %v4804
      %v4861 = vunpack.c.l.b16 %v4805
      %v4862 = vpack.c.b16 %v4847, %v4846
      %v4863 = vpack.c.b16 %v4849, %v4848
      %v4864 = vpack.c.b16 %v4851, %v4850
      %v4865 = vpack.c.b16 %v4853, %v4852
      %v4866 = vpack.c.b16 %v4855, %v4854
      %v4867 = vpack.c.b16 %v4857, %v4856
      %v4868 = vpack.c.b16 %v4859, %v4858
      %v4869 = vpack.c.b16 %v4861, %v4860
      %4878 = vmatprep.subr.bf16.mxu0 0
      %4879 = vmatpush1.bf16.msra.mxu0 %v4862
      %4880 = vmatprep.subr.bf16.mxu0 0
      %4881 = vmatpush1.bf16.msra.mxu0 %v4863
      %4882 = vmatprep.subr.bf16.mxu0 0
      %4883 = vmatpush1.bf16.msra.mxu0 %v4864
      %4884 = vmatprep.subr.bf16.mxu0 0
      %4885 = vmatpush1.bf16.msra.mxu0 %v4865
      %4886 = vmatprep.subr.bf16.mxu0 0
      %4887 = vmatpush1.bf16.msra.mxu0 %v4866
      %4888 = vmatprep.subr.bf16.mxu0 0
      %4889 = vmatpush1.bf16.msra.mxu0 %v4867
      %4890 = vmatprep.subr.bf16.mxu0 0
      %4891 = vmatpush1.bf16.msra.mxu0 %v4868
      %4892 = vmatprep.subr.bf16.mxu0 0
      %4893 = vmatpush1.bf16.msra.mxu0 %v4869
      %4894 = vmatprep.subr.bf16.mxu0 0
      %4895 = vmatpush1.bf16.msra.mxu0 0
      %4896 = vmatprep.subr.bf16.mxu0 0
      %4897 = vmatpush1.bf16.msra.mxu0 0
      %4898 = vmatprep.subr.bf16.mxu0 0
      %4899 = vmatpush1.bf16.msra.mxu0 0
      %4900 = vmatprep.subr.bf16.mxu0 0
      %4901 = vmatpush1.bf16.msra.mxu0 0
      %4902 = vmatprep.subr.bf16.mxu0 0
      %4903 = vmatpush1.bf16.msra.mxu0 0
      %4904 = vmatprep.subr.bf16.mxu0 0
      %4905 = vmatpush1.bf16.msra.mxu0 0
      %4906 = vmatprep.subr.bf16.mxu0 0
      %4907 = vmatpush1.bf16.msra.mxu0 0
      %4908 = vmatprep.subr.bf16.mxu0 0
      %4909 = vmatpush1.bf16.msra.mxu0 0
      %4910 = vmatprep.mubr.bf16.mxu0 0
      %4911 = vmatmul.mubr.bf16.gmra.mrb[0].mxu0 %v4822
      %v4912 = vpop.f32.mrb[0].mxu0
      %v4913 = vadd.f32 0.0, %v4912
      %v4914 = vpop.f32.mrb[0].mxu0
      %v4915 = vpop.f32.mrb[0].mxu0
      %v4916 = vadd.f32 0.0, %v4915
      %v4917 = vpop.f32.mrb[0].mxu0
      %4918 = vmatprep.mubr.bf16.mxu0 0
      %4919 = vmatmul.mubr.bf16.gmra.mrb[0].mxu0 %v4823
      %v4920 = vpop.f32.mrb[0].mxu0
      %v4921 = vadd.f32 0.0, %v4920
      %v4922 = vpop.f32.mrb[0].mxu0
      %v4923 = vpop.f32.mrb[0].mxu0
      %v4924 = vadd.f32 0.0, %v4923
      %v4925 = vpop.f32.mrb[0].mxu0
      %4926 = vmatprep.mubr.bf16.mxu0 0
      %4927 = vmatmul.mubr.bf16.gmra.mrb[0].mxu0 %v4824
      %v4928 = vpop.f32.mrb[0].mxu0
      %v4929 = vadd.f32 0.0, %v4928
      %v4930 = vpop.f32.mrb[0].mxu0
      %v4931 = vpop.f32.mrb[0].mxu0
      %v4932 = vadd.f32 0.0, %v4931
      %v4933 = vpop.f32.mrb[0].mxu0
      %4934 = vmatprep.mubr.bf16.mxu0 0
      %4935 = vmatmul.mubr.bf16.gmra.mrb[0].mxu0 %v4825
      %v4936 = vpop.f32.mrb[0].mxu0
      %v4937 = vadd.f32 0.0, %v4936
      %v4938 = vpop.f32.mrb[0].mxu0
      %v4939 = vpop.f32.mrb[0].mxu0
      %v4940 = vadd.f32 0.0, %v4939
      %v4941 = vpop.f32.mrb[0].mxu0
      %4942 = vdwg.mxu0
      %v4943 = vadd.f32 %v4743, %v4913
      %v4944 = vadd.f32 %v4746, %v4916
      %v4945 = vadd.f32 %v4751, %v4921
      %v4946 = vadd.f32 %v4754, %v4924
      %v4947 = vadd.f32 %v4759, %v4929
      %v4948 = vadd.f32 %v4762, %v4932
      %v4949 = vadd.f32 %v4767, %v4937
      %v4950 = vadd.f32 %v4770, %v4940
      %v4951 = vld [vmem:[#allocation2] sm:$0xff]
      %v4952 = vld [vmem:[#allocation2 + $0x10] sm:$0xff]
      %v4953 = vld [vmem:[#allocation2 + $0x20] sm:$0xff]
      %v4954 = vld [vmem:[#allocation2 + $0x30] sm:$0xff]
      %v4955 = vld [vmem:[#allocation2 + $0x40] sm:$0xff]
      %v4956 = vld [vmem:[#allocation2 + $0x50] sm:$0xff]
      %v4957 = vld [vmem:[#allocation2 + $0x60] sm:$0xff]
      %v4958 = vld [vmem:[#allocation2 + $0x70] sm:$0xff]
      %v4959 = vpack.c.bf16 %v4951, %v4951
      %v4960 = vpack.c.bf16 %v4952, %v4952
      %v4961 = vpack.c.bf16 %v4953, %v4953
      %v4962 = vpack.c.bf16 %v4954, %v4954
      %v4963 = vpack.c.bf16 %v4955, %v4955
      %v4964 = vpack.c.bf16 %v4956, %v4956
      %v4965 = vpack.c.bf16 %v4957, %v4957
      %v4966 = vpack.c.bf16 %v4958, %v4958
      %s4967 = scalar_lea.vmem %s2, 960
      %v4968 = vld [vmem:[%s4967] sm:$0xf]
      %v4969 = vld [vmem:[%s4967 + $0x4] sm:$0xf]
      %v4970 = vld [vmem:[%s4967 + $0x8] sm:$0xf]
      %v4971 = vld [vmem:[%s4967 + $0xc] sm:$0xf]
      %v4972 = vld [vmem:[%s4967 + $0x10] sm:$0xf]
      %v4973 = vld [vmem:[%s4967 + $0x14] sm:$0xf]
      %v4974 = vld [vmem:[%s4967 + $0x18] sm:$0xf]
      %v4975 = vld [vmem:[%s4967 + $0x1c] sm:$0xf]
      %v4976 = vld [vmem:[%s4967 + $0x20] sm:$0xf]
      %v4977 = vld [vmem:[%s4967 + $0x24] sm:$0xf]
      %v4978 = vld [vmem:[%s4967 + $0x28] sm:$0xf]
      %v4979 = vld [vmem:[%s4967 + $0x2c] sm:$0xf]
      %v4980 = vld [vmem:[%s4967 + $0x30] sm:$0xf]
      %v4981 = vld [vmem:[%s4967 + $0x34] sm:$0xf]
      %v4982 = vld [vmem:[%s4967 + $0x38] sm:$0xf]
      %v4983 = vld [vmem:[%s4967 + $0x3c] sm:$0xf]
      %v4992 = vunpack.c.l.b16 %v4959
      %v4993 = vunpack.c.l.b16 %v4960
      %v4994 = vunpack.c.l.b16 %v4961
      %v4995 = vunpack.c.l.b16 %v4962
      %v4996 = vunpack.c.l.b16 %v4963
      %v4997 = vunpack.c.l.b16 %v4964
      %v4998 = vunpack.c.l.b16 %v4965
      %v4999 = vunpack.c.l.b16 %v4966
      %v5000 = vpack.c.b16 %v4993, %v4992
      %v5001 = vpack.c.b16 %v4995, %v4994
      %v5002 = vpack.c.b16 %v4997, %v4996
      %v5003 = vpack.c.b16 %v4999, %v4998
      %v5024 = vunpack.c.l.b16 %v4968
      %v5025 = vunpack.c.l.b16 %v4969
      %v5026 = vunpack.c.l.b16 %v4970
      %v5027 = vunpack.c.l.b16 %v4971
      %v5028 = vunpack.c.l.b16 %v4972
      %v5029 = vunpack.c.l.b16 %v4973
      %v5030 = vunpack.c.l.b16 %v4974
      %v5031 = vunpack.c.l.b16 %v4975
      %v5032 = vunpack.c.l.b16 %v4976
      %v5033 = vunpack.c.l.b16 %v4977
      %v5034 = vunpack.c.l.b16 %v4978
      %v5035 = vunpack.c.l.b16 %v4979
      %v5036 = vunpack.c.l.b16 %v4980
      %v5037 = vunpack.c.l.b16 %v4981
      %v5038 = vunpack.c.l.b16 %v4982
      %v5039 = vunpack.c.l.b16 %v4983
      %v5040 = vpack.c.b16 %v5025, %v5024
      %v5041 = vpack.c.b16 %v5027, %v5026
      %v5042 = vpack.c.b16 %v5029, %v5028
      %v5043 = vpack.c.b16 %v5031, %v5030
      %v5044 = vpack.c.b16 %v5033, %v5032
      %v5045 = vpack.c.b16 %v5035, %v5034
      %v5046 = vpack.c.b16 %v5037, %v5036
      %v5047 = vpack.c.b16 %v5039, %v5038
      %5056 = vmatprep.subr.bf16.mxu0 0
      %5057 = vmatpush1.bf16.msra.mxu0 %v5040
      %5058 = vmatprep.subr.bf16.mxu0 0
      %5059 = vmatpush1.bf16.msra.mxu0 %v5041
      %5060 = vmatprep.subr.bf16.mxu0 0
      %5061 = vmatpush1.bf16.msra.mxu0 %v5042
      %5062 = vmatprep.subr.bf16.mxu0 0
      %5063 = vmatpush1.bf16.msra.mxu0 %v5043
      %5064 = vmatprep.subr.bf16.mxu0 0
      %5065 = vmatpush1.bf16.msra.mxu0 %v5044
      %5066 = vmatprep.subr.bf16.mxu0 0
      %5067 = vmatpush1.bf16.msra.mxu0 %v5045
      %5068 = vmatprep.subr.bf16.mxu0 0
      %5069 = vmatpush1.bf16.msra.mxu0 %v5046
      %5070 = vmatprep.subr.bf16.mxu0 0
      %5071 = vmatpush1.bf16.msra.mxu0 %v5047
      %5072 = vmatprep.subr.bf16.mxu0 0
      %5073 = vmatpush1.bf16.msra.mxu0 0
      %5074 = vmatprep.subr.bf16.mxu0 0
      %5075 = vmatpush1.bf16.msra.mxu0 0
      %5076 = vmatprep.subr.bf16.mxu0 0
      %5077 = vmatpush1.bf16.msra.mxu0 0
      %5078 = vmatprep.subr.bf16.mxu0 0
      %5079 = vmatpush1.bf16.msra.mxu0 0
      %5080 = vmatprep.subr.bf16.mxu0 0
      %5081 = vmatpush1.bf16.msra.mxu0 0
      %5082 = vmatprep.subr.bf16.mxu0 0
      %5083 = vmatpush1.bf16.msra.mxu0 0
      %5084 = vmatprep.subr.bf16.mxu0 0
      %5085 = vmatpush1.bf16.msra.mxu0 0
      %5086 = vmatprep.subr.bf16.mxu0 0
      %5087 = vmatpush1.bf16.msra.mxu0 0
      %5088 = vmatprep.mubr.bf16.mxu0 0
      %5089 = vmatmul.mubr.bf16.gmra.mrb[0].mxu0 %v5000
      %v5090 = vpop.f32.mrb[0].mxu0
      %v5091 = vadd.f32 0.0, %v5090
      %v5092 = vpop.f32.mrb[0].mxu0
      %v5093 = vpop.f32.mrb[0].mxu0
      %v5094 = vadd.f32 0.0, %v5093
      %v5095 = vpop.f32.mrb[0].mxu0
      %5096 = vmatprep.mubr.bf16.mxu0 0
      %5097 = vmatmul.mubr.bf16.gmra.mrb[0].mxu0 %v5001
      %v5098 = vpop.f32.mrb[0].mxu0
      %v5099 = vadd.f32 0.0, %v5098
      %v5100 = vpop.f32.mrb[0].mxu0
      %v5101 = vpop.f32.mrb[0].mxu0
      %v5102 = vadd.f32 0.0, %v5101
      %v5103 = vpop.f32.mrb[0].mxu0
      %5104 = vmatprep.mubr.bf16.mxu0 0
      %5105 = vmatmul.mubr.bf16.gmra.mrb[0].mxu0 %v5002
      %v5106 = vpop.f32.mrb[0].mxu0
      %v5107 = vadd.f32 0.0, %v5106
      %v5108 = vpop.f32.mrb[0].mxu0
      %v5109 = vpop.f32.mrb[0].mxu0
      %v5110 = vadd.f32 0.0, %v5109
      %v5111 = vpop.f32.mrb[0].mxu0
      %5112 = vmatprep.mubr.bf16.mxu0 0
      %5113 = vmatmul.mubr.bf16.gmra.mrb[0].mxu0 %v5003
      %v5114 = vpop.f32.mrb[0].mxu0
      %v5115 = vadd.f32 0.0, %v5114
      %v5116 = vpop.f32.mrb[0].mxu0
      %v5117 = vpop.f32.mrb[0].mxu0
      %v5118 = vadd.f32 0.0, %v5117
      %v5119 = vpop.f32.mrb[0].mxu0
      %5120 = vdwg.mxu0
      %v5121 = vadd.f32 %v4943, %v5091
      %v5122 = vadd.f32 %v4944, %v5094
      %v5123 = vadd.f32 %v4945, %v5099
      %v5124 = vadd.f32 %v4946, %v5102
      %v5125 = vadd.f32 %v4947, %v5107
      %v5126 = vadd.f32 %v4948, %v5110
      %v5127 = vadd.f32 %v4949, %v5115
      %v5128 = vadd.f32 %v4950, %v5118
      %5129 = vst [vmem:[%s204] sm:$0xff] %v5121
      %5130 = vst [vmem:[%s204 + $0x8] sm:$0xff] %v5122
      %5131 = vst [vmem:[%s204 + $0x10] sm:$0xff] %v5123
      %5132 = vst [vmem:[%s204 + $0x18] sm:$0xff] %v5124
      %5133 = vst [vmem:[%s204 + $0x20] sm:$0xff] %v5125
      %5134 = vst [vmem:[%s204 + $0x28] sm:$0xff] %v5126
      %5135 = vst [vmem:[%s204 + $0x30] sm:$0xff] %v5127
      %5136 = vst [vmem:[%s204 + $0x38] sm:$0xff] %v5128
      %v5137 = vadd.f32 %v5121, %v5122
      %v5138 = vadd.f32 %v5137, %v5123
      %v5139 = vadd.f32 %v5138, %v5124
      %v5140 = vadd.f32 %v5139, %v5125
      %v5141 = vadd.f32 %v5140, %v5126
      %v5142 = vadd.f32 %v5141, %v5127
      %v5143 = vadd.f32 %v5142, %v5128
      %v5144 = vrot.slane %v5143, 4
      %v5145 = vadd.f32 %v5143, %v5144
      %v5146 = vrot.slane %v5145, 2
      %v5147 = vadd.f32 %v5145, %v5146
      %v5148 = vrot.slane %v5147, 1
      %v5149 = vadd.f32 %v5147, %v5148
      %v5150 = vadd.f32 %v5149, 0.0
      %v5151 = vmul.f32 %v5121, %v5121
      %v5152 = vmul.f32 %v5122, %v5122
      %v5153 = vmul.f32 %v5123, %v5123
      %v5154 = vmul.f32 %v5124, %v5124
      %v5155 = vmul.f32 %v5125, %v5125
      %v5156 = vmul.f32 %v5126, %v5126
      %v5157 = vmul.f32 %v5127, %v5127
      %v5158 = vmul.f32 %v5128, %v5128
      %v5159 = vadd.f32 %v5151, %v5152
      %v5160 = vadd.f32 %v5159, %v5153
      %v5161 = vadd.f32 %v5160, %v5154
      %v5162 = vadd.f32 %v5161, %v5155
      %v5163 = vadd.f32 %v5162, %v5156
      %v5164 = vadd.f32 %v5163, %v5157
      %v5165 = vadd.f32 %v5164, %v5158
      %v5166 = vrot.slane %v5165, 4
      %v5167 = vadd.f32 %v5165, %v5166
      %v5168 = vrot.slane %v5167, 2
      %v5169 = vadd.f32 %v5167, %v5168
      %v5170 = vrot.slane %v5169, 1
      %v5171 = vadd.f32 %v5169, %v5170
      %v5172 = vadd.f32 %v5171, 0.0
      %v5173 = vld [vmem:[%s4424 + $0x1] sm:$0xff]
      %v5174 = vld [vmem:[%s4424 + $0x11] sm:$0xff]
      %v5175 = vld [vmem:[%s4424 + $0x21] sm:$0xff]
      %v5176 = vld [vmem:[%s4424 + $0x31] sm:$0xff]
      %v5177 = vld [vmem:[%s4424 + $0x41] sm:$0xff]
      %v5178 = vld [vmem:[%s4424 + $0x51] sm:$0xff]
      %v5179 = vld [vmem:[%s4424 + $0x61] sm:$0xff]
      %v5180 = vld [vmem:[%s4424 + $0x71] sm:$0xff]
      %v5181 = vpack.c.bf16 %v5173, %v5173
      %v5182 = vpack.c.bf16 %v5174, %v5174
      %v5183 = vpack.c.bf16 %v5175, %v5175
      %v5184 = vpack.c.bf16 %v5176, %v5176
      %v5185 = vpack.c.bf16 %v5177, %v5177
      %v5186 = vpack.c.bf16 %v5178, %v5178
      %v5187 = vpack.c.bf16 %v5179, %v5179
      %v5188 = vpack.c.bf16 %v5180, %v5180
      %s5189 = scalar_lea.vmem %s2, 384
      %v5190 = vld [vmem:[%s5189] sm:$0xf]
      %v5191 = vld [vmem:[%s5189 + $0x4] sm:$0xf]
      %v5192 = vld [vmem:[%s5189 + $0x8] sm:$0xf]
      %v5193 = vld [vmem:[%s5189 + $0xc] sm:$0xf]
      %v5194 = vld [vmem:[%s5189 + $0x10] sm:$0xf]
      %v5195 = vld [vmem:[%s5189 + $0x14] sm:$0xf]
      %v5196 = vld [vmem:[%s5189 + $0x18] sm:$0xf]
      %v5197 = vld [vmem:[%s5189 + $0x1c] sm:$0xf]
      %v5198 = vld [vmem:[%s5189 + $0x20] sm:$0xf]
      %v5199 = vld [vmem:[%s5189 + $0x24] sm:$0xf]
      %v5200 = vld [vmem:[%s5189 + $0x28] sm:$0xf]
      %v5201 = vld [vmem:[%s5189 + $0x2c] sm:$0xf]
      %v5202 = vld [vmem:[%s5189 + $0x30] sm:$0xf]
      %v5203 = vld [vmem:[%s5189 + $0x34] sm:$0xf]
      %v5204 = vld [vmem:[%s5189 + $0x38] sm:$0xf]
      %v5205 = vld [vmem:[%s5189 + $0x3c] sm:$0xf]
      %v5206 = vld [vmem:[%s4424 + $0x2] sm:$0xff]
      %v5207 = vld [vmem:[%s4424 + $0x12] sm:$0xff]
      %v5208 = vld [vmem:[%s4424 + $0x22] sm:$0xff]
      %v5209 = vld [vmem:[%s4424 + $0x32] sm:$0xff]
      %v5210 = vld [vmem:[%s4424 + $0x42] sm:$0xff]
      %v5211 = vld [vmem:[%s4424 + $0x52] sm:$0xff]
      %v5212 = vld [vmem:[%s4424 + $0x62] sm:$0xff]
      %v5213 = vld [vmem:[%s4424 + $0x72] sm:$0xff]
      %v5214 = vpack.c.bf16 %v5206, %v5206
      %v5215 = vpack.c.bf16 %v5207, %v5207
      %v5216 = vpack.c.bf16 %v5208, %v5208
      %v5217 = vpack.c.bf16 %v5209, %v5209
      %v5218 = vpack.c.bf16 %v5210, %v5210
      %v5219 = vpack.c.bf16 %v5211, %v5211
      %v5220 = vpack.c.bf16 %v5212, %v5212
      %v5221 = vpack.c.bf16 %v5213, %v5213
      %s5222 = scalar_lea.vmem %s2, 256
      %v5223 = vld [vmem:[%s5222] sm:$0xf]
      %v5224 = vld [vmem:[%s5222 + $0x4] sm:$0xf]
      %v5225 = vld [vmem:[%s5222 + $0x8] sm:$0xf]
      %v5226 = vld [vmem:[%s5222 + $0xc] sm:$0xf]
      %v5227 = vld [vmem:[%s5222 + $0x10] sm:$0xf]
      %v5228 = vld [vmem:[%s5222 + $0x14] sm:$0xf]
      %v5229 = vld [vmem:[%s5222 + $0x18] sm:$0xf]
      %v5230 = vld [vmem:[%s5222 + $0x1c] sm:$0xf]
      %v5231 = vld [vmem:[%s5222 + $0x20] sm:$0xf]
      %v5232 = vld [vmem:[%s5222 + $0x24] sm:$0xf]
      %v5233 = vld [vmem:[%s5222 + $0x28] sm:$0xf]
      %v5234 = vld [vmem:[%s5222 + $0x2c] sm:$0xf]
      %v5235 = vld [vmem:[%s5222 + $0x30] sm:$0xf]
      %v5236 = vld [vmem:[%s5222 + $0x34] sm:$0xf]
      %v5237 = vld [vmem:[%s5222 + $0x38] sm:$0xf]
      %v5238 = vld [vmem:[%s5222 + $0x3c] sm:$0xf]
      %v5247 = vunpack.c.l.b16 %v5214
      %v5248 = vunpack.c.l.b16 %v5215
      %v5249 = vunpack.c.l.b16 %v5216
      %v5250 = vunpack.c.l.b16 %v5217
      %v5251 = vunpack.c.l.b16 %v5218
      %v5252 = vunpack.c.l.b16 %v5219
      %v5253 = vunpack.c.l.b16 %v5220
      %v5254 = vunpack.c.l.b16 %v5221
      %v5255 = vpack.c.b16 %v5248, %v5247
      %v5256 = vpack.c.b16 %v5250, %v5249
      %v5257 = vpack.c.b16 %v5252, %v5251
      %v5258 = vpack.c.b16 %v5254, %v5253
      %v5279 = vunpack.c.l.b16 %v5223
      %v5280 = vunpack.c.l.b16 %v5224
      %v5281 = vunpack.c.l.b16 %v5225
      %v5282 = vunpack.c.l.b16 %v5226
      %v5283 = vunpack.c.l.b16 %v5227
      %v5284 = vunpack.c.l.b16 %v5228
      %v5285 = vunpack.c.l.b16 %v5229
      %v5286 = vunpack.c.l.b16 %v5230
      %v5287 = vunpack.c.l.b16 %v5231
      %v5288 = vunpack.c.l.b16 %v5232
      %v5289 = vunpack.c.l.b16 %v5233
      %v5290 = vunpack.c.l.b16 %v5234
      %v5291 = vunpack.c.l.b16 %v5235
      %v5292 = vunpack.c.l.b16 %v5236
      %v5293 = vunpack.c.l.b16 %v5237
      %v5294 = vunpack.c.l.b16 %v5238
      %v5295 = vpack.c.b16 %v5280, %v5279
      %v5296 = vpack.c.b16 %v5282, %v5281
      %v5297 = vpack.c.b16 %v5284, %v5283
      %v5298 = vpack.c.b16 %v5286, %v5285
      %v5299 = vpack.c.b16 %v5288, %v5287
      %v5300 = vpack.c.b16 %v5290, %v5289
      %v5301 = vpack.c.b16 %v5292, %v5291
      %v5302 = vpack.c.b16 %v5294, %v5293
      %5311 = vmatprep.subr.bf16.mxu0 0
      %5312 = vmatpush1.bf16.msra.mxu0 %v5295
      %5313 = vmatprep.subr.bf16.mxu0 0
      %5314 = vmatpush1.bf16.msra.mxu0 %v5296
      %5315 = vmatprep.subr.bf16.mxu0 0
      %5316 = vmatpush1.bf16.msra.mxu0 %v5297
      %5317 = vmatprep.subr.bf16.mxu0 0
      %5318 = vmatpush1.bf16.msra.mxu0 %v5298
      %5319 = vmatprep.subr.bf16.mxu0 0
      %5320 = vmatpush1.bf16.msra.mxu0 %v5299
      %5321 = vmatprep.subr.bf16.mxu0 0
      %5322 = vmatpush1.bf16.msra.mxu0 %v5300
      %5323 = vmatprep.subr.bf16.mxu0 0
      %5324 = vmatpush1.bf16.msra.mxu0 %v5301
      %5325 = vmatprep.subr.bf16.mxu0 0
      %5326 = vmatpush1.bf16.msra.mxu0 %v5302
      %5327 = vmatprep.subr.bf16.mxu0 0
      %5328 = vmatpush1.bf16.msra.mxu0 0
      %5329 = vmatprep.subr.bf16.mxu0 0
      %5330 = vmatpush1.bf16.msra.mxu0 0
      %5331 = vmatprep.subr.bf16.mxu0 0
      %5332 = vmatpush1.bf16.msra.mxu0 0
      %5333 = vmatprep.subr.bf16.mxu0 0
      %5334 = vmatpush1.bf16.msra.mxu0 0
      %5335 = vmatprep.subr.bf16.mxu0 0
      %5336 = vmatpush1.bf16.msra.mxu0 0
      %5337 = vmatprep.subr.bf16.mxu0 0
      %5338 = vmatpush1.bf16.msra.mxu0 0
      %5339 = vmatprep.subr.bf16.mxu0 0
      %5340 = vmatpush1.bf16.msra.mxu0 0
      %5341 = vmatprep.subr.bf16.mxu0 0
      %5342 = vmatpush1.bf16.msra.mxu0 0
      %5343 = vmatprep.mubr.bf16.mxu0 0
      %5344 = vmatmul.mubr.bf16.gmra.mrb[0].mxu0 %v5255
      %v5345 = vpop.f32.mrb[0].mxu0
      %v5346 = vadd.f32 0.0, %v5345
      %v5347 = vpop.f32.mrb[0].mxu0
      %v5348 = vpop.f32.mrb[0].mxu0
      %v5349 = vadd.f32 0.0, %v5348
      %v5350 = vpop.f32.mrb[0].mxu0
      %5351 = vmatprep.mubr.bf16.mxu0 0
      %5352 = vmatmul.mubr.bf16.gmra.mrb[0].mxu0 %v5256
      %v5353 = vpop.f32.mrb[0].mxu0
      %v5354 = vadd.f32 0.0, %v5353
      %v5355 = vpop.f32.mrb[0].mxu0
      %v5356 = vpop.f32.mrb[0].mxu0
      %v5357 = vadd.f32 0.0, %v5356
      %v5358 = vpop.f32.mrb[0].mxu0
      %5359 = vmatprep.mubr.bf16.mxu0 0
      %5360 = vmatmul.mubr.bf16.gmra.mrb[0].mxu0 %v5257
      %v5361 = vpop.f32.mrb[0].mxu0
      %v5362 = vadd.f32 0.0, %v5361
      %v5363 = vpop.f32.mrb[0].mxu0
      %v5364 = vpop.f32.mrb[0].mxu0
      %v5365 = vadd.f32 0.0, %v5364
      %v5366 = vpop.f32.mrb[0].mxu0
      %5367 = vmatprep.mubr.bf16.mxu0 0
      %5368 = vmatmul.mubr.bf16.gmra.mrb[0].mxu0 %v5258
      %v5369 = vpop.f32.mrb[0].mxu0
      %v5370 = vadd.f32 0.0, %v5369
      %v5371 = vpop.f32.mrb[0].mxu0
      %v5372 = vpop.f32.mrb[0].mxu0
      %v5373 = vadd.f32 0.0, %v5372
      %v5374 = vpop.f32.mrb[0].mxu0
      %5375 = vdwg.mxu0
      %v5384 = vunpack.c.l.b16 %v5181
      %v5385 = vunpack.c.l.b16 %v5182
      %v5386 = vunpack.c.l.b16 %v5183
      %v5387 = vunpack.c.l.b16 %v5184
      %v5388 = vunpack.c.l.b16 %v5185
      %v5389 = vunpack.c.l.b16 %v5186
      %v5390 = vunpack.c.l.b16 %v5187
      %v5391 = vunpack.c.l.b16 %v5188
      %v5392 = vpack.c.b16 %v5385, %v5384
      %v5393 = vpack.c.b16 %v5387, %v5386
      %v5394 = vpack.c.b16 %v5389, %v5388
      %v5395 = vpack.c.b16 %v5391, %v5390
      %v5416 = vunpack.c.l.b16 %v5190
      %v5417 = vunpack.c.l.b16 %v5191
      %v5418 = vunpack.c.l.b16 %v5192
      %v5419 = vunpack.c.l.b16 %v5193
      %v5420 = vunpack.c.l.b16 %v5194
      %v5421 = vunpack.c.l.b16 %v5195
      %v5422 = vunpack.c.l.b16 %v5196
      %v5423 = vunpack.c.l.b16 %v5197
      %v5424 = vunpack.c.l.b16 %v5198
      %v5425 = vunpack.c.l.b16 %v5199
      %v5426 = vunpack.c.l.b16 %v5200
      %v5427 = vunpack.c.l.b16 %v5201
      %v5428 = vunpack.c.l.b16 %v5202
      %v5429 = vunpack.c.l.b16 %v5203
      %v5430 = vunpack.c.l.b16 %v5204
      %v5431 = vunpack.c.l.b16 %v5205
      %v5432 = vpack.c.b16 %v5417, %v5416
      %v5433 = vpack.c.b16 %v5419, %v5418
      %v5434 = vpack.c.b16 %v5421, %v5420
      %v5435 = vpack.c.b16 %v5423, %v5422
      %v5436 = vpack.c.b16 %v5425, %v5424
      %v5437 = vpack.c.b16 %v5427, %v5426
      %v5438 = vpack.c.b16 %v5429, %v5428
      %v5439 = vpack.c.b16 %v5431, %v5430
      %5448 = vmatprep.subr.bf16.mxu0 0
      %5449 = vmatpush1.bf16.msra.mxu0 %v5432
      %5450 = vmatprep.subr.bf16.mxu0 0
      %5451 = vmatpush1.bf16.msra.mxu0 %v5433
      %5452 = vmatprep.subr.bf16.mxu0 0
      %5453 = vmatpush1.bf16.msra.mxu0 %v5434
      %5454 = vmatprep.subr.bf16.mxu0 0
      %5455 = vmatpush1.bf16.msra.mxu0 %v5435
      %5456 = vmatprep.subr.bf16.mxu0 0
      %5457 = vmatpush1.bf16.msra.mxu0 %v5436
      %5458 = vmatprep.subr.bf16.mxu0 0
      %5459 = vmatpush1.bf16.msra.mxu0 %v5437
      %5460 = vmatprep.subr.bf16.mxu0 0
      %5461 = vmatpush1.bf16.msra.mxu0 %v5438
      %5462 = vmatprep.subr.bf16.mxu0 0
      %5463 = vmatpush1.bf16.msra.mxu0 %v5439
      %5464 = vmatprep.subr.bf16.mxu0 0
      %5465 = vmatpush1.bf16.msra.mxu0 0
      %5466 = vmatprep.subr.bf16.mxu0 0
      %5467 = vmatpush1.bf16.msra.mxu0 0
      %5468 = vmatprep.subr.bf16.mxu0 0
      %5469 = vmatpush1.bf16.msra.mxu0 0
      %5470 = vmatprep.subr.bf16.mxu0 0
      %5471 = vmatpush1.bf16.msra.mxu0 0
      %5472 = vmatprep.subr.bf16.mxu0 0
      %5473 = vmatpush1.bf16.msra.mxu0 0
      %5474 = vmatprep.subr.bf16.mxu0 0
      %5475 = vmatpush1.bf16.msra.mxu0 0
      %5476 = vmatprep.subr.bf16.mxu0 0
      %5477 = vmatpush1.bf16.msra.mxu0 0
      %5478 = vmatprep.subr.bf16.mxu0 0
      %5479 = vmatpush1.bf16.msra.mxu0 0
      %5480 = vmatprep.mubr.bf16.mxu0 0
      %5481 = vmatmul.mubr.bf16.gmra.mrb[0].mxu0 %v5392
      %v5482 = vpop.f32.mrb[0].mxu0
      %v5483 = vadd.f32 %v5346, %v5482
      %v5484 = vpop.f32.mrb[0].mxu0
      %v5485 = vpop.f32.mrb[0].mxu0
      %v5486 = vadd.f32 %v5349, %v5485
      %v5487 = vpop.f32.mrb[0].mxu0
      %5488 = vmatprep.mubr.bf16.mxu0 0
      %5489 = vmatmul.mubr.bf16.gmra.mrb[0].mxu0 %v5393
      %v5490 = vpop.f32.mrb[0].mxu0
      %v5491 = vadd.f32 %v5354, %v5490
      %v5492 = vpop.f32.mrb[0].mxu0
      %v5493 = vpop.f32.mrb[0].mxu0
      %v5494 = vadd.f32 %v5357, %v5493
      %v5495 = vpop.f32.mrb[0].mxu0
      %5496 = vmatprep.mubr.bf16.mxu0 0
      %5497 = vmatmul.mubr.bf16.gmra.mrb[0].mxu0 %v5394
      %v5498 = vpop.f32.mrb[0].mxu0
      %v5499 = vadd.f32 %v5362, %v5498
      %v5500 = vpop.f32.mrb[0].mxu0
      %v5501 = vpop.f32.mrb[0].mxu0
      %v5502 = vadd.f32 %v5365, %v5501
      %v5503 = vpop.f32.mrb[0].mxu0
      %5504 = vmatprep.mubr.bf16.mxu0 0
      %5505 = vmatmul.mubr.bf16.gmra.mrb[0].mxu0 %v5395
      %v5506 = vpop.f32.mrb[0].mxu0
      %v5507 = vadd.f32 %v5370, %v5506
      %v5508 = vpop.f32.mrb[0].mxu0
      %v5509 = vpop.f32.mrb[0].mxu0
      %v5510 = vadd.f32 %v5373, %v5509
      %v5511 = vpop.f32.mrb[0].mxu0
      %5512 = vdwg.mxu0
      %v5513 = vld [vmem:[#allocation2 + $0x1] sm:$0xff]
      %v5514 = vld [vmem:[#allocation2 + $0x11] sm:$0xff]
      %v5515 = vld [vmem:[#allocation2 + $0x21] sm:$0xff]
      %v5516 = vld [vmem:[#allocation2 + $0x31] sm:$0xff]
      %v5517 = vld [vmem:[#allocation2 + $0x41] sm:$0xff]
      %v5518 = vld [vmem:[#allocation2 + $0x51] sm:$0xff]
      %v5519 = vld [vmem:[#allocation2 + $0x61] sm:$0xff]
      %v5520 = vld [vmem:[#allocation2 + $0x71] sm:$0xff]
      %v5521 = vpack.c.bf16 %v5513, %v5513
      %v5522 = vpack.c.bf16 %v5514, %v5514
      %v5523 = vpack.c.bf16 %v5515, %v5515
      %v5524 = vpack.c.bf16 %v5516, %v5516
      %v5525 = vpack.c.bf16 %v5517, %v5517
      %v5526 = vpack.c.bf16 %v5518, %v5518
      %v5527 = vpack.c.bf16 %v5519, %v5519
      %v5528 = vpack.c.bf16 %v5520, %v5520
      %s5529 = scalar_lea.vmem %s2, 896
      %v5530 = vld [vmem:[%s5529] sm:$0xf]
      %v5531 = vld [vmem:[%s5529 + $0x4] sm:$0xf]
      %v5532 = vld [vmem:[%s5529 + $0x8] sm:$0xf]
      %v5533 = vld [vmem:[%s5529 + $0xc] sm:$0xf]
      %v5534 = vld [vmem:[%s5529 + $0x10] sm:$0xf]
      %v5535 = vld [vmem:[%s5529 + $0x14] sm:$0xf]
      %v5536 = vld [vmem:[%s5529 + $0x18] sm:$0xf]
      %v5537 = vld [vmem:[%s5529 + $0x1c] sm:$0xf]
      %v5538 = vld [vmem:[%s5529 + $0x20] sm:$0xf]
      %v5539 = vld [vmem:[%s5529 + $0x24] sm:$0xf]
      %v5540 = vld [vmem:[%s5529 + $0x28] sm:$0xf]
      %v5541 = vld [vmem:[%s5529 + $0x2c] sm:$0xf]
      %v5542 = vld [vmem:[%s5529 + $0x30] sm:$0xf]
      %v5543 = vld [vmem:[%s5529 + $0x34] sm:$0xf]
      %v5544 = vld [vmem:[%s5529 + $0x38] sm:$0xf]
      %v5545 = vld [vmem:[%s5529 + $0x3c] sm:$0xf]
      %v5554 = vunpack.c.l.b16 %v5521
      %v5555 = vunpack.c.l.b16 %v5522
      %v5556 = vunpack.c.l.b16 %v5523
      %v5557 = vunpack.c.l.b16 %v5524
      %v5558 = vunpack.c.l.b16 %v5525
      %v5559 = vunpack.c.l.b16 %v5526
      %v5560 = vunpack.c.l.b16 %v5527
      %v5561 = vunpack.c.l.b16 %v5528
      %v5562 = vpack.c.b16 %v5555, %v5554
      %v5563 = vpack.c.b16 %v5557, %v5556
      %v5564 = vpack.c.b16 %v5559, %v5558
      %v5565 = vpack.c.b16 %v5561, %v5560
      %v5586 = vunpack.c.l.b16 %v5530
      %v5587 = vunpack.c.l.b16 %v5531
      %v5588 = vunpack.c.l.b16 %v5532
      %v5589 = vunpack.c.l.b16 %v5533
      %v5590 = vunpack.c.l.b16 %v5534
      %v5591 = vunpack.c.l.b16 %v5535
      %v5592 = vunpack.c.l.b16 %v5536
      %v5593 = vunpack.c.l.b16 %v5537
      %v5594 = vunpack.c.l.b16 %v5538
      %v5595 = vunpack.c.l.b16 %v5539
      %v5596 = vunpack.c.l.b16 %v5540
      %v5597 = vunpack.c.l.b16 %v5541
      %v5598 = vunpack.c.l.b16 %v5542
      %v5599 = vunpack.c.l.b16 %v5543
      %v5600 = vunpack.c.l.b16 %v5544
      %v5601 = vunpack.c.l.b16 %v5545
      %v5602 = vpack.c.b16 %v5587, %v5586
      %v5603 = vpack.c.b16 %v5589, %v5588
      %v5604 = vpack.c.b16 %v5591, %v5590
      %v5605 = vpack.c.b16 %v5593, %v5592
      %v5606 = vpack.c.b16 %v5595, %v5594
      %v5607 = vpack.c.b16 %v5597, %v5596
      %v5608 = vpack.c.b16 %v5599, %v5598
      %v5609 = vpack.c.b16 %v5601, %v5600
      %5618 = vmatprep.subr.bf16.mxu0 0
      %5619 = vmatpush1.bf16.msra.mxu0 %v5602
      %5620 = vmatprep.subr.bf16.mxu0 0
      %5621 = vmatpush1.bf16.msra.mxu0 %v5603
      %5622 = vmatprep.subr.bf16.mxu0 0
      %5623 = vmatpush1.bf16.msra.mxu0 %v5604
      %5624 = vmatprep.subr.bf16.mxu0 0
      %5625 = vmatpush1.bf16.msra.mxu0 %v5605
      %5626 = vmatprep.subr.bf16.mxu0 0
      %5627 = vmatpush1.bf16.msra.mxu0 %v5606
      %5628 = vmatprep.subr.bf16.mxu0 0
      %5629 = vmatpush1.bf16.msra.mxu0 %v5607
      %5630 = vmatprep.subr.bf16.mxu0 0
      %5631 = vmatpush1.bf16.msra.mxu0 %v5608
      %5632 = vmatprep.subr.bf16.mxu0 0
      %5633 = vmatpush1.bf16.msra.mxu0 %v5609
      %5634 = vmatprep.subr.bf16.mxu0 0
      %5635 = vmatpush1.bf16.msra.mxu0 0
      %5636 = vmatprep.subr.bf16.mxu0 0
      %5637 = vmatpush1.bf16.msra.mxu0 0
      %5638 = vmatprep.subr.bf16.mxu0 0
      %5639 = vmatpush1.bf16.msra.mxu0 0
      %5640 = vmatprep.subr.bf16.mxu0 0
      %5641 = vmatpush1.bf16.msra.mxu0 0
      %5642 = vmatprep.subr.bf16.mxu0 0
      %5643 = vmatpush1.bf16.msra.mxu0 0
      %5644 = vmatprep.subr.bf16.mxu0 0
      %5645 = vmatpush1.bf16.msra.mxu0 0
      %5646 = vmatprep.subr.bf16.mxu0 0
      %5647 = vmatpush1.bf16.msra.mxu0 0
      %5648 = vmatprep.subr.bf16.mxu0 0
      %5649 = vmatpush1.bf16.msra.mxu0 0
      %5650 = vmatprep.mubr.bf16.mxu0 0
      %5651 = vmatmul.mubr.bf16.gmra.mrb[0].mxu0 %v5562
      %v5652 = vpop.f32.mrb[0].mxu0
      %v5653 = vadd.f32 0.0, %v5652
      %v5654 = vpop.f32.mrb[0].mxu0
      %v5655 = vpop.f32.mrb[0].mxu0
      %v5656 = vadd.f32 0.0, %v5655
      %v5657 = vpop.f32.mrb[0].mxu0
      %5658 = vmatprep.mubr.bf16.mxu0 0
      %5659 = vmatmul.mubr.bf16.gmra.mrb[0].mxu0 %v5563
      %v5660 = vpop.f32.mrb[0].mxu0
      %v5661 = vadd.f32 0.0, %v5660
      %v5662 = vpop.f32.mrb[0].mxu0
      %v5663 = vpop.f32.mrb[0].mxu0
      %v5664 = vadd.f32 0.0, %v5663
      %v5665 = vpop.f32.mrb[0].mxu0
      %5666 = vmatprep.mubr.bf16.mxu0 0
      %5667 = vmatmul.mubr.bf16.gmra.mrb[0].mxu0 %v5564
      %v5668 = vpop.f32.mrb[0].mxu0
      %v5669 = vadd.f32 0.0, %v5668
      %v5670 = vpop.f32.mrb[0].mxu0
      %v5671 = vpop.f32.mrb[0].mxu0
      %v5672 = vadd.f32 0.0, %v5671
      %v5673 = vpop.f32.mrb[0].mxu0
      %5674 = vmatprep.mubr.bf16.mxu0 0
      %5675 = vmatmul.mubr.bf16.gmra.mrb[0].mxu0 %v5565
      %v5676 = vpop.f32.mrb[0].mxu0
      %v5677 = vadd.f32 0.0, %v5676
      %v5678 = vpop.f32.mrb[0].mxu0
      %v5679 = vpop.f32.mrb[0].mxu0
      %v5680 = vadd.f32 0.0, %v5679
      %v5681 = vpop.f32.mrb[0].mxu0
      %5682 = vdwg.mxu0
      %v5683 = vadd.f32 %v5483, %v5653
      %v5684 = vadd.f32 %v5486, %v5656
      %v5685 = vadd.f32 %v5491, %v5661
      %v5686 = vadd.f32 %v5494, %v5664
      %v5687 = vadd.f32 %v5499, %v5669
      %v5688 = vadd.f32 %v5502, %v5672
      %v5689 = vadd.f32 %v5507, %v5677
      %v5690 = vadd.f32 %v5510, %v5680
      %v5691 = vld [vmem:[#allocation2 + $0x2] sm:$0xff]
      %v5692 = vld [vmem:[#allocation2 + $0x12] sm:$0xff]
      %v5693 = vld [vmem:[#allocation2 + $0x22] sm:$0xff]
      %v5694 = vld [vmem:[#allocation2 + $0x32] sm:$0xff]
      %v5695 = vld [vmem:[#allocation2 + $0x42] sm:$0xff]
      %v5696 = vld [vmem:[#allocation2 + $0x52] sm:$0xff]
      %v5697 = vld [vmem:[#allocation2 + $0x62] sm:$0xff]
      %v5698 = vld [vmem:[#allocation2 + $0x72] sm:$0xff]
      %v5699 = vpack.c.bf16 %v5691, %v5691
      %v5700 = vpack.c.bf16 %v5692, %v5692
      %v5701 = vpack.c.bf16 %v5693, %v5693
      %v5702 = vpack.c.bf16 %v5694, %v5694
      %v5703 = vpack.c.bf16 %v5695, %v5695
      %v5704 = vpack.c.bf16 %v5696, %v5696
      %v5705 = vpack.c.bf16 %v5697, %v5697
      %v5706 = vpack.c.bf16 %v5698, %v5698
      %s5707 = scalar_lea.vmem %s2, 768
      %v5708 = vld [vmem:[%s5707] sm:$0xf]
      %v5709 = vld [vmem:[%s5707 + $0x4] sm:$0xf]
      %v5710 = vld [vmem:[%s5707 + $0x8] sm:$0xf]
      %v5711 = vld [vmem:[%s5707 + $0xc] sm:$0xf]
      %v5712 = vld [vmem:[%s5707 + $0x10] sm:$0xf]
      %v5713 = vld [vmem:[%s5707 + $0x14] sm:$0xf]
      %v5714 = vld [vmem:[%s5707 + $0x18] sm:$0xf]
      %v5715 = vld [vmem:[%s5707 + $0x1c] sm:$0xf]
      %v5716 = vld [vmem:[%s5707 + $0x20] sm:$0xf]
      %v5717 = vld [vmem:[%s5707 + $0x24] sm:$0xf]
      %v5718 = vld [vmem:[%s5707 + $0x28] sm:$0xf]
      %v5719 = vld [vmem:[%s5707 + $0x2c] sm:$0xf]
      %v5720 = vld [vmem:[%s5707 + $0x30] sm:$0xf]
      %v5721 = vld [vmem:[%s5707 + $0x34] sm:$0xf]
      %v5722 = vld [vmem:[%s5707 + $0x38] sm:$0xf]
      %v5723 = vld [vmem:[%s5707 + $0x3c] sm:$0xf]
      %v5732 = vunpack.c.l.b16 %v5699
      %v5733 = vunpack.c.l.b16 %v5700
      %v5734 = vunpack.c.l.b16 %v5701
      %v5735 = vunpack.c.l.b16 %v5702
      %v5736 = vunpack.c.l.b16 %v5703
      %v5737 = vunpack.c.l.b16 %v5704
      %v5738 = vunpack.c.l.b16 %v5705
      %v5739 = vunpack.c.l.b16 %v5706
      %v5740 = vpack.c.b16 %v5733, %v5732
      %v5741 = vpack.c.b16 %v5735, %v5734
      %v5742 = vpack.c.b16 %v5737, %v5736
      %v5743 = vpack.c.b16 %v5739, %v5738
      %v5764 = vunpack.c.l.b16 %v5708
      %v5765 = vunpack.c.l.b16 %v5709
      %v5766 = vunpack.c.l.b16 %v5710
      %v5767 = vunpack.c.l.b16 %v5711
      %v5768 = vunpack.c.l.b16 %v5712
      %v5769 = vunpack.c.l.b16 %v5713
      %v5770 = vunpack.c.l.b16 %v5714
      %v5771 = vunpack.c.l.b16 %v5715
      %v5772 = vunpack.c.l.b16 %v5716
      %v5773 = vunpack.c.l.b16 %v5717
      %v5774 = vunpack.c.l.b16 %v5718
      %v5775 = vunpack.c.l.b16 %v5719
      %v5776 = vunpack.c.l.b16 %v5720
      %v5777 = vunpack.c.l.b16 %v5721
      %v5778 = vunpack.c.l.b16 %v5722
      %v5779 = vunpack.c.l.b16 %v5723
      %v5780 = vpack.c.b16 %v5765, %v5764
      %v5781 = vpack.c.b16 %v5767, %v5766
      %v5782 = vpack.c.b16 %v5769, %v5768
      %v5783 = vpack.c.b16 %v5771, %v5770
      %v5784 = vpack.c.b16 %v5773, %v5772
      %v5785 = vpack.c.b16 %v5775, %v5774
      %v5786 = vpack.c.b16 %v5777, %v5776
      %v5787 = vpack.c.b16 %v5779, %v5778
      %5796 = vmatprep.subr.bf16.mxu0 0
      %5797 = vmatpush1.bf16.msra.mxu0 %v5780
      %5798 = vmatprep.subr.bf16.mxu0 0
      %5799 = vmatpush1.bf16.msra.mxu0 %v5781
      %5800 = vmatprep.subr.bf16.mxu0 0
      %5801 = vmatpush1.bf16.msra.mxu0 %v5782
      %5802 = vmatprep.subr.bf16.mxu0 0
      %5803 = vmatpush1.bf16.msra.mxu0 %v5783
      %5804 = vmatprep.subr.bf16.mxu0 0
      %5805 = vmatpush1.bf16.msra.mxu0 %v5784
      %5806 = vmatprep.subr.bf16.mxu0 0
      %5807 = vmatpush1.bf16.msra.mxu0 %v5785
      %5808 = vmatprep.subr.bf16.mxu0 0
      %5809 = vmatpush1.bf16.msra.mxu0 %v5786
      %5810 = vmatprep.subr.bf16.mxu0 0
      %5811 = vmatpush1.bf16.msra.mxu0 %v5787
      %5812 = vmatprep.subr.bf16.mxu0 0
      %5813 = vmatpush1.bf16.msra.mxu0 0
      %5814 = vmatprep.subr.bf16.mxu0 0
      %5815 = vmatpush1.bf16.msra.mxu0 0
      %5816 = vmatprep.subr.bf16.mxu0 0
      %5817 = vmatpush1.bf16.msra.mxu0 0
      %5818 = vmatprep.subr.bf16.mxu0 0
      %5819 = vmatpush1.bf16.msra.mxu0 0
      %5820 = vmatprep.subr.bf16.mxu0 0
      %5821 = vmatpush1.bf16.msra.mxu0 0
      %5822 = vmatprep.subr.bf16.mxu0 0
      %5823 = vmatpush1.bf16.msra.mxu0 0
      %5824 = vmatprep.subr.bf16.mxu0 0
      %5825 = vmatpush1.bf16.msra.mxu0 0
      %5826 = vmatprep.subr.bf16.mxu0 0
      %5827 = vmatpush1.bf16.msra.mxu0 0
      %5828 = vmatprep.mubr.bf16.mxu0 0
      %5829 = vmatmul.mubr.bf16.gmra.mrb[0].mxu0 %v5740
      %v5830 = vpop.f32.mrb[0].mxu0
      %v5831 = vadd.f32 0.0, %v5830
      %v5832 = vpop.f32.mrb[0].mxu0
      %v5833 = vpop.f32.mrb[0].mxu0
      %v5834 = vadd.f32 0.0, %v5833
      %v5835 = vpop.f32.mrb[0].mxu0
      %5836 = vmatprep.mubr.bf16.mxu0 0
      %5837 = vmatmul.mubr.bf16.gmra.mrb[0].mxu0 %v5741
      %v5838 = vpop.f32.mrb[0].mxu0
      %v5839 = vadd.f32 0.0, %v5838
      %v5840 = vpop.f32.mrb[0].mxu0
      %v5841 = vpop.f32.mrb[0].mxu0
      %v5842 = vadd.f32 0.0, %v5841
      %v5843 = vpop.f32.mrb[0].mxu0
      %5844 = vmatprep.mubr.bf16.mxu0 0
      %5845 = vmatmul.mubr.bf16.gmra.mrb[0].mxu0 %v5742
      %v5846 = vpop.f32.mrb[0].mxu0
      %v5847 = vadd.f32 0.0, %v5846
      %v5848 = vpop.f32.mrb[0].mxu0
      %v5849 = vpop.f32.mrb[0].mxu0
      %v5850 = vadd.f32 0.0, %v5849
      %v5851 = vpop.f32.mrb[0].mxu0
      %5852 = vmatprep.mubr.bf16.mxu0 0
      %5853 = vmatmul.mubr.bf16.gmra.mrb[0].mxu0 %v5743
      %v5854 = vpop.f32.mrb[0].mxu0
      %v5855 = vadd.f32 0.0, %v5854
      %v5856 = vpop.f32.mrb[0].mxu0
      %v5857 = vpop.f32.mrb[0].mxu0
      %v5858 = vadd.f32 0.0, %v5857
      %v5859 = vpop.f32.mrb[0].mxu0
      %5860 = vdwg.mxu0
      %v5861 = vadd.f32 %v5683, %v5831
      %v5862 = vadd.f32 %v5684, %v5834
      %v5863 = vadd.f32 %v5685, %v5839
      %v5864 = vadd.f32 %v5686, %v5842
      %v5865 = vadd.f32 %v5687, %v5847
      %v5866 = vadd.f32 %v5688, %v5850
      %v5867 = vadd.f32 %v5689, %v5855
      %v5868 = vadd.f32 %v5690, %v5858
      %s5869 = scalar_lea.vmem %s204, 64
      %5870 = vst [vmem:[%s5869] sm:$0xff] %v5861
      %5871 = vst [vmem:[%s5869 + $0x8] sm:$0xff] %v5862
      %5872 = vst [vmem:[%s5869 + $0x10] sm:$0xff] %v5863
      %5873 = vst [vmem:[%s5869 + $0x18] sm:$0xff] %v5864
      %5874 = vst [vmem:[%s5869 + $0x20] sm:$0xff] %v5865
      %5875 = vst [vmem:[%s5869 + $0x28] sm:$0xff] %v5866
      %5876 = vst [vmem:[%s5869 + $0x30] sm:$0xff] %v5867
      %5877 = vst [vmem:[%s5869 + $0x38] sm:$0xff] %v5868
      %v5878 = vadd.f32 %v5861, %v5862
      %v5879 = vadd.f32 %v5878, %v5863
      %v5880 = vadd.f32 %v5879, %v5864
      %v5881 = vadd.f32 %v5880, %v5865
      %v5882 = vadd.f32 %v5881, %v5866
      %v5883 = vadd.f32 %v5882, %v5867
      %v5884 = vadd.f32 %v5883, %v5868
      %v5885 = vrot.slane %v5884, 4
      %v5886 = vadd.f32 %v5884, %v5885
      %v5887 = vrot.slane %v5886, 2
      %v5888 = vadd.f32 %v5886, %v5887
      %v5889 = vrot.slane %v5888, 1
      %v5890 = vadd.f32 %v5888, %v5889
      %v5891 = vadd.f32 %v5150, %v5890
      %v5892 = vmul.f32 %v5861, %v5861
      %v5893 = vmul.f32 %v5862, %v5862
      %v5894 = vmul.f32 %v5863, %v5863
      %v5895 = vmul.f32 %v5864, %v5864
      %v5896 = vmul.f32 %v5865, %v5865
      %v5897 = vmul.f32 %v5866, %v5866
      %v5898 = vmul.f32 %v5867, %v5867
      %v5899 = vmul.f32 %v5868, %v5868
      %v5900 = vadd.f32 %v5892, %v5893
      %v5901 = vadd.f32 %v5900, %v5894
      %v5902 = vadd.f32 %v5901, %v5895
      %v5903 = vadd.f32 %v5902, %v5896
      %v5904 = vadd.f32 %v5903, %v5897
      %v5905 = vadd.f32 %v5904, %v5898
      %v5906 = vadd.f32 %v5905, %v5899
      %v5907 = vrot.slane %v5906, 4
      %v5908 = vadd.f32 %v5906, %v5907
      %v5909 = vrot.slane %v5908, 2
      %v5910 = vadd.f32 %v5908, %v5909
      %v5911 = vrot.slane %v5910, 1
      %v5912 = vadd.f32 %v5910, %v5911
      %v5913 = vadd.f32 %v5172, %v5912
      %v5914 = vld [vmem:[%s4424 + $0x1] sm:$0xff]
      %v5915 = vld [vmem:[%s4424 + $0x11] sm:$0xff]
      %v5916 = vld [vmem:[%s4424 + $0x21] sm:$0xff]
      %v5917 = vld [vmem:[%s4424 + $0x31] sm:$0xff]
      %v5918 = vld [vmem:[%s4424 + $0x41] sm:$0xff]
      %v5919 = vld [vmem:[%s4424 + $0x51] sm:$0xff]
      %v5920 = vld [vmem:[%s4424 + $0x61] sm:$0xff]
      %v5921 = vld [vmem:[%s4424 + $0x71] sm:$0xff]
      %v5922 = vpack.c.bf16 %v5914, %v5914
      %v5923 = vpack.c.bf16 %v5915, %v5915
      %v5924 = vpack.c.bf16 %v5916, %v5916
      %v5925 = vpack.c.bf16 %v5917, %v5917
      %v5926 = vpack.c.bf16 %v5918, %v5918
      %v5927 = vpack.c.bf16 %v5919, %v5919
      %v5928 = vpack.c.bf16 %v5920, %v5920
      %v5929 = vpack.c.bf16 %v5921, %v5921
      %s5930 = scalar_lea.vmem %s2, 576
      %v5931 = vld [vmem:[%s5930] sm:$0xf]
      %v5932 = vld [vmem:[%s5930 + $0x4] sm:$0xf]
      %v5933 = vld [vmem:[%s5930 + $0x8] sm:$0xf]
      %v5934 = vld [vmem:[%s5930 + $0xc] sm:$0xf]
      %v5935 = vld [vmem:[%s5930 + $0x10] sm:$0xf]
      %v5936 = vld [vmem:[%s5930 + $0x14] sm:$0xf]
      %v5937 = vld [vmem:[%s5930 + $0x18] sm:$0xf]
      %v5938 = vld [vmem:[%s5930 + $0x1c] sm:$0xf]
      %v5939 = vld [vmem:[%s5930 + $0x20] sm:$0xf]
      %v5940 = vld [vmem:[%s5930 + $0x24] sm:$0xf]
      %v5941 = vld [vmem:[%s5930 + $0x28] sm:$0xf]
      %v5942 = vld [vmem:[%s5930 + $0x2c] sm:$0xf]
      %v5943 = vld [vmem:[%s5930 + $0x30] sm:$0xf]
      %v5944 = vld [vmem:[%s5930 + $0x34] sm:$0xf]
      %v5945 = vld [vmem:[%s5930 + $0x38] sm:$0xf]
      %v5946 = vld [vmem:[%s5930 + $0x3c] sm:$0xf]
      %v5947 = vld [vmem:[%s4424] sm:$0xff]
      %v5948 = vld [vmem:[%s4424 + $0x10] sm:$0xff]
      %v5949 = vld [vmem:[%s4424 + $0x20] sm:$0xff]
      %v5950 = vld [vmem:[%s4424 + $0x30] sm:$0xff]
      %v5951 = vld [vmem:[%s4424 + $0x40] sm:$0xff]
      %v5952 = vld [vmem:[%s4424 + $0x50] sm:$0xff]
      %v5953 = vld [vmem:[%s4424 + $0x60] sm:$0xff]
      %v5954 = vld [vmem:[%s4424 + $0x70] sm:$0xff]
      %v5955 = vpack.c.bf16 %v5947, %v5947
      %v5956 = vpack.c.bf16 %v5948, %v5948
      %v5957 = vpack.c.bf16 %v5949, %v5949
      %v5958 = vpack.c.bf16 %v5950, %v5950
      %v5959 = vpack.c.bf16 %v5951, %v5951
      %v5960 = vpack.c.bf16 %v5952, %v5952
      %v5961 = vpack.c.bf16 %v5953, %v5953
      %v5962 = vpack.c.bf16 %v5954, %v5954
      %s5963 = scalar_lea.vmem %s2, 704
      %v5964 = vld [vmem:[%s5963] sm:$0xf]
      %v5965 = vld [vmem:[%s5963 + $0x4] sm:$0xf]
      %v5966 = vld [vmem:[%s5963 + $0x8] sm:$0xf]
      %v5967 = vld [vmem:[%s5963 + $0xc] sm:$0xf]
      %v5968 = vld [vmem:[%s5963 + $0x10] sm:$0xf]
      %v5969 = vld [vmem:[%s5963 + $0x14] sm:$0xf]
      %v5970 = vld [vmem:[%s5963 + $0x18] sm:$0xf]
      %v5971 = vld [vmem:[%s5963 + $0x1c] sm:$0xf]
      %v5972 = vld [vmem:[%s5963 + $0x20] sm:$0xf]
      %v5973 = vld [vmem:[%s5963 + $0x24] sm:$0xf]
      %v5974 = vld [vmem:[%s5963 + $0x28] sm:$0xf]
      %v5975 = vld [vmem:[%s5963 + $0x2c] sm:$0xf]
      %v5976 = vld [vmem:[%s5963 + $0x30] sm:$0xf]
      %v5977 = vld [vmem:[%s5963 + $0x34] sm:$0xf]
      %v5978 = vld [vmem:[%s5963 + $0x38] sm:$0xf]
      %v5979 = vld [vmem:[%s5963 + $0x3c] sm:$0xf]
      %v5988 = vunpack.c.l.b16 %v5955
      %v5989 = vunpack.c.l.b16 %v5956
      %v5990 = vunpack.c.l.b16 %v5957
      %v5991 = vunpack.c.l.b16 %v5958
      %v5992 = vunpack.c.l.b16 %v5959
      %v5993 = vunpack.c.l.b16 %v5960
      %v5994 = vunpack.c.l.b16 %v5961
      %v5995 = vunpack.c.l.b16 %v5962
      %v5996 = vpack.c.b16 %v5989, %v5988
      %v5997 = vpack.c.b16 %v5991, %v5990
      %v5998 = vpack.c.b16 %v5993, %v5992
      %v5999 = vpack.c.b16 %v5995, %v5994
      %v6020 = vunpack.c.l.b16 %v5964
      %v6021 = vunpack.c.l.b16 %v5965
      %v6022 = vunpack.c.l.b16 %v5966
      %v6023 = vunpack.c.l.b16 %v5967
      %v6024 = vunpack.c.l.b16 %v5968
      %v6025 = vunpack.c.l.b16 %v5969
      %v6026 = vunpack.c.l.b16 %v5970
      %v6027 = vunpack.c.l.b16 %v5971
      %v6028 = vunpack.c.l.b16 %v5972
      %v6029 = vunpack.c.l.b16 %v5973
      %v6030 = vunpack.c.l.b16 %v5974
      %v6031 = vunpack.c.l.b16 %v5975
      %v6032 = vunpack.c.l.b16 %v5976
      %v6033 = vunpack.c.l.b16 %v5977
      %v6034 = vunpack.c.l.b16 %v5978
      %v6035 = vunpack.c.l.b16 %v5979
      %v6036 = vpack.c.b16 %v6021, %v6020
      %v6037 = vpack.c.b16 %v6023, %v6022
      %v6038 = vpack.c.b16 %v6025, %v6024
      %v6039 = vpack.c.b16 %v6027, %v6026
      %v6040 = vpack.c.b16 %v6029, %v6028
      %v6041 = vpack.c.b16 %v6031, %v6030
      %v6042 = vpack.c.b16 %v6033, %v6032
      %v6043 = vpack.c.b16 %v6035, %v6034
      %6052 = vmatprep.subr.bf16.mxu0 0
      %6053 = vmatpush1.bf16.msra.mxu0 %v6036
      %6054 = vmatprep.subr.bf16.mxu0 0
      %6055 = vmatpush1.bf16.msra.mxu0 %v6037
      %6056 = vmatprep.subr.bf16.mxu0 0
      %6057 = vmatpush1.bf16.msra.mxu0 %v6038
      %6058 = vmatprep.subr.bf16.mxu0 0
      %6059 = vmatpush1.bf16.msra.mxu0 %v6039
      %6060 = vmatprep.subr.bf16.mxu0 0
      %6061 = vmatpush1.bf16.msra.mxu0 %v6040
      %6062 = vmatprep.subr.bf16.mxu0 0
      %6063 = vmatpush1.bf16.msra.mxu0 %v6041
      %6064 = vmatprep.subr.bf16.mxu0 0
      %6065 = vmatpush1.bf16.msra.mxu0 %v6042
      %6066 = vmatprep.subr.bf16.mxu0 0
      %6067 = vmatpush1.bf16.msra.mxu0 %v6043
      %6068 = vmatprep.subr.bf16.mxu0 0
      %6069 = vmatpush1.bf16.msra.mxu0 0
      %6070 = vmatprep.subr.bf16.mxu0 0
      %6071 = vmatpush1.bf16.msra.mxu0 0
      %6072 = vmatprep.subr.bf16.mxu0 0
      %6073 = vmatpush1.bf16.msra.mxu0 0
      %6074 = vmatprep.subr.bf16.mxu0 0
      %6075 = vmatpush1.bf16.msra.mxu0 0
      %6076 = vmatprep.subr.bf16.mxu0 0
      %6077 = vmatpush1.bf16.msra.mxu0 0
      %6078 = vmatprep.subr.bf16.mxu0 0
      %6079 = vmatpush1.bf16.msra.mxu0 0
      %6080 = vmatprep.subr.bf16.mxu0 0
      %6081 = vmatpush1.bf16.msra.mxu0 0
      %6082 = vmatprep.subr.bf16.mxu0 0
      %6083 = vmatpush1.bf16.msra.mxu0 0
      %6084 = vmatprep.mubr.bf16.mxu0 0
      %6085 = vmatmul.mubr.bf16.gmra.mrb[0].mxu0 %v5996
      %v6086 = vpop.f32.mrb[0].mxu0
      %v6087 = vadd.f32 0.0, %v6086
      %v6088 = vpop.f32.mrb[0].mxu0
      %v6089 = vpop.f32.mrb[0].mxu0
      %v6090 = vadd.f32 0.0, %v6089
      %v6091 = vpop.f32.mrb[0].mxu0
      %6092 = vmatprep.mubr.bf16.mxu0 0
      %6093 = vmatmul.mubr.bf16.gmra.mrb[0].mxu0 %v5997
      %v6094 = vpop.f32.mrb[0].mxu0
      %v6095 = vadd.f32 0.0, %v6094
      %v6096 = vpop.f32.mrb[0].mxu0
      %v6097 = vpop.f32.mrb[0].mxu0
      %v6098 = vadd.f32 0.0, %v6097
      %v6099 = vpop.f32.mrb[0].mxu0
      %6100 = vmatprep.mubr.bf16.mxu0 0
      %6101 = vmatmul.mubr.bf16.gmra.mrb[0].mxu0 %v5998
      %v6102 = vpop.f32.mrb[0].mxu0
      %v6103 = vadd.f32 0.0, %v6102
      %v6104 = vpop.f32.mrb[0].mxu0
      %v6105 = vpop.f32.mrb[0].mxu0
      %v6106 = vadd.f32 0.0, %v6105
      %v6107 = vpop.f32.mrb[0].mxu0
      %6108 = vmatprep.mubr.bf16.mxu0 0
      %6109 = vmatmul.mubr.bf16.gmra.mrb[0].mxu0 %v5999
      %v6110 = vpop.f32.mrb[0].mxu0
      %v6111 = vadd.f32 0.0, %v6110
      %v6112 = vpop.f32.mrb[0].mxu0
      %v6113 = vpop.f32.mrb[0].mxu0
      %v6114 = vadd.f32 0.0, %v6113
      %v6115 = vpop.f32.mrb[0].mxu0
      %6116 = vdwg.mxu0
      %v6125 = vunpack.c.l.b16 %v5922
      %v6126 = vunpack.c.l.b16 %v5923
      %v6127 = vunpack.c.l.b16 %v5924
      %v6128 = vunpack.c.l.b16 %v5925
      %v6129 = vunpack.c.l.b16 %v5926
      %v6130 = vunpack.c.l.b16 %v5927
      %v6131 = vunpack.c.l.b16 %v5928
      %v6132 = vunpack.c.l.b16 %v5929
      %v6133 = vpack.c.b16 %v6126, %v6125
      %v6134 = vpack.c.b16 %v6128, %v6127
      %v6135 = vpack.c.b16 %v6130, %v6129
      %v6136 = vpack.c.b16 %v6132, %v6131
      %v6157 = vunpack.c.l.b16 %v5931
      %v6158 = vunpack.c.l.b16 %v5932
      %v6159 = vunpack.c.l.b16 %v5933
      %v6160 = vunpack.c.l.b16 %v5934
      %v6161 = vunpack.c.l.b16 %v5935
      %v6162 = vunpack.c.l.b16 %v5936
      %v6163 = vunpack.c.l.b16 %v5937
      %v6164 = vunpack.c.l.b16 %v5938
      %v6165 = vunpack.c.l.b16 %v5939
      %v6166 = vunpack.c.l.b16 %v5940
      %v6167 = vunpack.c.l.b16 %v5941
      %v6168 = vunpack.c.l.b16 %v5942
      %v6169 = vunpack.c.l.b16 %v5943
      %v6170 = vunpack.c.l.b16 %v5944
      %v6171 = vunpack.c.l.b16 %v5945
      %v6172 = vunpack.c.l.b16 %v5946
      %v6173 = vpack.c.b16 %v6158, %v6157
      %v6174 = vpack.c.b16 %v6160, %v6159
      %v6175 = vpack.c.b16 %v6162, %v6161
      %v6176 = vpack.c.b16 %v6164, %v6163
      %v6177 = vpack.c.b16 %v6166, %v6165
      %v6178 = vpack.c.b16 %v6168, %v6167
      %v6179 = vpack.c.b16 %v6170, %v6169
      %v6180 = vpack.c.b16 %v6172, %v6171
      %6189 = vmatprep.subr.bf16.mxu0 0
      %6190 = vmatpush1.bf16.msra.mxu0 %v6173
      %6191 = vmatprep.subr.bf16.mxu0 0
      %6192 = vmatpush1.bf16.msra.mxu0 %v6174
      %6193 = vmatprep.subr.bf16.mxu0 0
      %6194 = vmatpush1.bf16.msra.mxu0 %v6175
      %6195 = vmatprep.subr.bf16.mxu0 0
      %6196 = vmatpush1.bf16.msra.mxu0 %v6176
      %6197 = vmatprep.subr.bf16.mxu0 0
      %6198 = vmatpush1.bf16.msra.mxu0 %v6177
      %6199 = vmatprep.subr.bf16.mxu0 0
      %6200 = vmatpush1.bf16.msra.mxu0 %v6178
      %6201 = vmatprep.subr.bf16.mxu0 0
      %6202 = vmatpush1.bf16.msra.mxu0 %v6179
      %6203 = vmatprep.subr.bf16.mxu0 0
      %6204 = vmatpush1.bf16.msra.mxu0 %v6180
      %6205 = vmatprep.subr.bf16.mxu0 0
      %6206 = vmatpush1.bf16.msra.mxu0 0
      %6207 = vmatprep.subr.bf16.mxu0 0
      %6208 = vmatpush1.bf16.msra.mxu0 0
      %6209 = vmatprep.subr.bf16.mxu0 0
      %6210 = vmatpush1.bf16.msra.mxu0 0
      %6211 = vmatprep.subr.bf16.mxu0 0
      %6212 = vmatpush1.bf16.msra.mxu0 0
      %6213 = vmatprep.subr.bf16.mxu0 0
      %6214 = vmatpush1.bf16.msra.mxu0 0
      %6215 = vmatprep.subr.bf16.mxu0 0
      %6216 = vmatpush1.bf16.msra.mxu0 0
      %6217 = vmatprep.subr.bf16.mxu0 0
      %6218 = vmatpush1.bf16.msra.mxu0 0
      %6219 = vmatprep.subr.bf16.mxu0 0
      %6220 = vmatpush1.bf16.msra.mxu0 0
      %6221 = vmatprep.mubr.bf16.mxu0 0
      %6222 = vmatmul.mubr.bf16.gmra.mrb[0].mxu0 %v6133
      %v6223 = vpop.f32.mrb[0].mxu0
      %v6224 = vadd.f32 %v6087, %v6223
      %v6225 = vpop.f32.mrb[0].mxu0
      %v6226 = vpop.f32.mrb[0].mxu0
      %v6227 = vadd.f32 %v6090, %v6226
      %v6228 = vpop.f32.mrb[0].mxu0
      %6229 = vmatprep.mubr.bf16.mxu0 0
      %6230 = vmatmul.mubr.bf16.gmra.mrb[0].mxu0 %v6134
      %v6231 = vpop.f32.mrb[0].mxu0
      %v6232 = vadd.f32 %v6095, %v6231
      %v6233 = vpop.f32.mrb[0].mxu0
      %v6234 = vpop.f32.mrb[0].mxu0
      %v6235 = vadd.f32 %v6098, %v6234
      %v6236 = vpop.f32.mrb[0].mxu0
      %6237 = vmatprep.mubr.bf16.mxu0 0
      %6238 = vmatmul.mubr.bf16.gmra.mrb[0].mxu0 %v6135
      %v6239 = vpop.f32.mrb[0].mxu0
      %v6240 = vadd.f32 %v6103, %v6239
      %v6241 = vpop.f32.mrb[0].mxu0
      %v6242 = vpop.f32.mrb[0].mxu0
      %v6243 = vadd.f32 %v6106, %v6242
      %v6244 = vpop.f32.mrb[0].mxu0
      %6245 = vmatprep.mubr.bf16.mxu0 0
      %6246 = vmatmul.mubr.bf16.gmra.mrb[0].mxu0 %v6136
      %v6247 = vpop.f32.mrb[0].mxu0
      %v6248 = vadd.f32 %v6111, %v6247
      %v6249 = vpop.f32.mrb[0].mxu0
      %v6250 = vpop.f32.mrb[0].mxu0
      %v6251 = vadd.f32 %v6114, %v6250
      %v6252 = vpop.f32.mrb[0].mxu0
      %6253 = vdwg.mxu0
      %s6254 = scalar_lea.vmem [#allocation2], 32
      %v6255 = vld [vmem:[%s6254 + $0x1] sm:$0xff]
      %v6256 = vld [vmem:[%s6254 + $0x11] sm:$0xff]
      %v6257 = vld [vmem:[%s6254 + $0x21] sm:$0xff]
      %v6258 = vld [vmem:[%s6254 + $0x31] sm:$0xff]
      %v6259 = vld [vmem:[%s6254 + $0x41] sm:$0xff]
      %v6260 = vld [vmem:[%s6254 + $0x51] sm:$0xff]
      %v6261 = vld [vmem:[%s6254 + $0x61] sm:$0xff]
      %v6262 = vld [vmem:[%s6254 + $0x71] sm:$0xff]
      %v6263 = vpack.c.bf16 %v6255, %v6255
      %v6264 = vpack.c.bf16 %v6256, %v6256
      %v6265 = vpack.c.bf16 %v6257, %v6257
      %v6266 = vpack.c.bf16 %v6258, %v6258
      %v6267 = vpack.c.bf16 %v6259, %v6259
      %v6268 = vpack.c.bf16 %v6260, %v6260
      %v6269 = vpack.c.bf16 %v6261, %v6261
      %v6270 = vpack.c.bf16 %v6262, %v6262
      %s6271 = scalar_lea.vmem %s2, 64
      %v6272 = vld [vmem:[%s6271] sm:$0xf]
      %v6273 = vld [vmem:[%s6271 + $0x4] sm:$0xf]
      %v6274 = vld [vmem:[%s6271 + $0x8] sm:$0xf]
      %v6275 = vld [vmem:[%s6271 + $0xc] sm:$0xf]
      %v6276 = vld [vmem:[%s6271 + $0x10] sm:$0xf]
      %v6277 = vld [vmem:[%s6271 + $0x14] sm:$0xf]
      %v6278 = vld [vmem:[%s6271 + $0x18] sm:$0xf]
      %v6279 = vld [vmem:[%s6271 + $0x1c] sm:$0xf]
      %v6280 = vld [vmem:[%s6271 + $0x20] sm:$0xf]
      %v6281 = vld [vmem:[%s6271 + $0x24] sm:$0xf]
      %v6282 = vld [vmem:[%s6271 + $0x28] sm:$0xf]
      %v6283 = vld [vmem:[%s6271 + $0x2c] sm:$0xf]
      %v6284 = vld [vmem:[%s6271 + $0x30] sm:$0xf]
      %v6285 = vld [vmem:[%s6271 + $0x34] sm:$0xf]
      %v6286 = vld [vmem:[%s6271 + $0x38] sm:$0xf]
      %v6287 = vld [vmem:[%s6271 + $0x3c] sm:$0xf]
      %v6296 = vunpack.c.l.b16 %v6263
      %v6297 = vunpack.c.l.b16 %v6264
      %v6298 = vunpack.c.l.b16 %v6265
      %v6299 = vunpack.c.l.b16 %v6266
      %v6300 = vunpack.c.l.b16 %v6267
      %v6301 = vunpack.c.l.b16 %v6268
      %v6302 = vunpack.c.l.b16 %v6269
      %v6303 = vunpack.c.l.b16 %v6270
      %v6304 = vpack.c.b16 %v6297, %v6296
      %v6305 = vpack.c.b16 %v6299, %v6298
      %v6306 = vpack.c.b16 %v6301, %v6300
      %v6307 = vpack.c.b16 %v6303, %v6302
      %v6328 = vunpack.c.l.b16 %v6272
      %v6329 = vunpack.c.l.b16 %v6273
      %v6330 = vunpack.c.l.b16 %v6274
      %v6331 = vunpack.c.l.b16 %v6275
      %v6332 = vunpack.c.l.b16 %v6276
      %v6333 = vunpack.c.l.b16 %v6277
      %v6334 = vunpack.c.l.b16 %v6278
      %v6335 = vunpack.c.l.b16 %v6279
      %v6336 = vunpack.c.l.b16 %v6280
      %v6337 = vunpack.c.l.b16 %v6281
      %v6338 = vunpack.c.l.b16 %v6282
      %v6339 = vunpack.c.l.b16 %v6283
      %v6340 = vunpack.c.l.b16 %v6284
      %v6341 = vunpack.c.l.b16 %v6285
      %v6342 = vunpack.c.l.b16 %v6286
      %v6343 = vunpack.c.l.b16 %v6287
      %v6344 = vpack.c.b16 %v6329, %v6328
      %v6345 = vpack.c.b16 %v6331, %v6330
      %v6346 = vpack.c.b16 %v6333, %v6332
      %v6347 = vpack.c.b16 %v6335, %v6334
      %v6348 = vpack.c.b16 %v6337, %v6336
      %v6349 = vpack.c.b16 %v6339, %v6338
      %v6350 = vpack.c.b16 %v6341, %v6340
      %v6351 = vpack.c.b16 %v6343, %v6342
      %6360 = vmatprep.subr.bf16.mxu0 0
      %6361 = vmatpush1.bf16.msra.mxu0 %v6344
      %6362 = vmatprep.subr.bf16.mxu0 0
      %6363 = vmatpush1.bf16.msra.mxu0 %v6345
      %6364 = vmatprep.subr.bf16.mxu0 0
      %6365 = vmatpush1.bf16.msra.mxu0 %v6346
      %6366 = vmatprep.subr.bf16.mxu0 0
      %6367 = vmatpush1.bf16.msra.mxu0 %v6347
      %6368 = vmatprep.subr.bf16.mxu0 0
      %6369 = vmatpush1.bf16.msra.mxu0 %v6348
      %6370 = vmatprep.subr.bf16.mxu0 0
      %6371 = vmatpush1.bf16.msra.mxu0 %v6349
      %6372 = vmatprep.subr.bf16.mxu0 0
      %6373 = vmatpush1.bf16.msra.mxu0 %v6350
      %6374 = vmatprep.subr.bf16.mxu0 0
      %6375 = vmatpush1.bf16.msra.mxu0 %v6351
      %6376 = vmatprep.subr.bf16.mxu0 0
      %6377 = vmatpush1.bf16.msra.mxu0 0
      %6378 = vmatprep.subr.bf16.mxu0 0
      %6379 = vmatpush1.bf16.msra.mxu0 0
      %6380 = vmatprep.subr.bf16.mxu0 0
      %6381 = vmatpush1.bf16.msra.mxu0 0
      %6382 = vmatprep.subr.bf16.mxu0 0
      %6383 = vmatpush1.bf16.msra.mxu0 0
      %6384 = vmatprep.subr.bf16.mxu0 0
      %6385 = vmatpush1.bf16.msra.mxu0 0
      %6386 = vmatprep.subr.bf16.mxu0 0
      %6387 = vmatpush1.bf16.msra.mxu0 0
      %6388 = vmatprep.subr.bf16.mxu0 0
      %6389 = vmatpush1.bf16.msra.mxu0 0
      %6390 = vmatprep.subr.bf16.mxu0 0
      %6391 = vmatpush1.bf16.msra.mxu0 0
      %6392 = vmatprep.mubr.bf16.mxu0 0
      %6393 = vmatmul.mubr.bf16.gmra.mrb[0].mxu0 %v6304
      %v6394 = vpop.f32.mrb[0].mxu0
      %v6395 = vadd.f32 0.0, %v6394
      %v6396 = vpop.f32.mrb[0].mxu0
      %v6397 = vpop.f32.mrb[0].mxu0
      %v6398 = vadd.f32 0.0, %v6397
      %v6399 = vpop.f32.mrb[0].mxu0
      %6400 = vmatprep.mubr.bf16.mxu0 0
      %6401 = vmatmul.mubr.bf16.gmra.mrb[0].mxu0 %v6305
      %v6402 = vpop.f32.mrb[0].mxu0
      %v6403 = vadd.f32 0.0, %v6402
      %v6404 = vpop.f32.mrb[0].mxu0
      %v6405 = vpop.f32.mrb[0].mxu0
      %v6406 = vadd.f32 0.0, %v6405
      %v6407 = vpop.f32.mrb[0].mxu0
      %6408 = vmatprep.mubr.bf16.mxu0 0
      %6409 = vmatmul.mubr.bf16.gmra.mrb[0].mxu0 %v6306
      %v6410 = vpop.f32.mrb[0].mxu0
      %v6411 = vadd.f32 0.0, %v6410
      %v6412 = vpop.f32.mrb[0].mxu0
      %v6413 = vpop.f32.mrb[0].mxu0
      %v6414 = vadd.f32 0.0, %v6413
      %v6415 = vpop.f32.mrb[0].mxu0
      %6416 = vmatprep.mubr.bf16.mxu0 0
      %6417 = vmatmul.mubr.bf16.gmra.mrb[0].mxu0 %v6307
      %v6418 = vpop.f32.mrb[0].mxu0
      %v6419 = vadd.f32 0.0, %v6418
      %v6420 = vpop.f32.mrb[0].mxu0
      %v6421 = vpop.f32.mrb[0].mxu0
      %v6422 = vadd.f32 0.0, %v6421
      %v6423 = vpop.f32.mrb[0].mxu0
      %6424 = vdwg.mxu0
      %v6425 = vadd.f32 %v6224, %v6395
      %v6426 = vadd.f32 %v6227, %v6398
      %v6427 = vadd.f32 %v6232, %v6403
      %v6428 = vadd.f32 %v6235, %v6406
      %v6429 = vadd.f32 %v6240, %v6411
      %v6430 = vadd.f32 %v6243, %v6414
      %v6431 = vadd.f32 %v6248, %v6419
      %v6432 = vadd.f32 %v6251, %v6422
      %v6433 = vld [vmem:[%s6254] sm:$0xff]
      %v6434 = vld [vmem:[%s6254 + $0x10] sm:$0xff]
      %v6435 = vld [vmem:[%s6254 + $0x20] sm:$0xff]
      %v6436 = vld [vmem:[%s6254 + $0x30] sm:$0xff]
      %v6437 = vld [vmem:[%s6254 + $0x40] sm:$0xff]
      %v6438 = vld [vmem:[%s6254 + $0x50] sm:$0xff]
      %v6439 = vld [vmem:[%s6254 + $0x60] sm:$0xff]
      %v6440 = vld [vmem:[%s6254 + $0x70] sm:$0xff]
      %v6441 = vpack.c.bf16 %v6433, %v6433
      %v6442 = vpack.c.bf16 %v6434, %v6434
      %v6443 = vpack.c.bf16 %v6435, %v6435
      %v6444 = vpack.c.bf16 %v6436, %v6436
      %v6445 = vpack.c.bf16 %v6437, %v6437
      %v6446 = vpack.c.bf16 %v6438, %v6438
      %v6447 = vpack.c.bf16 %v6439, %v6439
      %v6448 = vpack.c.bf16 %v6440, %v6440
      %s6449 = scalar_lea.vmem %s2, 192
      %v6450 = vld [vmem:[%s6449] sm:$0xf]
      %v6451 = vld [vmem:[%s6449 + $0x4] sm:$0xf]
      %v6452 = vld [vmem:[%s6449 + $0x8] sm:$0xf]
      %v6453 = vld [vmem:[%s6449 + $0xc] sm:$0xf]
      %v6454 = vld [vmem:[%s6449 + $0x10] sm:$0xf]
      %v6455 = vld [vmem:[%s6449 + $0x14] sm:$0xf]
      %v6456 = vld [vmem:[%s6449 + $0x18] sm:$0xf]
      %v6457 = vld [vmem:[%s6449 + $0x1c] sm:$0xf]
      %v6458 = vld [vmem:[%s6449 + $0x20] sm:$0xf]
      %v6459 = vld [vmem:[%s6449 + $0x24] sm:$0xf]
      %v6460 = vld [vmem:[%s6449 + $0x28] sm:$0xf]
      %v6461 = vld [vmem:[%s6449 + $0x2c] sm:$0xf]
      %v6462 = vld [vmem:[%s6449 + $0x30] sm:$0xf]
      %v6463 = vld [vmem:[%s6449 + $0x34] sm:$0xf]
      %v6464 = vld [vmem:[%s6449 + $0x38] sm:$0xf]
      %v6465 = vld [vmem:[%s6449 + $0x3c] sm:$0xf]
      %v6474 = vunpack.c.l.b16 %v6441
      %v6475 = vunpack.c.l.b16 %v6442
      %v6476 = vunpack.c.l.b16 %v6443
      %v6477 = vunpack.c.l.b16 %v6444
      %v6478 = vunpack.c.l.b16 %v6445
      %v6479 = vunpack.c.l.b16 %v6446
      %v6480 = vunpack.c.l.b16 %v6447
      %v6481 = vunpack.c.l.b16 %v6448
      %v6482 = vpack.c.b16 %v6475, %v6474
      %v6483 = vpack.c.b16 %v6477, %v6476
      %v6484 = vpack.c.b16 %v6479, %v6478
      %v6485 = vpack.c.b16 %v6481, %v6480
      %v6506 = vunpack.c.l.b16 %v6450
      %v6507 = vunpack.c.l.b16 %v6451
      %v6508 = vunpack.c.l.b16 %v6452
      %v6509 = vunpack.c.l.b16 %v6453
      %v6510 = vunpack.c.l.b16 %v6454
      %v6511 = vunpack.c.l.b16 %v6455
      %v6512 = vunpack.c.l.b16 %v6456
      %v6513 = vunpack.c.l.b16 %v6457
      %v6514 = vunpack.c.l.b16 %v6458
      %v6515 = vunpack.c.l.b16 %v6459
      %v6516 = vunpack.c.l.b16 %v6460
      %v6517 = vunpack.c.l.b16 %v6461
      %v6518 = vunpack.c.l.b16 %v6462
      %v6519 = vunpack.c.l.b16 %v6463
      %v6520 = vunpack.c.l.b16 %v6464
      %v6521 = vunpack.c.l.b16 %v6465
      %v6522 = vpack.c.b16 %v6507, %v6506
      %v6523 = vpack.c.b16 %v6509, %v6508
      %v6524 = vpack.c.b16 %v6511, %v6510
      %v6525 = vpack.c.b16 %v6513, %v6512
      %v6526 = vpack.c.b16 %v6515, %v6514
      %v6527 = vpack.c.b16 %v6517, %v6516
      %v6528 = vpack.c.b16 %v6519, %v6518
      %v6529 = vpack.c.b16 %v6521, %v6520
      %6538 = vmatprep.subr.bf16.mxu0 0
      %6539 = vmatpush1.bf16.msra.mxu0 %v6522
      %6540 = vmatprep.subr.bf16.mxu0 0
      %6541 = vmatpush1.bf16.msra.mxu0 %v6523
      %6542 = vmatprep.subr.bf16.mxu0 0
      %6543 = vmatpush1.bf16.msra.mxu0 %v6524
      %6544 = vmatprep.subr.bf16.mxu0 0
      %6545 = vmatpush1.bf16.msra.mxu0 %v6525
      %6546 = vmatprep.subr.bf16.mxu0 0
      %6547 = vmatpush1.bf16.msra.mxu0 %v6526
      %6548 = vmatprep.subr.bf16.mxu0 0
      %6549 = vmatpush1.bf16.msra.mxu0 %v6527
      %6550 = vmatprep.subr.bf16.mxu0 0
      %6551 = vmatpush1.bf16.msra.mxu0 %v6528
      %6552 = vmatprep.subr.bf16.mxu0 0
      %6553 = vmatpush1.bf16.msra.mxu0 %v6529
      %6554 = vmatprep.subr.bf16.mxu0 0
      %6555 = vmatpush1.bf16.msra.mxu0 0
      %6556 = vmatprep.subr.bf16.mxu0 0
      %6557 = vmatpush1.bf16.msra.mxu0 0
      %6558 = vmatprep.subr.bf16.mxu0 0
      %6559 = vmatpush1.bf16.msra.mxu0 0
      %6560 = vmatprep.subr.bf16.mxu0 0
      %6561 = vmatpush1.bf16.msra.mxu0 0
      %6562 = vmatprep.subr.bf16.mxu0 0
      %6563 = vmatpush1.bf16.msra.mxu0 0
      %6564 = vmatprep.subr.bf16.mxu0 0
      %6565 = vmatpush1.bf16.msra.mxu0 0
      %6566 = vmatprep.subr.bf16.mxu0 0
      %6567 = vmatpush1.bf16.msra.mxu0 0
      %6568 = vmatprep.subr.bf16.mxu0 0
      %6569 = vmatpush1.bf16.msra.mxu0 0
      %6570 = vmatprep.mubr.bf16.mxu0 0
      %6571 = vmatmul.mubr.bf16.gmra.mrb[0].mxu0 %v6482
      %v6572 = vpop.f32.mrb[0].mxu0
      %v6573 = vadd.f32 0.0, %v6572
      %v6574 = vpop.f32.mrb[0].mxu0
      %v6575 = vpop.f32.mrb[0].mxu0
      %v6576 = vadd.f32 0.0, %v6575
      %v6577 = vpop.f32.mrb[0].mxu0
      %6578 = vmatprep.mubr.bf16.mxu0 0
      %6579 = vmatmul.mubr.bf16.gmra.mrb[0].mxu0 %v6483
      %v6580 = vpop.f32.mrb[0].mxu0
      %v6581 = vadd.f32 0.0, %v6580
      %v6582 = vpop.f32.mrb[0].mxu0
      %v6583 = vpop.f32.mrb[0].mxu0
      %v6584 = vadd.f32 0.0, %v6583
      %v6585 = vpop.f32.mrb[0].mxu0
      %6586 = vmatprep.mubr.bf16.mxu0 0
      %6587 = vmatmul.mubr.bf16.gmra.mrb[0].mxu0 %v6484
      %v6588 = vpop.f32.mrb[0].mxu0
      %v6589 = vadd.f32 0.0, %v6588
      %v6590 = vpop.f32.mrb[0].mxu0
      %v6591 = vpop.f32.mrb[0].mxu0
      %v6592 = vadd.f32 0.0, %v6591
      %v6593 = vpop.f32.mrb[0].mxu0
      %6594 = vmatprep.mubr.bf16.mxu0 0
      %6595 = vmatmul.mubr.bf16.gmra.mrb[0].mxu0 %v6485
      %v6596 = vpop.f32.mrb[0].mxu0
      %v6597 = vadd.f32 0.0, %v6596
      %v6598 = vpop.f32.mrb[0].mxu0
      %v6599 = vpop.f32.mrb[0].mxu0
      %v6600 = vadd.f32 0.0, %v6599
      %v6601 = vpop.f32.mrb[0].mxu0
      %6602 = vdwg.mxu0
      %v6603 = vadd.f32 %v6425, %v6573
      %v6604 = vadd.f32 %v6426, %v6576
      %v6605 = vadd.f32 %v6427, %v6581
      %v6606 = vadd.f32 %v6428, %v6584
      %v6607 = vadd.f32 %v6429, %v6589
      %v6608 = vadd.f32 %v6430, %v6592
      %v6609 = vadd.f32 %v6431, %v6597
      %v6610 = vadd.f32 %v6432, %v6600
      %s6611 = scalar_lea.vmem %s204, 128
      %6612 = vst [vmem:[%s6611] sm:$0xff] %v6603
      %6613 = vst [vmem:[%s6611 + $0x8] sm:$0xff] %v6604
      %6614 = vst [vmem:[%s6611 + $0x10] sm:$0xff] %v6605
      %6615 = vst [vmem:[%s6611 + $0x18] sm:$0xff] %v6606
      %6616 = vst [vmem:[%s6611 + $0x20] sm:$0xff] %v6607
      %6617 = vst [vmem:[%s6611 + $0x28] sm:$0xff] %v6608
      %6618 = vst [vmem:[%s6611 + $0x30] sm:$0xff] %v6609
      %6619 = vst [vmem:[%s6611 + $0x38] sm:$0xff] %v6610
      %v6620 = vadd.f32 %v6603, %v6604
      %v6621 = vadd.f32 %v6620, %v6605
      %v6622 = vadd.f32 %v6621, %v6606
      %v6623 = vadd.f32 %v6622, %v6607
      %v6624 = vadd.f32 %v6623, %v6608
      %v6625 = vadd.f32 %v6624, %v6609
      %v6626 = vadd.f32 %v6625, %v6610
      %v6627 = vrot.slane %v6626, 4
      %v6628 = vadd.f32 %v6626, %v6627
      %v6629 = vrot.slane %v6628, 2
      %v6630 = vadd.f32 %v6628, %v6629
      %v6631 = vrot.slane %v6630, 1
      %v6632 = vadd.f32 %v6630, %v6631
      %v6633 = vadd.f32 %v5891, %v6632
      %v6634 = vmul.f32 %v6603, %v6603
      %v6635 = vmul.f32 %v6604, %v6604
      %v6636 = vmul.f32 %v6605, %v6605
      %v6637 = vmul.f32 %v6606, %v6606
      %v6638 = vmul.f32 %v6607, %v6607
      %v6639 = vmul.f32 %v6608, %v6608
      %v6640 = vmul.f32 %v6609, %v6609
      %v6641 = vmul.f32 %v6610, %v6610
      %v6642 = vadd.f32 %v6634, %v6635
      %v6643 = vadd.f32 %v6642, %v6636
      %v6644 = vadd.f32 %v6643, %v6637
      %v6645 = vadd.f32 %v6644, %v6638
      %v6646 = vadd.f32 %v6645, %v6639
      %v6647 = vadd.f32 %v6646, %v6640
      %v6648 = vadd.f32 %v6647, %v6641
      %v6649 = vrot.slane %v6648, 4
      %v6650 = vadd.f32 %v6648, %v6649
      %v6651 = vrot.slane %v6650, 2
      %v6652 = vadd.f32 %v6650, %v6651
      %v6653 = vrot.slane %v6652, 1
      %v6654 = vadd.f32 %v6652, %v6653
      %v6655 = vadd.f32 %v5913, %v6654
      %v6656 = vld [vmem:[%s4424 + $0x1] sm:$0xff]
      %v6657 = vld [vmem:[%s4424 + $0x11] sm:$0xff]
      %v6658 = vld [vmem:[%s4424 + $0x21] sm:$0xff]
      %v6659 = vld [vmem:[%s4424 + $0x31] sm:$0xff]
      %v6660 = vld [vmem:[%s4424 + $0x41] sm:$0xff]
      %v6661 = vld [vmem:[%s4424 + $0x51] sm:$0xff]
      %v6662 = vld [vmem:[%s4424 + $0x61] sm:$0xff]
      %v6663 = vld [vmem:[%s4424 + $0x71] sm:$0xff]
      %v6664 = vpack.c.bf16 %v6656, %v6656
      %v6665 = vpack.c.bf16 %v6657, %v6657
      %v6666 = vpack.c.bf16 %v6658, %v6658
      %v6667 = vpack.c.bf16 %v6659, %v6659
      %v6668 = vpack.c.bf16 %v6660, %v6660
      %v6669 = vpack.c.bf16 %v6661, %v6661
      %v6670 = vpack.c.bf16 %v6662, %v6662
      %v6671 = vpack.c.bf16 %v6663, %v6663
      %s6672 = scalar_lea.vmem %s2, 640
      %v6673 = vld [vmem:[%s6672] sm:$0xf]
      %v6674 = vld [vmem:[%s6672 + $0x4] sm:$0xf]
      %v6675 = vld [vmem:[%s6672 + $0x8] sm:$0xf]
      %v6676 = vld [vmem:[%s6672 + $0xc] sm:$0xf]
      %v6677 = vld [vmem:[%s6672 + $0x10] sm:$0xf]
      %v6678 = vld [vmem:[%s6672 + $0x14] sm:$0xf]
      %v6679 = vld [vmem:[%s6672 + $0x18] sm:$0xf]
      %v6680 = vld [vmem:[%s6672 + $0x1c] sm:$0xf]
      %v6681 = vld [vmem:[%s6672 + $0x20] sm:$0xf]
      %v6682 = vld [vmem:[%s6672 + $0x24] sm:$0xf]
      %v6683 = vld [vmem:[%s6672 + $0x28] sm:$0xf]
      %v6684 = vld [vmem:[%s6672 + $0x2c] sm:$0xf]
      %v6685 = vld [vmem:[%s6672 + $0x30] sm:$0xf]
      %v6686 = vld [vmem:[%s6672 + $0x34] sm:$0xf]
      %v6687 = vld [vmem:[%s6672 + $0x38] sm:$0xf]
      %v6688 = vld [vmem:[%s6672 + $0x3c] sm:$0xf]
      %v6689 = vld [vmem:[%s4424 + $0x2] sm:$0xff]
      %v6690 = vld [vmem:[%s4424 + $0x12] sm:$0xff]
      %v6691 = vld [vmem:[%s4424 + $0x22] sm:$0xff]
      %v6692 = vld [vmem:[%s4424 + $0x32] sm:$0xff]
      %v6693 = vld [vmem:[%s4424 + $0x42] sm:$0xff]
      %v6694 = vld [vmem:[%s4424 + $0x52] sm:$0xff]
      %v6695 = vld [vmem:[%s4424 + $0x62] sm:$0xff]
      %v6696 = vld [vmem:[%s4424 + $0x72] sm:$0xff]
      %v6697 = vpack.c.bf16 %v6689, %v6689
      %v6698 = vpack.c.bf16 %v6690, %v6690
      %v6699 = vpack.c.bf16 %v6691, %v6691
      %v6700 = vpack.c.bf16 %v6692, %v6692
      %v6701 = vpack.c.bf16 %v6693, %v6693
      %v6702 = vpack.c.bf16 %v6694, %v6694
      %v6703 = vpack.c.bf16 %v6695, %v6695
      %v6704 = vpack.c.bf16 %v6696, %v6696
      %s6705 = scalar_lea.vmem %s2, 512
      %v6706 = vld [vmem:[%s6705] sm:$0xf]
      %v6707 = vld [vmem:[%s6705 + $0x4] sm:$0xf]
      %v6708 = vld [vmem:[%s6705 + $0x8] sm:$0xf]
      %v6709 = vld [vmem:[%s6705 + $0xc] sm:$0xf]
      %v6710 = vld [vmem:[%s6705 + $0x10] sm:$0xf]
      %v6711 = vld [vmem:[%s6705 + $0x14] sm:$0xf]
      %v6712 = vld [vmem:[%s6705 + $0x18] sm:$0xf]
      %v6713 = vld [vmem:[%s6705 + $0x1c] sm:$0xf]
      %v6714 = vld [vmem:[%s6705 + $0x20] sm:$0xf]
      %v6715 = vld [vmem:[%s6705 + $0x24] sm:$0xf]
      %v6716 = vld [vmem:[%s6705 + $0x28] sm:$0xf]
      %v6717 = vld [vmem:[%s6705 + $0x2c] sm:$0xf]
      %v6718 = vld [vmem:[%s6705 + $0x30] sm:$0xf]
      %v6719 = vld [vmem:[%s6705 + $0x34] sm:$0xf]
      %v6720 = vld [vmem:[%s6705 + $0x38] sm:$0xf]
      %v6721 = vld [vmem:[%s6705 + $0x3c] sm:$0xf]
      %v6730 = vunpack.c.l.b16 %v6697
      %v6731 = vunpack.c.l.b16 %v6698
      %v6732 = vunpack.c.l.b16 %v6699
      %v6733 = vunpack.c.l.b16 %v6700
      %v6734 = vunpack.c.l.b16 %v6701
      %v6735 = vunpack.c.l.b16 %v6702
      %v6736 = vunpack.c.l.b16 %v6703
      %v6737 = vunpack.c.l.b16 %v6704
      %v6738 = vpack.c.b16 %v6731, %v6730
      %v6739 = vpack.c.b16 %v6733, %v6732
      %v6740 = vpack.c.b16 %v6735, %v6734
      %v6741 = vpack.c.b16 %v6737, %v6736
      %v6762 = vunpack.c.l.b16 %v6706
      %v6763 = vunpack.c.l.b16 %v6707
      %v6764 = vunpack.c.l.b16 %v6708
      %v6765 = vunpack.c.l.b16 %v6709
      %v6766 = vunpack.c.l.b16 %v6710
      %v6767 = vunpack.c.l.b16 %v6711
      %v6768 = vunpack.c.l.b16 %v6712
      %v6769 = vunpack.c.l.b16 %v6713
      %v6770 = vunpack.c.l.b16 %v6714
      %v6771 = vunpack.c.l.b16 %v6715
      %v6772 = vunpack.c.l.b16 %v6716
      %v6773 = vunpack.c.l.b16 %v6717
      %v6774 = vunpack.c.l.b16 %v6718
      %v6775 = vunpack.c.l.b16 %v6719
      %v6776 = vunpack.c.l.b16 %v6720
      %v6777 = vunpack.c.l.b16 %v6721
      %v6778 = vpack.c.b16 %v6763, %v6762
      %v6779 = vpack.c.b16 %v6765, %v6764
      %v6780 = vpack.c.b16 %v6767, %v6766
      %v6781 = vpack.c.b16 %v6769, %v6768
      %v6782 = vpack.c.b16 %v6771, %v6770
      %v6783 = vpack.c.b16 %v6773, %v6772
      %v6784 = vpack.c.b16 %v6775, %v6774
      %v6785 = vpack.c.b16 %v6777, %v6776
      %6794 = vmatprep.subr.bf16.mxu0 0
      %6795 = vmatpush1.bf16.msra.mxu0 %v6778
      %6796 = vmatprep.subr.bf16.mxu0 0
      %6797 = vmatpush1.bf16.msra.mxu0 %v6779
      %6798 = vmatprep.subr.bf16.mxu0 0
      %6799 = vmatpush1.bf16.msra.mxu0 %v6780
      %6800 = vmatprep.subr.bf16.mxu0 0
      %6801 = vmatpush1.bf16.msra.mxu0 %v6781
      %6802 = vmatprep.subr.bf16.mxu0 0
      %6803 = vmatpush1.bf16.msra.mxu0 %v6782
      %6804 = vmatprep.subr.bf16.mxu0 0
      %6805 = vmatpush1.bf16.msra.mxu0 %v6783
      %6806 = vmatprep.subr.bf16.mxu0 0
      %6807 = vmatpush1.bf16.msra.mxu0 %v6784
      %6808 = vmatprep.subr.bf16.mxu0 0
      %6809 = vmatpush1.bf16.msra.mxu0 %v6785
      %6810 = vmatprep.subr.bf16.mxu0 0
      %6811 = vmatpush1.bf16.msra.mxu0 0
      %6812 = vmatprep.subr.bf16.mxu0 0
      %6813 = vmatpush1.bf16.msra.mxu0 0
      %6814 = vmatprep.subr.bf16.mxu0 0
      %6815 = vmatpush1.bf16.msra.mxu0 0
      %6816 = vmatprep.subr.bf16.mxu0 0
      %6817 = vmatpush1.bf16.msra.mxu0 0
      %6818 = vmatprep.subr.bf16.mxu0 0
      %6819 = vmatpush1.bf16.msra.mxu0 0
      %6820 = vmatprep.subr.bf16.mxu0 0
      %6821 = vmatpush1.bf16.msra.mxu0 0
      %6822 = vmatprep.subr.bf16.mxu0 0
      %6823 = vmatpush1.bf16.msra.mxu0 0
      %6824 = vmatprep.subr.bf16.mxu0 0
      %6825 = vmatpush1.bf16.msra.mxu0 0
      %6826 = vmatprep.mubr.bf16.mxu0 0
      %6827 = vmatmul.mubr.bf16.gmra.mrb[0].mxu0 %v6738
      %v6828 = vpop.f32.mrb[0].mxu0
      %v6829 = vadd.f32 0.0, %v6828
      %v6830 = vpop.f32.mrb[0].mxu0
      %v6831 = vpop.f32.mrb[0].mxu0
      %v6832 = vadd.f32 0.0, %v6831
      %v6833 = vpop.f32.mrb[0].mxu0
      %6834 = vmatprep.mubr.bf16.mxu0 0
      %6835 = vmatmul.mubr.bf16.gmra.mrb[0].mxu0 %v6739
      %v6836 = vpop.f32.mrb[0].mxu0
      %v6837 = vadd.f32 0.0, %v6836
      %v6838 = vpop.f32.mrb[0].mxu0
      %v6839 = vpop.f32.mrb[0].mxu0
      %v6840 = vadd.f32 0.0, %v6839
      %v6841 = vpop.f32.mrb[0].mxu0
      %6842 = vmatprep.mubr.bf16.mxu0 0
      %6843 = vmatmul.mubr.bf16.gmra.mrb[0].mxu0 %v6740
      %v6844 = vpop.f32.mrb[0].mxu0
      %v6845 = vadd.f32 0.0, %v6844
      %v6846 = vpop.f32.mrb[0].mxu0
      %v6847 = vpop.f32.mrb[0].mxu0
      %v6848 = vadd.f32 0.0, %v6847
      %v6849 = vpop.f32.mrb[0].mxu0
      %6850 = vmatprep.mubr.bf16.mxu0 0
      %6851 = vmatmul.mubr.bf16.gmra.mrb[0].mxu0 %v6741
      %v6852 = vpop.f32.mrb[0].mxu0
      %v6853 = vadd.f32 0.0, %v6852
      %v6854 = vpop.f32.mrb[0].mxu0
      %v6855 = vpop.f32.mrb[0].mxu0
      %v6856 = vadd.f32 0.0, %v6855
      %v6857 = vpop.f32.mrb[0].mxu0
      %6858 = vdwg.mxu0
      %v6867 = vunpack.c.l.b16 %v6664
      %v6868 = vunpack.c.l.b16 %v6665
      %v6869 = vunpack.c.l.b16 %v6666
      %v6870 = vunpack.c.l.b16 %v6667
      %v6871 = vunpack.c.l.b16 %v6668
      %v6872 = vunpack.c.l.b16 %v6669
      %v6873 = vunpack.c.l.b16 %v6670
      %v6874 = vunpack.c.l.b16 %v6671
      %v6875 = vpack.c.b16 %v6868, %v6867
      %v6876 = vpack.c.b16 %v6870, %v6869
      %v6877 = vpack.c.b16 %v6872, %v6871
      %v6878 = vpack.c.b16 %v6874, %v6873
      %v6899 = vunpack.c.l.b16 %v6673
      %v6900 = vunpack.c.l.b16 %v6674
      %v6901 = vunpack.c.l.b16 %v6675
      %v6902 = vunpack.c.l.b16 %v6676
      %v6903 = vunpack.c.l.b16 %v6677
      %v6904 = vunpack.c.l.b16 %v6678
      %v6905 = vunpack.c.l.b16 %v6679
      %v6906 = vunpack.c.l.b16 %v6680
      %v6907 = vunpack.c.l.b16 %v6681
      %v6908 = vunpack.c.l.b16 %v6682
      %v6909 = vunpack.c.l.b16 %v6683
      %v6910 = vunpack.c.l.b16 %v6684
      %v6911 = vunpack.c.l.b16 %v6685
      %v6912 = vunpack.c.l.b16 %v6686
      %v6913 = vunpack.c.l.b16 %v6687
      %v6914 = vunpack.c.l.b16 %v6688
      %v6915 = vpack.c.b16 %v6900, %v6899
      %v6916 = vpack.c.b16 %v6902, %v6901
      %v6917 = vpack.c.b16 %v6904, %v6903
      %v6918 = vpack.c.b16 %v6906, %v6905
      %v6919 = vpack.c.b16 %v6908, %v6907
      %v6920 = vpack.c.b16 %v6910, %v6909
      %v6921 = vpack.c.b16 %v6912, %v6911
      %v6922 = vpack.c.b16 %v6914, %v6913
      %6931 = vmatprep.subr.bf16.mxu0 0
      %6932 = vmatpush1.bf16.msra.mxu0 %v6915
      %6933 = vmatprep.subr.bf16.mxu0 0
      %6934 = vmatpush1.bf16.msra.mxu0 %v6916
      %6935 = vmatprep.subr.bf16.mxu0 0
      %6936 = vmatpush1.bf16.msra.mxu0 %v6917
      %6937 = vmatprep.subr.bf16.mxu0 0
      %6938 = vmatpush1.bf16.msra.mxu0 %v6918
      %6939 = vmatprep.subr.bf16.mxu0 0
      %6940 = vmatpush1.bf16.msra.mxu0 %v6919
      %6941 = vmatprep.subr.bf16.mxu0 0
      %6942 = vmatpush1.bf16.msra.mxu0 %v6920
      %6943 = vmatprep.subr.bf16.mxu0 0
      %6944 = vmatpush1.bf16.msra.mxu0 %v6921
      %6945 = vmatprep.subr.bf16.mxu0 0
      %6946 = vmatpush1.bf16.msra.mxu0 %v6922
      %6947 = vmatprep.subr.bf16.mxu0 0
      %6948 = vmatpush1.bf16.msra.mxu0 0
      %6949 = vmatprep.subr.bf16.mxu0 0
      %6950 = vmatpush1.bf16.msra.mxu0 0
      %6951 = vmatprep.subr.bf16.mxu0 0
      %6952 = vmatpush1.bf16.msra.mxu0 0
      %6953 = vmatprep.subr.bf16.mxu0 0
      %6954 = vmatpush1.bf16.msra.mxu0 0
      %6955 = vmatprep.subr.bf16.mxu0 0
      %6956 = vmatpush1.bf16.msra.mxu0 0
      %6957 = vmatprep.subr.bf16.mxu0 0
      %6958 = vmatpush1.bf16.msra.mxu0 0
      %6959 = vmatprep.subr.bf16.mxu0 0
      %6960 = vmatpush1.bf16.msra.mxu0 0
      %6961 = vmatprep.subr.bf16.mxu0 0
      %6962 = vmatpush1.bf16.msra.mxu0 0
      %6963 = vmatprep.mubr.bf16.mxu0 0
      %6964 = vmatmul.mubr.bf16.gmra.mrb[0].mxu0 %v6875
      %v6965 = vpop.f32.mrb[0].mxu0
      %v6966 = vadd.f32 %v6829, %v6965
      %v6967 = vpop.f32.mrb[0].mxu0
      %v6968 = vpop.f32.mrb[0].mxu0
      %v6969 = vadd.f32 %v6832, %v6968
      %v6970 = vpop.f32.mrb[0].mxu0
      %6971 = vmatprep.mubr.bf16.mxu0 0
      %6972 = vmatmul.mubr.bf16.gmra.mrb[0].mxu0 %v6876
      %v6973 = vpop.f32.mrb[0].mxu0
      %v6974 = vadd.f32 %v6837, %v6973
      %v6975 = vpop.f32.mrb[0].mxu0
      %v6976 = vpop.f32.mrb[0].mxu0
      %v6977 = vadd.f32 %v6840, %v6976
      %v6978 = vpop.f32.mrb[0].mxu0
      %6979 = vmatprep.mubr.bf16.mxu0 0
      %6980 = vmatmul.mubr.bf16.gmra.mrb[0].mxu0 %v6877
      %v6981 = vpop.f32.mrb[0].mxu0
      %v6982 = vadd.f32 %v6845, %v6981
      %v6983 = vpop.f32.mrb[0].mxu0
      %v6984 = vpop.f32.mrb[0].mxu0
      %v6985 = vadd.f32 %v6848, %v6984
      %v6986 = vpop.f32.mrb[0].mxu0
      %6987 = vmatprep.mubr.bf16.mxu0 0
      %6988 = vmatmul.mubr.bf16.gmra.mrb[0].mxu0 %v6878
      %v6989 = vpop.f32.mrb[0].mxu0
      %v6990 = vadd.f32 %v6853, %v6989
      %v6991 = vpop.f32.mrb[0].mxu0
      %v6992 = vpop.f32.mrb[0].mxu0
      %v6993 = vadd.f32 %v6856, %v6992
      %v6994 = vpop.f32.mrb[0].mxu0
      %6995 = vdwg.mxu0
      %v6996 = vld [vmem:[%s6254 + $0x1] sm:$0xff]
      %v6997 = vld [vmem:[%s6254 + $0x11] sm:$0xff]
      %v6998 = vld [vmem:[%s6254 + $0x21] sm:$0xff]
      %v6999 = vld [vmem:[%s6254 + $0x31] sm:$0xff]
      %v7000 = vld [vmem:[%s6254 + $0x41] sm:$0xff]
      %v7001 = vld [vmem:[%s6254 + $0x51] sm:$0xff]
      %v7002 = vld [vmem:[%s6254 + $0x61] sm:$0xff]
      %v7003 = vld [vmem:[%s6254 + $0x71] sm:$0xff]
      %v7004 = vpack.c.bf16 %v6996, %v6996
      %v7005 = vpack.c.bf16 %v6997, %v6997
      %v7006 = vpack.c.bf16 %v6998, %v6998
      %v7007 = vpack.c.bf16 %v6999, %v6999
      %v7008 = vpack.c.bf16 %v7000, %v7000
      %v7009 = vpack.c.bf16 %v7001, %v7001
      %v7010 = vpack.c.bf16 %v7002, %v7002
      %v7011 = vpack.c.bf16 %v7003, %v7003
      %s7012 = scalar_lea.vmem %s2, 128
      %v7013 = vld [vmem:[%s7012] sm:$0xf]
      %v7014 = vld [vmem:[%s7012 + $0x4] sm:$0xf]
      %v7015 = vld [vmem:[%s7012 + $0x8] sm:$0xf]
      %v7016 = vld [vmem:[%s7012 + $0xc] sm:$0xf]
      %v7017 = vld [vmem:[%s7012 + $0x10] sm:$0xf]
      %v7018 = vld [vmem:[%s7012 + $0x14] sm:$0xf]
      %v7019 = vld [vmem:[%s7012 + $0x18] sm:$0xf]
      %v7020 = vld [vmem:[%s7012 + $0x1c] sm:$0xf]
      %v7021 = vld [vmem:[%s7012 + $0x20] sm:$0xf]
      %v7022 = vld [vmem:[%s7012 + $0x24] sm:$0xf]
      %v7023 = vld [vmem:[%s7012 + $0x28] sm:$0xf]
      %v7024 = vld [vmem:[%s7012 + $0x2c] sm:$0xf]
      %v7025 = vld [vmem:[%s7012 + $0x30] sm:$0xf]
      %v7026 = vld [vmem:[%s7012 + $0x34] sm:$0xf]
      %v7027 = vld [vmem:[%s7012 + $0x38] sm:$0xf]
      %v7028 = vld [vmem:[%s7012 + $0x3c] sm:$0xf]
      %v7037 = vunpack.c.l.b16 %v7004
      %v7038 = vunpack.c.l.b16 %v7005
      %v7039 = vunpack.c.l.b16 %v7006
      %v7040 = vunpack.c.l.b16 %v7007
      %v7041 = vunpack.c.l.b16 %v7008
      %v7042 = vunpack.c.l.b16 %v7009
      %v7043 = vunpack.c.l.b16 %v7010
      %v7044 = vunpack.c.l.b16 %v7011
      %v7045 = vpack.c.b16 %v7038, %v7037
      %v7046 = vpack.c.b16 %v7040, %v7039
      %v7047 = vpack.c.b16 %v7042, %v7041
      %v7048 = vpack.c.b16 %v7044, %v7043
      %v7069 = vunpack.c.l.b16 %v7013
      %v7070 = vunpack.c.l.b16 %v7014
      %v7071 = vunpack.c.l.b16 %v7015
      %v7072 = vunpack.c.l.b16 %v7016
      %v7073 = vunpack.c.l.b16 %v7017
      %v7074 = vunpack.c.l.b16 %v7018
      %v7075 = vunpack.c.l.b16 %v7019
      %v7076 = vunpack.c.l.b16 %v7020
      %v7077 = vunpack.c.l.b16 %v7021
      %v7078 = vunpack.c.l.b16 %v7022
      %v7079 = vunpack.c.l.b16 %v7023
      %v7080 = vunpack.c.l.b16 %v7024
      %v7081 = vunpack.c.l.b16 %v7025
      %v7082 = vunpack.c.l.b16 %v7026
      %v7083 = vunpack.c.l.b16 %v7027
      %v7084 = vunpack.c.l.b16 %v7028
      %v7085 = vpack.c.b16 %v7070, %v7069
      %v7086 = vpack.c.b16 %v7072, %v7071
      %v7087 = vpack.c.b16 %v7074, %v7073
      %v7088 = vpack.c.b16 %v7076, %v7075
      %v7089 = vpack.c.b16 %v7078, %v7077
      %v7090 = vpack.c.b16 %v7080, %v7079
      %v7091 = vpack.c.b16 %v7082, %v7081
      %v7092 = vpack.c.b16 %v7084, %v7083
      %7101 = vmatprep.subr.bf16.mxu0 0
      %7102 = vmatpush1.bf16.msra.mxu0 %v7085
      %7103 = vmatprep.subr.bf16.mxu0 0
      %7104 = vmatpush1.bf16.msra.mxu0 %v7086
      %7105 = vmatprep.subr.bf16.mxu0 0
      %7106 = vmatpush1.bf16.msra.mxu0 %v7087
      %7107 = vmatprep.subr.bf16.mxu0 0
      %7108 = vmatpush1.bf16.msra.mxu0 %v7088
      %7109 = vmatprep.subr.bf16.mxu0 0
      %7110 = vmatpush1.bf16.msra.mxu0 %v7089
      %7111 = vmatprep.subr.bf16.mxu0 0
      %7112 = vmatpush1.bf16.msra.mxu0 %v7090
      %7113 = vmatprep.subr.bf16.mxu0 0
      %7114 = vmatpush1.bf16.msra.mxu0 %v7091
      %7115 = vmatprep.subr.bf16.mxu0 0
      %7116 = vmatpush1.bf16.msra.mxu0 %v7092
      %7117 = vmatprep.subr.bf16.mxu0 0
      %7118 = vmatpush1.bf16.msra.mxu0 0
      %7119 = vmatprep.subr.bf16.mxu0 0
      %7120 = vmatpush1.bf16.msra.mxu0 0
      %7121 = vmatprep.subr.bf16.mxu0 0
      %7122 = vmatpush1.bf16.msra.mxu0 0
      %7123 = vmatprep.subr.bf16.mxu0 0
      %7124 = vmatpush1.bf16.msra.mxu0 0
      %7125 = vmatprep.subr.bf16.mxu0 0
      %7126 = vmatpush1.bf16.msra.mxu0 0
      %7127 = vmatprep.subr.bf16.mxu0 0
      %7128 = vmatpush1.bf16.msra.mxu0 0
      %7129 = vmatprep.subr.bf16.mxu0 0
      %7130 = vmatpush1.bf16.msra.mxu0 0
      %7131 = vmatprep.subr.bf16.mxu0 0
      %7132 = vmatpush1.bf16.msra.mxu0 0
      %7133 = vmatprep.mubr.bf16.mxu0 0
      %7134 = vmatmul.mubr.bf16.gmra.mrb[0].mxu0 %v7045
      %v7135 = vpop.f32.mrb[0].mxu0
      %v7136 = vadd.f32 0.0, %v7135
      %v7137 = vpop.f32.mrb[0].mxu0
      %v7138 = vpop.f32.mrb[0].mxu0
      %v7139 = vadd.f32 0.0, %v7138
      %v7140 = vpop.f32.mrb[0].mxu0
      %7141 = vmatprep.mubr.bf16.mxu0 0
      %7142 = vmatmul.mubr.bf16.gmra.mrb[0].mxu0 %v7046
      %v7143 = vpop.f32.mrb[0].mxu0
      %v7144 = vadd.f32 0.0, %v7143
      %v7145 = vpop.f32.mrb[0].mxu0
      %v7146 = vpop.f32.mrb[0].mxu0
      %v7147 = vadd.f32 0.0, %v7146
      %v7148 = vpop.f32.mrb[0].mxu0
      %7149 = vmatprep.mubr.bf16.mxu0 0
      %7150 = vmatmul.mubr.bf16.gmra.mrb[0].mxu0 %v7047
      %v7151 = vpop.f32.mrb[0].mxu0
      %v7152 = vadd.f32 0.0, %v7151
      %v7153 = vpop.f32.mrb[0].mxu0
      %v7154 = vpop.f32.mrb[0].mxu0
      %v7155 = vadd.f32 0.0, %v7154
      %v7156 = vpop.f32.mrb[0].mxu0
      %7157 = vmatprep.mubr.bf16.mxu0 0
      %7158 = vmatmul.mubr.bf16.gmra.mrb[0].mxu0 %v7048
      %v7159 = vpop.f32.mrb[0].mxu0
      %v7160 = vadd.f32 0.0, %v7159
      %v7161 = vpop.f32.mrb[0].mxu0
      %v7162 = vpop.f32.mrb[0].mxu0
      %v7163 = vadd.f32 0.0, %v7162
      %v7164 = vpop.f32.mrb[0].mxu0
      %7165 = vdwg.mxu0
      %v7166 = vadd.f32 %v6966, %v7136
      %v7167 = vadd.f32 %v6969, %v7139
      %v7168 = vadd.f32 %v6974, %v7144
      %v7169 = vadd.f32 %v6977, %v7147
      %v7170 = vadd.f32 %v6982, %v7152
      %v7171 = vadd.f32 %v6985, %v7155
      %v7172 = vadd.f32 %v6990, %v7160
      %v7173 = vadd.f32 %v6993, %v7163
      %v7174 = vld [vmem:[%s6254 + $0x2] sm:$0xff]
      %v7175 = vld [vmem:[%s6254 + $0x12] sm:$0xff]
      %v7176 = vld [vmem:[%s6254 + $0x22] sm:$0xff]
      %v7177 = vld [vmem:[%s6254 + $0x32] sm:$0xff]
      %v7178 = vld [vmem:[%s6254 + $0x42] sm:$0xff]
      %v7179 = vld [vmem:[%s6254 + $0x52] sm:$0xff]
      %v7180 = vld [vmem:[%s6254 + $0x62] sm:$0xff]
      %v7181 = vld [vmem:[%s6254 + $0x72] sm:$0xff]
      %v7182 = vpack.c.bf16 %v7174, %v7174
      %v7183 = vpack.c.bf16 %v7175, %v7175
      %v7184 = vpack.c.bf16 %v7176, %v7176
      %v7185 = vpack.c.bf16 %v7177, %v7177
      %v7186 = vpack.c.bf16 %v7178, %v7178
      %v7187 = vpack.c.bf16 %v7179, %v7179
      %v7188 = vpack.c.bf16 %v7180, %v7180
      %v7189 = vpack.c.bf16 %v7181, %v7181
      %v7190 = vld [vmem:[%s2] sm:$0xf]
      %v7191 = vld [vmem:[%s2 + $0x4] sm:$0xf]
      %v7192 = vld [vmem:[%s2 + $0x8] sm:$0xf]
      %v7193 = vld [vmem:[%s2 + $0xc] sm:$0xf]
      %v7194 = vld [vmem:[%s2 + $0x10] sm:$0xf]
      %v7195 = vld [vmem:[%s2 + $0x14] sm:$0xf]
      %v7196 = vld [vmem:[%s2 + $0x18] sm:$0xf]
      %v7197 = vld [vmem:[%s2 + $0x1c] sm:$0xf]
      %v7198 = vld [vmem:[%s2 + $0x20] sm:$0xf]
      %v7199 = vld [vmem:[%s2 + $0x24] sm:$0xf]
      %v7200 = vld [vmem:[%s2 + $0x28] sm:$0xf]
      %v7201 = vld [vmem:[%s2 + $0x2c] sm:$0xf]
      %v7202 = vld [vmem:[%s2 + $0x30] sm:$0xf]
      %v7203 = vld [vmem:[%s2 + $0x34] sm:$0xf]
      %v7204 = vld [vmem:[%s2 + $0x38] sm:$0xf]
      %v7205 = vld [vmem:[%s2 + $0x3c] sm:$0xf]
      %v7214 = vunpack.c.l.b16 %v7182
      %v7215 = vunpack.c.l.b16 %v7183
      %v7216 = vunpack.c.l.b16 %v7184
      %v7217 = vunpack.c.l.b16 %v7185
      %v7218 = vunpack.c.l.b16 %v7186
      %v7219 = vunpack.c.l.b16 %v7187
      %v7220 = vunpack.c.l.b16 %v7188
      %v7221 = vunpack.c.l.b16 %v7189
      %v7222 = vpack.c.b16 %v7215, %v7214
      %v7223 = vpack.c.b16 %v7217, %v7216
      %v7224 = vpack.c.b16 %v7219, %v7218
      %v7225 = vpack.c.b16 %v7221, %v7220
      %v7246 = vunpack.c.l.b16 %v7190
      %v7247 = vunpack.c.l.b16 %v7191
      %v7248 = vunpack.c.l.b16 %v7192
      %v7249 = vunpack.c.l.b16 %v7193
      %v7250 = vunpack.c.l.b16 %v7194
      %v7251 = vunpack.c.l.b16 %v7195
      %v7252 = vunpack.c.l.b16 %v7196
      %v7253 = vunpack.c.l.b16 %v7197
      %v7254 = vunpack.c.l.b16 %v7198
      %v7255 = vunpack.c.l.b16 %v7199
      %v7256 = vunpack.c.l.b16 %v7200
      %v7257 = vunpack.c.l.b16 %v7201
      %v7258 = vunpack.c.l.b16 %v7202
      %v7259 = vunpack.c.l.b16 %v7203
      %v7260 = vunpack.c.l.b16 %v7204
      %v7261 = vunpack.c.l.b16 %v7205
      %v7262 = vpack.c.b16 %v7247, %v7246
      %v7263 = vpack.c.b16 %v7249, %v7248
      %v7264 = vpack.c.b16 %v7251, %v7250
      %v7265 = vpack.c.b16 %v7253, %v7252
      %v7266 = vpack.c.b16 %v7255, %v7254
      %v7267 = vpack.c.b16 %v7257, %v7256
      %v7268 = vpack.c.b16 %v7259, %v7258
      %v7269 = vpack.c.b16 %v7261, %v7260
      %7278 = vmatprep.subr.bf16.mxu0 0
      %7279 = vmatpush1.bf16.msra.mxu0 %v7262
      %7280 = vmatprep.subr.bf16.mxu0 0
      %7281 = vmatpush1.bf16.msra.mxu0 %v7263
      %7282 = vmatprep.subr.bf16.mxu0 0
      %7283 = vmatpush1.bf16.msra.mxu0 %v7264
      %7284 = vmatprep.subr.bf16.mxu0 0
      %7285 = vmatpush1.bf16.msra.mxu0 %v7265
      %7286 = vmatprep.subr.bf16.mxu0 0
      %7287 = vmatpush1.bf16.msra.mxu0 %v7266
      %7288 = vmatprep.subr.bf16.mxu0 0
      %7289 = vmatpush1.bf16.msra.mxu0 %v7267
      %7290 = vmatprep.subr.bf16.mxu0 0
      %7291 = vmatpush1.bf16.msra.mxu0 %v7268
      %7292 = vmatprep.subr.bf16.mxu0 0
      %7293 = vmatpush1.bf16.msra.mxu0 %v7269
      %7294 = vmatprep.subr.bf16.mxu0 0
      %7295 = vmatpush1.bf16.msra.mxu0 0
      %7296 = vmatprep.subr.bf16.mxu0 0
      %7297 = vmatpush1.bf16.msra.mxu0 0
      %7298 = vmatprep.subr.bf16.mxu0 0
      %7299 = vmatpush1.bf16.msra.mxu0 0
      %7300 = vmatprep.subr.bf16.mxu0 0
      %7301 = vmatpush1.bf16.msra.mxu0 0
      %7302 = vmatprep.subr.bf16.mxu0 0
      %7303 = vmatpush1.bf16.msra.mxu0 0
      %7304 = vmatprep.subr.bf16.mxu0 0
      %7305 = vmatpush1.bf16.msra.mxu0 0
      %7306 = vmatprep.subr.bf16.mxu0 0
      %7307 = vmatpush1.bf16.msra.mxu0 0
      %7308 = vmatprep.subr.bf16.mxu0 0
      %7309 = vmatpush1.bf16.msra.mxu0 0
      %7310 = vmatprep.mubr.bf16.mxu0 0
      %7311 = vmatmul.mubr.bf16.gmra.mrb[0].mxu0 %v7222
      %v7312 = vpop.f32.mrb[0].mxu0
      %v7313 = vadd.f32 0.0, %v7312
      %v7314 = vpop.f32.mrb[0].mxu0
      %v7315 = vpop.f32.mrb[0].mxu0
      %v7316 = vadd.f32 0.0, %v7315
      %v7317 = vpop.f32.mrb[0].mxu0
      %7318 = vmatprep.mubr.bf16.mxu0 0
      %7319 = vmatmul.mubr.bf16.gmra.mrb[0].mxu0 %v7223
      %v7320 = vpop.f32.mrb[0].mxu0
      %v7321 = vadd.f32 0.0, %v7320
      %v7322 = vpop.f32.mrb[0].mxu0
      %v7323 = vpop.f32.mrb[0].mxu0
      %v7324 = vadd.f32 0.0, %v7323
      %v7325 = vpop.f32.mrb[0].mxu0
      %7326 = vmatprep.mubr.bf16.mxu0 0
      %7327 = vmatmul.mubr.bf16.gmra.mrb[0].mxu0 %v7224
      %v7328 = vpop.f32.mrb[0].mxu0
      %v7329 = vadd.f32 0.0, %v7328
      %v7330 = vpop.f32.mrb[0].mxu0
      %v7331 = vpop.f32.mrb[0].mxu0
      %v7332 = vadd.f32 0.0, %v7331
      %v7333 = vpop.f32.mrb[0].mxu0
      %7334 = vmatprep.mubr.bf16.mxu0 0
      %7335 = vmatmul.mubr.bf16.gmra.mrb[0].mxu0 %v7225
      %v7336 = vpop.f32.mrb[0].mxu0
      %v7337 = vadd.f32 0.0, %v7336
      %v7338 = vpop.f32.mrb[0].mxu0
      %v7339 = vpop.f32.mrb[0].mxu0
      %v7340 = vadd.f32 0.0, %v7339
      %v7341 = vpop.f32.mrb[0].mxu0
      %7342 = vdwg.mxu0
      %v7343 = vadd.f32 %v7166, %v7313
      %v7344 = vadd.f32 %v7167, %v7316
      %v7345 = vadd.f32 %v7168, %v7321
      %v7346 = vadd.f32 %v7169, %v7324
      %v7347 = vadd.f32 %v7170, %v7329
      %v7348 = vadd.f32 %v7171, %v7332
      %v7349 = vadd.f32 %v7172, %v7337
      %v7350 = vadd.f32 %v7173, %v7340
      %s7351 = scalar_lea.vmem %s204, 192
      %7352 = vst [vmem:[%s7351] sm:$0xff] %v7343
      %7353 = vst [vmem:[%s7351 + $0x8] sm:$0xff] %v7344
      %7354 = vst [vmem:[%s7351 + $0x10] sm:$0xff] %v7345
      %7355 = vst [vmem:[%s7351 + $0x18] sm:$0xff] %v7346
      %7356 = vst [vmem:[%s7351 + $0x20] sm:$0xff] %v7347
      %7357 = vst [vmem:[%s7351 + $0x28] sm:$0xff] %v7348
      %7358 = vst [vmem:[%s7351 + $0x30] sm:$0xff] %v7349
      %7359 = vst [vmem:[%s7351 + $0x38] sm:$0xff] %v7350
      %v7360 = vadd.f32 %v7343, %v7344
      %v7361 = vadd.f32 %v7360, %v7345
      %v7362 = vadd.f32 %v7361, %v7346
      %v7363 = vadd.f32 %v7362, %v7347
      %v7364 = vadd.f32 %v7363, %v7348
      %v7365 = vadd.f32 %v7364, %v7349
      %v7366 = vadd.f32 %v7365, %v7350
      %v7367 = vrot.slane %v7366, 4
      %v7368 = vadd.f32 %v7366, %v7367
      %v7369 = vrot.slane %v7368, 2
      %v7370 = vadd.f32 %v7368, %v7369
      %v7371 = vrot.slane %v7370, 1
      %v7372 = vadd.f32 %v7370, %v7371
      %v7373 = vadd.f32 %v6633, %v7372
      %v7374 = vmul.f32 %v7343, %v7343
      %v7375 = vmul.f32 %v7344, %v7344
      %v7376 = vmul.f32 %v7345, %v7345
      %v7377 = vmul.f32 %v7346, %v7346
      %v7378 = vmul.f32 %v7347, %v7347
      %v7379 = vmul.f32 %v7348, %v7348
      %v7380 = vmul.f32 %v7349, %v7349
      %v7381 = vmul.f32 %v7350, %v7350
      %v7382 = vadd.f32 %v7374, %v7375
      %v7383 = vadd.f32 %v7382, %v7376
      %v7384 = vadd.f32 %v7383, %v7377
      %v7385 = vadd.f32 %v7384, %v7378
      %v7386 = vadd.f32 %v7385, %v7379
      %v7387 = vadd.f32 %v7386, %v7380
      %v7388 = vadd.f32 %v7387, %v7381
      %v7389 = vrot.slane %v7388, 4
      %v7390 = vadd.f32 %v7388, %v7389
      %v7391 = vrot.slane %v7390, 2
      %v7392 = vadd.f32 %v7390, %v7391
      %v7393 = vrot.slane %v7392, 1
      %v7394 = vadd.f32 %v7392, %v7393
      %v7395 = vadd.f32 %v6655, %v7394
      %7396 = vst [vmem:[%s208] sm:$0x1] %v7373
      %7397 = vst [vmem:[%s208 + $0x1] sm:$0x1] %v7395
      %p7398 = scmp.lt.s32.totalorder %s16, 1
      %s7399 = scalar_select %p7398, %s16, 1
      %s7400 = smul.addr %s7399, 32
      %s7401 = smul.addr %s7400, 8
      %s7402 = scalar_lea.vmem %s3, %s7401
      %p7403 = scmp.lt.s32.totalorder %s16, 1
      %s7404 = scalar_select %p7403, %s16, 1
      %s7405 = smul.addr %s7404, 2
      %s7406 = scalar_lea.vmem %s4, %s7405
      // Predicated region
      $region33: #{unet_innermost_forward.2} parent=31 // pred_check
        %p7407 = pneg %p102
      $region34: #{unet_innermost_forward.2} parent=31 // pred_check_branch
        %7409 = sbr.rel (%p7407) target = $region36
      $region35: #{unet_innermost_forward.2} parent=31 // pred_region
        _
      $region36: #{unet_innermost_forward.2} parent=31 // pred_fallthru
        _
      // Predicated region
      $region37: #{unet_innermost_forward.2} parent=31 // pred_check
        %p7410 = pneg %p128
      $region38: #{unet_innermost_forward.2} parent=31 // pred_check_branch
        %7412 = sbr.rel (%p7410) target = $region40
      $region39: #{unet_innermost_forward.2} parent=31 // pred_region
        _
      $region40: #{unet_innermost_forward.2} parent=31 // pred_fallthru
        _
    $region32: #{unet_innermost_forward.2} parent=5 // pred_fallthru
      _
    %p7413 = scmp.le.s32.totalorder 2, %s11
    // Predicated region
    $region41: #{unet_innermost_forward.2} parent=5 // pred_check
      %p7414 = pneg %p7413
    $region42: #{unet_innermost_forward.2} parent=5 // pred_check_branch
      %7416 = sbr.rel (%p7414) target = $region44
    $region43: #{unet_innermost_forward.2} parent=5 // pred_region
      %s7417 = ssub.s32 %s11, 2
      // Predicated region
      $region45: #{unet_innermost_forward.2} parent=43 // pred_check
        %p7418 = pneg %p108
      $region46: #{unet_innermost_forward.2} parent=43 // pred_check_branch
        %7420 = sbr.rel (%p7418) target = $region48
      $region47: #{unet_innermost_forward.2} parent=43 // pred_region
        %p7421 = scmp.lt.s32.totalorder %s17, 1
        %s7422 = scalar_select %p7421, %s17, 1
        %s7423 = smul.addr %s7422, 32
        %s7424 = smul.addr %s7423, 8
        %s7425 = scalar_lea.vmem %s3, %s7424
      $region48: #{unet_innermost_forward.2} parent=43 // pred_fallthru
        _
      // Predicated region
      $region49: #{unet_innermost_forward.2} parent=43 // pred_check
        %p7426 = pneg %p134
      $region50: #{unet_innermost_forward.2} parent=43 // pred_check_branch
        %7428 = sbr.rel (%p7426) target = $region52
      $region51: #{unet_innermost_forward.2} parent=43 // pred_region
        %p7429 = scmp.lt.s32.totalorder %s17, 1
        %s7430 = scalar_select %p7429, %s17, 1
        %s7431 = smul.addr %s7430, 2
        %s7432 = scalar_lea.vmem %s4, %s7431
      $region52: #{unet_innermost_forward.2} parent=43 // pred_fallthru
        _
    $region44: #{unet_innermost_forward.2} parent=5 // pred_fallthru
      _
  $region6: #{unet_innermost_forward.2} parent=0 // loop_footer
    %s15 = sadd.s32 1, %s11
  $region7: #{unet_innermost_forward.2} parent=0 // loop_footer_branch
    %10 = sbr.rel target = $region3
  $region8: #{unet_innermost_forward.2} parent=0 // loop_exit
    _

</llo_original>
